<compile_context>
chip_gen: v6e
topology: v6e:2x2x1
jax: 0.10.0
libtpu: 0.0.40
codegen_flags: <defaults>
</compile_context>

<pallas_src>
import jax
import jax.numpy as jnp
from jax import lax
from jax.experimental import pallas as pl
from jax.experimental.pallas import tpu as pltpu


# ----------------------------------------------------------------------------
# Pallas kernel 1: fused conv-as-matmul   y = relu(patches @ W + b)
# ----------------------------------------------------------------------------
def _conv_mm_kernel(x_ref, w_ref, b_ref, o_ref):
    acc = jnp.dot(x_ref[...], w_ref[...], preferred_element_type=jnp.float32)
    o_ref[...] = jnp.maximum(acc + b_ref[...], 0.0).astype(o_ref.dtype)


def pallas_conv_matmul(patches, w, b):
    """relu(patches @ w + b).  patches [M, K] bf16, w [K, N] bf16, b [1, N] f32 -> bf16 [M, N].

    Every conv layer of this model fits in VMEM as a single block (largest operand
    is the conv2 patch matrix, ~0.3 MB), so grid=(1,) with full-array blocks
    (full dims satisfy the (8,128) block rule)."""
    M, K = patches.shape
    Kw, N = w.shape
    assert K == Kw and b.shape == (1, N)
    return pl.pallas_call(
        _conv_mm_kernel,
        out_shape=jax.ShapeDtypeStruct((M, N), jnp.bfloat16),
        grid_spec=pl.GridSpec(
            grid=(1,),
            in_specs=[
                pl.BlockSpec((M, K), lambda i: (0, 0)),
                pl.BlockSpec((K, N), lambda i: (0, 0)),
                pl.BlockSpec((1, N), lambda i: (0, 0)),
            ],
            out_specs=pl.BlockSpec((M, N), lambda i: (0, 0)),
        ),
    )(patches, w, b)


# ----------------------------------------------------------------------------
# Pallas kernel 2: fused  fc (+ReLU) + [actor_mean | critic] heads
# ----------------------------------------------------------------------------
def _fc_heads_fused_kernel(x_ref, wf_ref, bf_ref, wh_ref, bh_ref, o_ref):
    # Single-block variant (v5e / v6e): whole fc weight resident, bias on-core.
    feat = jnp.dot(x_ref[...], wf_ref[...], preferred_element_type=jnp.float32)
    feat = jnp.maximum(feat + bf_ref[...], 0.0)
    heads = jnp.dot(feat.astype(jnp.bfloat16), wh_ref[...],
                    preferred_element_type=jnp.float32)
    o_ref[...] = heads + bh_ref[...]


def _fc_heads_split_kernel(x_ref, wf_ref, bf_ref, wh_ref, o_ref):
    # v7x variant: each grid step handles a lane-dense 128-column fc tile and emits
    # its partial head contribution; partials are summed (+ bias) host-side.
    feat = jnp.dot(x_ref[...], wf_ref[...], preferred_element_type=jnp.float32)
    feat = jnp.maximum(feat + bf_ref[...], 0.0)
    part = jnp.dot(feat.astype(jnp.bfloat16), wh_ref[...],
                   preferred_element_type=jnp.float32)
    o_ref[...] = part[None, :, :]


def _has_multiple_tensorcores():
    """True on chips with >1 TensorCore per chip (v7x).  Trace-time query."""
    try:
        kind = jax.devices()[0].device_kind.lower()
    except Exception:
        return False
    return "v7" in kind


def pallas_fc_heads(x, wf, bf, wh, bh, *, split=None):
    B, K = x.shape
    Kw, N = wf.shape
    Nh = wh.shape[1]
    assert K == Kw and wh.shape[0] == N and bf.shape == (1, N) and bh.shape == (1, Nh)
    if split is None:
        split = _has_multiple_tensorcores()

    if not split:
        # Single-TC chips: one block, no partial output in HBM, no host-side reduce.
        return pl.pallas_call(
            _fc_heads_fused_kernel,
            out_shape=jax.ShapeDtypeStruct((B, Nh), jnp.float32),
            grid_spec=pl.GridSpec(
                grid=(1,),
                in_specs=[
                    pl.BlockSpec((B, K), lambda i: (0, 0)),
                    pl.BlockSpec((K, N), lambda i: (0, 0)),
                    pl.BlockSpec((1, N), lambda i: (0, 0)),
                    pl.BlockSpec((N, Nh), lambda i: (0, 0)),
                    pl.BlockSpec((1, Nh), lambda i: (0, 0)),
                ],
                out_specs=pl.BlockSpec((B, Nh), lambda i: (0, 0)),
            ),
        )(x, wf, bf, wh, bh)

    # v7x: shard the dominant ~3.1 MB fc-weight DMA across the 2 TensorCores with two
    # lane-dense 128-column fc tiles ("parallel").  Keep n_split=2 (4-way would drop
    # below 128-lane density).
    n_split = 2
    assert N % n_split == 0 and (N // n_split) % 128 == 0
    bn = N // n_split
    partial = pl.pallas_call(
        _fc_heads_split_kernel,
        out_shape=jax.ShapeDtypeStruct((n_split, B, Nh), jnp.float32),
        grid_spec=pl.GridSpec(
            grid=(n_split,),
            in_specs=[
                pl.BlockSpec((B, K), lambda i: (0, 0)),
                pl.BlockSpec((K, bn), lambda i: (0, i)),
                pl.BlockSpec((1, bn), lambda i: (0, i)),
                pl.BlockSpec((bn, Nh), lambda i: (i, 0)),
            ],
            out_specs=pl.BlockSpec((1, B, Nh), lambda i: (i, 0, 0)),
        ),
        compiler_params=pltpu.CompilerParams(dimension_semantics=("parallel",)),
    )(x, wf, bf, wh)
    return jnp.sum(partial, axis=0) + bh


# ----------------------------------------------------------------------------
# Host-side helpers
# ----------------------------------------------------------------------------
def _conv_out_hw(h, w, k, s):
    return (h - k) // s + 1, (w - k) // s + 1


def _extract_patches(a, k, s):
    """a: [B, H, W, C] -> [B, oh, ow, C*k*k] patches, feature order (c, kh, kw).
    One XLA op per conv layer (vs ~90 strided slices + concats before)."""
    return lax.conv_general_dilated_patches(
        a, filter_shape=(k, k), window_strides=(s, s), padding="VALID",
        dimension_numbers=("NHWC", "HWIO", "NHWC"))


# ----------------------------------------------------------------------------
# Parameter construction: canonical PyTorch-layout init, then one-time packing
# into matmul-ready bf16 [K, N] matrices (the forward never transposes weights).
# ----------------------------------------------------------------------------
def init_params(key, input_shape=(1, 96, 128), action_dim=2, log_std=(0.5, 0.0)):
    C, H, W = input_shape
    h1, w1 = _conv_out_hw(H, W, 8, 4)
    h2, w2 = _conv_out_hw(h1, w1, 4, 2)
    h3, w3 = _conv_out_hw(h2, w2, 3, 1)
    conv_out = 64 * h3 * w3

    keys = jax.random.split(key, 12)

    def uni(k, shape, fan_in):
        bound = 1.0 / (fan_in ** 0.5)
        return jax.random.uniform(k, shape, jnp.float32, -bound, bound)

    # Canonical (PyTorch-layout) parameters.
    c1_w = uni(keys[0], (32, C, 8, 8), C * 64);      c1_b = uni(keys[1], (32,), C * 64)
    c2_w = uni(keys[2], (64, 32, 4, 4), 32 * 16);    c2_b = uni(keys[3], (64,), 32 * 16)
    c3_w = uni(keys[4], (64, 64, 3, 3), 64 * 9);     c3_b = uni(keys[5], (64,), 64 * 9)
    fc_w = uni(keys[6], (256, conv_out), conv_out);  fc_b = uni(keys[7], (256,), conv_out)
    am_w = uni(keys[8], (action_dim, 256), 256);     am_b = uni(keys[9], (action_dim,), 256)
    cr_w = uni(keys[10], (1, 256), 256);             cr_b = uni(keys[11], (1,), 256)

    def conv_mat(w):  # [O, C, KH, KW] -> [C*KH*KW, O]  ((c, kh, kw) patch order)
        O, Ci, KH, KW = w.shape
        return jnp.transpose(w, (1, 2, 3, 0)).reshape(Ci * KH * KW, O)

    # fc weight: permute input features from PyTorch's (c, h, w) flatten of NCHW
    # features to our channels-last (h, w, c) flatten, then store as [K, N].
    fc_w_hwc = fc_w.reshape(256, 64, h3, w3).transpose(0, 2, 3, 1).reshape(256, conv_out)

    return {
        "c1_w": conv_mat(c1_w).astype(jnp.bfloat16), "c1_b": c1_b.reshape(1, -1),
        "c2_w": conv_mat(c2_w).astype(jnp.bfloat16), "c2_b": c2_b.reshape(1, -1),
        "c3_w": conv_mat(c3_w).astype(jnp.bfloat16), "c3_b": c3_b.reshape(1, -1),
        "fc_w": fc_w_hwc.T.astype(jnp.bfloat16),     "fc_b": fc_b.reshape(1, -1),
        # heads fused: columns = [actor_mean (action_dim) | critic (1)]
        "head_w": jnp.concatenate([am_w, cr_w], axis=0).T.astype(jnp.bfloat16),   # [256, action_dim+1]
        "head_b": jnp.concatenate([am_b, cr_b], axis=0).reshape(1, -1),           # [1, action_dim+1]
        "log_std": jnp.asarray(log_std, dtype=jnp.float32),
    }


# ----------------------------------------------------------------------------
# Forward pass == ActorCriticPolicy.forward
# ----------------------------------------------------------------------------
_CONV_CFG = ((("c1_w", "c1_b"), 8, 4),
             (("c2_w", "c2_b"), 4, 2),
             (("c3_w", "c3_b"), 3, 1))


def actor_critic_forward(params, x, fc_split=None):
    """x: [B, 1, H, W] float32 (NCHW).  Returns (mean, log_std, value)."""
    B = x.shape[0]
    # NHWC + bf16 on the host BEFORE any patch extraction / kernel DMA.
    a = jnp.transpose(x, (0, 2, 3, 1)).astype(jnp.bfloat16)
    for (wn, bn), k, s in _CONV_CFG:
        p = _extract_patches(a, k, s)                       # [B, oh, ow, K] bf16
        _, oh, ow, K = p.shape
        y = pallas_conv_matmul(p.reshape(B * oh * ow, K), params[wn], params[bn])
        a = y.reshape(B, oh, ow, -1)                        # channels-last, bf16
    feat_in = a.reshape(B, -1)                              # (h, w, c) flatten; fc_w pre-permuted to match
    heads = pallas_fc_heads(feat_in, params["fc_w"], params["fc_b"],
                            params["head_w"], params["head_b"], split=fc_split)
    nh = heads.shape[1]
    mean = heads[:, : nh - 1]
    value = heads[:, nh - 1:]
    log_std = jnp.broadcast_to(params["log_std"], mean.shape)   # expand_as(mean)
    return mean, log_std, value


# Pure-jnp/lax mirror of the same math / quantization points (kernel cross-check).
def reference_forward(params, x):
    B = x.shape[0]
    a = jnp.transpose(x, (0, 2, 3, 1)).astype(jnp.bfloat16)
    for (wn, bn), k, s in _CONV_CFG:
        p = _extract_patches(a, k, s)
        _, oh, ow, K = p.shape
        y = jnp.dot(p.reshape(B * oh * ow, K), params[wn], preferred_element_type=jnp.float32)
        y = jnp.maximum(y + params[bn], 0.0).astype(jnp.bfloat16)
        a = y.reshape(B, oh, ow, -1)
    feat_in = a.reshape(B, -1)
    feat = jnp.dot(feat_in, params["fc_w"], preferred_element_type=jnp.float32)
    feat = jnp.maximum(feat + params["fc_b"], 0.0)
    heads = jnp.dot(feat.astype(jnp.bfloat16), params["head_w"], preferred_element_type=jnp.float32)
    heads = heads + params["head_b"]
    nh = heads.shape[1]
    return heads[:, : nh - 1], heads[:, nh - 1:]


if __name__ == "__main__":
    key = jax.random.PRNGKey(0)
    k_param, k_x = jax.random.split(key)

    input_shape = (1, 96, 128)   # module default (C, H, W)
    action_dim = 2
    batch = 2

    params = init_params(k_param, input_shape=input_shape, action_dim=action_dim,
                         log_std=(0.5, 0.0))
    x = jax.random.normal(k_x, (batch,) + input_shape, dtype=jnp.float32)

    fwd = jax.jit(actor_critic_forward)
    mean, log_std, value = jax.block_until_ready(fwd(params, x))

    assert mean.shape == (batch, action_dim)
    assert log_std.shape == (batch, action_dim)
    assert value.shape == (batch, 1)
    assert bool(jnp.all(jnp.isfinite(mean))) and bool(jnp.all(jnp.isfinite(value)))
    assert jnp.allclose(log_std[0], jnp.array([0.5, 0.0]))

    # Cross-check Pallas kernels against the pure-jnp/lax mirror of the same math.
    ref_mean, ref_value = jax.jit(reference_forward)(params, x)
    assert jnp.allclose(mean, ref_mean, rtol=2e-2, atol=1e-2)
    assert jnp.allclose(value, ref_value, rtol=2e-2, atol=1e-2)

    # Exercise BOTH fc/heads variants (v5e/v6e single-block and v7x 2-way parallel
    # split) regardless of which chip this runs on; they must agree.
    fwd_split = jax.jit(lambda p, xx: actor_critic_forward(p, xx, fc_split=True))
    fwd_fused = jax.jit(lambda p, xx: actor_critic_forward(p, xx, fc_split=False))
    m1, _, v1 = jax.block_until_ready(fwd_split(params, x))
    m2, _, v2 = jax.block_until_ready(fwd_fused(params, x))
    assert jnp.allclose(m1, m2, rtol=2e-2, atol=1e-2)
    assert jnp.allclose(v1, v2, rtol=2e-2, atol=1e-2)

    print("KERNEL_OK")
</pallas_src>

<mosaic_0001>
module attributes {stable_mosaic.version = 11 : i64} {
  func.func @_conv_mm_kernel(%arg0: i32, %arg1: memref<1426x64xbf16, #tpu.memory_space<vmem>>, %arg2: memref<64x32xbf16, #tpu.memory_space<vmem>>, %arg3: memref<1x32xf32, #tpu.memory_space<vmem>>, %arg4: memref<1426x32xbf16, #tpu.memory_space<vmem>>) attributes {dimension_semantics = [#tpu.dimension_semantics<arbitrary>], iteration_bounds = array<i64: 1>, scalar_prefetch = 0 : i64, scratch_operands = 0 : i64, tpu.core_type = #tpu.core_type<tc>, window_params = [{pipeline_mode = #tpu.pipeline_mode<synchronous>, transform_indices = @transform_0, window_bounds = array<i64: 1426, 64>}, {pipeline_mode = #tpu.pipeline_mode<synchronous>, transform_indices = @transform_1, window_bounds = array<i64: 64, 32>}, {pipeline_mode = #tpu.pipeline_mode<synchronous>, transform_indices = @transform_2, window_bounds = array<i64: 1, 32>}, {pipeline_mode = #tpu.pipeline_mode<synchronous>, transform_indices = @transform_3, window_bounds = array<i64: 1426, 32>}]} {
    %c0 = arith.constant 0 : index
    %c0_0 = arith.constant 0 : index
    %0 = vector.load %arg1[%c0, %c0_0] : memref<1426x64xbf16, #tpu.memory_space<vmem>>, vector<1426x64xbf16>
    %c0_1 = arith.constant 0 : index
    %c0_2 = arith.constant 0 : index
    %1 = vector.load %arg2[%c0_1, %c0_2] : memref<64x32xbf16, #tpu.memory_space<vmem>>, vector<64x32xbf16>
    %cst = arith.constant dense<0.000000e+00> : vector<1426x32xf32>
    %2 = tpu.matmul %0, %1, %cst {dimension_numbers = #tpu.dot_dimension_numbers<[1], [0], [0], [1], [0, 0, 1, 1], [], []>} : vector<1426x64xbf16>, vector<64x32xbf16>, vector<1426x32xf32> -> vector<1426x32xf32>
    %c0_3 = arith.constant 0 : index
    %c0_4 = arith.constant 0 : index
    %3 = vector.load %arg3[%c0_3, %c0_4] : memref<1x32xf32, #tpu.memory_space<vmem>>, vector<1x32xf32>
    %4 = vector.broadcast %3 : vector<1x32xf32> to vector<1426x32xf32>
    %5 = arith.addf %2, %4 : vector<1426x32xf32>
    %cst_5 = arith.constant 0.000000e+00 : f32
    %6 = vector.broadcast %cst_5 : f32 to vector<1426x32xf32>
    %7 = arith.maximumf %5, %6 : vector<1426x32xf32>
    %8 = arith.truncf %7 : vector<1426x32xf32> to vector<1426x32xbf16>
    %c0_6 = arith.constant 0 : index
    %c0_7 = arith.constant 0 : index
    %9 = vector.load %arg4[%c0_6, %c0_7] : memref<1426x32xbf16, #tpu.memory_space<vmem>>, vector<1426x32xbf16>
    tpu.vector_store %arg4[%c0_6, %c0_7], %8 {strides = array<i32>} : memref<1426x32xbf16, #tpu.memory_space<vmem>>, vector<1426x32xbf16>,
    return
  }
  func.func @transform_0(%arg0: i32) -> (i32, i32) {
    %c0_i32 = arith.constant 0 : i32
    %c0_i32_0 = arith.constant 0 : i32
    %c0_i32_1 = arith.constant 0 : i32
    return %c0_i32, %c0_i32_0 : i32, i32
  }
  func.func @transform_1(%arg0: i32) -> (i32, i32) {
    %c0_i32 = arith.constant 0 : i32
    %c0_i32_0 = arith.constant 0 : i32
    %c0_i32_1 = arith.constant 0 : i32
    return %c0_i32, %c0_i32_0 : i32, i32
  }
  func.func @transform_2(%arg0: i32) -> (i32, i32) {
    %c0_i32 = arith.constant 0 : i32
    %c0_i32_0 = arith.constant 0 : i32
    %c0_i32_1 = arith.constant 0 : i32
    return %c0_i32, %c0_i32_0 : i32, i32
  }
  func.func @transform_3(%arg0: i32) -> (i32, i32) {
    %c0_i32 = arith.constant 0 : i32
    %c0_i32_0 = arith.constant 0 : i32
    %c0_i32_1 = arith.constant 0 : i32
    return %c0_i32, %c0_i32_0 : i32, i32
  }
}

module attributes {stable_mosaic.version = 11 : i64} {
  func.func @_conv_mm_kernel(%arg0: i32, %arg1: memref<280x512xbf16, #tpu.memory_space<vmem>>, %arg2: memref<512x64xbf16, #tpu.memory_space<vmem>>, %arg3: memref<1x64xf32, #tpu.memory_space<vmem>>, %arg4: memref<280x64xbf16, #tpu.memory_space<vmem>>) attributes {dimension_semantics = [#tpu.dimension_semantics<arbitrary>], iteration_bounds = array<i64: 1>, scalar_prefetch = 0 : i64, scratch_operands = 0 : i64, tpu.core_type = #tpu.core_type<tc>, window_params = [{pipeline_mode = #tpu.pipeline_mode<synchronous>, transform_indices = @transform_0, window_bounds = array<i64: 280, 512>}, {pipeline_mode = #tpu.pipeline_mode<synchronous>, transform_indices = @transform_1, window_bounds = array<i64: 512, 64>}, {pipeline_mode = #tpu.pipeline_mode<synchronous>, transform_indices = @transform_2, window_bounds = array<i64: 1, 64>}, {pipeline_mode = #tpu.pipeline_mode<synchronous>, transform_indices = @transform_3, window_bounds = array<i64: 280, 64>}]} {
    %c0 = arith.constant 0 : index
    %c0_0 = arith.constant 0 : index
    %0 = vector.load %arg1[%c0, %c0_0] : memref<280x512xbf16, #tpu.memory_space<vmem>>, vector<280x512xbf16>
    %c0_1 = arith.constant 0 : index
    %c0_2 = arith.constant 0 : index
    %1 = vector.load %arg2[%c0_1, %c0_2] : memref<512x64xbf16, #tpu.memory_space<vmem>>, vector<512x64xbf16>
    %cst = arith.constant dense<0.000000e+00> : vector<280x64xf32>
    %2 = tpu.matmul %0, %1, %cst {dimension_numbers = #tpu.dot_dimension_numbers<[1], [0], [0], [1], [0, 0, 1, 1], [], []>} : vector<280x512xbf16>, vector<512x64xbf16>, vector<280x64xf32> -> vector<280x64xf32>
    %c0_3 = arith.constant 0 : index
    %c0_4 = arith.constant 0 : index
    %3 = vector.load %arg3[%c0_3, %c0_4] : memref<1x64xf32, #tpu.memory_space<vmem>>, vector<1x64xf32>
    %4 = vector.broadcast %3 : vector<1x64xf32> to vector<280x64xf32>
    %5 = arith.addf %2, %4 : vector<280x64xf32>
    %cst_5 = arith.constant 0.000000e+00 : f32
    %6 = vector.broadcast %cst_5 : f32 to vector<280x64xf32>
    %7 = arith.maximumf %5, %6 : vector<280x64xf32>
    %8 = arith.truncf %7 : vector<280x64xf32> to vector<280x64xbf16>
    %c0_6 = arith.constant 0 : index
    %c0_7 = arith.constant 0 : index
    %9 = vector.load %arg4[%c0_6, %c0_7] : memref<280x64xbf16, #tpu.memory_space<vmem>>, vector<280x64xbf16>
    tpu.vector_store %arg4[%c0_6, %c0_7], %8 {strides = array<i32>} : memref<280x64xbf16, #tpu.memory_space<vmem>>, vector<280x64xbf16>,
    return
  }
  func.func @transform_0(%arg0: i32) -> (i32, i32) {
    %c0_i32 = arith.constant 0 : i32
    %c0_i32_0 = arith.constant 0 : i32
    %c0_i32_1 = arith.constant 0 : i32
    return %c0_i32, %c0_i32_0 : i32, i32
  }
  func.func @transform_1(%arg0: i32) -> (i32, i32) {
    %c0_i32 = arith.constant 0 : i32
    %c0_i32_0 = arith.constant 0 : i32
    %c0_i32_1 = arith.constant 0 : i32
    return %c0_i32, %c0_i32_0 : i32, i32
  }
  func.func @transform_2(%arg0: i32) -> (i32, i32) {
    %c0_i32 = arith.constant 0 : i32
    %c0_i32_0 = arith.constant 0 : i32
    %c0_i32_1 = arith.constant 0 : i32
    return %c0_i32, %c0_i32_0 : i32, i32
  }
  func.func @transform_3(%arg0: i32) -> (i32, i32) {
    %c0_i32 = arith.constant 0 : i32
    %c0_i32_0 = arith.constant 0 : i32
    %c0_i32_1 = arith.constant 0 : i32
    return %c0_i32, %c0_i32_0 : i32, i32
  }
}

module attributes {stable_mosaic.version = 11 : i64} {
  func.func @_conv_mm_kernel(%arg0: i32, %arg1: memref<192x576xbf16, #tpu.memory_space<vmem>>, %arg2: memref<576x64xbf16, #tpu.memory_space<vmem>>, %arg3: memref<1x64xf32, #tpu.memory_space<vmem>>, %arg4: memref<192x64xbf16, #tpu.memory_space<vmem>>) attributes {dimension_semantics = [#tpu.dimension_semantics<arbitrary>], iteration_bounds = array<i64: 1>, scalar_prefetch = 0 : i64, scratch_operands = 0 : i64, tpu.core_type = #tpu.core_type<tc>, window_params = [{pipeline_mode = #tpu.pipeline_mode<synchronous>, transform_indices = @transform_0, window_bounds = array<i64: 192, 576>}, {pipeline_mode = #tpu.pipeline_mode<synchronous>, transform_indices = @transform_1, window_bounds = array<i64: 576, 64>}, {pipeline_mode = #tpu.pipeline_mode<synchronous>, transform_indices = @transform_2, window_bounds = array<i64: 1, 64>}, {pipeline_mode = #tpu.pipeline_mode<synchronous>, transform_indices = @transform_3, window_bounds = array<i64: 192, 64>}]} {
    %c0 = arith.constant 0 : index
    %c0_0 = arith.constant 0 : index
    %0 = vector.load %arg1[%c0, %c0_0] : memref<192x576xbf16, #tpu.memory_space<vmem>>, vector<192x576xbf16>
    %c0_1 = arith.constant 0 : index
    %c0_2 = arith.constant 0 : index
    %1 = vector.load %arg2[%c0_1, %c0_2] : memref<576x64xbf16, #tpu.memory_space<vmem>>, vector<576x64xbf16>
    %cst = arith.constant dense<0.000000e+00> : vector<192x64xf32>
    %2 = tpu.matmul %0, %1, %cst {dimension_numbers = #tpu.dot_dimension_numbers<[1], [0], [0], [1], [0, 0, 1, 1], [], []>} : vector<192x576xbf16>, vector<576x64xbf16>, vector<192x64xf32> -> vector<192x64xf32>
    %c0_3 = arith.constant 0 : index
    %c0_4 = arith.constant 0 : index
    %3 = vector.load %arg3[%c0_3, %c0_4] : memref<1x64xf32, #tpu.memory_space<vmem>>, vector<1x64xf32>
    %4 = vector.broadcast %3 : vector<1x64xf32> to vector<192x64xf32>
    %5 = arith.addf %2, %4 : vector<192x64xf32>
    %cst_5 = arith.constant 0.000000e+00 : f32
    %6 = vector.broadcast %cst_5 : f32 to vector<192x64xf32>
    %7 = arith.maximumf %5, %6 : vector<192x64xf32>
    %8 = arith.truncf %7 : vector<192x64xf32> to vector<192x64xbf16>
    %c0_6 = arith.constant 0 : index
    %c0_7 = arith.constant 0 : index
    %9 = vector.load %arg4[%c0_6, %c0_7] : memref<192x64xbf16, #tpu.memory_space<vmem>>, vector<192x64xbf16>
    tpu.vector_store %arg4[%c0_6, %c0_7], %8 {strides = array<i32>} : memref<192x64xbf16, #tpu.memory_space<vmem>>, vector<192x64xbf16>,
    return
  }
  func.func @transform_0(%arg0: i32) -> (i32, i32) {
    %c0_i32 = arith.constant 0 : i32
    %c0_i32_0 = arith.constant 0 : i32
    %c0_i32_1 = arith.constant 0 : i32
    return %c0_i32, %c0_i32_0 : i32, i32
  }
  func.func @transform_1(%arg0: i32) -> (i32, i32) {
    %c0_i32 = arith.constant 0 : i32
    %c0_i32_0 = arith.constant 0 : i32
    %c0_i32_1 = arith.constant 0 : i32
    return %c0_i32, %c0_i32_0 : i32, i32
  }
  func.func @transform_2(%arg0: i32) -> (i32, i32) {
    %c0_i32 = arith.constant 0 : i32
    %c0_i32_0 = arith.constant 0 : i32
    %c0_i32_1 = arith.constant 0 : i32
    return %c0_i32, %c0_i32_0 : i32, i32
  }
  func.func @transform_3(%arg0: i32) -> (i32, i32) {
    %c0_i32 = arith.constant 0 : i32
    %c0_i32_0 = arith.constant 0 : i32
    %c0_i32_1 = arith.constant 0 : i32
    return %c0_i32, %c0_i32_0 : i32, i32
  }
}

module attributes {stable_mosaic.version = 11 : i64} {
  func.func @_fc_heads_fused_kernel(%arg0: i32, %arg1: memref<2x6144xbf16, #tpu.memory_space<vmem>>, %arg2: memref<6144x256xbf16, #tpu.memory_space<vmem>>, %arg3: memref<1x256xf32, #tpu.memory_space<vmem>>, %arg4: memref<256x3xbf16, #tpu.memory_space<vmem>>, %arg5: memref<1x3xf32, #tpu.memory_space<vmem>>, %arg6: memref<2x3xf32, #tpu.memory_space<vmem>>) attributes {dimension_semantics = [#tpu.dimension_semantics<arbitrary>], iteration_bounds = array<i64: 1>, scalar_prefetch = 0 : i64, scratch_operands = 0 : i64, tpu.core_type = #tpu.core_type<tc>, window_params = [{pipeline_mode = #tpu.pipeline_mode<synchronous>, transform_indices = @transform_0, window_bounds = array<i64: 2, 6144>}, {pipeline_mode = #tpu.pipeline_mode<synchronous>, transform_indices = @transform_1, window_bounds = array<i64: 6144, 256>}, {pipeline_mode = #tpu.pipeline_mode<synchronous>, transform_indices = @transform_2, window_bounds = array<i64: 1, 256>}, {pipeline_mode = #tpu.pipeline_mode<synchronous>, transform_indices = @transform_3, window_bounds = array<i64: 256, 3>}, {pipeline_mode = #tpu.pipeline_mode<synchronous>, transform_indices = @transform_4, window_bounds = array<i64: 1, 3>}, {pipeline_mode = #tpu.pipeline_mode<synchronous>, transform_indices = @transform_5, window_bounds = array<i64: 2, 3>}]} {
    %c0 = arith.constant 0 : index
    %c0_0 = arith.constant 0 : index
    %0 = vector.load %arg1[%c0, %c0_0] : memref<2x6144xbf16, #tpu.memory_space<vmem>>, vector<2x6144xbf16>
    %c0_1 = arith.constant 0 : index
    %c0_2 = arith.constant 0 : index
    %1 = vector.load %arg2[%c0_1, %c0_2] : memref<6144x256xbf16, #tpu.memory_space<vmem>>, vector<6144x256xbf16>
    %cst = arith.constant dense<0.000000e+00> : vector<2x256xf32>
    %2 = tpu.matmul %0, %1, %cst {dimension_numbers = #tpu.dot_dimension_numbers<[1], [0], [0], [1], [0, 0, 1, 1], [], []>} : vector<2x6144xbf16>, vector<6144x256xbf16>, vector<2x256xf32> -> vector<2x256xf32>
    %c0_3 = arith.constant 0 : index
    %c0_4 = arith.constant 0 : index
    %3 = vector.load %arg3[%c0_3, %c0_4] : memref<1x256xf32, #tpu.memory_space<vmem>>, vector<1x256xf32>
    %4 = vector.broadcast %3 : vector<1x256xf32> to vector<2x256xf32>
    %5 = arith.addf %2, %4 : vector<2x256xf32>
    %cst_5 = arith.constant 0.000000e+00 : f32
    %6 = vector.broadcast %cst_5 : f32 to vector<2x256xf32>
    %7 = arith.maximumf %5, %6 : vector<2x256xf32>
    %8 = arith.truncf %7 : vector<2x256xf32> to vector<2x256xbf16>
    %c0_6 = arith.constant 0 : index
    %c0_7 = arith.constant 0 : index
    %9 = vector.load %arg4[%c0_6, %c0_7] : memref<256x3xbf16, #tpu.memory_space<vmem>>, vector<256x3xbf16>
    %cst_8 = arith.constant dense<0.000000e+00> : vector<2x3xf32>
    %10 = tpu.matmul %8, %9, %cst_8 {dimension_numbers = #tpu.dot_dimension_numbers<[1], [0], [0], [1], [0, 0, 1, 1], [], []>} : vector<2x256xbf16>, vector<256x3xbf16>, vector<2x3xf32> -> vector<2x3xf32>
    %c0_9 = arith.constant 0 : index
    %c0_10 = arith.constant 0 : index
    %11 = vector.load %arg5[%c0_9, %c0_10] : memref<1x3xf32, #tpu.memory_space<vmem>>, vector<1x3xf32>
    %12 = vector.broadcast %11 : vector<1x3xf32> to vector<2x3xf32>
    %13 = arith.addf %10, %12 : vector<2x3xf32>
    %c0_11 = arith.constant 0 : index
    %c0_12 = arith.constant 0 : index
    %14 = vector.load %arg6[%c0_11, %c0_12] : memref<2x3xf32, #tpu.memory_space<vmem>>, vector<2x3xf32>
    tpu.vector_store %arg6[%c0_11, %c0_12], %13 {strides = array<i32>} : memref<2x3xf32, #tpu.memory_space<vmem>>, vector<2x3xf32>,
    return
  }
  func.func @transform_0(%arg0: i32) -> (i32, i32) {
    %c0_i32 = arith.constant 0 : i32
    %c0_i32_0 = arith.constant 0 : i32
    %c0_i32_1 = arith.constant 0 : i32
    return %c0_i32, %c0_i32_0 : i32, i32
  }
  func.func @transform_1(%arg0: i32) -> (i32, i32) {
    %c0_i32 = arith.constant 0 : i32
    %c0_i32_0 = arith.constant 0 : i32
    %c0_i32_1 = arith.constant 0 : i32
    return %c0_i32, %c0_i32_0 : i32, i32
  }
  func.func @transform_2(%arg0: i32) -> (i32, i32) {
    %c0_i32 = arith.constant 0 : i32
    %c0_i32_0 = arith.constant 0 : i32
    %c0_i32_1 = arith.constant 0 : i32
    return %c0_i32, %c0_i32_0 : i32, i32
  }
  func.func @transform_3(%arg0: i32) -> (i32, i32) {
    %c0_i32 = arith.constant 0 : i32
    %c0_i32_0 = arith.constant 0 : i32
    %c0_i32_1 = arith.constant 0 : i32
    return %c0_i32, %c0_i32_0 : i32, i32
  }
  func.func @transform_4(%arg0: i32) -> (i32, i32) {
    %c0_i32 = arith.constant 0 : i32
    %c0_i32_0 = arith.constant 0 : i32
    %c0_i32_1 = arith.constant 0 : i32
    return %c0_i32, %c0_i32_0 : i32, i32
  }
  func.func @transform_5(%arg0: i32) -> (i32, i32) {
    %c0_i32 = arith.constant 0 : i32
    %c0_i32_0 = arith.constant 0 : i32
    %c0_i32_1 = arith.constant 0 : i32
    return %c0_i32, %c0_i32_0 : i32, i32
  }
}

</mosaic_0001>

<llo_original>
// kernel: actor_critic_forward.4
$region0: #{actor_critic_forward.4}
  #allocation0 [shape = 'u32[]', space=smem, size = 0x4, offset = 0x4, fixed_abs, tag = 'smem constant byte address 0x4 - core index']
  #allocation1 [shape = 'u32[144,128]{1,0:T(1,128)}', space=vmem, size = 0x12000, scoped, tag = 'internal scratch']
  %s0 = inlined_call_operand.vmem [shape: bf16[1426,64], index: 0, kind: input, shape index: {}]
  %s1 = inlined_call_operand.vmem [shape: bf16[64,32], index: 1, kind: input, shape index: {}]
  %s2 = inlined_call_operand.vmem [shape: f32[1,32], index: 2, kind: input, shape index: {}]
  %s3 = inlined_call_operand.vmem [shape: bf16[1426,32], index: 3, kind: output, shape index: {}]
  %s4 = sld [smem:[#allocation0]]
  $region22: #{actor_critic_forward.4} parent=0
    _
  %s6 = ssub.s32 1, %s4
  %s7 = scalar_select 0, %s6, %s4
  // Predicated region
  $region2: #{actor_critic_forward.4} parent=0 // pred_check
    _
  $region3: #{actor_critic_forward.4} parent=0 // pred_check_branch
    %9 = sbr.rel (0) target = $region5
  $region4: #{actor_critic_forward.4} parent=0 // pred_region
    _
  $region5: #{actor_critic_forward.4} parent=0 // pred_fallthru
    _
  // Predicated region
  $region6: #{actor_critic_forward.4} parent=0 // pred_check
    _
  $region7: #{actor_critic_forward.4} parent=0 // pred_check_branch
    %11 = sbr.rel (0) target = $region9
  $region8: #{actor_critic_forward.4} parent=0 // pred_region
    _
  $region9: #{actor_critic_forward.4} parent=0 // pred_fallthru
    _
  // Predicated region
  $region10: #{actor_critic_forward.4} parent=0 // pred_check
    _
  $region11: #{actor_critic_forward.4} parent=0 // pred_check_branch
    %13 = sbr.rel (0) target = $region13
  $region12: #{actor_critic_forward.4} parent=0 // pred_region
    _
  $region13: #{actor_critic_forward.4} parent=0 // pred_fallthru
    _
  %v15 = vld [vmem:[%s0] sm:$0xf]
  %v16 = vld [vmem:[%s0 + $0x4] sm:$0xf]
  %v17 = vld [vmem:[%s0 + $0x8] sm:$0xf]
  %v18 = vld [vmem:[%s0 + $0xc] sm:$0xf]
  %v19 = vld [vmem:[%s0 + $0x10] sm:$0xf]
  %v20 = vld [vmem:[%s0 + $0x14] sm:$0xf]
  %v21 = vld [vmem:[%s0 + $0x18] sm:$0xf]
  %v22 = vld [vmem:[%s0 + $0x1c] sm:$0xf]
  %v23 = vld [vmem:[%s0 + $0x20] sm:$0xf]
  %v24 = vld [vmem:[%s0 + $0x24] sm:$0xf]
  %v25 = vld [vmem:[%s0 + $0x28] sm:$0xf]
  %v26 = vld [vmem:[%s0 + $0x2c] sm:$0xf]
  %v27 = vld [vmem:[%s0 + $0x30] sm:$0xf]
  %v28 = vld [vmem:[%s0 + $0x34] sm:$0xf]
  %v29 = vld [vmem:[%s0 + $0x38] sm:$0xf]
  %v30 = vld [vmem:[%s0 + $0x3c] sm:$0xf]
  %v31 = vld [vmem:[%s0 + $0x40] sm:$0xf]
  %v32 = vld [vmem:[%s0 + $0x44] sm:$0xf]
  %v33 = vld [vmem:[%s0 + $0x48] sm:$0xf]
  %v34 = vld [vmem:[%s0 + $0x4c] sm:$0xf]
  %v35 = vld [vmem:[%s0 + $0x50] sm:$0xf]
  %v36 = vld [vmem:[%s0 + $0x54] sm:$0xf]
  %v37 = vld [vmem:[%s0 + $0x58] sm:$0xf]
  %v38 = vld [vmem:[%s0 + $0x5c] sm:$0xf]
  %v39 = vld [vmem:[%s0 + $0x60] sm:$0xf]
  %v40 = vld [vmem:[%s0 + $0x64] sm:$0xf]
  %v41 = vld [vmem:[%s0 + $0x68] sm:$0xf]
  %v42 = vld [vmem:[%s0 + $0x6c] sm:$0xf]
  %v43 = vld [vmem:[%s0 + $0x70] sm:$0xf]
  %v44 = vld [vmem:[%s0 + $0x74] sm:$0xf]
  %v45 = vld [vmem:[%s0 + $0x78] sm:$0xf]
  %v46 = vld [vmem:[%s0 + $0x7c] sm:$0xf]
  %v47 = vld [vmem:[%s0 + $0x80] sm:$0xf]
  %v48 = vld [vmem:[%s0 + $0x84] sm:$0xf]
  %v49 = vld [vmem:[%s0 + $0x88] sm:$0xf]
  %v50 = vld [vmem:[%s0 + $0x8c] sm:$0xf]
  %v51 = vld [vmem:[%s0 + $0x90] sm:$0xf]
  %v52 = vld [vmem:[%s0 + $0x94] sm:$0xf]
  %v53 = vld [vmem:[%s0 + $0x98] sm:$0xf]
  %v54 = vld [vmem:[%s0 + $0x9c] sm:$0xf]
  %v55 = vld [vmem:[%s0 + $0xa0] sm:$0xf]
  %v56 = vld [vmem:[%s0 + $0xa4] sm:$0xf]
  %v57 = vld [vmem:[%s0 + $0xa8] sm:$0xf]
  %v58 = vld [vmem:[%s0 + $0xac] sm:$0xf]
  %v59 = vld [vmem:[%s0 + $0xb0] sm:$0xf]
  %v60 = vld [vmem:[%s0 + $0xb4] sm:$0xf]
  %v61 = vld [vmem:[%s0 + $0xb8] sm:$0xf]
  %v62 = vld [vmem:[%s0 + $0xbc] sm:$0xf]
  %v63 = vld [vmem:[%s0 + $0xc0] sm:$0xf]
  %v64 = vld [vmem:[%s0 + $0xc4] sm:$0xf]
  %v65 = vld [vmem:[%s0 + $0xc8] sm:$0xf]
  %v66 = vld [vmem:[%s0 + $0xcc] sm:$0xf]
  %v67 = vld [vmem:[%s0 + $0xd0] sm:$0xf]
  %v68 = vld [vmem:[%s0 + $0xd4] sm:$0xf]
  %v69 = vld [vmem:[%s0 + $0xd8] sm:$0xf]
  %v70 = vld [vmem:[%s0 + $0xdc] sm:$0xf]
  %v71 = vld [vmem:[%s0 + $0xe0] sm:$0xf]
  %v72 = vld [vmem:[%s0 + $0xe4] sm:$0xf]
  %v73 = vld [vmem:[%s0 + $0xe8] sm:$0xf]
  %v74 = vld [vmem:[%s0 + $0xec] sm:$0xf]
  %v75 = vld [vmem:[%s0 + $0xf0] sm:$0xf]
  %v76 = vld [vmem:[%s0 + $0xf4] sm:$0xf]
  %v77 = vld [vmem:[%s0 + $0xf8] sm:$0xf]
  %v78 = vld [vmem:[%s0 + $0xfc] sm:$0xf]
  %v79 = vld [vmem:[%s0 + $0x100] sm:$0xf]
  %v80 = vld [vmem:[%s0 + $0x104] sm:$0xf]
  %v81 = vld [vmem:[%s0 + $0x108] sm:$0xf]
  %v82 = vld [vmem:[%s0 + $0x10c] sm:$0xf]
  %v83 = vld [vmem:[%s0 + $0x110] sm:$0xf]
  %v84 = vld [vmem:[%s0 + $0x114] sm:$0xf]
  %v85 = vld [vmem:[%s0 + $0x118] sm:$0xf]
  %v86 = vld [vmem:[%s0 + $0x11c] sm:$0xf]
  %v87 = vld [vmem:[%s0 + $0x120] sm:$0xf]
  %v88 = vld [vmem:[%s0 + $0x124] sm:$0xf]
  %v89 = vld [vmem:[%s0 + $0x128] sm:$0xf]
  %v90 = vld [vmem:[%s0 + $0x12c] sm:$0xf]
  %v91 = vld [vmem:[%s0 + $0x130] sm:$0xf]
  %v92 = vld [vmem:[%s0 + $0x134] sm:$0xf]
  %v93 = vld [vmem:[%s0 + $0x138] sm:$0xf]
  %v94 = vld [vmem:[%s0 + $0x13c] sm:$0xf]
  %v95 = vld [vmem:[%s0 + $0x140] sm:$0xf]
  %v96 = vld [vmem:[%s0 + $0x144] sm:$0xf]
  %v97 = vld [vmem:[%s0 + $0x148] sm:$0xf]
  %v98 = vld [vmem:[%s0 + $0x14c] sm:$0xf]
  %v99 = vld [vmem:[%s0 + $0x150] sm:$0xf]
  %v100 = vld [vmem:[%s0 + $0x154] sm:$0xf]
  %v101 = vld [vmem:[%s0 + $0x158] sm:$0xf]
  %v102 = vld [vmem:[%s0 + $0x15c] sm:$0xf]
  %v103 = vld [vmem:[%s0 + $0x160] sm:$0xf]
  %v104 = vld [vmem:[%s0 + $0x164] sm:$0xf]
  %v105 = vld [vmem:[%s0 + $0x168] sm:$0xf]
  %v106 = vld [vmem:[%s0 + $0x16c] sm:$0xf]
  %v107 = vld [vmem:[%s0 + $0x170] sm:$0xf]
  %v108 = vld [vmem:[%s0 + $0x174] sm:$0xf]
  %v109 = vld [vmem:[%s0 + $0x178] sm:$0xf]
  %v110 = vld [vmem:[%s0 + $0x17c] sm:$0xf]
  %v111 = vld [vmem:[%s0 + $0x180] sm:$0xf]
  %v112 = vld [vmem:[%s0 + $0x184] sm:$0xf]
  %v113 = vld [vmem:[%s0 + $0x188] sm:$0xf]
  %v114 = vld [vmem:[%s0 + $0x18c] sm:$0xf]
  %v115 = vld [vmem:[%s0 + $0x190] sm:$0xf]
  %v116 = vld [vmem:[%s0 + $0x194] sm:$0xf]
  %v117 = vld [vmem:[%s0 + $0x198] sm:$0xf]
  %v118 = vld [vmem:[%s0 + $0x19c] sm:$0xf]
  %v119 = vld [vmem:[%s0 + $0x1a0] sm:$0xf]
  %v120 = vld [vmem:[%s0 + $0x1a4] sm:$0xf]
  %v121 = vld [vmem:[%s0 + $0x1a8] sm:$0xf]
  %v122 = vld [vmem:[%s0 + $0x1ac] sm:$0xf]
  %v123 = vld [vmem:[%s0 + $0x1b0] sm:$0xf]
  %v124 = vld [vmem:[%s0 + $0x1b4] sm:$0xf]
  %v125 = vld [vmem:[%s0 + $0x1b8] sm:$0xf]
  %v126 = vld [vmem:[%s0 + $0x1bc] sm:$0xf]
  %v127 = vld [vmem:[%s0 + $0x1c0] sm:$0xf]
  %v128 = vld [vmem:[%s0 + $0x1c4] sm:$0xf]
  %v129 = vld [vmem:[%s0 + $0x1c8] sm:$0xf]
  %v130 = vld [vmem:[%s0 + $0x1cc] sm:$0xf]
  %v131 = vld [vmem:[%s0 + $0x1d0] sm:$0xf]
  %v132 = vld [vmem:[%s0 + $0x1d4] sm:$0xf]
  %v133 = vld [vmem:[%s0 + $0x1d8] sm:$0xf]
  %v134 = vld [vmem:[%s0 + $0x1dc] sm:$0xf]
  %v135 = vld [vmem:[%s0 + $0x1e0] sm:$0xf]
  %v136 = vld [vmem:[%s0 + $0x1e4] sm:$0xf]
  %v137 = vld [vmem:[%s0 + $0x1e8] sm:$0xf]
  %v138 = vld [vmem:[%s0 + $0x1ec] sm:$0xf]
  %v139 = vld [vmem:[%s0 + $0x1f0] sm:$0xf]
  %v140 = vld [vmem:[%s0 + $0x1f4] sm:$0xf]
  %v141 = vld [vmem:[%s0 + $0x1f8] sm:$0xf]
  %v142 = vld [vmem:[%s0 + $0x1fc] sm:$0xf]
  %v143 = vld [vmem:[%s0 + $0x200] sm:$0xf]
  %v144 = vld [vmem:[%s0 + $0x204] sm:$0xf]
  %v145 = vld [vmem:[%s0 + $0x208] sm:$0xf]
  %v146 = vld [vmem:[%s0 + $0x20c] sm:$0xf]
  %v147 = vld [vmem:[%s0 + $0x210] sm:$0xf]
  %v148 = vld [vmem:[%s0 + $0x214] sm:$0xf]
  %v149 = vld [vmem:[%s0 + $0x218] sm:$0xf]
  %v150 = vld [vmem:[%s0 + $0x21c] sm:$0xf]
  %v151 = vld [vmem:[%s0 + $0x220] sm:$0xf]
  %v152 = vld [vmem:[%s0 + $0x224] sm:$0xf]
  %v153 = vld [vmem:[%s0 + $0x228] sm:$0xf]
  %v154 = vld [vmem:[%s0 + $0x22c] sm:$0xf]
  %v155 = vld [vmem:[%s0 + $0x230] sm:$0xf]
  %v156 = vld [vmem:[%s0 + $0x234] sm:$0xf]
  %v157 = vld [vmem:[%s0 + $0x238] sm:$0xf]
  %v158 = vld [vmem:[%s0 + $0x23c] sm:$0xf]
  %v159 = vld [vmem:[%s0 + $0x240] sm:$0xf]
  %v160 = vld [vmem:[%s0 + $0x244] sm:$0xf]
  %v161 = vld [vmem:[%s0 + $0x248] sm:$0xf]
  %v162 = vld [vmem:[%s0 + $0x24c] sm:$0xf]
  %v163 = vld [vmem:[%s0 + $0x250] sm:$0xf]
  %v164 = vld [vmem:[%s0 + $0x254] sm:$0xf]
  %v165 = vld [vmem:[%s0 + $0x258] sm:$0xf]
  %v166 = vld [vmem:[%s0 + $0x25c] sm:$0xf]
  %v167 = vld [vmem:[%s0 + $0x260] sm:$0xf]
  %v168 = vld [vmem:[%s0 + $0x264] sm:$0xf]
  %v169 = vld [vmem:[%s0 + $0x268] sm:$0xf]
  %v170 = vld [vmem:[%s0 + $0x26c] sm:$0xf]
  %v171 = vld [vmem:[%s0 + $0x270] sm:$0xf]
  %v172 = vld [vmem:[%s0 + $0x274] sm:$0xf]
  %v173 = vld [vmem:[%s0 + $0x278] sm:$0xf]
  %v174 = vld [vmem:[%s0 + $0x27c] sm:$0xf]
  %v175 = vld [vmem:[%s0 + $0x280] sm:$0xf]
  %v176 = vld [vmem:[%s0 + $0x284] sm:$0xf]
  %v177 = vld [vmem:[%s0 + $0x288] sm:$0xf]
  %v178 = vld [vmem:[%s0 + $0x28c] sm:$0xf]
  %v179 = vld [vmem:[%s0 + $0x290] sm:$0xf]
  %v180 = vld [vmem:[%s0 + $0x294] sm:$0xf]
  %v181 = vld [vmem:[%s0 + $0x298] sm:$0xf]
  %v182 = vld [vmem:[%s0 + $0x29c] sm:$0xf]
  %v183 = vld [vmem:[%s0 + $0x2a0] sm:$0xf]
  %v184 = vld [vmem:[%s0 + $0x2a4] sm:$0xf]
  %v185 = vld [vmem:[%s0 + $0x2a8] sm:$0xf]
  %v186 = vld [vmem:[%s0 + $0x2ac] sm:$0xf]
  %v187 = vld [vmem:[%s0 + $0x2b0] sm:$0xf]
  %v188 = vld [vmem:[%s0 + $0x2b4] sm:$0xf]
  %v189 = vld [vmem:[%s0 + $0x2b8] sm:$0xf]
  %v190 = vld [vmem:[%s0 + $0x2bc] sm:$0xf]
  %v191 = vld [vmem:[%s0 + $0x2c0] sm:$0xf]
  %v192 = vld [vmem:[%s0 + $0x2c4] sm:$0xf]
  %v193 = vld [vmem:[%s0 + $0x2c8] sm:$0x1]
  %v194 = vld [vmem:[%s1] sm:$0xf]
  %v195 = vld [vmem:[%s1 + $0x4] sm:$0xf]
  %v196 = vld [vmem:[%s1 + $0x8] sm:$0xf]
  %v197 = vld [vmem:[%s1 + $0xc] sm:$0xf]
  %v198 = vld [vmem:[%s1 + $0x10] sm:$0xf]
  %v199 = vld [vmem:[%s1 + $0x14] sm:$0xf]
  %v200 = vld [vmem:[%s1 + $0x18] sm:$0xf]
  %v201 = vld [vmem:[%s1 + $0x1c] sm:$0xf]
  %v202 = vld [vmem:[%s2] sm:$0x1]
  %v204 = vlaneseq
  %v205 = vshrl.u32 %v204, 7
  %v206 = vsub.s32 0, %v205
  %v207 = vrot.slane %v202, %v206
  %v388 = vunpack.c.l.b16 %v15
  %v389 = vunpack.c.l.b16 %v16
  %v390 = vunpack.c.l.b16 %v17
  %v391 = vunpack.c.l.b16 %v18
  %v392 = vunpack.c.l.b16 %v19
  %v393 = vunpack.c.l.b16 %v20
  %v394 = vunpack.c.l.b16 %v21
  %v395 = vunpack.c.l.b16 %v22
  %v396 = vunpack.c.l.b16 %v23
  %v397 = vunpack.c.l.b16 %v24
  %v398 = vunpack.c.l.b16 %v25
  %v399 = vunpack.c.l.b16 %v26
  %v400 = vunpack.c.l.b16 %v27
  %v401 = vunpack.c.l.b16 %v28
  %v402 = vunpack.c.l.b16 %v29
  %v403 = vunpack.c.l.b16 %v30
  %v404 = vunpack.c.l.b16 %v31
  %v405 = vunpack.c.l.b16 %v32
  %v406 = vunpack.c.l.b16 %v33
  %v407 = vunpack.c.l.b16 %v34
  %v408 = vunpack.c.l.b16 %v35
  %v409 = vunpack.c.l.b16 %v36
  %v410 = vunpack.c.l.b16 %v37
  %v411 = vunpack.c.l.b16 %v38
  %v412 = vunpack.c.l.b16 %v39
  %v413 = vunpack.c.l.b16 %v40
  %v414 = vunpack.c.l.b16 %v41
  %v415 = vunpack.c.l.b16 %v42
  %v416 = vunpack.c.l.b16 %v43
  %v417 = vunpack.c.l.b16 %v44
  %v418 = vunpack.c.l.b16 %v45
  %v419 = vunpack.c.l.b16 %v46
  %v420 = vunpack.c.l.b16 %v47
  %v421 = vunpack.c.l.b16 %v48
  %v422 = vunpack.c.l.b16 %v49
  %v423 = vunpack.c.l.b16 %v50
  %v424 = vunpack.c.l.b16 %v51
  %v425 = vunpack.c.l.b16 %v52
  %v426 = vunpack.c.l.b16 %v53
  %v427 = vunpack.c.l.b16 %v54
  %v428 = vunpack.c.l.b16 %v55
  %v429 = vunpack.c.l.b16 %v56
  %v430 = vunpack.c.l.b16 %v57
  %v431 = vunpack.c.l.b16 %v58
  %v432 = vunpack.c.l.b16 %v59
  %v433 = vunpack.c.l.b16 %v60
  %v434 = vunpack.c.l.b16 %v61
  %v435 = vunpack.c.l.b16 %v62
  %v436 = vunpack.c.l.b16 %v63
  %v437 = vunpack.c.l.b16 %v64
  %v438 = vunpack.c.l.b16 %v65
  %v439 = vunpack.c.l.b16 %v66
  %v440 = vunpack.c.l.b16 %v67
  %v441 = vunpack.c.l.b16 %v68
  %v442 = vunpack.c.l.b16 %v69
  %v443 = vunpack.c.l.b16 %v70
  %v444 = vunpack.c.l.b16 %v71
  %v445 = vunpack.c.l.b16 %v72
  %v446 = vunpack.c.l.b16 %v73
  %v447 = vunpack.c.l.b16 %v74
  %v448 = vunpack.c.l.b16 %v75
  %v449 = vunpack.c.l.b16 %v76
  %v450 = vunpack.c.l.b16 %v77
  %v451 = vunpack.c.l.b16 %v78
  %v452 = vunpack.c.l.b16 %v79
  %v453 = vunpack.c.l.b16 %v80
  %v454 = vunpack.c.l.b16 %v81
  %v455 = vunpack.c.l.b16 %v82
  %v456 = vunpack.c.l.b16 %v83
  %v457 = vunpack.c.l.b16 %v84
  %v458 = vunpack.c.l.b16 %v85
  %v459 = vunpack.c.l.b16 %v86
  %v460 = vunpack.c.l.b16 %v87
  %v461 = vunpack.c.l.b16 %v88
  %v462 = vunpack.c.l.b16 %v89
  %v463 = vunpack.c.l.b16 %v90
  %v464 = vunpack.c.l.b16 %v91
  %v465 = vunpack.c.l.b16 %v92
  %v466 = vunpack.c.l.b16 %v93
  %v467 = vunpack.c.l.b16 %v94
  %v468 = vunpack.c.l.b16 %v95
  %v469 = vunpack.c.l.b16 %v96
  %v470 = vunpack.c.l.b16 %v97
  %v471 = vunpack.c.l.b16 %v98
  %v472 = vunpack.c.l.b16 %v99
  %v473 = vunpack.c.l.b16 %v100
  %v474 = vunpack.c.l.b16 %v101
  %v475 = vunpack.c.l.b16 %v102
  %v476 = vunpack.c.l.b16 %v103
  %v477 = vunpack.c.l.b16 %v104
  %v478 = vunpack.c.l.b16 %v105
  %v479 = vunpack.c.l.b16 %v106
  %v480 = vunpack.c.l.b16 %v107
  %v481 = vunpack.c.l.b16 %v108
  %v482 = vunpack.c.l.b16 %v109
  %v483 = vunpack.c.l.b16 %v110
  %v484 = vunpack.c.l.b16 %v111
  %v485 = vunpack.c.l.b16 %v112
  %v486 = vunpack.c.l.b16 %v113
  %v487 = vunpack.c.l.b16 %v114
  %v488 = vunpack.c.l.b16 %v115
  %v489 = vunpack.c.l.b16 %v116
  %v490 = vunpack.c.l.b16 %v117
  %v491 = vunpack.c.l.b16 %v118
  %v492 = vunpack.c.l.b16 %v119
  %v493 = vunpack.c.l.b16 %v120
  %v494 = vunpack.c.l.b16 %v121
  %v495 = vunpack.c.l.b16 %v122
  %v496 = vunpack.c.l.b16 %v123
  %v497 = vunpack.c.l.b16 %v124
  %v498 = vunpack.c.l.b16 %v125
  %v499 = vunpack.c.l.b16 %v126
  %v500 = vunpack.c.l.b16 %v127
  %v501 = vunpack.c.l.b16 %v128
  %v502 = vunpack.c.l.b16 %v129
  %v503 = vunpack.c.l.b16 %v130
  %v504 = vunpack.c.l.b16 %v131
  %v505 = vunpack.c.l.b16 %v132
  %v506 = vunpack.c.l.b16 %v133
  %v507 = vunpack.c.l.b16 %v134
  %v508 = vunpack.c.l.b16 %v135
  %v509 = vunpack.c.l.b16 %v136
  %v510 = vunpack.c.l.b16 %v137
  %v511 = vunpack.c.l.b16 %v138
  %v512 = vunpack.c.l.b16 %v139
  %v513 = vunpack.c.l.b16 %v140
  %v514 = vunpack.c.l.b16 %v141
  %v515 = vunpack.c.l.b16 %v142
  %v516 = vunpack.c.l.b16 %v143
  %v517 = vunpack.c.l.b16 %v144
  %v518 = vunpack.c.l.b16 %v145
  %v519 = vunpack.c.l.b16 %v146
  %v520 = vunpack.c.l.b16 %v147
  %v521 = vunpack.c.l.b16 %v148
  %v522 = vunpack.c.l.b16 %v149
  %v523 = vunpack.c.l.b16 %v150
  %v524 = vunpack.c.l.b16 %v151
  %v525 = vunpack.c.l.b16 %v152
  %v526 = vunpack.c.l.b16 %v153
  %v527 = vunpack.c.l.b16 %v154
  %v528 = vunpack.c.l.b16 %v155
  %v529 = vunpack.c.l.b16 %v156
  %v530 = vunpack.c.l.b16 %v157
  %v531 = vunpack.c.l.b16 %v158
  %v532 = vunpack.c.l.b16 %v159
  %v533 = vunpack.c.l.b16 %v160
  %v534 = vunpack.c.l.b16 %v161
  %v535 = vunpack.c.l.b16 %v162
  %v536 = vunpack.c.l.b16 %v163
  %v537 = vunpack.c.l.b16 %v164
  %v538 = vunpack.c.l.b16 %v165
  %v539 = vunpack.c.l.b16 %v166
  %v540 = vunpack.c.l.b16 %v167
  %v541 = vunpack.c.l.b16 %v168
  %v542 = vunpack.c.l.b16 %v169
  %v543 = vunpack.c.l.b16 %v170
  %v544 = vunpack.c.l.b16 %v171
  %v545 = vunpack.c.l.b16 %v172
  %v546 = vunpack.c.l.b16 %v173
  %v547 = vunpack.c.l.b16 %v174
  %v548 = vunpack.c.l.b16 %v175
  %v549 = vunpack.c.l.b16 %v176
  %v550 = vunpack.c.l.b16 %v177
  %v551 = vunpack.c.l.b16 %v178
  %v552 = vunpack.c.l.b16 %v179
  %v553 = vunpack.c.l.b16 %v180
  %v554 = vunpack.c.l.b16 %v181
  %v555 = vunpack.c.l.b16 %v182
  %v556 = vunpack.c.l.b16 %v183
  %v557 = vunpack.c.l.b16 %v184
  %v558 = vunpack.c.l.b16 %v185
  %v559 = vunpack.c.l.b16 %v186
  %v560 = vunpack.c.l.b16 %v187
  %v561 = vunpack.c.l.b16 %v188
  %v562 = vunpack.c.l.b16 %v189
  %v563 = vunpack.c.l.b16 %v190
  %v564 = vunpack.c.l.b16 %v191
  %v565 = vunpack.c.l.b16 %v192
  %v566 = vunpack.c.l.b16 %v193
  %v567 = vpack.c.b16 %v389, %v388
  %v568 = vpack.c.b16 %v391, %v390
  %v569 = vpack.c.b16 %v393, %v392
  %v570 = vpack.c.b16 %v395, %v394
  %v571 = vpack.c.b16 %v397, %v396
  %v572 = vpack.c.b16 %v399, %v398
  %v573 = vpack.c.b16 %v401, %v400
  %v574 = vpack.c.b16 %v403, %v402
  %v575 = vpack.c.b16 %v405, %v404
  %v576 = vpack.c.b16 %v407, %v406
  %v577 = vpack.c.b16 %v409, %v408
  %v578 = vpack.c.b16 %v411, %v410
  %v579 = vpack.c.b16 %v413, %v412
  %v580 = vpack.c.b16 %v415, %v414
  %v581 = vpack.c.b16 %v417, %v416
  %v582 = vpack.c.b16 %v419, %v418
  %v583 = vpack.c.b16 %v421, %v420
  %v584 = vpack.c.b16 %v423, %v422
  %v585 = vpack.c.b16 %v425, %v424
  %v586 = vpack.c.b16 %v427, %v426
  %v587 = vpack.c.b16 %v429, %v428
  %v588 = vpack.c.b16 %v431, %v430
  %v589 = vpack.c.b16 %v433, %v432
  %v590 = vpack.c.b16 %v435, %v434
  %v591 = vpack.c.b16 %v437, %v436
  %v592 = vpack.c.b16 %v439, %v438
  %v593 = vpack.c.b16 %v441, %v440
  %v594 = vpack.c.b16 %v443, %v442
  %v595 = vpack.c.b16 %v445, %v444
  %v596 = vpack.c.b16 %v447, %v446
  %v597 = vpack.c.b16 %v449, %v448
  %v598 = vpack.c.b16 %v451, %v450
  %v599 = vpack.c.b16 %v453, %v452
  %v600 = vpack.c.b16 %v455, %v454
  %v601 = vpack.c.b16 %v457, %v456
  %v602 = vpack.c.b16 %v459, %v458
  %v603 = vpack.c.b16 %v461, %v460
  %v604 = vpack.c.b16 %v463, %v462
  %v605 = vpack.c.b16 %v465, %v464
  %v606 = vpack.c.b16 %v467, %v466
  %v607 = vpack.c.b16 %v469, %v468
  %v608 = vpack.c.b16 %v471, %v470
  %v609 = vpack.c.b16 %v473, %v472
  %v610 = vpack.c.b16 %v475, %v474
  %v611 = vpack.c.b16 %v477, %v476
  %v612 = vpack.c.b16 %v479, %v478
  %v613 = vpack.c.b16 %v481, %v480
  %v614 = vpack.c.b16 %v483, %v482
  %v615 = vpack.c.b16 %v485, %v484
  %v616 = vpack.c.b16 %v487, %v486
  %v617 = vpack.c.b16 %v489, %v488
  %v618 = vpack.c.b16 %v491, %v490
  %v619 = vpack.c.b16 %v493, %v492
  %v620 = vpack.c.b16 %v495, %v494
  %v621 = vpack.c.b16 %v497, %v496
  %v622 = vpack.c.b16 %v499, %v498
  %v623 = vpack.c.b16 %v501, %v500
  %v624 = vpack.c.b16 %v503, %v502
  %v625 = vpack.c.b16 %v505, %v504
  %v626 = vpack.c.b16 %v507, %v506
  %v627 = vpack.c.b16 %v509, %v508
  %v628 = vpack.c.b16 %v511, %v510
  %v629 = vpack.c.b16 %v513, %v512
  %v630 = vpack.c.b16 %v515, %v514
  %v631 = vpack.c.b16 %v517, %v516
  %v632 = vpack.c.b16 %v519, %v518
  %v633 = vpack.c.b16 %v521, %v520
  %v634 = vpack.c.b16 %v523, %v522
  %v635 = vpack.c.b16 %v525, %v524
  %v636 = vpack.c.b16 %v527, %v526
  %v637 = vpack.c.b16 %v529, %v528
  %v638 = vpack.c.b16 %v531, %v530
  %v639 = vpack.c.b16 %v533, %v532
  %v640 = vpack.c.b16 %v535, %v534
  %v641 = vpack.c.b16 %v537, %v536
  %v642 = vpack.c.b16 %v539, %v538
  %v643 = vpack.c.b16 %v541, %v540
  %v644 = vpack.c.b16 %v543, %v542
  %v645 = vpack.c.b16 %v545, %v544
  %v646 = vpack.c.b16 %v547, %v546
  %v647 = vpack.c.b16 %v549, %v548
  %v648 = vpack.c.b16 %v551, %v550
  %v649 = vpack.c.b16 %v553, %v552
  %v650 = vpack.c.b16 %v555, %v554
  %v651 = vpack.c.b16 %v557, %v556
  %v652 = vpack.c.b16 %v559, %v558
  %v653 = vpack.c.b16 %v561, %v560
  %v654 = vpack.c.b16 %v563, %v562
  %v655 = vpack.c.b16 %v565, %v564
  %v656 = vpack.c.b16 %v566, %v566
  %v665 = vunpack.c.l.b16 %v194
  %v666 = vunpack.c.l.b16 %v195
  %v667 = vunpack.c.l.b16 %v196
  %v668 = vunpack.c.l.b16 %v197
  %v669 = vunpack.c.l.b16 %v198
  %v670 = vunpack.c.l.b16 %v199
  %v671 = vunpack.c.l.b16 %v200
  %v672 = vunpack.c.l.b16 %v201
  %v673 = vpack.c.b16 %v666, %v665
  %v674 = vpack.c.b16 %v668, %v667
  %v675 = vpack.c.b16 %v670, %v669
  %v676 = vpack.c.b16 %v672, %v671
  %vm681 = vcmask 523264
  %v683 = vsel %vm681, %v567, 0
  %v686 = vsel %vm681, %v568, 0
  %v689 = vsel %vm681, %v569, 0
  %v692 = vsel %vm681, %v570, 0
  %v695 = vsel %vm681, %v571, 0
  %v698 = vsel %vm681, %v572, 0
  %v701 = vsel %vm681, %v573, 0
  %v704 = vsel %vm681, %v574, 0
  %v707 = vsel %vm681, %v575, 0
  %v710 = vsel %vm681, %v576, 0
  %v713 = vsel %vm681, %v577, 0
  %v716 = vsel %vm681, %v578, 0
  %v719 = vsel %vm681, %v579, 0
  %v722 = vsel %vm681, %v580, 0
  %v725 = vsel %vm681, %v581, 0
  %v728 = vsel %vm681, %v582, 0
  %v731 = vsel %vm681, %v583, 0
  %v734 = vsel %vm681, %v584, 0
  %v737 = vsel %vm681, %v585, 0
  %v740 = vsel %vm681, %v586, 0
  %v743 = vsel %vm681, %v587, 0
  %v746 = vsel %vm681, %v588, 0
  %v749 = vsel %vm681, %v589, 0
  %v752 = vsel %vm681, %v590, 0
  %v755 = vsel %vm681, %v591, 0
  %v758 = vsel %vm681, %v592, 0
  %v761 = vsel %vm681, %v593, 0
  %v764 = vsel %vm681, %v594, 0
  %v767 = vsel %vm681, %v595, 0
  %v770 = vsel %vm681, %v596, 0
  %v773 = vsel %vm681, %v597, 0
  %v776 = vsel %vm681, %v598, 0
  %v779 = vsel %vm681, %v599, 0
  %v782 = vsel %vm681, %v600, 0
  %v785 = vsel %vm681, %v601, 0
  %v788 = vsel %vm681, %v602, 0
  %v791 = vsel %vm681, %v603, 0
  %v794 = vsel %vm681, %v604, 0
  %v797 = vsel %vm681, %v605, 0
  %v800 = vsel %vm681, %v606, 0
  %v803 = vsel %vm681, %v607, 0
  %v806 = vsel %vm681, %v608, 0
  %v809 = vsel %vm681, %v609, 0
  %v812 = vsel %vm681, %v610, 0
  %v815 = vsel %vm681, %v611, 0
  %v818 = vsel %vm681, %v612, 0
  %v821 = vsel %vm681, %v613, 0
  %v824 = vsel %vm681, %v614, 0
  %v827 = vsel %vm681, %v615, 0
  %v830 = vsel %vm681, %v616, 0
  %v833 = vsel %vm681, %v617, 0
  %v836 = vsel %vm681, %v618, 0
  %v839 = vsel %vm681, %v619, 0
  %v842 = vsel %vm681, %v620, 0
  %v845 = vsel %vm681, %v621, 0
  %v848 = vsel %vm681, %v622, 0
  %v851 = vsel %vm681, %v623, 0
  %v854 = vsel %vm681, %v624, 0
  %v857 = vsel %vm681, %v625, 0
  %v860 = vsel %vm681, %v626, 0
  %v863 = vsel %vm681, %v627, 0
  %v866 = vsel %vm681, %v628, 0
  %v869 = vsel %vm681, %v629, 0
  %v872 = vsel %vm681, %v630, 0
  %v875 = vsel %vm681, %v631, 0
  %v878 = vsel %vm681, %v632, 0
  %v881 = vsel %vm681, %v633, 0
  %v884 = vsel %vm681, %v634, 0
  %v887 = vsel %vm681, %v635, 0
  %v890 = vsel %vm681, %v636, 0
  %v893 = vsel %vm681, %v637, 0
  %v896 = vsel %vm681, %v638, 0
  %v899 = vsel %vm681, %v639, 0
  %v902 = vsel %vm681, %v640, 0
  %v905 = vsel %vm681, %v641, 0
  %v908 = vsel %vm681, %v642, 0
  %v911 = vsel %vm681, %v643, 0
  %v914 = vsel %vm681, %v644, 0
  %v917 = vsel %vm681, %v645, 0
  %v920 = vsel %vm681, %v646, 0
  %v923 = vsel %vm681, %v647, 0
  %v926 = vsel %vm681, %v648, 0
  %v929 = vsel %vm681, %v649, 0
  %v932 = vsel %vm681, %v650, 0
  %v935 = vsel %vm681, %v651, 0
  %v938 = vsel %vm681, %v652, 0
  %v941 = vsel %vm681, %v653, 0
  %v944 = vsel %vm681, %v654, 0
  %v947 = vsel %vm681, %v655, 0
  %v950 = vsel %vm681, %v656, 0
  %952 = vmatprep.subr.bf16.mxu0 0
  %953 = vmatpush1.bf16.msra.mxu0 0
  %954 = vmatprep.subr.bf16.mxu0 0
  %955 = vmatpush1.bf16.msra.mxu0 0
  %956 = vmatprep.subr.bf16.mxu0 0
  %957 = vmatpush1.bf16.msra.mxu0 0
  %958 = vmatprep.subr.bf16.mxu0 0
  %959 = vmatpush1.bf16.msra.mxu0 0
  %960 = vmatprep.subr.bf16.mxu0 0
  %961 = vmatpush1.bf16.msra.mxu0 %v676
  %962 = vmatprep.subr.bf16.mxu0 0
  %963 = vmatpush1.bf16.msra.mxu0 %v675
  %964 = vmatprep.subr.bf16.mxu0 0
  %965 = vmatpush1.bf16.msra.mxu0 %v674
  %966 = vmatprep.subr.bf16.mxu0 0
  %967 = vmatpush1.bf16.msra.mxu0 %v673
  %968 = vmatprep.subr.bf16.mxu0 0
  %969 = vmatpush2.bf16.msra.mxu0 0
  %970 = vmatprep.subr.bf16.mxu0 0
  %971 = vmatpush2.bf16.msra.mxu0 0
  %972 = vmatprep.subr.bf16.mxu0 0
  %973 = vmatpush2.bf16.msra.mxu0 0
  %974 = vmatprep.subr.bf16.mxu0 0
  %975 = vmatpush2.bf16.msra.mxu0 0
  %976 = vmatprep.subr.bf16.mxu0 0
  %977 = vmatpush2.bf16.msra.mxu0 0
  %978 = vmatprep.subr.bf16.mxu0 0
  %979 = vmatpush2.bf16.msra.mxu0 0
  %980 = vmatprep.subr.bf16.mxu0 0
  %981 = vmatpush2.bf16.msra.mxu0 0
  %982 = vmatprep.subr.bf16.mxu0 0
  %983 = vmatpush2.bf16.msra.mxu0 0
  %984 = vmatprep.mubr.bf16.mxu0 0
  %985 = vmatmul.mubr.bf16.gmra.mxu0 %v683
  %v986 = vpop.f32.mrf.mxu0
  %v987 = vadd.f32 %v207, %v986
  %v988 = vpop.f32.mrf.mxu0
  %v989 = vpop.f32.mrf.mxu0
  %v990 = vadd.f32 %v207, %v989
  %v991 = vpop.f32.mrf.mxu0
  %992 = vmatprep.mubr.bf16.mxu0 0
  %993 = vmatmul.mubr.bf16.gmra.mxu0 %v686
  %v994 = vpop.f32.mrf.mxu0
  %v995 = vadd.f32 %v207, %v994
  %v996 = vpop.f32.mrf.mxu0
  %v997 = vpop.f32.mrf.mxu0
  %v998 = vadd.f32 %v207, %v997
  %v999 = vpop.f32.mrf.mxu0
  %1000 = vmatprep.mubr.bf16.mxu0 0
  %1001 = vmatmul.mubr.bf16.gmra.mxu0 %v689
  %v1002 = vpop.f32.mrf.mxu0
  %v1003 = vadd.f32 %v207, %v1002
  %v1004 = vpop.f32.mrf.mxu0
  %v1005 = vpop.f32.mrf.mxu0
  %v1006 = vadd.f32 %v207, %v1005
  %v1007 = vpop.f32.mrf.mxu0
  %1008 = vmatprep.mubr.bf16.mxu0 0
  %1009 = vmatmul.mubr.bf16.gmra.mxu0 %v692
  %v1010 = vpop.f32.mrf.mxu0
  %v1011 = vadd.f32 %v207, %v1010
  %v1012 = vpop.f32.mrf.mxu0
  %v1013 = vpop.f32.mrf.mxu0
  %v1014 = vadd.f32 %v207, %v1013
  %v1015 = vpop.f32.mrf.mxu0
  %1016 = vmatprep.mubr.bf16.mxu0 0
  %1017 = vmatmul.mubr.bf16.gmra.mxu0 %v695
  %v1018 = vpop.f32.mrf.mxu0
  %v1019 = vadd.f32 %v207, %v1018
  %v1020 = vpop.f32.mrf.mxu0
  %v1021 = vpop.f32.mrf.mxu0
  %v1022 = vadd.f32 %v207, %v1021
  %v1023 = vpop.f32.mrf.mxu0
  %1024 = vmatprep.mubr.bf16.mxu0 0
  %1025 = vmatmul.mubr.bf16.gmra.mxu0 %v698
  %v1026 = vpop.f32.mrf.mxu0
  %v1027 = vadd.f32 %v207, %v1026
  %v1028 = vpop.f32.mrf.mxu0
  %v1029 = vpop.f32.mrf.mxu0
  %v1030 = vadd.f32 %v207, %v1029
  %v1031 = vpop.f32.mrf.mxu0
  %1032 = vmatprep.mubr.bf16.mxu0 0
  %1033 = vmatmul.mubr.bf16.gmra.mxu0 %v701
  %v1034 = vpop.f32.mrf.mxu0
  %v1035 = vadd.f32 %v207, %v1034
  %v1036 = vpop.f32.mrf.mxu0
  %v1037 = vpop.f32.mrf.mxu0
  %v1038 = vadd.f32 %v207, %v1037
  %v1039 = vpop.f32.mrf.mxu0
  %1040 = vmatprep.mubr.bf16.mxu0 0
  %1041 = vmatmul.mubr.bf16.gmra.mxu0 %v704
  %v1042 = vpop.f32.mrf.mxu0
  %v1043 = vadd.f32 %v207, %v1042
  %v1044 = vpop.f32.mrf.mxu0
  %v1045 = vpop.f32.mrf.mxu0
  %v1046 = vadd.f32 %v207, %v1045
  %v1047 = vpop.f32.mrf.mxu0
  %1048 = vmatprep.mubr.bf16.mxu0 0
  %1049 = vmatmul.mubr.bf16.gmra.mxu0 %v707
  %v1050 = vpop.f32.mrf.mxu0
  %v1051 = vadd.f32 %v207, %v1050
  %v1052 = vpop.f32.mrf.mxu0
  %v1053 = vpop.f32.mrf.mxu0
  %v1054 = vadd.f32 %v207, %v1053
  %v1055 = vpop.f32.mrf.mxu0
  %1056 = vmatprep.mubr.bf16.mxu0 0
  %1057 = vmatmul.mubr.bf16.gmra.mxu0 %v710
  %v1058 = vpop.f32.mrf.mxu0
  %v1059 = vadd.f32 %v207, %v1058
  %v1060 = vpop.f32.mrf.mxu0
  %v1061 = vpop.f32.mrf.mxu0
  %v1062 = vadd.f32 %v207, %v1061
  %v1063 = vpop.f32.mrf.mxu0
  %1064 = vmatprep.mubr.bf16.mxu0 0
  %1065 = vmatmul.mubr.bf16.gmra.mxu0 %v713
  %v1066 = vpop.f32.mrf.mxu0
  %v1067 = vadd.f32 %v207, %v1066
  %v1068 = vpop.f32.mrf.mxu0
  %v1069 = vpop.f32.mrf.mxu0
  %v1070 = vadd.f32 %v207, %v1069
  %v1071 = vpop.f32.mrf.mxu0
  %1072 = vmatprep.mubr.bf16.mxu0 0
  %1073 = vmatmul.mubr.bf16.gmra.mxu0 %v716
  %v1074 = vpop.f32.mrf.mxu0
  %v1075 = vadd.f32 %v207, %v1074
  %v1076 = vpop.f32.mrf.mxu0
  %v1077 = vpop.f32.mrf.mxu0
  %v1078 = vadd.f32 %v207, %v1077
  %v1079 = vpop.f32.mrf.mxu0
  %1080 = vmatprep.mubr.bf16.mxu0 0
  %1081 = vmatmul.mubr.bf16.gmra.mxu0 %v719
  %v1082 = vpop.f32.mrf.mxu0
  %v1083 = vadd.f32 %v207, %v1082
  %v1084 = vpop.f32.mrf.mxu0
  %v1085 = vpop.f32.mrf.mxu0
  %v1086 = vadd.f32 %v207, %v1085
  %v1087 = vpop.f32.mrf.mxu0
  %1088 = vmatprep.mubr.bf16.mxu0 0
  %1089 = vmatmul.mubr.bf16.gmra.mxu0 %v722
  %v1090 = vpop.f32.mrf.mxu0
  %v1091 = vadd.f32 %v207, %v1090
  %v1092 = vpop.f32.mrf.mxu0
  %v1093 = vpop.f32.mrf.mxu0
  %v1094 = vadd.f32 %v207, %v1093
  %v1095 = vpop.f32.mrf.mxu0
  %1096 = vmatprep.mubr.bf16.mxu0 0
  %1097 = vmatmul.mubr.bf16.gmra.mxu0 %v725
  %v1098 = vpop.f32.mrf.mxu0
  %v1099 = vadd.f32 %v207, %v1098
  %v1100 = vpop.f32.mrf.mxu0
  %v1101 = vpop.f32.mrf.mxu0
  %v1102 = vadd.f32 %v207, %v1101
  %v1103 = vpop.f32.mrf.mxu0
  %1104 = vmatprep.mubr.bf16.mxu0 0
  %1105 = vmatmul.mubr.bf16.gmra.mxu0 %v728
  %v1106 = vpop.f32.mrf.mxu0
  %v1107 = vadd.f32 %v207, %v1106
  %v1108 = vpop.f32.mrf.mxu0
  %v1109 = vpop.f32.mrf.mxu0
  %v1110 = vadd.f32 %v207, %v1109
  %v1111 = vpop.f32.mrf.mxu0
  %1112 = vmatprep.mubr.bf16.mxu0 0
  %1113 = vmatmul.mubr.bf16.gmra.mxu0 %v731
  %v1114 = vpop.f32.mrf.mxu0
  %v1115 = vadd.f32 %v207, %v1114
  %v1116 = vpop.f32.mrf.mxu0
  %v1117 = vpop.f32.mrf.mxu0
  %v1118 = vadd.f32 %v207, %v1117
  %v1119 = vpop.f32.mrf.mxu0
  %1120 = vmatprep.mubr.bf16.mxu0 0
  %1121 = vmatmul.mubr.bf16.gmra.mxu0 %v734
  %v1122 = vpop.f32.mrf.mxu0
  %v1123 = vadd.f32 %v207, %v1122
  %v1124 = vpop.f32.mrf.mxu0
  %v1125 = vpop.f32.mrf.mxu0
  %v1126 = vadd.f32 %v207, %v1125
  %v1127 = vpop.f32.mrf.mxu0
  %1128 = vmatprep.mubr.bf16.mxu0 0
  %1129 = vmatmul.mubr.bf16.gmra.mxu0 %v737
  %v1130 = vpop.f32.mrf.mxu0
  %v1131 = vadd.f32 %v207, %v1130
  %v1132 = vpop.f32.mrf.mxu0
  %v1133 = vpop.f32.mrf.mxu0
  %v1134 = vadd.f32 %v207, %v1133
  %v1135 = vpop.f32.mrf.mxu0
  %1136 = vmatprep.mubr.bf16.mxu0 0
  %1137 = vmatmul.mubr.bf16.gmra.mxu0 %v740
  %v1138 = vpop.f32.mrf.mxu0
  %v1139 = vadd.f32 %v207, %v1138
  %v1140 = vpop.f32.mrf.mxu0
  %v1141 = vpop.f32.mrf.mxu0
  %v1142 = vadd.f32 %v207, %v1141
  %v1143 = vpop.f32.mrf.mxu0
  %1144 = vmatprep.mubr.bf16.mxu0 0
  %1145 = vmatmul.mubr.bf16.gmra.mxu0 %v743
  %v1146 = vpop.f32.mrf.mxu0
  %v1147 = vadd.f32 %v207, %v1146
  %v1148 = vpop.f32.mrf.mxu0
  %v1149 = vpop.f32.mrf.mxu0
  %v1150 = vadd.f32 %v207, %v1149
  %v1151 = vpop.f32.mrf.mxu0
  %1152 = vmatprep.mubr.bf16.mxu0 0
  %1153 = vmatmul.mubr.bf16.gmra.mxu0 %v746
  %v1154 = vpop.f32.mrf.mxu0
  %v1155 = vadd.f32 %v207, %v1154
  %v1156 = vpop.f32.mrf.mxu0
  %v1157 = vpop.f32.mrf.mxu0
  %v1158 = vadd.f32 %v207, %v1157
  %v1159 = vpop.f32.mrf.mxu0
  %1160 = vmatprep.mubr.bf16.mxu0 0
  %1161 = vmatmul.mubr.bf16.gmra.mxu0 %v749
  %v1162 = vpop.f32.mrf.mxu0
  %v1163 = vadd.f32 %v207, %v1162
  %v1164 = vpop.f32.mrf.mxu0
  %v1165 = vpop.f32.mrf.mxu0
  %v1166 = vadd.f32 %v207, %v1165
  %v1167 = vpop.f32.mrf.mxu0
  %1168 = vmatprep.mubr.bf16.mxu0 0
  %1169 = vmatmul.mubr.bf16.gmra.mxu0 %v752
  %v1170 = vpop.f32.mrf.mxu0
  %v1171 = vadd.f32 %v207, %v1170
  %v1172 = vpop.f32.mrf.mxu0
  %v1173 = vpop.f32.mrf.mxu0
  %v1174 = vadd.f32 %v207, %v1173
  %v1175 = vpop.f32.mrf.mxu0
  %1176 = vmatprep.mubr.bf16.mxu0 0
  %1177 = vmatmul.mubr.bf16.gmra.mxu0 %v755
  %v1178 = vpop.f32.mrf.mxu0
  %v1179 = vadd.f32 %v207, %v1178
  %v1180 = vpop.f32.mrf.mxu0
  %v1181 = vpop.f32.mrf.mxu0
  %v1182 = vadd.f32 %v207, %v1181
  %v1183 = vpop.f32.mrf.mxu0
  %1184 = vmatprep.mubr.bf16.mxu0 0
  %1185 = vmatmul.mubr.bf16.gmra.mxu0 %v758
  %v1186 = vpop.f32.mrf.mxu0
  %v1187 = vadd.f32 %v207, %v1186
  %v1188 = vpop.f32.mrf.mxu0
  %v1189 = vpop.f32.mrf.mxu0
  %v1190 = vadd.f32 %v207, %v1189
  %v1191 = vpop.f32.mrf.mxu0
  %1192 = vmatprep.mubr.bf16.mxu0 0
  %1193 = vmatmul.mubr.bf16.gmra.mxu0 %v761
  %v1194 = vpop.f32.mrf.mxu0
  %v1195 = vadd.f32 %v207, %v1194
  %v1196 = vpop.f32.mrf.mxu0
  %v1197 = vpop.f32.mrf.mxu0
  %v1198 = vadd.f32 %v207, %v1197
  %v1199 = vpop.f32.mrf.mxu0
  %1200 = vmatprep.mubr.bf16.mxu0 0
  %1201 = vmatmul.mubr.bf16.gmra.mxu0 %v764
  %v1202 = vpop.f32.mrf.mxu0
  %v1203 = vadd.f32 %v207, %v1202
  %v1204 = vpop.f32.mrf.mxu0
  %v1205 = vpop.f32.mrf.mxu0
  %v1206 = vadd.f32 %v207, %v1205
  %v1207 = vpop.f32.mrf.mxu0
  %1208 = vmatprep.mubr.bf16.mxu0 0
  %1209 = vmatmul.mubr.bf16.gmra.mxu0 %v767
  %v1210 = vpop.f32.mrf.mxu0
  %v1211 = vadd.f32 %v207, %v1210
  %v1212 = vpop.f32.mrf.mxu0
  %v1213 = vpop.f32.mrf.mxu0
  %v1214 = vadd.f32 %v207, %v1213
  %v1215 = vpop.f32.mrf.mxu0
  %1216 = vmatprep.mubr.bf16.mxu0 0
  %1217 = vmatmul.mubr.bf16.gmra.mxu0 %v770
  %v1218 = vpop.f32.mrf.mxu0
  %v1219 = vadd.f32 %v207, %v1218
  %v1220 = vpop.f32.mrf.mxu0
  %v1221 = vpop.f32.mrf.mxu0
  %v1222 = vadd.f32 %v207, %v1221
  %v1223 = vpop.f32.mrf.mxu0
  %1224 = vmatprep.mubr.bf16.mxu0 0
  %1225 = vmatmul.mubr.bf16.gmra.mxu0 %v773
  %v1226 = vpop.f32.mrf.mxu0
  %v1227 = vadd.f32 %v207, %v1226
  %v1228 = vpop.f32.mrf.mxu0
  %v1229 = vpop.f32.mrf.mxu0
  %v1230 = vadd.f32 %v207, %v1229
  %v1231 = vpop.f32.mrf.mxu0
  %1232 = vmatprep.mubr.bf16.mxu0 0
  %1233 = vmatmul.mubr.bf16.gmra.mxu0 %v776
  %v1234 = vpop.f32.mrf.mxu0
  %v1235 = vadd.f32 %v207, %v1234
  %v1236 = vpop.f32.mrf.mxu0
  %v1237 = vpop.f32.mrf.mxu0
  %v1238 = vadd.f32 %v207, %v1237
  %v1239 = vpop.f32.mrf.mxu0
  %1240 = vmatprep.mubr.bf16.mxu0 0
  %1241 = vmatmul.mubr.bf16.gmra.mxu0 %v779
  %v1242 = vpop.f32.mrf.mxu0
  %v1243 = vadd.f32 %v207, %v1242
  %v1244 = vpop.f32.mrf.mxu0
  %v1245 = vpop.f32.mrf.mxu0
  %v1246 = vadd.f32 %v207, %v1245
  %v1247 = vpop.f32.mrf.mxu0
  %1248 = vmatprep.mubr.bf16.mxu0 0
  %1249 = vmatmul.mubr.bf16.gmra.mxu0 %v782
  %v1250 = vpop.f32.mrf.mxu0
  %v1251 = vadd.f32 %v207, %v1250
  %v1252 = vpop.f32.mrf.mxu0
  %v1253 = vpop.f32.mrf.mxu0
  %v1254 = vadd.f32 %v207, %v1253
  %v1255 = vpop.f32.mrf.mxu0
  %1256 = vmatprep.mubr.bf16.mxu0 0
  %1257 = vmatmul.mubr.bf16.gmra.mxu0 %v785
  %v1258 = vpop.f32.mrf.mxu0
  %v1259 = vadd.f32 %v207, %v1258
  %v1260 = vpop.f32.mrf.mxu0
  %v1261 = vpop.f32.mrf.mxu0
  %v1262 = vadd.f32 %v207, %v1261
  %v1263 = vpop.f32.mrf.mxu0
  %1264 = vmatprep.mubr.bf16.mxu0 0
  %1265 = vmatmul.mubr.bf16.gmra.mxu0 %v788
  %v1266 = vpop.f32.mrf.mxu0
  %v1267 = vadd.f32 %v207, %v1266
  %v1268 = vpop.f32.mrf.mxu0
  %v1269 = vpop.f32.mrf.mxu0
  %v1270 = vadd.f32 %v207, %v1269
  %v1271 = vpop.f32.mrf.mxu0
  %1272 = vmatprep.mubr.bf16.mxu0 0
  %1273 = vmatmul.mubr.bf16.gmra.mxu0 %v791
  %v1274 = vpop.f32.mrf.mxu0
  %v1275 = vadd.f32 %v207, %v1274
  %v1276 = vpop.f32.mrf.mxu0
  %v1277 = vpop.f32.mrf.mxu0
  %v1278 = vadd.f32 %v207, %v1277
  %v1279 = vpop.f32.mrf.mxu0
  %1280 = vmatprep.mubr.bf16.mxu0 0
  %1281 = vmatmul.mubr.bf16.gmra.mxu0 %v794
  %v1282 = vpop.f32.mrf.mxu0
  %v1283 = vadd.f32 %v207, %v1282
  %v1284 = vpop.f32.mrf.mxu0
  %v1285 = vpop.f32.mrf.mxu0
  %v1286 = vadd.f32 %v207, %v1285
  %v1287 = vpop.f32.mrf.mxu0
  %1288 = vmatprep.mubr.bf16.mxu0 0
  %1289 = vmatmul.mubr.bf16.gmra.mxu0 %v797
  %v1290 = vpop.f32.mrf.mxu0
  %v1291 = vadd.f32 %v207, %v1290
  %v1292 = vpop.f32.mrf.mxu0
  %v1293 = vpop.f32.mrf.mxu0
  %v1294 = vadd.f32 %v207, %v1293
  %v1295 = vpop.f32.mrf.mxu0
  %1296 = vmatprep.mubr.bf16.mxu0 0
  %1297 = vmatmul.mubr.bf16.gmra.mxu0 %v800
  %v1298 = vpop.f32.mrf.mxu0
  %v1299 = vadd.f32 %v207, %v1298
  %v1300 = vpop.f32.mrf.mxu0
  %v1301 = vpop.f32.mrf.mxu0
  %v1302 = vadd.f32 %v207, %v1301
  %v1303 = vpop.f32.mrf.mxu0
  %1304 = vmatprep.mubr.bf16.mxu0 0
  %1305 = vmatmul.mubr.bf16.gmra.mxu0 %v803
  %v1306 = vpop.f32.mrf.mxu0
  %v1307 = vadd.f32 %v207, %v1306
  %v1308 = vpop.f32.mrf.mxu0
  %v1309 = vpop.f32.mrf.mxu0
  %v1310 = vadd.f32 %v207, %v1309
  %v1311 = vpop.f32.mrf.mxu0
  %1312 = vmatprep.mubr.bf16.mxu0 0
  %1313 = vmatmul.mubr.bf16.gmra.mxu0 %v806
  %v1314 = vpop.f32.mrf.mxu0
  %v1315 = vadd.f32 %v207, %v1314
  %v1316 = vpop.f32.mrf.mxu0
  %v1317 = vpop.f32.mrf.mxu0
  %v1318 = vadd.f32 %v207, %v1317
  %v1319 = vpop.f32.mrf.mxu0
  %1320 = vmatprep.mubr.bf16.mxu0 0
  %1321 = vmatmul.mubr.bf16.gmra.mxu0 %v809
  %v1322 = vpop.f32.mrf.mxu0
  %v1323 = vadd.f32 %v207, %v1322
  %v1324 = vpop.f32.mrf.mxu0
  %v1325 = vpop.f32.mrf.mxu0
  %v1326 = vadd.f32 %v207, %v1325
  %v1327 = vpop.f32.mrf.mxu0
  %1328 = vmatprep.mubr.bf16.mxu0 0
  %1329 = vmatmul.mubr.bf16.gmra.mxu0 %v812
  %v1330 = vpop.f32.mrf.mxu0
  %v1331 = vadd.f32 %v207, %v1330
  %v1332 = vpop.f32.mrf.mxu0
  %v1333 = vpop.f32.mrf.mxu0
  %v1334 = vadd.f32 %v207, %v1333
  %v1335 = vpop.f32.mrf.mxu0
  %1336 = vmatprep.mubr.bf16.mxu0 0
  %1337 = vmatmul.mubr.bf16.gmra.mxu0 %v815
  %v1338 = vpop.f32.mrf.mxu0
  %v1339 = vadd.f32 %v207, %v1338
  %v1340 = vpop.f32.mrf.mxu0
  %v1341 = vpop.f32.mrf.mxu0
  %v1342 = vadd.f32 %v207, %v1341
  %v1343 = vpop.f32.mrf.mxu0
  %1344 = vmatprep.mubr.bf16.mxu0 0
  %1345 = vmatmul.mubr.bf16.gmra.mxu0 %v818
  %v1346 = vpop.f32.mrf.mxu0
  %v1347 = vadd.f32 %v207, %v1346
  %v1348 = vpop.f32.mrf.mxu0
  %v1349 = vpop.f32.mrf.mxu0
  %v1350 = vadd.f32 %v207, %v1349
  %v1351 = vpop.f32.mrf.mxu0
  %1352 = vmatprep.mubr.bf16.mxu0 0
  %1353 = vmatmul.mubr.bf16.gmra.mxu0 %v821
  %v1354 = vpop.f32.mrf.mxu0
  %v1355 = vadd.f32 %v207, %v1354
  %v1356 = vpop.f32.mrf.mxu0
  %v1357 = vpop.f32.mrf.mxu0
  %v1358 = vadd.f32 %v207, %v1357
  %v1359 = vpop.f32.mrf.mxu0
  %1360 = vmatprep.mubr.bf16.mxu0 0
  %1361 = vmatmul.mubr.bf16.gmra.mxu0 %v824
  %v1362 = vpop.f32.mrf.mxu0
  %v1363 = vadd.f32 %v207, %v1362
  %v1364 = vpop.f32.mrf.mxu0
  %v1365 = vpop.f32.mrf.mxu0
  %v1366 = vadd.f32 %v207, %v1365
  %v1367 = vpop.f32.mrf.mxu0
  %1368 = vmatprep.mubr.bf16.mxu0 0
  %1369 = vmatmul.mubr.bf16.gmra.mxu0 %v827
  %v1370 = vpop.f32.mrf.mxu0
  %v1371 = vadd.f32 %v207, %v1370
  %v1372 = vpop.f32.mrf.mxu0
  %v1373 = vpop.f32.mrf.mxu0
  %v1374 = vadd.f32 %v207, %v1373
  %v1375 = vpop.f32.mrf.mxu0
  %1376 = vmatprep.mubr.bf16.mxu0 0
  %1377 = vmatmul.mubr.bf16.gmra.mxu0 %v830
  %v1378 = vpop.f32.mrf.mxu0
  %v1379 = vadd.f32 %v207, %v1378
  %v1380 = vpop.f32.mrf.mxu0
  %v1381 = vpop.f32.mrf.mxu0
  %v1382 = vadd.f32 %v207, %v1381
  %v1383 = vpop.f32.mrf.mxu0
  %1384 = vmatprep.mubr.bf16.mxu0 0
  %1385 = vmatmul.mubr.bf16.gmra.mxu0 %v833
  %v1386 = vpop.f32.mrf.mxu0
  %v1387 = vadd.f32 %v207, %v1386
  %v1388 = vpop.f32.mrf.mxu0
  %v1389 = vpop.f32.mrf.mxu0
  %v1390 = vadd.f32 %v207, %v1389
  %v1391 = vpop.f32.mrf.mxu0
  %1392 = vmatprep.mubr.bf16.mxu0 0
  %1393 = vmatmul.mubr.bf16.gmra.mxu0 %v836
  %v1394 = vpop.f32.mrf.mxu0
  %v1395 = vadd.f32 %v207, %v1394
  %v1396 = vpop.f32.mrf.mxu0
  %v1397 = vpop.f32.mrf.mxu0
  %v1398 = vadd.f32 %v207, %v1397
  %v1399 = vpop.f32.mrf.mxu0
  %1400 = vmatprep.mubr.bf16.mxu0 0
  %1401 = vmatmul.mubr.bf16.gmra.mxu0 %v839
  %v1402 = vpop.f32.mrf.mxu0
  %v1403 = vadd.f32 %v207, %v1402
  %v1404 = vpop.f32.mrf.mxu0
  %v1405 = vpop.f32.mrf.mxu0
  %v1406 = vadd.f32 %v207, %v1405
  %v1407 = vpop.f32.mrf.mxu0
  %1408 = vmatprep.mubr.bf16.mxu0 0
  %1409 = vmatmul.mubr.bf16.gmra.mxu0 %v842
  %v1410 = vpop.f32.mrf.mxu0
  %v1411 = vadd.f32 %v207, %v1410
  %v1412 = vpop.f32.mrf.mxu0
  %v1413 = vpop.f32.mrf.mxu0
  %v1414 = vadd.f32 %v207, %v1413
  %v1415 = vpop.f32.mrf.mxu0
  %1416 = vmatprep.mubr.bf16.mxu0 0
  %1417 = vmatmul.mubr.bf16.gmra.mxu0 %v845
  %v1418 = vpop.f32.mrf.mxu0
  %v1419 = vadd.f32 %v207, %v1418
  %v1420 = vpop.f32.mrf.mxu0
  %v1421 = vpop.f32.mrf.mxu0
  %v1422 = vadd.f32 %v207, %v1421
  %v1423 = vpop.f32.mrf.mxu0
  %1424 = vmatprep.mubr.bf16.mxu0 0
  %1425 = vmatmul.mubr.bf16.gmra.mxu0 %v848
  %v1426 = vpop.f32.mrf.mxu0
  %v1427 = vadd.f32 %v207, %v1426
  %v1428 = vpop.f32.mrf.mxu0
  %v1429 = vpop.f32.mrf.mxu0
  %v1430 = vadd.f32 %v207, %v1429
  %v1431 = vpop.f32.mrf.mxu0
  %1432 = vmatprep.mubr.bf16.mxu0 0
  %1433 = vmatmul.mubr.bf16.gmra.mxu0 %v851
  %v1434 = vpop.f32.mrf.mxu0
  %v1435 = vadd.f32 %v207, %v1434
  %v1436 = vpop.f32.mrf.mxu0
  %v1437 = vpop.f32.mrf.mxu0
  %v1438 = vadd.f32 %v207, %v1437
  %v1439 = vpop.f32.mrf.mxu0
  %1440 = vmatprep.mubr.bf16.mxu0 0
  %1441 = vmatmul.mubr.bf16.gmra.mxu0 %v854
  %v1442 = vpop.f32.mrf.mxu0
  %v1443 = vadd.f32 %v207, %v1442
  %v1444 = vpop.f32.mrf.mxu0
  %v1445 = vpop.f32.mrf.mxu0
  %v1446 = vadd.f32 %v207, %v1445
  %v1447 = vpop.f32.mrf.mxu0
  %1448 = vmatprep.mubr.bf16.mxu0 0
  %1449 = vmatmul.mubr.bf16.gmra.mxu0 %v857
  %v1450 = vpop.f32.mrf.mxu0
  %v1451 = vadd.f32 %v207, %v1450
  %v1452 = vpop.f32.mrf.mxu0
  %v1453 = vpop.f32.mrf.mxu0
  %v1454 = vadd.f32 %v207, %v1453
  %v1455 = vpop.f32.mrf.mxu0
  %1456 = vmatprep.mubr.bf16.mxu0 0
  %1457 = vmatmul.mubr.bf16.gmra.mxu0 %v860
  %v1458 = vpop.f32.mrf.mxu0
  %v1459 = vadd.f32 %v207, %v1458
  %v1460 = vpop.f32.mrf.mxu0
  %v1461 = vpop.f32.mrf.mxu0
  %v1462 = vadd.f32 %v207, %v1461
  %v1463 = vpop.f32.mrf.mxu0
  %1464 = vmatprep.mubr.bf16.mxu0 0
  %1465 = vmatmul.mubr.bf16.gmra.mxu0 %v863
  %v1466 = vpop.f32.mrf.mxu0
  %v1467 = vadd.f32 %v207, %v1466
  %v1468 = vpop.f32.mrf.mxu0
  %v1469 = vpop.f32.mrf.mxu0
  %v1470 = vadd.f32 %v207, %v1469
  %v1471 = vpop.f32.mrf.mxu0
  %1472 = vmatprep.mubr.bf16.mxu0 0
  %1473 = vmatmul.mubr.bf16.gmra.mxu0 %v866
  %v1474 = vpop.f32.mrf.mxu0
  %v1475 = vadd.f32 %v207, %v1474
  %v1476 = vpop.f32.mrf.mxu0
  %v1477 = vpop.f32.mrf.mxu0
  %v1478 = vadd.f32 %v207, %v1477
  %v1479 = vpop.f32.mrf.mxu0
  %1480 = vmatprep.mubr.bf16.mxu0 0
  %1481 = vmatmul.mubr.bf16.gmra.mxu0 %v869
  %v1482 = vpop.f32.mrf.mxu0
  %v1483 = vadd.f32 %v207, %v1482
  %v1484 = vpop.f32.mrf.mxu0
  %v1485 = vpop.f32.mrf.mxu0
  %v1486 = vadd.f32 %v207, %v1485
  %v1487 = vpop.f32.mrf.mxu0
  %1488 = vmatprep.mubr.bf16.mxu0 0
  %1489 = vmatmul.mubr.bf16.gmra.mxu0 %v872
  %v1490 = vpop.f32.mrf.mxu0
  %v1491 = vadd.f32 %v207, %v1490
  %v1492 = vpop.f32.mrf.mxu0
  %v1493 = vpop.f32.mrf.mxu0
  %v1494 = vadd.f32 %v207, %v1493
  %v1495 = vpop.f32.mrf.mxu0
  %1496 = vmatprep.mubr.bf16.mxu0 0
  %1497 = vmatmul.mubr.bf16.gmra.mxu0 %v875
  %v1498 = vpop.f32.mrf.mxu0
  %v1499 = vadd.f32 %v207, %v1498
  %v1500 = vpop.f32.mrf.mxu0
  %v1501 = vpop.f32.mrf.mxu0
  %v1502 = vadd.f32 %v207, %v1501
  %v1503 = vpop.f32.mrf.mxu0
  %1504 = vmatprep.mubr.bf16.mxu0 0
  %1505 = vmatmul.mubr.bf16.gmra.mxu0 %v878
  %v1506 = vpop.f32.mrf.mxu0
  %v1507 = vadd.f32 %v207, %v1506
  %v1508 = vpop.f32.mrf.mxu0
  %v1509 = vpop.f32.mrf.mxu0
  %v1510 = vadd.f32 %v207, %v1509
  %v1511 = vpop.f32.mrf.mxu0
  %1512 = vmatprep.mubr.bf16.mxu0 0
  %1513 = vmatmul.mubr.bf16.gmra.mxu0 %v881
  %v1514 = vpop.f32.mrf.mxu0
  %v1515 = vadd.f32 %v207, %v1514
  %v1516 = vpop.f32.mrf.mxu0
  %v1517 = vpop.f32.mrf.mxu0
  %v1518 = vadd.f32 %v207, %v1517
  %v1519 = vpop.f32.mrf.mxu0
  %1520 = vmatprep.mubr.bf16.mxu0 0
  %1521 = vmatmul.mubr.bf16.gmra.mxu0 %v884
  %v1522 = vpop.f32.mrf.mxu0
  %v1523 = vadd.f32 %v207, %v1522
  %v1524 = vpop.f32.mrf.mxu0
  %v1525 = vpop.f32.mrf.mxu0
  %v1526 = vadd.f32 %v207, %v1525
  %v1527 = vpop.f32.mrf.mxu0
  %1528 = vmatprep.mubr.bf16.mxu0 0
  %1529 = vmatmul.mubr.bf16.gmra.mxu0 %v887
  %v1530 = vpop.f32.mrf.mxu0
  %v1531 = vadd.f32 %v207, %v1530
  %v1532 = vpop.f32.mrf.mxu0
  %v1533 = vpop.f32.mrf.mxu0
  %v1534 = vadd.f32 %v207, %v1533
  %v1535 = vpop.f32.mrf.mxu0
  %1536 = vmatprep.mubr.bf16.mxu0 0
  %1537 = vmatmul.mubr.bf16.gmra.mxu0 %v890
  %v1538 = vpop.f32.mrf.mxu0
  %v1539 = vadd.f32 %v207, %v1538
  %v1540 = vpop.f32.mrf.mxu0
  %v1541 = vpop.f32.mrf.mxu0
  %v1542 = vadd.f32 %v207, %v1541
  %v1543 = vpop.f32.mrf.mxu0
  %1544 = vmatprep.mubr.bf16.mxu0 0
  %1545 = vmatmul.mubr.bf16.gmra.mxu0 %v893
  %v1546 = vpop.f32.mrf.mxu0
  %v1547 = vadd.f32 %v207, %v1546
  %v1548 = vpop.f32.mrf.mxu0
  %v1549 = vpop.f32.mrf.mxu0
  %v1550 = vadd.f32 %v207, %v1549
  %v1551 = vpop.f32.mrf.mxu0
  %1552 = vmatprep.mubr.bf16.mxu0 0
  %1553 = vmatmul.mubr.bf16.gmra.mxu0 %v896
  %v1554 = vpop.f32.mrf.mxu0
  %v1555 = vadd.f32 %v207, %v1554
  %v1556 = vpop.f32.mrf.mxu0
  %v1557 = vpop.f32.mrf.mxu0
  %v1558 = vadd.f32 %v207, %v1557
  %v1559 = vpop.f32.mrf.mxu0
  %1560 = vmatprep.mubr.bf16.mxu0 0
  %1561 = vmatmul.mubr.bf16.gmra.mxu0 %v899
  %v1562 = vpop.f32.mrf.mxu0
  %v1563 = vadd.f32 %v207, %v1562
  %v1564 = vpop.f32.mrf.mxu0
  %v1565 = vpop.f32.mrf.mxu0
  %v1566 = vadd.f32 %v207, %v1565
  %v1567 = vpop.f32.mrf.mxu0
  %1568 = vmatprep.mubr.bf16.mxu0 0
  %1569 = vmatmul.mubr.bf16.gmra.mxu0 %v902
  %v1570 = vpop.f32.mrf.mxu0
  %v1571 = vadd.f32 %v207, %v1570
  %v1572 = vpop.f32.mrf.mxu0
  %v1573 = vpop.f32.mrf.mxu0
  %v1574 = vadd.f32 %v207, %v1573
  %v1575 = vpop.f32.mrf.mxu0
  %1576 = vmatprep.mubr.bf16.mxu0 0
  %1577 = vmatmul.mubr.bf16.gmra.mxu0 %v905
  %v1578 = vpop.f32.mrf.mxu0
  %v1579 = vadd.f32 %v207, %v1578
  %v1580 = vpop.f32.mrf.mxu0
  %v1581 = vpop.f32.mrf.mxu0
  %v1582 = vadd.f32 %v207, %v1581
  %v1583 = vpop.f32.mrf.mxu0
  %1584 = vmatprep.mubr.bf16.mxu0 0
  %1585 = vmatmul.mubr.bf16.gmra.mxu0 %v908
  %v1586 = vpop.f32.mrf.mxu0
  %v1587 = vadd.f32 %v207, %v1586
  %v1588 = vpop.f32.mrf.mxu0
  %v1589 = vpop.f32.mrf.mxu0
  %v1590 = vadd.f32 %v207, %v1589
  %v1591 = vpop.f32.mrf.mxu0
  %1592 = vmatprep.mubr.bf16.mxu0 0
  %1593 = vmatmul.mubr.bf16.gmra.mxu0 %v911
  %v1594 = vpop.f32.mrf.mxu0
  %v1595 = vadd.f32 %v207, %v1594
  %v1596 = vpop.f32.mrf.mxu0
  %v1597 = vpop.f32.mrf.mxu0
  %v1598 = vadd.f32 %v207, %v1597
  %v1599 = vpop.f32.mrf.mxu0
  %1600 = vmatprep.mubr.bf16.mxu0 0
  %1601 = vmatmul.mubr.bf16.gmra.mxu0 %v914
  %v1602 = vpop.f32.mrf.mxu0
  %v1603 = vadd.f32 %v207, %v1602
  %v1604 = vpop.f32.mrf.mxu0
  %v1605 = vpop.f32.mrf.mxu0
  %v1606 = vadd.f32 %v207, %v1605
  %v1607 = vpop.f32.mrf.mxu0
  %1608 = vmatprep.mubr.bf16.mxu0 0
  %1609 = vmatmul.mubr.bf16.gmra.mxu0 %v917
  %v1610 = vpop.f32.mrf.mxu0
  %v1611 = vadd.f32 %v207, %v1610
  %v1612 = vpop.f32.mrf.mxu0
  %v1613 = vpop.f32.mrf.mxu0
  %v1614 = vadd.f32 %v207, %v1613
  %v1615 = vpop.f32.mrf.mxu0
  %1616 = vmatprep.mubr.bf16.mxu0 0
  %1617 = vmatmul.mubr.bf16.gmra.mxu0 %v920
  %v1618 = vpop.f32.mrf.mxu0
  %v1619 = vadd.f32 %v207, %v1618
  %v1620 = vpop.f32.mrf.mxu0
  %v1621 = vpop.f32.mrf.mxu0
  %v1622 = vadd.f32 %v207, %v1621
  %v1623 = vpop.f32.mrf.mxu0
  %1624 = vmatprep.mubr.bf16.mxu0 0
  %1625 = vmatmul.mubr.bf16.gmra.mxu0 %v923
  %v1626 = vpop.f32.mrf.mxu0
  %v1627 = vadd.f32 %v207, %v1626
  %v1628 = vpop.f32.mrf.mxu0
  %v1629 = vpop.f32.mrf.mxu0
  %v1630 = vadd.f32 %v207, %v1629
  %v1631 = vpop.f32.mrf.mxu0
  %1632 = vmatprep.mubr.bf16.mxu0 0
  %1633 = vmatmul.mubr.bf16.gmra.mxu0 %v926
  %v1634 = vpop.f32.mrf.mxu0
  %v1635 = vadd.f32 %v207, %v1634
  %v1636 = vpop.f32.mrf.mxu0
  %v1637 = vpop.f32.mrf.mxu0
  %v1638 = vadd.f32 %v207, %v1637
  %v1639 = vpop.f32.mrf.mxu0
  %1640 = vmatprep.mubr.bf16.mxu0 0
  %1641 = vmatmul.mubr.bf16.gmra.mxu0 %v929
  %v1642 = vpop.f32.mrf.mxu0
  %v1643 = vadd.f32 %v207, %v1642
  %v1644 = vpop.f32.mrf.mxu0
  %v1645 = vpop.f32.mrf.mxu0
  %v1646 = vadd.f32 %v207, %v1645
  %v1647 = vpop.f32.mrf.mxu0
  %1648 = vmatprep.mubr.bf16.mxu0 0
  %1649 = vmatmul.mubr.bf16.gmra.mxu0 %v932
  %v1650 = vpop.f32.mrf.mxu0
  %v1651 = vadd.f32 %v207, %v1650
  %v1652 = vpop.f32.mrf.mxu0
  %v1653 = vpop.f32.mrf.mxu0
  %v1654 = vadd.f32 %v207, %v1653
  %v1655 = vpop.f32.mrf.mxu0
  %1656 = vmatprep.mubr.bf16.mxu0 0
  %1657 = vmatmul.mubr.bf16.gmra.mxu0 %v935
  %v1658 = vpop.f32.mrf.mxu0
  %v1659 = vadd.f32 %v207, %v1658
  %v1660 = vpop.f32.mrf.mxu0
  %v1661 = vpop.f32.mrf.mxu0
  %v1662 = vadd.f32 %v207, %v1661
  %v1663 = vpop.f32.mrf.mxu0
  %1664 = vmatprep.mubr.bf16.mxu0 0
  %1665 = vmatmul.mubr.bf16.gmra.mxu0 %v938
  %v1666 = vpop.f32.mrf.mxu0
  %v1667 = vadd.f32 %v207, %v1666
  %v1668 = vpop.f32.mrf.mxu0
  %v1669 = vpop.f32.mrf.mxu0
  %v1670 = vadd.f32 %v207, %v1669
  %v1671 = vpop.f32.mrf.mxu0
  %1672 = vmatprep.mubr.bf16.mxu0 0
  %1673 = vmatmul.mubr.bf16.gmra.mxu0 %v941
  %v1674 = vpop.f32.mrf.mxu0
  %v1675 = vadd.f32 %v207, %v1674
  %v1676 = vpop.f32.mrf.mxu0
  %v1677 = vpop.f32.mrf.mxu0
  %v1678 = vadd.f32 %v207, %v1677
  %v1679 = vpop.f32.mrf.mxu0
  %1680 = vmatprep.mubr.bf16.mxu0 0
  %1681 = vmatmul.mubr.bf16.gmra.mxu0 %v944
  %v1682 = vpop.f32.mrf.mxu0
  %v1683 = vadd.f32 %v207, %v1682
  %v1684 = vpop.f32.mrf.mxu0
  %v1685 = vpop.f32.mrf.mxu0
  %v1686 = vadd.f32 %v207, %v1685
  %v1687 = vpop.f32.mrf.mxu0
  %1688 = vmatprep.mubr.bf16.mxu0 0
  %1689 = vmatmul.mubr.bf16.gmra.mxu0 %v947
  %v1690 = vpop.f32.mrf.mxu0
  %v1691 = vadd.f32 %v207, %v1690
  %v1692 = vpop.f32.mrf.mxu0
  %v1693 = vpop.f32.mrf.mxu0
  %v1694 = vadd.f32 %v207, %v1693
  %v1695 = vpop.f32.mrf.mxu0
  %1696 = vmatprep.mubr.bf16.mxu0 0
  %1697 = vmatmul.mubr.bf16.gmra.mxu0 %v950
  %v1698 = vpop.f32.mrf.mxu0
  %v1699 = vadd.f32 %v207, %v1698
  %v1700 = vpop.f32.mrf.mxu0
  %v1701 = vpop.f32.mrf.mxu0
  %v1702 = vpop.f32.mrf.mxu0
  %1703 = vdwg.mxu0
  %v1704 = vmax.f32 %v987, 0.0
  %v1705 = vmax.f32 %v990, 0.0
  %v1706 = vmax.f32 %v995, 0.0
  %v1707 = vmax.f32 %v998, 0.0
  %v1708 = vmax.f32 %v1003, 0.0
  %v1709 = vmax.f32 %v1006, 0.0
  %v1710 = vmax.f32 %v1011, 0.0
  %v1711 = vmax.f32 %v1014, 0.0
  %v1712 = vmax.f32 %v1019, 0.0
  %v1713 = vmax.f32 %v1022, 0.0
  %v1714 = vmax.f32 %v1027, 0.0
  %v1715 = vmax.f32 %v1030, 0.0
  %v1716 = vmax.f32 %v1035, 0.0
  %v1717 = vmax.f32 %v1038, 0.0
  %v1718 = vmax.f32 %v1043, 0.0
  %v1719 = vmax.f32 %v1046, 0.0
  %v1720 = vmax.f32 %v1051, 0.0
  %v1721 = vmax.f32 %v1054, 0.0
  %v1722 = vmax.f32 %v1059, 0.0
  %v1723 = vmax.f32 %v1062, 0.0
  %v1724 = vmax.f32 %v1067, 0.0
  %v1725 = vmax.f32 %v1070, 0.0
  %v1726 = vmax.f32 %v1075, 0.0
  %v1727 = vmax.f32 %v1078, 0.0
  %v1728 = vmax.f32 %v1083, 0.0
  %v1729 = vmax.f32 %v1086, 0.0
  %v1730 = vmax.f32 %v1091, 0.0
  %v1731 = vmax.f32 %v1094, 0.0
  %v1732 = vmax.f32 %v1099, 0.0
  %v1733 = vmax.f32 %v1102, 0.0
  %v1734 = vmax.f32 %v1107, 0.0
  %v1735 = vmax.f32 %v1110, 0.0
  %v1736 = vmax.f32 %v1115, 0.0
  %v1737 = vmax.f32 %v1118, 0.0
  %v1738 = vmax.f32 %v1123, 0.0
  %v1739 = vmax.f32 %v1126, 0.0
  %v1740 = vmax.f32 %v1131, 0.0
  %v1741 = vmax.f32 %v1134, 0.0
  %v1742 = vmax.f32 %v1139, 0.0
  %v1743 = vmax.f32 %v1142, 0.0
  %v1744 = vmax.f32 %v1147, 0.0
  %v1745 = vmax.f32 %v1150, 0.0
  %v1746 = vmax.f32 %v1155, 0.0
  %v1747 = vmax.f32 %v1158, 0.0
  %v1748 = vmax.f32 %v1163, 0.0
  %v1749 = vmax.f32 %v1166, 0.0
  %v1750 = vmax.f32 %v1171, 0.0
  %v1751 = vmax.f32 %v1174, 0.0
  %v1752 = vmax.f32 %v1179, 0.0
  %v1753 = vmax.f32 %v1182, 0.0
  %v1754 = vmax.f32 %v1187, 0.0
  %v1755 = vmax.f32 %v1190, 0.0
  %v1756 = vmax.f32 %v1195, 0.0
  %v1757 = vmax.f32 %v1198, 0.0
  %v1758 = vmax.f32 %v1203, 0.0
  %v1759 = vmax.f32 %v1206, 0.0
  %v1760 = vmax.f32 %v1211, 0.0
  %v1761 = vmax.f32 %v1214, 0.0
  %v1762 = vmax.f32 %v1219, 0.0
  %v1763 = vmax.f32 %v1222, 0.0
  %v1764 = vmax.f32 %v1227, 0.0
  %v1765 = vmax.f32 %v1230, 0.0
  %v1766 = vmax.f32 %v1235, 0.0
  %v1767 = vmax.f32 %v1238, 0.0
  %v1768 = vmax.f32 %v1243, 0.0
  %v1769 = vmax.f32 %v1246, 0.0
  %v1770 = vmax.f32 %v1251, 0.0
  %v1771 = vmax.f32 %v1254, 0.0
  %v1772 = vmax.f32 %v1259, 0.0
  %v1773 = vmax.f32 %v1262, 0.0
  %v1774 = vmax.f32 %v1267, 0.0
  %v1775 = vmax.f32 %v1270, 0.0
  %v1776 = vmax.f32 %v1275, 0.0
  %v1777 = vmax.f32 %v1278, 0.0
  %v1778 = vmax.f32 %v1283, 0.0
  %v1779 = vmax.f32 %v1286, 0.0
  %v1780 = vmax.f32 %v1291, 0.0
  %v1781 = vmax.f32 %v1294, 0.0
  %v1782 = vmax.f32 %v1299, 0.0
  %v1783 = vmax.f32 %v1302, 0.0
  %v1784 = vmax.f32 %v1307, 0.0
  %v1785 = vmax.f32 %v1310, 0.0
  %v1786 = vmax.f32 %v1315, 0.0
  %v1787 = vmax.f32 %v1318, 0.0
  %v1788 = vmax.f32 %v1323, 0.0
  %v1789 = vmax.f32 %v1326, 0.0
  %v1790 = vmax.f32 %v1331, 0.0
  %v1791 = vmax.f32 %v1334, 0.0
  %v1792 = vmax.f32 %v1339, 0.0
  %v1793 = vmax.f32 %v1342, 0.0
  %v1794 = vmax.f32 %v1347, 0.0
  %v1795 = vmax.f32 %v1350, 0.0
  %v1796 = vmax.f32 %v1355, 0.0
  %v1797 = vmax.f32 %v1358, 0.0
  %v1798 = vmax.f32 %v1363, 0.0
  %v1799 = vmax.f32 %v1366, 0.0
  %v1800 = vmax.f32 %v1371, 0.0
  %v1801 = vmax.f32 %v1374, 0.0
  %v1802 = vmax.f32 %v1379, 0.0
  %v1803 = vmax.f32 %v1382, 0.0
  %v1804 = vmax.f32 %v1387, 0.0
  %v1805 = vmax.f32 %v1390, 0.0
  %v1806 = vmax.f32 %v1395, 0.0
  %v1807 = vmax.f32 %v1398, 0.0
  %v1808 = vmax.f32 %v1403, 0.0
  %v1809 = vmax.f32 %v1406, 0.0
  %v1810 = vmax.f32 %v1411, 0.0
  %v1811 = vmax.f32 %v1414, 0.0
  %v1812 = vmax.f32 %v1419, 0.0
  %v1813 = vmax.f32 %v1422, 0.0
  %v1814 = vmax.f32 %v1427, 0.0
  %v1815 = vmax.f32 %v1430, 0.0
  %v1816 = vmax.f32 %v1435, 0.0
  %v1817 = vmax.f32 %v1438, 0.0
  %v1818 = vmax.f32 %v1443, 0.0
  %v1819 = vmax.f32 %v1446, 0.0
  %v1820 = vmax.f32 %v1451, 0.0
  %v1821 = vmax.f32 %v1454, 0.0
  %v1822 = vmax.f32 %v1459, 0.0
  %v1823 = vmax.f32 %v1462, 0.0
  %v1824 = vmax.f32 %v1467, 0.0
  %v1825 = vmax.f32 %v1470, 0.0
  %v1826 = vmax.f32 %v1475, 0.0
  %v1827 = vmax.f32 %v1478, 0.0
  %v1828 = vmax.f32 %v1483, 0.0
  %v1829 = vmax.f32 %v1486, 0.0
  %v1830 = vmax.f32 %v1491, 0.0
  %v1831 = vmax.f32 %v1494, 0.0
  %v1832 = vmax.f32 %v1499, 0.0
  %v1833 = vmax.f32 %v1502, 0.0
  %v1834 = vmax.f32 %v1507, 0.0
  %v1835 = vmax.f32 %v1510, 0.0
  %v1836 = vmax.f32 %v1515, 0.0
  %v1837 = vmax.f32 %v1518, 0.0
  %v1838 = vmax.f32 %v1523, 0.0
  %v1839 = vmax.f32 %v1526, 0.0
  %v1840 = vmax.f32 %v1531, 0.0
  %v1841 = vmax.f32 %v1534, 0.0
  %v1842 = vmax.f32 %v1539, 0.0
  %v1843 = vmax.f32 %v1542, 0.0
  %v1844 = vmax.f32 %v1547, 0.0
  %v1845 = vmax.f32 %v1550, 0.0
  %v1846 = vmax.f32 %v1555, 0.0
  %v1847 = vmax.f32 %v1558, 0.0
  %v1848 = vmax.f32 %v1563, 0.0
  %v1849 = vmax.f32 %v1566, 0.0
  %v1850 = vmax.f32 %v1571, 0.0
  %v1851 = vmax.f32 %v1574, 0.0
  %v1852 = vmax.f32 %v1579, 0.0
  %v1853 = vmax.f32 %v1582, 0.0
  %v1854 = vmax.f32 %v1587, 0.0
  %v1855 = vmax.f32 %v1590, 0.0
  %v1856 = vmax.f32 %v1595, 0.0
  %v1857 = vmax.f32 %v1598, 0.0
  %v1858 = vmax.f32 %v1603, 0.0
  %v1859 = vmax.f32 %v1606, 0.0
  %v1860 = vmax.f32 %v1611, 0.0
  %v1861 = vmax.f32 %v1614, 0.0
  %v1862 = vmax.f32 %v1619, 0.0
  %v1863 = vmax.f32 %v1622, 0.0
  %v1864 = vmax.f32 %v1627, 0.0
  %v1865 = vmax.f32 %v1630, 0.0
  %v1866 = vmax.f32 %v1635, 0.0
  %v1867 = vmax.f32 %v1638, 0.0
  %v1868 = vmax.f32 %v1643, 0.0
  %v1869 = vmax.f32 %v1646, 0.0
  %v1870 = vmax.f32 %v1651, 0.0
  %v1871 = vmax.f32 %v1654, 0.0
  %v1872 = vmax.f32 %v1659, 0.0
  %v1873 = vmax.f32 %v1662, 0.0
  %v1874 = vmax.f32 %v1667, 0.0
  %v1875 = vmax.f32 %v1670, 0.0
  %v1876 = vmax.f32 %v1675, 0.0
  %v1877 = vmax.f32 %v1678, 0.0
  %v1878 = vmax.f32 %v1683, 0.0
  %v1879 = vmax.f32 %v1686, 0.0
  %v1880 = vmax.f32 %v1691, 0.0
  %v1881 = vmax.f32 %v1694, 0.0
  %v1882 = vmax.f32 %v1699, 0.0
  %v1883 = vpack.c.bf16 %v1705, %v1704
  %v1884 = vpack.c.bf16 %v1707, %v1706
  %v1885 = vpack.c.bf16 %v1709, %v1708
  %v1886 = vpack.c.bf16 %v1711, %v1710
  %v1887 = vpack.c.bf16 %v1713, %v1712
  %v1888 = vpack.c.bf16 %v1715, %v1714
  %v1889 = vpack.c.bf16 %v1717, %v1716
  %v1890 = vpack.c.bf16 %v1719, %v1718
  %v1891 = vpack.c.bf16 %v1721, %v1720
  %v1892 = vpack.c.bf16 %v1723, %v1722
  %v1893 = vpack.c.bf16 %v1725, %v1724
  %v1894 = vpack.c.bf16 %v1727, %v1726
  %v1895 = vpack.c.bf16 %v1729, %v1728
  %v1896 = vpack.c.bf16 %v1731, %v1730
  %v1897 = vpack.c.bf16 %v1733, %v1732
  %v1898 = vpack.c.bf16 %v1735, %v1734
  %v1899 = vpack.c.bf16 %v1737, %v1736
  %v1900 = vpack.c.bf16 %v1739, %v1738
  %v1901 = vpack.c.bf16 %v1741, %v1740
  %v1902 = vpack.c.bf16 %v1743, %v1742
  %v1903 = vpack.c.bf16 %v1745, %v1744
  %v1904 = vpack.c.bf16 %v1747, %v1746
  %v1905 = vpack.c.bf16 %v1749, %v1748
  %v1906 = vpack.c.bf16 %v1751, %v1750
  %v1907 = vpack.c.bf16 %v1753, %v1752
  %v1908 = vpack.c.bf16 %v1755, %v1754
  %v1909 = vpack.c.bf16 %v1757, %v1756
  %v1910 = vpack.c.bf16 %v1759, %v1758
  %v1911 = vpack.c.bf16 %v1761, %v1760
  %v1912 = vpack.c.bf16 %v1763, %v1762
  %v1913 = vpack.c.bf16 %v1765, %v1764
  %v1914 = vpack.c.bf16 %v1767, %v1766
  %v1915 = vpack.c.bf16 %v1769, %v1768
  %v1916 = vpack.c.bf16 %v1771, %v1770
  %v1917 = vpack.c.bf16 %v1773, %v1772
  %v1918 = vpack.c.bf16 %v1775, %v1774
  %v1919 = vpack.c.bf16 %v1777, %v1776
  %v1920 = vpack.c.bf16 %v1779, %v1778
  %v1921 = vpack.c.bf16 %v1781, %v1780
  %v1922 = vpack.c.bf16 %v1783, %v1782
  %v1923 = vpack.c.bf16 %v1785, %v1784
  %v1924 = vpack.c.bf16 %v1787, %v1786
  %v1925 = vpack.c.bf16 %v1789, %v1788
  %v1926 = vpack.c.bf16 %v1791, %v1790
  %v1927 = vpack.c.bf16 %v1793, %v1792
  %v1928 = vpack.c.bf16 %v1795, %v1794
  %v1929 = vpack.c.bf16 %v1797, %v1796
  %v1930 = vpack.c.bf16 %v1799, %v1798
  %v1931 = vpack.c.bf16 %v1801, %v1800
  %v1932 = vpack.c.bf16 %v1803, %v1802
  %v1933 = vpack.c.bf16 %v1805, %v1804
  %v1934 = vpack.c.bf16 %v1807, %v1806
  %v1935 = vpack.c.bf16 %v1809, %v1808
  %v1936 = vpack.c.bf16 %v1811, %v1810
  %v1937 = vpack.c.bf16 %v1813, %v1812
  %v1938 = vpack.c.bf16 %v1815, %v1814
  %v1939 = vpack.c.bf16 %v1817, %v1816
  %v1940 = vpack.c.bf16 %v1819, %v1818
  %v1941 = vpack.c.bf16 %v1821, %v1820
  %v1942 = vpack.c.bf16 %v1823, %v1822
  %v1943 = vpack.c.bf16 %v1825, %v1824
  %v1944 = vpack.c.bf16 %v1827, %v1826
  %v1945 = vpack.c.bf16 %v1829, %v1828
  %v1946 = vpack.c.bf16 %v1831, %v1830
  %v1947 = vpack.c.bf16 %v1833, %v1832
  %v1948 = vpack.c.bf16 %v1835, %v1834
  %v1949 = vpack.c.bf16 %v1837, %v1836
  %v1950 = vpack.c.bf16 %v1839, %v1838
  %v1951 = vpack.c.bf16 %v1841, %v1840
  %v1952 = vpack.c.bf16 %v1843, %v1842
  %v1953 = vpack.c.bf16 %v1845, %v1844
  %v1954 = vpack.c.bf16 %v1847, %v1846
  %v1955 = vpack.c.bf16 %v1849, %v1848
  %v1956 = vpack.c.bf16 %v1851, %v1850
  %v1957 = vpack.c.bf16 %v1853, %v1852
  %v1958 = vpack.c.bf16 %v1855, %v1854
  %v1959 = vpack.c.bf16 %v1857, %v1856
  %v1960 = vpack.c.bf16 %v1859, %v1858
  %v1961 = vpack.c.bf16 %v1861, %v1860
  %v1962 = vpack.c.bf16 %v1863, %v1862
  %v1963 = vpack.c.bf16 %v1865, %v1864
  %v1964 = vpack.c.bf16 %v1867, %v1866
  %v1965 = vpack.c.bf16 %v1869, %v1868
  %v1966 = vpack.c.bf16 %v1871, %v1870
  %v1967 = vpack.c.bf16 %v1873, %v1872
  %v1968 = vpack.c.bf16 %v1875, %v1874
  %v1969 = vpack.c.bf16 %v1877, %v1876
  %v1970 = vpack.c.bf16 %v1879, %v1878
  %v1971 = vpack.c.bf16 %v1881, %v1880
  %v1972 = vpack.c.bf16 %v1882, %v1882
  %v2063 = vunpack.c.l.b16 %v1883
  %v2064 = vunpack.c.h.b16 %v1883
  %v2065 = vunpack.c.l.b16 %v1884
  %v2066 = vunpack.c.h.b16 %v1884
  %v2067 = vunpack.c.l.b16 %v1885
  %v2068 = vunpack.c.h.b16 %v1885
  %v2069 = vunpack.c.l.b16 %v1886
  %v2070 = vunpack.c.h.b16 %v1886
  %v2071 = vunpack.c.l.b16 %v1887
  %v2072 = vunpack.c.h.b16 %v1887
  %v2073 = vunpack.c.l.b16 %v1888
  %v2074 = vunpack.c.h.b16 %v1888
  %v2075 = vunpack.c.l.b16 %v1889
  %v2076 = vunpack.c.h.b16 %v1889
  %v2077 = vunpack.c.l.b16 %v1890
  %v2078 = vunpack.c.h.b16 %v1890
  %v2079 = vunpack.c.l.b16 %v1891
  %v2080 = vunpack.c.h.b16 %v1891
  %v2081 = vunpack.c.l.b16 %v1892
  %v2082 = vunpack.c.h.b16 %v1892
  %v2083 = vunpack.c.l.b16 %v1893
  %v2084 = vunpack.c.h.b16 %v1893
  %v2085 = vunpack.c.l.b16 %v1894
  %v2086 = vunpack.c.h.b16 %v1894
  %v2087 = vunpack.c.l.b16 %v1895
  %v2088 = vunpack.c.h.b16 %v1895
  %v2089 = vunpack.c.l.b16 %v1896
  %v2090 = vunpack.c.h.b16 %v1896
  %v2091 = vunpack.c.l.b16 %v1897
  %v2092 = vunpack.c.h.b16 %v1897
  %v2093 = vunpack.c.l.b16 %v1898
  %v2094 = vunpack.c.h.b16 %v1898
  %v2095 = vunpack.c.l.b16 %v1899
  %v2096 = vunpack.c.h.b16 %v1899
  %v2097 = vunpack.c.l.b16 %v1900
  %v2098 = vunpack.c.h.b16 %v1900
  %v2099 = vunpack.c.l.b16 %v1901
  %v2100 = vunpack.c.h.b16 %v1901
  %v2101 = vunpack.c.l.b16 %v1902
  %v2102 = vunpack.c.h.b16 %v1902
  %v2103 = vunpack.c.l.b16 %v1903
  %v2104 = vunpack.c.h.b16 %v1903
  %v2105 = vunpack.c.l.b16 %v1904
  %v2106 = vunpack.c.h.b16 %v1904
  %v2107 = vunpack.c.l.b16 %v1905
  %v2108 = vunpack.c.h.b16 %v1905
  %v2109 = vunpack.c.l.b16 %v1906
  %v2110 = vunpack.c.h.b16 %v1906
  %v2111 = vunpack.c.l.b16 %v1907
  %v2112 = vunpack.c.h.b16 %v1907
  %v2113 = vunpack.c.l.b16 %v1908
  %v2114 = vunpack.c.h.b16 %v1908
  %v2115 = vunpack.c.l.b16 %v1909
  %v2116 = vunpack.c.h.b16 %v1909
  %v2117 = vunpack.c.l.b16 %v1910
  %v2118 = vunpack.c.h.b16 %v1910
  %v2119 = vunpack.c.l.b16 %v1911
  %v2120 = vunpack.c.h.b16 %v1911
  %v2121 = vunpack.c.l.b16 %v1912
  %v2122 = vunpack.c.h.b16 %v1912
  %v2123 = vunpack.c.l.b16 %v1913
  %v2124 = vunpack.c.h.b16 %v1913
  %v2125 = vunpack.c.l.b16 %v1914
  %v2126 = vunpack.c.h.b16 %v1914
  %v2127 = vunpack.c.l.b16 %v1915
  %v2128 = vunpack.c.h.b16 %v1915
  %v2129 = vunpack.c.l.b16 %v1916
  %v2130 = vunpack.c.h.b16 %v1916
  %v2131 = vunpack.c.l.b16 %v1917
  %v2132 = vunpack.c.h.b16 %v1917
  %v2133 = vunpack.c.l.b16 %v1918
  %v2134 = vunpack.c.h.b16 %v1918
  %v2135 = vunpack.c.l.b16 %v1919
  %v2136 = vunpack.c.h.b16 %v1919
  %v2137 = vunpack.c.l.b16 %v1920
  %v2138 = vunpack.c.h.b16 %v1920
  %v2139 = vunpack.c.l.b16 %v1921
  %v2140 = vunpack.c.h.b16 %v1921
  %v2141 = vunpack.c.l.b16 %v1922
  %v2142 = vunpack.c.h.b16 %v1922
  %v2143 = vunpack.c.l.b16 %v1923
  %v2144 = vunpack.c.h.b16 %v1923
  %v2145 = vunpack.c.l.b16 %v1924
  %v2146 = vunpack.c.h.b16 %v1924
  %v2147 = vunpack.c.l.b16 %v1925
  %v2148 = vunpack.c.h.b16 %v1925
  %v2149 = vunpack.c.l.b16 %v1926
  %v2150 = vunpack.c.h.b16 %v1926
  %v2151 = vunpack.c.l.b16 %v1927
  %v2152 = vunpack.c.h.b16 %v1927
  %v2153 = vunpack.c.l.b16 %v1928
  %v2154 = vunpack.c.h.b16 %v1928
  %v2155 = vunpack.c.l.b16 %v1929
  %v2156 = vunpack.c.h.b16 %v1929
  %v2157 = vunpack.c.l.b16 %v1930
  %v2158 = vunpack.c.h.b16 %v1930
  %v2159 = vunpack.c.l.b16 %v1931
  %v2160 = vunpack.c.h.b16 %v1931
  %v2161 = vunpack.c.l.b16 %v1932
  %v2162 = vunpack.c.h.b16 %v1932
  %v2163 = vunpack.c.l.b16 %v1933
  %v2164 = vunpack.c.h.b16 %v1933
  %v2165 = vunpack.c.l.b16 %v1934
  %v2166 = vunpack.c.h.b16 %v1934
  %v2167 = vunpack.c.l.b16 %v1935
  %v2168 = vunpack.c.h.b16 %v1935
  %v2169 = vunpack.c.l.b16 %v1936
  %v2170 = vunpack.c.h.b16 %v1936
  %v2171 = vunpack.c.l.b16 %v1937
  %v2172 = vunpack.c.h.b16 %v1937
  %v2173 = vunpack.c.l.b16 %v1938
  %v2174 = vunpack.c.h.b16 %v1938
  %v2175 = vunpack.c.l.b16 %v1939
  %v2176 = vunpack.c.h.b16 %v1939
  %v2177 = vunpack.c.l.b16 %v1940
  %v2178 = vunpack.c.h.b16 %v1940
  %v2179 = vunpack.c.l.b16 %v1941
  %v2180 = vunpack.c.h.b16 %v1941
  %v2181 = vunpack.c.l.b16 %v1942
  %v2182 = vunpack.c.h.b16 %v1942
  %v2183 = vunpack.c.l.b16 %v1943
  %v2184 = vunpack.c.h.b16 %v1943
  %v2185 = vunpack.c.l.b16 %v1944
  %v2186 = vunpack.c.h.b16 %v1944
  %v2187 = vunpack.c.l.b16 %v1945
  %v2188 = vunpack.c.h.b16 %v1945
  %v2189 = vunpack.c.l.b16 %v1946
  %v2190 = vunpack.c.h.b16 %v1946
  %v2191 = vunpack.c.l.b16 %v1947
  %v2192 = vunpack.c.h.b16 %v1947
  %v2193 = vunpack.c.l.b16 %v1948
  %v2194 = vunpack.c.h.b16 %v1948
  %v2195 = vunpack.c.l.b16 %v1949
  %v2196 = vunpack.c.h.b16 %v1949
  %v2197 = vunpack.c.l.b16 %v1950
  %v2198 = vunpack.c.h.b16 %v1950
  %v2199 = vunpack.c.l.b16 %v1951
  %v2200 = vunpack.c.h.b16 %v1951
  %v2201 = vunpack.c.l.b16 %v1952
  %v2202 = vunpack.c.h.b16 %v1952
  %v2203 = vunpack.c.l.b16 %v1953
  %v2204 = vunpack.c.h.b16 %v1953
  %v2205 = vunpack.c.l.b16 %v1954
  %v2206 = vunpack.c.h.b16 %v1954
  %v2207 = vunpack.c.l.b16 %v1955
  %v2208 = vunpack.c.h.b16 %v1955
  %v2209 = vunpack.c.l.b16 %v1956
  %v2210 = vunpack.c.h.b16 %v1956
  %v2211 = vunpack.c.l.b16 %v1957
  %v2212 = vunpack.c.h.b16 %v1957
  %v2213 = vunpack.c.l.b16 %v1958
  %v2214 = vunpack.c.h.b16 %v1958
  %v2215 = vunpack.c.l.b16 %v1959
  %v2216 = vunpack.c.h.b16 %v1959
  %v2217 = vunpack.c.l.b16 %v1960
  %v2218 = vunpack.c.h.b16 %v1960
  %v2219 = vunpack.c.l.b16 %v1961
  %v2220 = vunpack.c.h.b16 %v1961
  %v2221 = vunpack.c.l.b16 %v1962
  %v2222 = vunpack.c.h.b16 %v1962
  %v2223 = vunpack.c.l.b16 %v1963
  %v2224 = vunpack.c.h.b16 %v1963
  %v2225 = vunpack.c.l.b16 %v1964
  %v2226 = vunpack.c.h.b16 %v1964
  %v2227 = vunpack.c.l.b16 %v1965
  %v2228 = vunpack.c.h.b16 %v1965
  %v2229 = vunpack.c.l.b16 %v1966
  %v2230 = vunpack.c.h.b16 %v1966
  %v2231 = vunpack.c.l.b16 %v1967
  %v2232 = vunpack.c.h.b16 %v1967
  %v2233 = vunpack.c.l.b16 %v1968
  %v2234 = vunpack.c.h.b16 %v1968
  %v2235 = vunpack.c.l.b16 %v1969
  %v2236 = vunpack.c.h.b16 %v1969
  %v2237 = vunpack.c.l.b16 %v1970
  %v2238 = vunpack.c.h.b16 %v1970
  %v2239 = vunpack.c.l.b16 %v1971
  %v2240 = vunpack.c.h.b16 %v1971
  %v2241 = vunpack.c.l.b16 %v1972
  %v2242 = vpack.c.b16 %v2063, %v2063
  %v2243 = vpack.c.b16 %v2064, %v2064
  %v2244 = vpack.c.b16 %v2065, %v2065
  %v2245 = vpack.c.b16 %v2066, %v2066
  %v2246 = vpack.c.b16 %v2067, %v2067
  %v2247 = vpack.c.b16 %v2068, %v2068
  %v2248 = vpack.c.b16 %v2069, %v2069
  %v2249 = vpack.c.b16 %v2070, %v2070
  %v2250 = vpack.c.b16 %v2071, %v2071
  %v2251 = vpack.c.b16 %v2072, %v2072
  %v2252 = vpack.c.b16 %v2073, %v2073
  %v2253 = vpack.c.b16 %v2074, %v2074
  %v2254 = vpack.c.b16 %v2075, %v2075
  %v2255 = vpack.c.b16 %v2076, %v2076
  %v2256 = vpack.c.b16 %v2077, %v2077
  %v2257 = vpack.c.b16 %v2078, %v2078
  %v2258 = vpack.c.b16 %v2079, %v2079
  %v2259 = vpack.c.b16 %v2080, %v2080
  %v2260 = vpack.c.b16 %v2081, %v2081
  %v2261 = vpack.c.b16 %v2082, %v2082
  %v2262 = vpack.c.b16 %v2083, %v2083
  %v2263 = vpack.c.b16 %v2084, %v2084
  %v2264 = vpack.c.b16 %v2085, %v2085
  %v2265 = vpack.c.b16 %v2086, %v2086
  %v2266 = vpack.c.b16 %v2087, %v2087
  %v2267 = vpack.c.b16 %v2088, %v2088
  %v2268 = vpack.c.b16 %v2089, %v2089
  %v2269 = vpack.c.b16 %v2090, %v2090
  %v2270 = vpack.c.b16 %v2091, %v2091
  %v2271 = vpack.c.b16 %v2092, %v2092
  %v2272 = vpack.c.b16 %v2093, %v2093
  %v2273 = vpack.c.b16 %v2094, %v2094
  %v2274 = vpack.c.b16 %v2095, %v2095
  %v2275 = vpack.c.b16 %v2096, %v2096
  %v2276 = vpack.c.b16 %v2097, %v2097
  %v2277 = vpack.c.b16 %v2098, %v2098
  %v2278 = vpack.c.b16 %v2099, %v2099
  %v2279 = vpack.c.b16 %v2100, %v2100
  %v2280 = vpack.c.b16 %v2101, %v2101
  %v2281 = vpack.c.b16 %v2102, %v2102
  %v2282 = vpack.c.b16 %v2103, %v2103
  %v2283 = vpack.c.b16 %v2104, %v2104
  %v2284 = vpack.c.b16 %v2105, %v2105
  %v2285 = vpack.c.b16 %v2106, %v2106
  %v2286 = vpack.c.b16 %v2107, %v2107
  %v2287 = vpack.c.b16 %v2108, %v2108
  %v2288 = vpack.c.b16 %v2109, %v2109
  %v2289 = vpack.c.b16 %v2110, %v2110
  %v2290 = vpack.c.b16 %v2111, %v2111
  %v2291 = vpack.c.b16 %v2112, %v2112
  %v2292 = vpack.c.b16 %v2113, %v2113
  %v2293 = vpack.c.b16 %v2114, %v2114
  %v2294 = vpack.c.b16 %v2115, %v2115
  %v2295 = vpack.c.b16 %v2116, %v2116
  %v2296 = vpack.c.b16 %v2117, %v2117
  %v2297 = vpack.c.b16 %v2118, %v2118
  %v2298 = vpack.c.b16 %v2119, %v2119
  %v2299 = vpack.c.b16 %v2120, %v2120
  %v2300 = vpack.c.b16 %v2121, %v2121
  %v2301 = vpack.c.b16 %v2122, %v2122
  %v2302 = vpack.c.b16 %v2123, %v2123
  %v2303 = vpack.c.b16 %v2124, %v2124
  %v2304 = vpack.c.b16 %v2125, %v2125
  %v2305 = vpack.c.b16 %v2126, %v2126
  %v2306 = vpack.c.b16 %v2127, %v2127
  %v2307 = vpack.c.b16 %v2128, %v2128
  %v2308 = vpack.c.b16 %v2129, %v2129
  %v2309 = vpack.c.b16 %v2130, %v2130
  %v2310 = vpack.c.b16 %v2131, %v2131
  %v2311 = vpack.c.b16 %v2132, %v2132
  %v2312 = vpack.c.b16 %v2133, %v2133
  %v2313 = vpack.c.b16 %v2134, %v2134
  %v2314 = vpack.c.b16 %v2135, %v2135
  %v2315 = vpack.c.b16 %v2136, %v2136
  %v2316 = vpack.c.b16 %v2137, %v2137
  %v2317 = vpack.c.b16 %v2138, %v2138
  %v2318 = vpack.c.b16 %v2139, %v2139
  %v2319 = vpack.c.b16 %v2140, %v2140
  %v2320 = vpack.c.b16 %v2141, %v2141
  %v2321 = vpack.c.b16 %v2142, %v2142
  %v2322 = vpack.c.b16 %v2143, %v2143
  %v2323 = vpack.c.b16 %v2144, %v2144
  %v2324 = vpack.c.b16 %v2145, %v2145
  %v2325 = vpack.c.b16 %v2146, %v2146
  %v2326 = vpack.c.b16 %v2147, %v2147
  %v2327 = vpack.c.b16 %v2148, %v2148
  %v2328 = vpack.c.b16 %v2149, %v2149
  %v2329 = vpack.c.b16 %v2150, %v2150
  %v2330 = vpack.c.b16 %v2151, %v2151
  %v2331 = vpack.c.b16 %v2152, %v2152
  %v2332 = vpack.c.b16 %v2153, %v2153
  %v2333 = vpack.c.b16 %v2154, %v2154
  %v2334 = vpack.c.b16 %v2155, %v2155
  %v2335 = vpack.c.b16 %v2156, %v2156
  %v2336 = vpack.c.b16 %v2157, %v2157
  %v2337 = vpack.c.b16 %v2158, %v2158
  %v2338 = vpack.c.b16 %v2159, %v2159
  %v2339 = vpack.c.b16 %v2160, %v2160
  %v2340 = vpack.c.b16 %v2161, %v2161
  %v2341 = vpack.c.b16 %v2162, %v2162
  %v2342 = vpack.c.b16 %v2163, %v2163
  %v2343 = vpack.c.b16 %v2164, %v2164
  %v2344 = vpack.c.b16 %v2165, %v2165
  %v2345 = vpack.c.b16 %v2166, %v2166
  %v2346 = vpack.c.b16 %v2167, %v2167
  %v2347 = vpack.c.b16 %v2168, %v2168
  %v2348 = vpack.c.b16 %v2169, %v2169
  %v2349 = vpack.c.b16 %v2170, %v2170
  %v2350 = vpack.c.b16 %v2171, %v2171
  %v2351 = vpack.c.b16 %v2172, %v2172
  %v2352 = vpack.c.b16 %v2173, %v2173
  %v2353 = vpack.c.b16 %v2174, %v2174
  %v2354 = vpack.c.b16 %v2175, %v2175
  %v2355 = vpack.c.b16 %v2176, %v2176
  %v2356 = vpack.c.b16 %v2177, %v2177
  %v2357 = vpack.c.b16 %v2178, %v2178
  %v2358 = vpack.c.b16 %v2179, %v2179
  %v2359 = vpack.c.b16 %v2180, %v2180
  %v2360 = vpack.c.b16 %v2181, %v2181
  %v2361 = vpack.c.b16 %v2182, %v2182
  %v2362 = vpack.c.b16 %v2183, %v2183
  %v2363 = vpack.c.b16 %v2184, %v2184
  %v2364 = vpack.c.b16 %v2185, %v2185
  %v2365 = vpack.c.b16 %v2186, %v2186
  %v2366 = vpack.c.b16 %v2187, %v2187
  %v2367 = vpack.c.b16 %v2188, %v2188
  %v2368 = vpack.c.b16 %v2189, %v2189
  %v2369 = vpack.c.b16 %v2190, %v2190
  %v2370 = vpack.c.b16 %v2191, %v2191
  %v2371 = vpack.c.b16 %v2192, %v2192
  %v2372 = vpack.c.b16 %v2193, %v2193
  %v2373 = vpack.c.b16 %v2194, %v2194
  %v2374 = vpack.c.b16 %v2195, %v2195
  %v2375 = vpack.c.b16 %v2196, %v2196
  %v2376 = vpack.c.b16 %v2197, %v2197
  %v2377 = vpack.c.b16 %v2198, %v2198
  %v2378 = vpack.c.b16 %v2199, %v2199
  %v2379 = vpack.c.b16 %v2200, %v2200
  %v2380 = vpack.c.b16 %v2201, %v2201
  %v2381 = vpack.c.b16 %v2202, %v2202
  %v2382 = vpack.c.b16 %v2203, %v2203
  %v2383 = vpack.c.b16 %v2204, %v2204
  %v2384 = vpack.c.b16 %v2205, %v2205
  %v2385 = vpack.c.b16 %v2206, %v2206
  %v2386 = vpack.c.b16 %v2207, %v2207
  %v2387 = vpack.c.b16 %v2208, %v2208
  %v2388 = vpack.c.b16 %v2209, %v2209
  %v2389 = vpack.c.b16 %v2210, %v2210
  %v2390 = vpack.c.b16 %v2211, %v2211
  %v2391 = vpack.c.b16 %v2212, %v2212
  %v2392 = vpack.c.b16 %v2213, %v2213
  %v2393 = vpack.c.b16 %v2214, %v2214
  %v2394 = vpack.c.b16 %v2215, %v2215
  %v2395 = vpack.c.b16 %v2216, %v2216
  %v2396 = vpack.c.b16 %v2217, %v2217
  %v2397 = vpack.c.b16 %v2218, %v2218
  %v2398 = vpack.c.b16 %v2219, %v2219
  %v2399 = vpack.c.b16 %v2220, %v2220
  %v2400 = vpack.c.b16 %v2221, %v2221
  %v2401 = vpack.c.b16 %v2222, %v2222
  %v2402 = vpack.c.b16 %v2223, %v2223
  %v2403 = vpack.c.b16 %v2224, %v2224
  %v2404 = vpack.c.b16 %v2225, %v2225
  %v2405 = vpack.c.b16 %v2226, %v2226
  %v2406 = vpack.c.b16 %v2227, %v2227
  %v2407 = vpack.c.b16 %v2228, %v2228
  %v2408 = vpack.c.b16 %v2229, %v2229
  %v2409 = vpack.c.b16 %v2230, %v2230
  %v2410 = vpack.c.b16 %v2231, %v2231
  %v2411 = vpack.c.b16 %v2232, %v2232
  %v2412 = vpack.c.b16 %v2233, %v2233
  %v2413 = vpack.c.b16 %v2234, %v2234
  %v2414 = vpack.c.b16 %v2235, %v2235
  %v2415 = vpack.c.b16 %v2236, %v2236
  %v2416 = vpack.c.b16 %v2237, %v2237
  %v2417 = vpack.c.b16 %v2238, %v2238
  %v2418 = vpack.c.b16 %v2239, %v2239
  %v2419 = vpack.c.b16 %v2240, %v2240
  %v2420 = vpack.c.b16 %v2241, %v2241
  %vm2600 = vcmask 257024
  %2601 = vst.msk [vmem:[%s3] sm:$0xf] %vm2600, %v2242
  %2602 = vst.msk [vmem:[%s3 + $0x4] sm:$0xf] %vm2600, %v2243
  %2603 = vst.msk [vmem:[%s3 + $0x8] sm:$0xf] %vm2600, %v2244
  %2604 = vst.msk [vmem:[%s3 + $0xc] sm:$0xf] %vm2600, %v2245
  %2605 = vst.msk [vmem:[%s3 + $0x10] sm:$0xf] %vm2600, %v2246
  %2606 = vst.msk [vmem:[%s3 + $0x14] sm:$0xf] %vm2600, %v2247
  %2607 = vst.msk [vmem:[%s3 + $0x18] sm:$0xf] %vm2600, %v2248
  %2608 = vst.msk [vmem:[%s3 + $0x1c] sm:$0xf] %vm2600, %v2249
  %2609 = vst.msk [vmem:[%s3 + $0x20] sm:$0xf] %vm2600, %v2250
  %2610 = vst.msk [vmem:[%s3 + $0x24] sm:$0xf] %vm2600, %v2251
  %2611 = vst.msk [vmem:[%s3 + $0x28] sm:$0xf] %vm2600, %v2252
  %2612 = vst.msk [vmem:[%s3 + $0x2c] sm:$0xf] %vm2600, %v2253
  %2613 = vst.msk [vmem:[%s3 + $0x30] sm:$0xf] %vm2600, %v2254
  %2614 = vst.msk [vmem:[%s3 + $0x34] sm:$0xf] %vm2600, %v2255
  %2615 = vst.msk [vmem:[%s3 + $0x38] sm:$0xf] %vm2600, %v2256
  %2616 = vst.msk [vmem:[%s3 + $0x3c] sm:$0xf] %vm2600, %v2257
  %2617 = vst.msk [vmem:[%s3 + $0x40] sm:$0xf] %vm2600, %v2258
  %2618 = vst.msk [vmem:[%s3 + $0x44] sm:$0xf] %vm2600, %v2259
  %2619 = vst.msk [vmem:[%s3 + $0x48] sm:$0xf] %vm2600, %v2260
  %2620 = vst.msk [vmem:[%s3 + $0x4c] sm:$0xf] %vm2600, %v2261
  %2621 = vst.msk [vmem:[%s3 + $0x50] sm:$0xf] %vm2600, %v2262
  %2622 = vst.msk [vmem:[%s3 + $0x54] sm:$0xf] %vm2600, %v2263
  %2623 = vst.msk [vmem:[%s3 + $0x58] sm:$0xf] %vm2600, %v2264
  %2624 = vst.msk [vmem:[%s3 + $0x5c] sm:$0xf] %vm2600, %v2265
  %2625 = vst.msk [vmem:[%s3 + $0x60] sm:$0xf] %vm2600, %v2266
  %2626 = vst.msk [vmem:[%s3 + $0x64] sm:$0xf] %vm2600, %v2267
  %2627 = vst.msk [vmem:[%s3 + $0x68] sm:$0xf] %vm2600, %v2268
  %2628 = vst.msk [vmem:[%s3 + $0x6c] sm:$0xf] %vm2600, %v2269
  %2629 = vst.msk [vmem:[%s3 + $0x70] sm:$0xf] %vm2600, %v2270
  %2630 = vst.msk [vmem:[%s3 + $0x74] sm:$0xf] %vm2600, %v2271
  %2631 = vst.msk [vmem:[%s3 + $0x78] sm:$0xf] %vm2600, %v2272
  %2632 = vst.msk [vmem:[%s3 + $0x7c] sm:$0xf] %vm2600, %v2273
  %2633 = vst.msk [vmem:[%s3 + $0x80] sm:$0xf] %vm2600, %v2274
  %2634 = vst.msk [vmem:[%s3 + $0x84] sm:$0xf] %vm2600, %v2275
  %2635 = vst.msk [vmem:[%s3 + $0x88] sm:$0xf] %vm2600, %v2276
  %2636 = vst.msk [vmem:[%s3 + $0x8c] sm:$0xf] %vm2600, %v2277
  %2637 = vst.msk [vmem:[%s3 + $0x90] sm:$0xf] %vm2600, %v2278
  %2638 = vst.msk [vmem:[%s3 + $0x94] sm:$0xf] %vm2600, %v2279
  %2639 = vst.msk [vmem:[%s3 + $0x98] sm:$0xf] %vm2600, %v2280
  %2640 = vst.msk [vmem:[%s3 + $0x9c] sm:$0xf] %vm2600, %v2281
  %2641 = vst.msk [vmem:[%s3 + $0xa0] sm:$0xf] %vm2600, %v2282
  %2642 = vst.msk [vmem:[%s3 + $0xa4] sm:$0xf] %vm2600, %v2283
  %2643 = vst.msk [vmem:[%s3 + $0xa8] sm:$0xf] %vm2600, %v2284
  %2644 = vst.msk [vmem:[%s3 + $0xac] sm:$0xf] %vm2600, %v2285
  %2645 = vst.msk [vmem:[%s3 + $0xb0] sm:$0xf] %vm2600, %v2286
  %2646 = vst.msk [vmem:[%s3 + $0xb4] sm:$0xf] %vm2600, %v2287
  %2647 = vst.msk [vmem:[%s3 + $0xb8] sm:$0xf] %vm2600, %v2288
  %2648 = vst.msk [vmem:[%s3 + $0xbc] sm:$0xf] %vm2600, %v2289
  %2649 = vst.msk [vmem:[%s3 + $0xc0] sm:$0xf] %vm2600, %v2290
  %2650 = vst.msk [vmem:[%s3 + $0xc4] sm:$0xf] %vm2600, %v2291
  %2651 = vst.msk [vmem:[%s3 + $0xc8] sm:$0xf] %vm2600, %v2292
  %2652 = vst.msk [vmem:[%s3 + $0xcc] sm:$0xf] %vm2600, %v2293
  %2653 = vst.msk [vmem:[%s3 + $0xd0] sm:$0xf] %vm2600, %v2294
  %2654 = vst.msk [vmem:[%s3 + $0xd4] sm:$0xf] %vm2600, %v2295
  %2655 = vst.msk [vmem:[%s3 + $0xd8] sm:$0xf] %vm2600, %v2296
  %2656 = vst.msk [vmem:[%s3 + $0xdc] sm:$0xf] %vm2600, %v2297
  %2657 = vst.msk [vmem:[%s3 + $0xe0] sm:$0xf] %vm2600, %v2298
  %2658 = vst.msk [vmem:[%s3 + $0xe4] sm:$0xf] %vm2600, %v2299
  %2659 = vst.msk [vmem:[%s3 + $0xe8] sm:$0xf] %vm2600, %v2300
  %2660 = vst.msk [vmem:[%s3 + $0xec] sm:$0xf] %vm2600, %v2301
  %2661 = vst.msk [vmem:[%s3 + $0xf0] sm:$0xf] %vm2600, %v2302
  %2662 = vst.msk [vmem:[%s3 + $0xf4] sm:$0xf] %vm2600, %v2303
  %2663 = vst.msk [vmem:[%s3 + $0xf8] sm:$0xf] %vm2600, %v2304
  %2664 = vst.msk [vmem:[%s3 + $0xfc] sm:$0xf] %vm2600, %v2305
  %2665 = vst.msk [vmem:[%s3 + $0x100] sm:$0xf] %vm2600, %v2306
  %2666 = vst.msk [vmem:[%s3 + $0x104] sm:$0xf] %vm2600, %v2307
  %2667 = vst.msk [vmem:[%s3 + $0x108] sm:$0xf] %vm2600, %v2308
  %2668 = vst.msk [vmem:[%s3 + $0x10c] sm:$0xf] %vm2600, %v2309
  %2669 = vst.msk [vmem:[%s3 + $0x110] sm:$0xf] %vm2600, %v2310
  %2670 = vst.msk [vmem:[%s3 + $0x114] sm:$0xf] %vm2600, %v2311
  %2671 = vst.msk [vmem:[%s3 + $0x118] sm:$0xf] %vm2600, %v2312
  %2672 = vst.msk [vmem:[%s3 + $0x11c] sm:$0xf] %vm2600, %v2313
  %2673 = vst.msk [vmem:[%s3 + $0x120] sm:$0xf] %vm2600, %v2314
  %2674 = vst.msk [vmem:[%s3 + $0x124] sm:$0xf] %vm2600, %v2315
  %2675 = vst.msk [vmem:[%s3 + $0x128] sm:$0xf] %vm2600, %v2316
  %2676 = vst.msk [vmem:[%s3 + $0x12c] sm:$0xf] %vm2600, %v2317
  %2677 = vst.msk [vmem:[%s3 + $0x130] sm:$0xf] %vm2600, %v2318
  %2678 = vst.msk [vmem:[%s3 + $0x134] sm:$0xf] %vm2600, %v2319
  %2679 = vst.msk [vmem:[%s3 + $0x138] sm:$0xf] %vm2600, %v2320
  %2680 = vst.msk [vmem:[%s3 + $0x13c] sm:$0xf] %vm2600, %v2321
  %2681 = vst.msk [vmem:[%s3 + $0x140] sm:$0xf] %vm2600, %v2322
  %2682 = vst.msk [vmem:[%s3 + $0x144] sm:$0xf] %vm2600, %v2323
  %2683 = vst.msk [vmem:[%s3 + $0x148] sm:$0xf] %vm2600, %v2324
  %2684 = vst.msk [vmem:[%s3 + $0x14c] sm:$0xf] %vm2600, %v2325
  %2685 = vst.msk [vmem:[%s3 + $0x150] sm:$0xf] %vm2600, %v2326
  %2686 = vst.msk [vmem:[%s3 + $0x154] sm:$0xf] %vm2600, %v2327
  %2687 = vst.msk [vmem:[%s3 + $0x158] sm:$0xf] %vm2600, %v2328
  %2688 = vst.msk [vmem:[%s3 + $0x15c] sm:$0xf] %vm2600, %v2329
  %2689 = vst.msk [vmem:[%s3 + $0x160] sm:$0xf] %vm2600, %v2330
  %2690 = vst.msk [vmem:[%s3 + $0x164] sm:$0xf] %vm2600, %v2331
  %2691 = vst.msk [vmem:[%s3 + $0x168] sm:$0xf] %vm2600, %v2332
  %2692 = vst.msk [vmem:[%s3 + $0x16c] sm:$0xf] %vm2600, %v2333
  %2693 = vst.msk [vmem:[%s3 + $0x170] sm:$0xf] %vm2600, %v2334
  %2694 = vst.msk [vmem:[%s3 + $0x174] sm:$0xf] %vm2600, %v2335
  %2695 = vst.msk [vmem:[%s3 + $0x178] sm:$0xf] %vm2600, %v2336
  %2696 = vst.msk [vmem:[%s3 + $0x17c] sm:$0xf] %vm2600, %v2337
  %2697 = vst.msk [vmem:[%s3 + $0x180] sm:$0xf] %vm2600, %v2338
  %2698 = vst.msk [vmem:[%s3 + $0x184] sm:$0xf] %vm2600, %v2339
  %2699 = vst.msk [vmem:[%s3 + $0x188] sm:$0xf] %vm2600, %v2340
  %2700 = vst.msk [vmem:[%s3 + $0x18c] sm:$0xf] %vm2600, %v2341
  %2701 = vst.msk [vmem:[%s3 + $0x190] sm:$0xf] %vm2600, %v2342
  %2702 = vst.msk [vmem:[%s3 + $0x194] sm:$0xf] %vm2600, %v2343
  %2703 = vst.msk [vmem:[%s3 + $0x198] sm:$0xf] %vm2600, %v2344
  %2704 = vst.msk [vmem:[%s3 + $0x19c] sm:$0xf] %vm2600, %v2345
  %2705 = vst.msk [vmem:[%s3 + $0x1a0] sm:$0xf] %vm2600, %v2346
  %2706 = vst.msk [vmem:[%s3 + $0x1a4] sm:$0xf] %vm2600, %v2347
  %2707 = vst.msk [vmem:[%s3 + $0x1a8] sm:$0xf] %vm2600, %v2348
  %2708 = vst.msk [vmem:[%s3 + $0x1ac] sm:$0xf] %vm2600, %v2349
  %2709 = vst.msk [vmem:[%s3 + $0x1b0] sm:$0xf] %vm2600, %v2350
  %2710 = vst.msk [vmem:[%s3 + $0x1b4] sm:$0xf] %vm2600, %v2351
  %2711 = vst.msk [vmem:[%s3 + $0x1b8] sm:$0xf] %vm2600, %v2352
  %2712 = vst.msk [vmem:[%s3 + $0x1bc] sm:$0xf] %vm2600, %v2353
  %2713 = vst.msk [vmem:[%s3 + $0x1c0] sm:$0xf] %vm2600, %v2354
  %2714 = vst.msk [vmem:[%s3 + $0x1c4] sm:$0xf] %vm2600, %v2355
  %2715 = vst.msk [vmem:[%s3 + $0x1c8] sm:$0xf] %vm2600, %v2356
  %2716 = vst.msk [vmem:[%s3 + $0x1cc] sm:$0xf] %vm2600, %v2357
  %2717 = vst.msk [vmem:[%s3 + $0x1d0] sm:$0xf] %vm2600, %v2358
  %2718 = vst.msk [vmem:[%s3 + $0x1d4] sm:$0xf] %vm2600, %v2359
  %2719 = vst.msk [vmem:[%s3 + $0x1d8] sm:$0xf] %vm2600, %v2360
  %2720 = vst.msk [vmem:[%s3 + $0x1dc] sm:$0xf] %vm2600, %v2361
  %2721 = vst.msk [vmem:[%s3 + $0x1e0] sm:$0xf] %vm2600, %v2362
  %2722 = vst.msk [vmem:[%s3 + $0x1e4] sm:$0xf] %vm2600, %v2363
  %2723 = vst.msk [vmem:[%s3 + $0x1e8] sm:$0xf] %vm2600, %v2364
  %2724 = vst.msk [vmem:[%s3 + $0x1ec] sm:$0xf] %vm2600, %v2365
  %2725 = vst.msk [vmem:[%s3 + $0x1f0] sm:$0xf] %vm2600, %v2366
  %2726 = vst.msk [vmem:[%s3 + $0x1f4] sm:$0xf] %vm2600, %v2367
  %2727 = vst.msk [vmem:[%s3 + $0x1f8] sm:$0xf] %vm2600, %v2368
  %2728 = vst.msk [vmem:[%s3 + $0x1fc] sm:$0xf] %vm2600, %v2369
  %2729 = vst.msk [vmem:[%s3 + $0x200] sm:$0xf] %vm2600, %v2370
  %2730 = vst.msk [vmem:[%s3 + $0x204] sm:$0xf] %vm2600, %v2371
  %2731 = vst.msk [vmem:[%s3 + $0x208] sm:$0xf] %vm2600, %v2372
  %2732 = vst.msk [vmem:[%s3 + $0x20c] sm:$0xf] %vm2600, %v2373
  %2733 = vst.msk [vmem:[%s3 + $0x210] sm:$0xf] %vm2600, %v2374
  %2734 = vst.msk [vmem:[%s3 + $0x214] sm:$0xf] %vm2600, %v2375
  %2735 = vst.msk [vmem:[%s3 + $0x218] sm:$0xf] %vm2600, %v2376
  %2736 = vst.msk [vmem:[%s3 + $0x21c] sm:$0xf] %vm2600, %v2377
  %2737 = vst.msk [vmem:[%s3 + $0x220] sm:$0xf] %vm2600, %v2378
  %2738 = vst.msk [vmem:[%s3 + $0x224] sm:$0xf] %vm2600, %v2379
  %2739 = vst.msk [vmem:[%s3 + $0x228] sm:$0xf] %vm2600, %v2380
  %2740 = vst.msk [vmem:[%s3 + $0x22c] sm:$0xf] %vm2600, %v2381
  %2741 = vst.msk [vmem:[%s3 + $0x230] sm:$0xf] %vm2600, %v2382
  %2742 = vst.msk [vmem:[%s3 + $0x234] sm:$0xf] %vm2600, %v2383
  %2743 = vst.msk [vmem:[%s3 + $0x238] sm:$0xf] %vm2600, %v2384
  %2744 = vst.msk [vmem:[%s3 + $0x23c] sm:$0xf] %vm2600, %v2385
  %2745 = vst.msk [vmem:[%s3 + $0x240] sm:$0xf] %vm2600, %v2386
  %2746 = vst.msk [vmem:[%s3 + $0x244] sm:$0xf] %vm2600, %v2387
  %2747 = vst.msk [vmem:[%s3 + $0x248] sm:$0xf] %vm2600, %v2388
  %2748 = vst.msk [vmem:[%s3 + $0x24c] sm:$0xf] %vm2600, %v2389
  %2749 = vst.msk [vmem:[%s3 + $0x250] sm:$0xf] %vm2600, %v2390
  %2750 = vst.msk [vmem:[%s3 + $0x254] sm:$0xf] %vm2600, %v2391
  %2751 = vst.msk [vmem:[%s3 + $0x258] sm:$0xf] %vm2600, %v2392
  %2752 = vst.msk [vmem:[%s3 + $0x25c] sm:$0xf] %vm2600, %v2393
  %2753 = vst.msk [vmem:[%s3 + $0x260] sm:$0xf] %vm2600, %v2394
  %2754 = vst.msk [vmem:[%s3 + $0x264] sm:$0xf] %vm2600, %v2395
  %2755 = vst.msk [vmem:[%s3 + $0x268] sm:$0xf] %vm2600, %v2396
  %2756 = vst.msk [vmem:[%s3 + $0x26c] sm:$0xf] %vm2600, %v2397
  %2757 = vst.msk [vmem:[%s3 + $0x270] sm:$0xf] %vm2600, %v2398
  %2758 = vst.msk [vmem:[%s3 + $0x274] sm:$0xf] %vm2600, %v2399
  %2759 = vst.msk [vmem:[%s3 + $0x278] sm:$0xf] %vm2600, %v2400
  %2760 = vst.msk [vmem:[%s3 + $0x27c] sm:$0xf] %vm2600, %v2401
  %2761 = vst.msk [vmem:[%s3 + $0x280] sm:$0xf] %vm2600, %v2402
  %2762 = vst.msk [vmem:[%s3 + $0x284] sm:$0xf] %vm2600, %v2403
  %2763 = vst.msk [vmem:[%s3 + $0x288] sm:$0xf] %vm2600, %v2404
  %2764 = vst.msk [vmem:[%s3 + $0x28c] sm:$0xf] %vm2600, %v2405
  %2765 = vst.msk [vmem:[%s3 + $0x290] sm:$0xf] %vm2600, %v2406
  %2766 = vst.msk [vmem:[%s3 + $0x294] sm:$0xf] %vm2600, %v2407
  %2767 = vst.msk [vmem:[%s3 + $0x298] sm:$0xf] %vm2600, %v2408
  %2768 = vst.msk [vmem:[%s3 + $0x29c] sm:$0xf] %vm2600, %v2409
  %2769 = vst.msk [vmem:[%s3 + $0x2a0] sm:$0xf] %vm2600, %v2410
  %2770 = vst.msk [vmem:[%s3 + $0x2a4] sm:$0xf] %vm2600, %v2411
  %2771 = vst.msk [vmem:[%s3 + $0x2a8] sm:$0xf] %vm2600, %v2412
  %2772 = vst.msk [vmem:[%s3 + $0x2ac] sm:$0xf] %vm2600, %v2413
  %2773 = vst.msk [vmem:[%s3 + $0x2b0] sm:$0xf] %vm2600, %v2414
  %2774 = vst.msk [vmem:[%s3 + $0x2b4] sm:$0xf] %vm2600, %v2415
  %2775 = vst.msk [vmem:[%s3 + $0x2b8] sm:$0xf] %vm2600, %v2416
  %2776 = vst.msk [vmem:[%s3 + $0x2bc] sm:$0xf] %vm2600, %v2417
  %2777 = vst.msk [vmem:[%s3 + $0x2c0] sm:$0xf] %vm2600, %v2418
  %2778 = vst.msk [vmem:[%s3 + $0x2c4] sm:$0xf] %vm2600, %v2419
  %vm2779 = vcmask 253952
  %2780 = vst.msk [vmem:[%s3 + $0x2c8] sm:$0x1] %vm2779, %v2420
  // Predicated region
  $region14: #{actor_critic_forward.4} parent=0 // pred_check
    _
  $region15: #{actor_critic_forward.4} parent=0 // pred_check_branch
    %2782 = sbr.rel (0) target = $region17
  $region16: #{actor_critic_forward.4} parent=0 // pred_region
    _
  $region17: #{actor_critic_forward.4} parent=0 // pred_fallthru
    _
  // Predicated region
  $region18: #{actor_critic_forward.4} parent=0 // pred_check
    _
  $region19: #{actor_critic_forward.4} parent=0 // pred_check_branch
    %2784 = sbr.rel (0) target = $region21
  $region20: #{actor_critic_forward.4} parent=0 // pred_region
    _
  $region21: #{actor_critic_forward.4} parent=0 // pred_fallthru
    _

// kernel: actor_critic_forward.5
$region0: #{actor_critic_forward.5}
  #allocation0 [shape = 'u32[]', space=smem, size = 0x4, offset = 0x4, fixed_abs, tag = 'smem constant byte address 0x4 - core index']
  #allocation1 [shape = 'u32[144,128]{1,0:T(1,128)}', space=vmem, size = 0x12000, scoped, tag = 'internal scratch']
  %s0 = inlined_call_operand.vmem [shape: bf16[280,512], index: 0, kind: input, shape index: {}]
  %s1 = inlined_call_operand.vmem [shape: bf16[512,64], index: 1, kind: input, shape index: {}]
  %s2 = inlined_call_operand.vmem [shape: f32[1,64], index: 2, kind: input, shape index: {}]
  %s3 = inlined_call_operand.vmem [shape: bf16[280,64], index: 3, kind: output, shape index: {}]
  %s4 = sld [smem:[#allocation0]]
  $region22: #{actor_critic_forward.5} parent=0
    _
  %s6 = ssub.s32 1, %s4
  %s7 = scalar_select 0, %s6, %s4
  // Predicated region
  $region2: #{actor_critic_forward.5} parent=0 // pred_check
    _
  $region3: #{actor_critic_forward.5} parent=0 // pred_check_branch
    %9 = sbr.rel (0) target = $region5
  $region4: #{actor_critic_forward.5} parent=0 // pred_region
    _
  $region5: #{actor_critic_forward.5} parent=0 // pred_fallthru
    _
  // Predicated region
  $region6: #{actor_critic_forward.5} parent=0 // pred_check
    _
  $region7: #{actor_critic_forward.5} parent=0 // pred_check_branch
    %11 = sbr.rel (0) target = $region9
  $region8: #{actor_critic_forward.5} parent=0 // pred_region
    _
  $region9: #{actor_critic_forward.5} parent=0 // pred_fallthru
    _
  // Predicated region
  $region10: #{actor_critic_forward.5} parent=0 // pred_check
    _
  $region11: #{actor_critic_forward.5} parent=0 // pred_check_branch
    %13 = sbr.rel (0) target = $region13
  $region12: #{actor_critic_forward.5} parent=0 // pred_region
    _
  $region13: #{actor_critic_forward.5} parent=0 // pred_fallthru
    _
  %v15 = vld [vmem:[%s0] sm:$0xff]
  %v16 = vld [vmem:[%s0 + $0x8] sm:$0xff]
  %v17 = vld [vmem:[%s0 + $0x10] sm:$0xff]
  %v18 = vld [vmem:[%s0 + $0x18] sm:$0xff]
  %v19 = vld [vmem:[%s0 + $0x20] sm:$0xff]
  %v20 = vld [vmem:[%s0 + $0x28] sm:$0xff]
  %v21 = vld [vmem:[%s0 + $0x30] sm:$0xff]
  %v22 = vld [vmem:[%s0 + $0x38] sm:$0xff]
  %v23 = vld [vmem:[%s0 + $0x40] sm:$0xff]
  %v24 = vld [vmem:[%s0 + $0x48] sm:$0xff]
  %v25 = vld [vmem:[%s0 + $0x50] sm:$0xff]
  %v26 = vld [vmem:[%s0 + $0x58] sm:$0xff]
  %v27 = vld [vmem:[%s0 + $0x60] sm:$0xff]
  %v28 = vld [vmem:[%s0 + $0x68] sm:$0xff]
  %v29 = vld [vmem:[%s0 + $0x70] sm:$0xff]
  %v30 = vld [vmem:[%s0 + $0x78] sm:$0xff]
  %v31 = vld [vmem:[%s0 + $0x80] sm:$0xff]
  %v32 = vld [vmem:[%s0 + $0x88] sm:$0xff]
  %v33 = vld [vmem:[%s0 + $0x90] sm:$0xff]
  %v34 = vld [vmem:[%s0 + $0x98] sm:$0xff]
  %v35 = vld [vmem:[%s0 + $0xa0] sm:$0xff]
  %v36 = vld [vmem:[%s0 + $0xa8] sm:$0xff]
  %v37 = vld [vmem:[%s0 + $0xb0] sm:$0xff]
  %v38 = vld [vmem:[%s0 + $0xb8] sm:$0xff]
  %v39 = vld [vmem:[%s0 + $0xc0] sm:$0xff]
  %v40 = vld [vmem:[%s0 + $0xc8] sm:$0xff]
  %v41 = vld [vmem:[%s0 + $0xd0] sm:$0xff]
  %v42 = vld [vmem:[%s0 + $0xd8] sm:$0xff]
  %v43 = vld [vmem:[%s0 + $0xe0] sm:$0xff]
  %v44 = vld [vmem:[%s0 + $0xe8] sm:$0xff]
  %v45 = vld [vmem:[%s0 + $0xf0] sm:$0xff]
  %v46 = vld [vmem:[%s0 + $0xf8] sm:$0xff]
  %v47 = vld [vmem:[%s0 + $0x100] sm:$0xff]
  %v48 = vld [vmem:[%s0 + $0x108] sm:$0xff]
  %v49 = vld [vmem:[%s0 + $0x110] sm:$0xff]
  %v50 = vld [vmem:[%s0 + $0x118] sm:$0xff]
  %v51 = vld [vmem:[%s0 + $0x120] sm:$0xff]
  %v52 = vld [vmem:[%s0 + $0x128] sm:$0xff]
  %v53 = vld [vmem:[%s0 + $0x130] sm:$0xff]
  %v54 = vld [vmem:[%s0 + $0x138] sm:$0xff]
  %v55 = vld [vmem:[%s0 + $0x140] sm:$0xff]
  %v56 = vld [vmem:[%s0 + $0x148] sm:$0xff]
  %v57 = vld [vmem:[%s0 + $0x150] sm:$0xff]
  %v58 = vld [vmem:[%s0 + $0x158] sm:$0xff]
  %v59 = vld [vmem:[%s0 + $0x160] sm:$0xff]
  %v60 = vld [vmem:[%s0 + $0x168] sm:$0xff]
  %v61 = vld [vmem:[%s0 + $0x170] sm:$0xff]
  %v62 = vld [vmem:[%s0 + $0x178] sm:$0xff]
  %v63 = vld [vmem:[%s0 + $0x180] sm:$0xff]
  %v64 = vld [vmem:[%s0 + $0x188] sm:$0xff]
  %v65 = vld [vmem:[%s0 + $0x190] sm:$0xff]
  %v66 = vld [vmem:[%s0 + $0x198] sm:$0xff]
  %v67 = vld [vmem:[%s0 + $0x1a0] sm:$0xff]
  %v68 = vld [vmem:[%s0 + $0x1a8] sm:$0xff]
  %v69 = vld [vmem:[%s0 + $0x1b0] sm:$0xff]
  %v70 = vld [vmem:[%s0 + $0x1b8] sm:$0xff]
  %v71 = vld [vmem:[%s0 + $0x1c0] sm:$0xff]
  %v72 = vld [vmem:[%s0 + $0x1c8] sm:$0xff]
  %v73 = vld [vmem:[%s0 + $0x1d0] sm:$0xff]
  %v74 = vld [vmem:[%s0 + $0x1d8] sm:$0xff]
  %v75 = vld [vmem:[%s0 + $0x1e0] sm:$0xff]
  %v76 = vld [vmem:[%s0 + $0x1e8] sm:$0xff]
  %v77 = vld [vmem:[%s0 + $0x1f0] sm:$0xff]
  %v78 = vld [vmem:[%s0 + $0x1f8] sm:$0xff]
  %v79 = vld [vmem:[%s0 + $0x200] sm:$0xff]
  %v80 = vld [vmem:[%s0 + $0x208] sm:$0xff]
  %v81 = vld [vmem:[%s0 + $0x210] sm:$0xff]
  %v82 = vld [vmem:[%s0 + $0x218] sm:$0xff]
  %v83 = vld [vmem:[%s0 + $0x220] sm:$0xff]
  %v84 = vld [vmem:[%s0 + $0x228] sm:$0xff]
  %v85 = vld [vmem:[%s1] sm:$0xf]
  %v86 = vld [vmem:[%s1 + $0x4] sm:$0xf]
  %v87 = vld [vmem:[%s1 + $0x8] sm:$0xf]
  %v88 = vld [vmem:[%s1 + $0xc] sm:$0xf]
  %v89 = vld [vmem:[%s1 + $0x10] sm:$0xf]
  %v90 = vld [vmem:[%s1 + $0x14] sm:$0xf]
  %v91 = vld [vmem:[%s1 + $0x18] sm:$0xf]
  %v92 = vld [vmem:[%s1 + $0x1c] sm:$0xf]
  %v93 = vld [vmem:[%s1 + $0x20] sm:$0xf]
  %v94 = vld [vmem:[%s1 + $0x24] sm:$0xf]
  %v95 = vld [vmem:[%s1 + $0x28] sm:$0xf]
  %v96 = vld [vmem:[%s1 + $0x2c] sm:$0xf]
  %v97 = vld [vmem:[%s1 + $0x30] sm:$0xf]
  %v98 = vld [vmem:[%s1 + $0x34] sm:$0xf]
  %v99 = vld [vmem:[%s1 + $0x38] sm:$0xf]
  %v100 = vld [vmem:[%s1 + $0x3c] sm:$0xf]
  %v101 = vld [vmem:[%s1 + $0x40] sm:$0xf]
  %v102 = vld [vmem:[%s1 + $0x44] sm:$0xf]
  %v103 = vld [vmem:[%s1 + $0x48] sm:$0xf]
  %v104 = vld [vmem:[%s1 + $0x4c] sm:$0xf]
  %v105 = vld [vmem:[%s1 + $0x50] sm:$0xf]
  %v106 = vld [vmem:[%s1 + $0x54] sm:$0xf]
  %v107 = vld [vmem:[%s1 + $0x58] sm:$0xf]
  %v108 = vld [vmem:[%s1 + $0x5c] sm:$0xf]
  %v109 = vld [vmem:[%s1 + $0x60] sm:$0xf]
  %v110 = vld [vmem:[%s1 + $0x64] sm:$0xf]
  %v111 = vld [vmem:[%s1 + $0x68] sm:$0xf]
  %v112 = vld [vmem:[%s1 + $0x6c] sm:$0xf]
  %v113 = vld [vmem:[%s1 + $0x70] sm:$0xf]
  %v114 = vld [vmem:[%s1 + $0x74] sm:$0xf]
  %v115 = vld [vmem:[%s1 + $0x78] sm:$0xf]
  %v116 = vld [vmem:[%s1 + $0x7c] sm:$0xf]
  %v117 = vld [vmem:[%s1 + $0x80] sm:$0xf]
  %v118 = vld [vmem:[%s1 + $0x84] sm:$0xf]
  %v119 = vld [vmem:[%s1 + $0x88] sm:$0xf]
  %v120 = vld [vmem:[%s1 + $0x8c] sm:$0xf]
  %v121 = vld [vmem:[%s1 + $0x90] sm:$0xf]
  %v122 = vld [vmem:[%s1 + $0x94] sm:$0xf]
  %v123 = vld [vmem:[%s1 + $0x98] sm:$0xf]
  %v124 = vld [vmem:[%s1 + $0x9c] sm:$0xf]
  %v125 = vld [vmem:[%s1 + $0xa0] sm:$0xf]
  %v126 = vld [vmem:[%s1 + $0xa4] sm:$0xf]
  %v127 = vld [vmem:[%s1 + $0xa8] sm:$0xf]
  %v128 = vld [vmem:[%s1 + $0xac] sm:$0xf]
  %v129 = vld [vmem:[%s1 + $0xb0] sm:$0xf]
  %v130 = vld [vmem:[%s1 + $0xb4] sm:$0xf]
  %v131 = vld [vmem:[%s1 + $0xb8] sm:$0xf]
  %v132 = vld [vmem:[%s1 + $0xbc] sm:$0xf]
  %v133 = vld [vmem:[%s1 + $0xc0] sm:$0xf]
  %v134 = vld [vmem:[%s1 + $0xc4] sm:$0xf]
  %v135 = vld [vmem:[%s1 + $0xc8] sm:$0xf]
  %v136 = vld [vmem:[%s1 + $0xcc] sm:$0xf]
  %v137 = vld [vmem:[%s1 + $0xd0] sm:$0xf]
  %v138 = vld [vmem:[%s1 + $0xd4] sm:$0xf]
  %v139 = vld [vmem:[%s1 + $0xd8] sm:$0xf]
  %v140 = vld [vmem:[%s1 + $0xdc] sm:$0xf]
  %v141 = vld [vmem:[%s1 + $0xe0] sm:$0xf]
  %v142 = vld [vmem:[%s1 + $0xe4] sm:$0xf]
  %v143 = vld [vmem:[%s1 + $0xe8] sm:$0xf]
  %v144 = vld [vmem:[%s1 + $0xec] sm:$0xf]
  %v145 = vld [vmem:[%s1 + $0xf0] sm:$0xf]
  %v146 = vld [vmem:[%s1 + $0xf4] sm:$0xf]
  %v147 = vld [vmem:[%s1 + $0xf8] sm:$0xf]
  %v148 = vld [vmem:[%s1 + $0xfc] sm:$0xf]
  %v149 = vld [vmem:[%s2] sm:$0x1]
  %v151 = vlaneseq
  %v152 = vshrl.u32 %v151, 7
  %v153 = vsub.s32 0, %v152
  %v154 = vrot.slane %v149, %v153
  %v226 = vunpack.c.l.b16 %v15
  %v227 = vunpack.c.h.b16 %v15
  %v228 = vunpack.c.l.b16 %v16
  %v229 = vunpack.c.h.b16 %v16
  %v230 = vunpack.c.l.b16 %v17
  %v231 = vunpack.c.h.b16 %v17
  %v232 = vunpack.c.l.b16 %v18
  %v233 = vunpack.c.h.b16 %v18
  %v234 = vunpack.c.l.b16 %v19
  %v235 = vunpack.c.h.b16 %v19
  %v236 = vunpack.c.l.b16 %v20
  %v237 = vunpack.c.h.b16 %v20
  %v238 = vunpack.c.l.b16 %v21
  %v239 = vunpack.c.h.b16 %v21
  %v240 = vunpack.c.l.b16 %v22
  %v241 = vunpack.c.h.b16 %v22
  %v242 = vunpack.c.l.b16 %v23
  %v243 = vunpack.c.h.b16 %v23
  %v244 = vunpack.c.l.b16 %v24
  %v245 = vunpack.c.h.b16 %v24
  %v246 = vunpack.c.l.b16 %v25
  %v247 = vunpack.c.h.b16 %v25
  %v248 = vunpack.c.l.b16 %v26
  %v249 = vunpack.c.h.b16 %v26
  %v250 = vunpack.c.l.b16 %v27
  %v251 = vunpack.c.h.b16 %v27
  %v252 = vunpack.c.l.b16 %v28
  %v253 = vunpack.c.h.b16 %v28
  %v254 = vunpack.c.l.b16 %v29
  %v255 = vunpack.c.h.b16 %v29
  %v256 = vunpack.c.l.b16 %v30
  %v257 = vunpack.c.h.b16 %v30
  %v258 = vunpack.c.l.b16 %v31
  %v259 = vunpack.c.h.b16 %v31
  %v260 = vunpack.c.l.b16 %v32
  %v261 = vunpack.c.h.b16 %v32
  %v262 = vunpack.c.l.b16 %v33
  %v263 = vunpack.c.h.b16 %v33
  %v264 = vunpack.c.l.b16 %v34
  %v265 = vunpack.c.h.b16 %v34
  %v266 = vunpack.c.l.b16 %v35
  %v267 = vunpack.c.h.b16 %v35
  %v268 = vunpack.c.l.b16 %v36
  %v269 = vunpack.c.h.b16 %v36
  %v270 = vunpack.c.l.b16 %v37
  %v271 = vunpack.c.h.b16 %v37
  %v272 = vunpack.c.l.b16 %v38
  %v273 = vunpack.c.h.b16 %v38
  %v274 = vunpack.c.l.b16 %v39
  %v275 = vunpack.c.h.b16 %v39
  %v276 = vunpack.c.l.b16 %v40
  %v277 = vunpack.c.h.b16 %v40
  %v278 = vunpack.c.l.b16 %v41
  %v279 = vunpack.c.h.b16 %v41
  %v280 = vunpack.c.l.b16 %v42
  %v281 = vunpack.c.h.b16 %v42
  %v282 = vunpack.c.l.b16 %v43
  %v283 = vunpack.c.h.b16 %v43
  %v284 = vunpack.c.l.b16 %v44
  %v285 = vunpack.c.h.b16 %v44
  %v286 = vunpack.c.l.b16 %v45
  %v287 = vunpack.c.h.b16 %v45
  %v288 = vunpack.c.l.b16 %v46
  %v289 = vunpack.c.h.b16 %v46
  %v290 = vunpack.c.l.b16 %v47
  %v291 = vunpack.c.h.b16 %v47
  %v292 = vunpack.c.l.b16 %v48
  %v293 = vunpack.c.h.b16 %v48
  %v294 = vunpack.c.l.b16 %v49
  %v295 = vunpack.c.h.b16 %v49
  %v296 = vunpack.c.l.b16 %v50
  %v297 = vunpack.c.h.b16 %v50
  %v298 = vunpack.c.l.b16 %v51
  %v299 = vunpack.c.h.b16 %v51
  %v300 = vunpack.c.l.b16 %v52
  %v301 = vunpack.c.h.b16 %v52
  %v302 = vunpack.c.l.b16 %v53
  %v303 = vunpack.c.h.b16 %v53
  %v304 = vunpack.c.l.b16 %v54
  %v305 = vunpack.c.h.b16 %v54
  %v306 = vunpack.c.l.b16 %v55
  %v307 = vunpack.c.h.b16 %v55
  %v308 = vunpack.c.l.b16 %v56
  %v309 = vunpack.c.h.b16 %v56
  %v310 = vunpack.c.l.b16 %v57
  %v311 = vunpack.c.h.b16 %v57
  %v312 = vunpack.c.l.b16 %v58
  %v313 = vunpack.c.h.b16 %v58
  %v314 = vunpack.c.l.b16 %v59
  %v315 = vunpack.c.h.b16 %v59
  %v316 = vunpack.c.l.b16 %v60
  %v317 = vunpack.c.h.b16 %v60
  %v318 = vunpack.c.l.b16 %v61
  %v319 = vunpack.c.h.b16 %v61
  %v320 = vunpack.c.l.b16 %v62
  %v321 = vunpack.c.h.b16 %v62
  %v322 = vunpack.c.l.b16 %v63
  %v323 = vunpack.c.h.b16 %v63
  %v324 = vunpack.c.l.b16 %v64
  %v325 = vunpack.c.h.b16 %v64
  %v326 = vunpack.c.l.b16 %v65
  %v327 = vunpack.c.h.b16 %v65
  %v328 = vunpack.c.l.b16 %v66
  %v329 = vunpack.c.h.b16 %v66
  %v330 = vunpack.c.l.b16 %v67
  %v331 = vunpack.c.h.b16 %v67
  %v332 = vunpack.c.l.b16 %v68
  %v333 = vunpack.c.h.b16 %v68
  %v334 = vunpack.c.l.b16 %v69
  %v335 = vunpack.c.h.b16 %v69
  %v336 = vunpack.c.l.b16 %v70
  %v337 = vunpack.c.h.b16 %v70
  %v338 = vunpack.c.l.b16 %v71
  %v339 = vunpack.c.h.b16 %v71
  %v340 = vunpack.c.l.b16 %v72
  %v341 = vunpack.c.h.b16 %v72
  %v342 = vunpack.c.l.b16 %v73
  %v343 = vunpack.c.h.b16 %v73
  %v344 = vunpack.c.l.b16 %v74
  %v345 = vunpack.c.h.b16 %v74
  %v346 = vunpack.c.l.b16 %v75
  %v347 = vunpack.c.h.b16 %v75
  %v348 = vunpack.c.l.b16 %v76
  %v349 = vunpack.c.h.b16 %v76
  %v350 = vunpack.c.l.b16 %v77
  %v351 = vunpack.c.h.b16 %v77
  %v352 = vunpack.c.l.b16 %v78
  %v353 = vunpack.c.h.b16 %v78
  %v354 = vunpack.c.l.b16 %v79
  %v355 = vunpack.c.h.b16 %v79
  %v356 = vunpack.c.l.b16 %v80
  %v357 = vunpack.c.h.b16 %v80
  %v358 = vunpack.c.l.b16 %v81
  %v359 = vunpack.c.h.b16 %v81
  %v360 = vunpack.c.l.b16 %v82
  %v361 = vunpack.c.h.b16 %v82
  %v362 = vunpack.c.l.b16 %v83
  %v363 = vunpack.c.h.b16 %v83
  %v364 = vunpack.c.l.b16 %v84
  %v365 = vunpack.c.h.b16 %v84
  %v366 = vpack.c.b16 %v230, %v226
  %v367 = vpack.c.b16 %v231, %v227
  %v368 = vpack.c.b16 %v232, %v228
  %v369 = vpack.c.b16 %v233, %v229
  %v370 = vpack.c.b16 %v238, %v234
  %v371 = vpack.c.b16 %v239, %v235
  %v372 = vpack.c.b16 %v240, %v236
  %v373 = vpack.c.b16 %v241, %v237
  %v374 = vpack.c.b16 %v246, %v242
  %v375 = vpack.c.b16 %v247, %v243
  %v376 = vpack.c.b16 %v248, %v244
  %v377 = vpack.c.b16 %v249, %v245
  %v378 = vpack.c.b16 %v254, %v250
  %v379 = vpack.c.b16 %v255, %v251
  %v380 = vpack.c.b16 %v256, %v252
  %v381 = vpack.c.b16 %v257, %v253
  %v382 = vpack.c.b16 %v262, %v258
  %v383 = vpack.c.b16 %v263, %v259
  %v384 = vpack.c.b16 %v264, %v260
  %v385 = vpack.c.b16 %v265, %v261
  %v386 = vpack.c.b16 %v270, %v266
  %v387 = vpack.c.b16 %v271, %v267
  %v388 = vpack.c.b16 %v272, %v268
  %v389 = vpack.c.b16 %v273, %v269
  %v390 = vpack.c.b16 %v278, %v274
  %v391 = vpack.c.b16 %v279, %v275
  %v392 = vpack.c.b16 %v280, %v276
  %v393 = vpack.c.b16 %v281, %v277
  %v394 = vpack.c.b16 %v286, %v282
  %v395 = vpack.c.b16 %v287, %v283
  %v396 = vpack.c.b16 %v288, %v284
  %v397 = vpack.c.b16 %v289, %v285
  %v398 = vpack.c.b16 %v294, %v290
  %v399 = vpack.c.b16 %v295, %v291
  %v400 = vpack.c.b16 %v296, %v292
  %v401 = vpack.c.b16 %v297, %v293
  %v402 = vpack.c.b16 %v302, %v298
  %v403 = vpack.c.b16 %v303, %v299
  %v404 = vpack.c.b16 %v304, %v300
  %v405 = vpack.c.b16 %v305, %v301
  %v406 = vpack.c.b16 %v310, %v306
  %v407 = vpack.c.b16 %v311, %v307
  %v408 = vpack.c.b16 %v312, %v308
  %v409 = vpack.c.b16 %v313, %v309
  %v410 = vpack.c.b16 %v318, %v314
  %v411 = vpack.c.b16 %v319, %v315
  %v412 = vpack.c.b16 %v320, %v316
  %v413 = vpack.c.b16 %v321, %v317
  %v414 = vpack.c.b16 %v326, %v322
  %v415 = vpack.c.b16 %v327, %v323
  %v416 = vpack.c.b16 %v328, %v324
  %v417 = vpack.c.b16 %v329, %v325
  %v418 = vpack.c.b16 %v334, %v330
  %v419 = vpack.c.b16 %v335, %v331
  %v420 = vpack.c.b16 %v336, %v332
  %v421 = vpack.c.b16 %v337, %v333
  %v422 = vpack.c.b16 %v342, %v338
  %v423 = vpack.c.b16 %v343, %v339
  %v424 = vpack.c.b16 %v344, %v340
  %v425 = vpack.c.b16 %v345, %v341
  %v426 = vpack.c.b16 %v350, %v346
  %v427 = vpack.c.b16 %v351, %v347
  %v428 = vpack.c.b16 %v352, %v348
  %v429 = vpack.c.b16 %v353, %v349
  %v430 = vpack.c.b16 %v358, %v354
  %v431 = vpack.c.b16 %v359, %v355
  %v432 = vpack.c.b16 %v360, %v356
  %v433 = vpack.c.b16 %v361, %v357
  %v434 = vpack.c.b16 %v362, %v362
  %v435 = vpack.c.b16 %v363, %v363
  %v436 = vpack.c.b16 %v364, %v364
  %v437 = vpack.c.b16 %v365, %v365
  %v574 = vunpack.c.l.b16 %v85
  %v575 = vunpack.c.l.b16 %v86
  %v576 = vunpack.c.l.b16 %v87
  %v577 = vunpack.c.l.b16 %v88
  %v578 = vunpack.c.l.b16 %v89
  %v579 = vunpack.c.l.b16 %v90
  %v580 = vunpack.c.l.b16 %v91
  %v581 = vunpack.c.l.b16 %v92
  %v582 = vunpack.c.l.b16 %v93
  %v583 = vunpack.c.l.b16 %v94
  %v584 = vunpack.c.l.b16 %v95
  %v585 = vunpack.c.l.b16 %v96
  %v586 = vunpack.c.l.b16 %v97
  %v587 = vunpack.c.l.b16 %v98
  %v588 = vunpack.c.l.b16 %v99
  %v589 = vunpack.c.l.b16 %v100
  %v590 = vunpack.c.l.b16 %v101
  %v591 = vunpack.c.l.b16 %v102
  %v592 = vunpack.c.l.b16 %v103
  %v593 = vunpack.c.l.b16 %v104
  %v594 = vunpack.c.l.b16 %v105
  %v595 = vunpack.c.l.b16 %v106
  %v596 = vunpack.c.l.b16 %v107
  %v597 = vunpack.c.l.b16 %v108
  %v598 = vunpack.c.l.b16 %v109
  %v599 = vunpack.c.l.b16 %v110
  %v600 = vunpack.c.l.b16 %v111
  %v601 = vunpack.c.l.b16 %v112
  %v602 = vunpack.c.l.b16 %v113
  %v603 = vunpack.c.l.b16 %v114
  %v604 = vunpack.c.l.b16 %v115
  %v605 = vunpack.c.l.b16 %v116
  %v606 = vunpack.c.l.b16 %v117
  %v607 = vunpack.c.l.b16 %v118
  %v608 = vunpack.c.l.b16 %v119
  %v609 = vunpack.c.l.b16 %v120
  %v610 = vunpack.c.l.b16 %v121
  %v611 = vunpack.c.l.b16 %v122
  %v612 = vunpack.c.l.b16 %v123
  %v613 = vunpack.c.l.b16 %v124
  %v614 = vunpack.c.l.b16 %v125
  %v615 = vunpack.c.l.b16 %v126
  %v616 = vunpack.c.l.b16 %v127
  %v617 = vunpack.c.l.b16 %v128
  %v618 = vunpack.c.l.b16 %v129
  %v619 = vunpack.c.l.b16 %v130
  %v620 = vunpack.c.l.b16 %v131
  %v621 = vunpack.c.l.b16 %v132
  %v622 = vunpack.c.l.b16 %v133
  %v623 = vunpack.c.l.b16 %v134
  %v624 = vunpack.c.l.b16 %v135
  %v625 = vunpack.c.l.b16 %v136
  %v626 = vunpack.c.l.b16 %v137
  %v627 = vunpack.c.l.b16 %v138
  %v628 = vunpack.c.l.b16 %v139
  %v629 = vunpack.c.l.b16 %v140
  %v630 = vunpack.c.l.b16 %v141
  %v631 = vunpack.c.l.b16 %v142
  %v632 = vunpack.c.l.b16 %v143
  %v633 = vunpack.c.l.b16 %v144
  %v634 = vunpack.c.l.b16 %v145
  %v635 = vunpack.c.l.b16 %v146
  %v636 = vunpack.c.l.b16 %v147
  %v637 = vunpack.c.l.b16 %v148
  %v638 = vpack.c.b16 %v575, %v574
  %v639 = vpack.c.b16 %v577, %v576
  %v640 = vpack.c.b16 %v579, %v578
  %v641 = vpack.c.b16 %v581, %v580
  %v642 = vpack.c.b16 %v583, %v582
  %v643 = vpack.c.b16 %v585, %v584
  %v644 = vpack.c.b16 %v587, %v586
  %v645 = vpack.c.b16 %v589, %v588
  %v646 = vpack.c.b16 %v591, %v590
  %v647 = vpack.c.b16 %v593, %v592
  %v648 = vpack.c.b16 %v595, %v594
  %v649 = vpack.c.b16 %v597, %v596
  %v650 = vpack.c.b16 %v599, %v598
  %v651 = vpack.c.b16 %v601, %v600
  %v652 = vpack.c.b16 %v603, %v602
  %v653 = vpack.c.b16 %v605, %v604
  %v654 = vpack.c.b16 %v607, %v606
  %v655 = vpack.c.b16 %v609, %v608
  %v656 = vpack.c.b16 %v611, %v610
  %v657 = vpack.c.b16 %v613, %v612
  %v658 = vpack.c.b16 %v615, %v614
  %v659 = vpack.c.b16 %v617, %v616
  %v660 = vpack.c.b16 %v619, %v618
  %v661 = vpack.c.b16 %v621, %v620
  %v662 = vpack.c.b16 %v623, %v622
  %v663 = vpack.c.b16 %v625, %v624
  %v664 = vpack.c.b16 %v627, %v626
  %v665 = vpack.c.b16 %v629, %v628
  %v666 = vpack.c.b16 %v631, %v630
  %v667 = vpack.c.b16 %v633, %v632
  %v668 = vpack.c.b16 %v635, %v634
  %v669 = vpack.c.b16 %v637, %v636
  %702 = vmatprep.subr.bf16.mxu0 0
  %703 = vmatpush1.bf16.msra.mxu0 %v645
  %704 = vmatprep.subr.bf16.mxu0 0
  %705 = vmatpush1.bf16.msra.mxu0 %v644
  %706 = vmatprep.subr.bf16.mxu0 0
  %707 = vmatpush1.bf16.msra.mxu0 %v643
  %708 = vmatprep.subr.bf16.mxu0 0
  %709 = vmatpush1.bf16.msra.mxu0 %v642
  %710 = vmatprep.subr.bf16.mxu0 0
  %711 = vmatpush1.bf16.msra.mxu0 %v641
  %712 = vmatprep.subr.bf16.mxu0 0
  %713 = vmatpush1.bf16.msra.mxu0 %v640
  %714 = vmatprep.subr.bf16.mxu0 0
  %715 = vmatpush1.bf16.msra.mxu0 %v639
  %716 = vmatprep.subr.bf16.mxu0 0
  %717 = vmatpush1.bf16.msra.mxu0 %v638
  %718 = vmatprep.subr.bf16.mxu0 0
  %719 = vmatpush2.bf16.msra.mxu0 %v653
  %720 = vmatprep.subr.bf16.mxu0 0
  %721 = vmatpush2.bf16.msra.mxu0 %v652
  %722 = vmatprep.subr.bf16.mxu0 0
  %723 = vmatpush2.bf16.msra.mxu0 %v651
  %724 = vmatprep.subr.bf16.mxu0 0
  %725 = vmatpush2.bf16.msra.mxu0 %v650
  %726 = vmatprep.subr.bf16.mxu0 0
  %727 = vmatpush2.bf16.msra.mxu0 %v649
  %728 = vmatprep.subr.bf16.mxu0 0
  %729 = vmatpush2.bf16.msra.mxu0 %v648
  %730 = vmatprep.subr.bf16.mxu0 0
  %731 = vmatpush2.bf16.msra.mxu0 %v647
  %732 = vmatprep.subr.bf16.mxu0 0
  %733 = vmatpush2.bf16.msra.mxu0 %v646
  %734 = vmatprep.mubr.bf16.mxu0 %v367
  %735 = vmatmul.mubr.bf16.gmra.mxu0 %v366
  %v736 = vpop.f32.mrf.mxu0
  %v737 = vadd.f32 %v154, %v736
  %v738 = vpop.f32.mrf.mxu0
  %v739 = vpop.f32.mrf.mxu0
  %v740 = vadd.f32 %v154, %v739
  %v741 = vpop.f32.mrf.mxu0
  %742 = vmatprep.mubr.bf16.mxu0 %v371
  %743 = vmatmul.mubr.bf16.gmra.mxu0 %v370
  %v744 = vpop.f32.mrf.mxu0
  %v745 = vadd.f32 %v154, %v744
  %v746 = vpop.f32.mrf.mxu0
  %v747 = vpop.f32.mrf.mxu0
  %v748 = vadd.f32 %v154, %v747
  %v749 = vpop.f32.mrf.mxu0
  %750 = vmatprep.mubr.bf16.mxu0 %v375
  %751 = vmatmul.mubr.bf16.gmra.mxu0 %v374
  %v752 = vpop.f32.mrf.mxu0
  %v753 = vadd.f32 %v154, %v752
  %v754 = vpop.f32.mrf.mxu0
  %v755 = vpop.f32.mrf.mxu0
  %v756 = vadd.f32 %v154, %v755
  %v757 = vpop.f32.mrf.mxu0
  %758 = vmatprep.mubr.bf16.mxu0 %v379
  %759 = vmatmul.mubr.bf16.gmra.mxu0 %v378
  %v760 = vpop.f32.mrf.mxu0
  %v761 = vadd.f32 %v154, %v760
  %v762 = vpop.f32.mrf.mxu0
  %v763 = vpop.f32.mrf.mxu0
  %v764 = vadd.f32 %v154, %v763
  %v765 = vpop.f32.mrf.mxu0
  %766 = vmatprep.mubr.bf16.mxu0 %v383
  %767 = vmatmul.mubr.bf16.gmra.mxu0 %v382
  %v768 = vpop.f32.mrf.mxu0
  %v769 = vadd.f32 %v154, %v768
  %v770 = vpop.f32.mrf.mxu0
  %v771 = vpop.f32.mrf.mxu0
  %v772 = vadd.f32 %v154, %v771
  %v773 = vpop.f32.mrf.mxu0
  %774 = vmatprep.mubr.bf16.mxu0 %v387
  %775 = vmatmul.mubr.bf16.gmra.mxu0 %v386
  %v776 = vpop.f32.mrf.mxu0
  %v777 = vadd.f32 %v154, %v776
  %v778 = vpop.f32.mrf.mxu0
  %v779 = vpop.f32.mrf.mxu0
  %v780 = vadd.f32 %v154, %v779
  %v781 = vpop.f32.mrf.mxu0
  %782 = vmatprep.mubr.bf16.mxu0 %v391
  %783 = vmatmul.mubr.bf16.gmra.mxu0 %v390
  %v784 = vpop.f32.mrf.mxu0
  %v785 = vadd.f32 %v154, %v784
  %v786 = vpop.f32.mrf.mxu0
  %v787 = vpop.f32.mrf.mxu0
  %v788 = vadd.f32 %v154, %v787
  %v789 = vpop.f32.mrf.mxu0
  %790 = vmatprep.mubr.bf16.mxu0 %v395
  %791 = vmatmul.mubr.bf16.gmra.mxu0 %v394
  %v792 = vpop.f32.mrf.mxu0
  %v793 = vadd.f32 %v154, %v792
  %v794 = vpop.f32.mrf.mxu0
  %v795 = vpop.f32.mrf.mxu0
  %v796 = vadd.f32 %v154, %v795
  %v797 = vpop.f32.mrf.mxu0
  %798 = vmatprep.mubr.bf16.mxu0 %v399
  %799 = vmatmul.mubr.bf16.gmra.mxu0 %v398
  %v800 = vpop.f32.mrf.mxu0
  %v801 = vadd.f32 %v154, %v800
  %v802 = vpop.f32.mrf.mxu0
  %v803 = vpop.f32.mrf.mxu0
  %v804 = vadd.f32 %v154, %v803
  %v805 = vpop.f32.mrf.mxu0
  %806 = vmatprep.mubr.bf16.mxu0 %v403
  %807 = vmatmul.mubr.bf16.gmra.mxu0 %v402
  %v808 = vpop.f32.mrf.mxu0
  %v809 = vadd.f32 %v154, %v808
  %v810 = vpop.f32.mrf.mxu0
  %v811 = vpop.f32.mrf.mxu0
  %v812 = vadd.f32 %v154, %v811
  %v813 = vpop.f32.mrf.mxu0
  %814 = vmatprep.mubr.bf16.mxu0 %v407
  %815 = vmatmul.mubr.bf16.gmra.mxu0 %v406
  %v816 = vpop.f32.mrf.mxu0
  %v817 = vadd.f32 %v154, %v816
  %v818 = vpop.f32.mrf.mxu0
  %v819 = vpop.f32.mrf.mxu0
  %v820 = vadd.f32 %v154, %v819
  %v821 = vpop.f32.mrf.mxu0
  %822 = vmatprep.mubr.bf16.mxu0 %v411
  %823 = vmatmul.mubr.bf16.gmra.mxu0 %v410
  %v824 = vpop.f32.mrf.mxu0
  %v825 = vadd.f32 %v154, %v824
  %v826 = vpop.f32.mrf.mxu0
  %v827 = vpop.f32.mrf.mxu0
  %v828 = vadd.f32 %v154, %v827
  %v829 = vpop.f32.mrf.mxu0
  %830 = vmatprep.mubr.bf16.mxu0 %v415
  %831 = vmatmul.mubr.bf16.gmra.mxu0 %v414
  %v832 = vpop.f32.mrf.mxu0
  %v833 = vadd.f32 %v154, %v832
  %v834 = vpop.f32.mrf.mxu0
  %v835 = vpop.f32.mrf.mxu0
  %v836 = vadd.f32 %v154, %v835
  %v837 = vpop.f32.mrf.mxu0
  %838 = vmatprep.mubr.bf16.mxu0 %v419
  %839 = vmatmul.mubr.bf16.gmra.mxu0 %v418
  %v840 = vpop.f32.mrf.mxu0
  %v841 = vadd.f32 %v154, %v840
  %v842 = vpop.f32.mrf.mxu0
  %v843 = vpop.f32.mrf.mxu0
  %v844 = vadd.f32 %v154, %v843
  %v845 = vpop.f32.mrf.mxu0
  %846 = vmatprep.mubr.bf16.mxu0 %v423
  %847 = vmatmul.mubr.bf16.gmra.mxu0 %v422
  %v848 = vpop.f32.mrf.mxu0
  %v849 = vadd.f32 %v154, %v848
  %v850 = vpop.f32.mrf.mxu0
  %v851 = vpop.f32.mrf.mxu0
  %v852 = vadd.f32 %v154, %v851
  %v853 = vpop.f32.mrf.mxu0
  %854 = vmatprep.mubr.bf16.mxu0 %v427
  %855 = vmatmul.mubr.bf16.gmra.mxu0 %v426
  %v856 = vpop.f32.mrf.mxu0
  %v857 = vadd.f32 %v154, %v856
  %v858 = vpop.f32.mrf.mxu0
  %v859 = vpop.f32.mrf.mxu0
  %v860 = vadd.f32 %v154, %v859
  %v861 = vpop.f32.mrf.mxu0
  %862 = vmatprep.mubr.bf16.mxu0 %v431
  %863 = vmatmul.mubr.bf16.gmra.mxu0 %v430
  %v864 = vpop.f32.mrf.mxu0
  %v865 = vadd.f32 %v154, %v864
  %v866 = vpop.f32.mrf.mxu0
  %v867 = vpop.f32.mrf.mxu0
  %v868 = vadd.f32 %v154, %v867
  %v869 = vpop.f32.mrf.mxu0
  %870 = vmatprep.mubr.bf16.mxu0 %v435
  %871 = vmatmul.mubr.bf16.gmra.mxu0 %v434
  %v872 = vpop.f32.mrf.mxu0
  %v873 = vadd.f32 %v154, %v872
  %v874 = vpop.f32.mrf.mxu0
  %v875 = vpop.f32.mrf.mxu0
  %v876 = vpop.f32.mrf.mxu0
  %877 = vdwg.mxu0
  %878 = vmatprep.subr.bf16.mxu0 0
  %879 = vmatpush1.bf16.msra.mxu0 %v661
  %880 = vmatprep.subr.bf16.mxu0 0
  %881 = vmatpush1.bf16.msra.mxu0 %v660
  %882 = vmatprep.subr.bf16.mxu0 0
  %883 = vmatpush1.bf16.msra.mxu0 %v659
  %884 = vmatprep.subr.bf16.mxu0 0
  %885 = vmatpush1.bf16.msra.mxu0 %v658
  %886 = vmatprep.subr.bf16.mxu0 0
  %887 = vmatpush1.bf16.msra.mxu0 %v657
  %888 = vmatprep.subr.bf16.mxu0 0
  %889 = vmatpush1.bf16.msra.mxu0 %v656
  %890 = vmatprep.subr.bf16.mxu0 0
  %891 = vmatpush1.bf16.msra.mxu0 %v655
  %892 = vmatprep.subr.bf16.mxu0 0
  %893 = vmatpush1.bf16.msra.mxu0 %v654
  %894 = vmatprep.subr.bf16.mxu0 0
  %895 = vmatpush2.bf16.msra.mxu0 %v669
  %896 = vmatprep.subr.bf16.mxu0 0
  %897 = vmatpush2.bf16.msra.mxu0 %v668
  %898 = vmatprep.subr.bf16.mxu0 0
  %899 = vmatpush2.bf16.msra.mxu0 %v667
  %900 = vmatprep.subr.bf16.mxu0 0
  %901 = vmatpush2.bf16.msra.mxu0 %v666
  %902 = vmatprep.subr.bf16.mxu0 0
  %903 = vmatpush2.bf16.msra.mxu0 %v665
  %904 = vmatprep.subr.bf16.mxu0 0
  %905 = vmatpush2.bf16.msra.mxu0 %v664
  %906 = vmatprep.subr.bf16.mxu0 0
  %907 = vmatpush2.bf16.msra.mxu0 %v663
  %908 = vmatprep.subr.bf16.mxu0 0
  %909 = vmatpush2.bf16.msra.mxu0 %v662
  %910 = vmatprep.mubr.bf16.mxu0 %v369
  %911 = vmatmul.mubr.bf16.gmra.mxu0 %v368
  %v912 = vpop.f32.mrf.mxu0
  %v913 = vadd.f32 %v737, %v912
  %v914 = vpop.f32.mrf.mxu0
  %v915 = vpop.f32.mrf.mxu0
  %v916 = vadd.f32 %v740, %v915
  %v917 = vpop.f32.mrf.mxu0
  %918 = vmatprep.mubr.bf16.mxu0 %v373
  %919 = vmatmul.mubr.bf16.gmra.mxu0 %v372
  %v920 = vpop.f32.mrf.mxu0
  %v921 = vadd.f32 %v745, %v920
  %v922 = vpop.f32.mrf.mxu0
  %v923 = vpop.f32.mrf.mxu0
  %v924 = vadd.f32 %v748, %v923
  %v925 = vpop.f32.mrf.mxu0
  %926 = vmatprep.mubr.bf16.mxu0 %v377
  %927 = vmatmul.mubr.bf16.gmra.mxu0 %v376
  %v928 = vpop.f32.mrf.mxu0
  %v929 = vadd.f32 %v753, %v928
  %v930 = vpop.f32.mrf.mxu0
  %v931 = vpop.f32.mrf.mxu0
  %v932 = vadd.f32 %v756, %v931
  %v933 = vpop.f32.mrf.mxu0
  %934 = vmatprep.mubr.bf16.mxu0 %v381
  %935 = vmatmul.mubr.bf16.gmra.mxu0 %v380
  %v936 = vpop.f32.mrf.mxu0
  %v937 = vadd.f32 %v761, %v936
  %v938 = vpop.f32.mrf.mxu0
  %v939 = vpop.f32.mrf.mxu0
  %v940 = vadd.f32 %v764, %v939
  %v941 = vpop.f32.mrf.mxu0
  %942 = vmatprep.mubr.bf16.mxu0 %v385
  %943 = vmatmul.mubr.bf16.gmra.mxu0 %v384
  %v944 = vpop.f32.mrf.mxu0
  %v945 = vadd.f32 %v769, %v944
  %v946 = vpop.f32.mrf.mxu0
  %v947 = vpop.f32.mrf.mxu0
  %v948 = vadd.f32 %v772, %v947
  %v949 = vpop.f32.mrf.mxu0
  %950 = vmatprep.mubr.bf16.mxu0 %v389
  %951 = vmatmul.mubr.bf16.gmra.mxu0 %v388
  %v952 = vpop.f32.mrf.mxu0
  %v953 = vadd.f32 %v777, %v952
  %v954 = vpop.f32.mrf.mxu0
  %v955 = vpop.f32.mrf.mxu0
  %v956 = vadd.f32 %v780, %v955
  %v957 = vpop.f32.mrf.mxu0
  %958 = vmatprep.mubr.bf16.mxu0 %v393
  %959 = vmatmul.mubr.bf16.gmra.mxu0 %v392
  %v960 = vpop.f32.mrf.mxu0
  %v961 = vadd.f32 %v785, %v960
  %v962 = vpop.f32.mrf.mxu0
  %v963 = vpop.f32.mrf.mxu0
  %v964 = vadd.f32 %v788, %v963
  %v965 = vpop.f32.mrf.mxu0
  %966 = vmatprep.mubr.bf16.mxu0 %v397
  %967 = vmatmul.mubr.bf16.gmra.mxu0 %v396
  %v968 = vpop.f32.mrf.mxu0
  %v969 = vadd.f32 %v793, %v968
  %v970 = vpop.f32.mrf.mxu0
  %v971 = vpop.f32.mrf.mxu0
  %v972 = vadd.f32 %v796, %v971
  %v973 = vpop.f32.mrf.mxu0
  %974 = vmatprep.mubr.bf16.mxu0 %v401
  %975 = vmatmul.mubr.bf16.gmra.mxu0 %v400
  %v976 = vpop.f32.mrf.mxu0
  %v977 = vadd.f32 %v801, %v976
  %v978 = vpop.f32.mrf.mxu0
  %v979 = vpop.f32.mrf.mxu0
  %v980 = vadd.f32 %v804, %v979
  %v981 = vpop.f32.mrf.mxu0
  %982 = vmatprep.mubr.bf16.mxu0 %v405
  %983 = vmatmul.mubr.bf16.gmra.mxu0 %v404
  %v984 = vpop.f32.mrf.mxu0
  %v985 = vadd.f32 %v809, %v984
  %v986 = vpop.f32.mrf.mxu0
  %v987 = vpop.f32.mrf.mxu0
  %v988 = vadd.f32 %v812, %v987
  %v989 = vpop.f32.mrf.mxu0
  %990 = vmatprep.mubr.bf16.mxu0 %v409
  %991 = vmatmul.mubr.bf16.gmra.mxu0 %v408
  %v992 = vpop.f32.mrf.mxu0
  %v993 = vadd.f32 %v817, %v992
  %v994 = vpop.f32.mrf.mxu0
  %v995 = vpop.f32.mrf.mxu0
  %v996 = vadd.f32 %v820, %v995
  %v997 = vpop.f32.mrf.mxu0
  %998 = vmatprep.mubr.bf16.mxu0 %v413
  %999 = vmatmul.mubr.bf16.gmra.mxu0 %v412
  %v1000 = vpop.f32.mrf.mxu0
  %v1001 = vadd.f32 %v825, %v1000
  %v1002 = vpop.f32.mrf.mxu0
  %v1003 = vpop.f32.mrf.mxu0
  %v1004 = vadd.f32 %v828, %v1003
  %v1005 = vpop.f32.mrf.mxu0
  %1006 = vmatprep.mubr.bf16.mxu0 %v417
  %1007 = vmatmul.mubr.bf16.gmra.mxu0 %v416
  %v1008 = vpop.f32.mrf.mxu0
  %v1009 = vadd.f32 %v833, %v1008
  %v1010 = vpop.f32.mrf.mxu0
  %v1011 = vpop.f32.mrf.mxu0
  %v1012 = vadd.f32 %v836, %v1011
  %v1013 = vpop.f32.mrf.mxu0
  %1014 = vmatprep.mubr.bf16.mxu0 %v421
  %1015 = vmatmul.mubr.bf16.gmra.mxu0 %v420
  %v1016 = vpop.f32.mrf.mxu0
  %v1017 = vadd.f32 %v841, %v1016
  %v1018 = vpop.f32.mrf.mxu0
  %v1019 = vpop.f32.mrf.mxu0
  %v1020 = vadd.f32 %v844, %v1019
  %v1021 = vpop.f32.mrf.mxu0
  %1022 = vmatprep.mubr.bf16.mxu0 %v425
  %1023 = vmatmul.mubr.bf16.gmra.mxu0 %v424
  %v1024 = vpop.f32.mrf.mxu0
  %v1025 = vadd.f32 %v849, %v1024
  %v1026 = vpop.f32.mrf.mxu0
  %v1027 = vpop.f32.mrf.mxu0
  %v1028 = vadd.f32 %v852, %v1027
  %v1029 = vpop.f32.mrf.mxu0
  %1030 = vmatprep.mubr.bf16.mxu0 %v429
  %1031 = vmatmul.mubr.bf16.gmra.mxu0 %v428
  %v1032 = vpop.f32.mrf.mxu0
  %v1033 = vadd.f32 %v857, %v1032
  %v1034 = vpop.f32.mrf.mxu0
  %v1035 = vpop.f32.mrf.mxu0
  %v1036 = vadd.f32 %v860, %v1035
  %v1037 = vpop.f32.mrf.mxu0
  %1038 = vmatprep.mubr.bf16.mxu0 %v433
  %1039 = vmatmul.mubr.bf16.gmra.mxu0 %v432
  %v1040 = vpop.f32.mrf.mxu0
  %v1041 = vadd.f32 %v865, %v1040
  %v1042 = vpop.f32.mrf.mxu0
  %v1043 = vpop.f32.mrf.mxu0
  %v1044 = vadd.f32 %v868, %v1043
  %v1045 = vpop.f32.mrf.mxu0
  %1046 = vmatprep.mubr.bf16.mxu0 %v437
  %1047 = vmatmul.mubr.bf16.gmra.mxu0 %v436
  %v1048 = vpop.f32.mrf.mxu0
  %v1049 = vadd.f32 %v873, %v1048
  %v1050 = vpop.f32.mrf.mxu0
  %v1051 = vpop.f32.mrf.mxu0
  %v1052 = vpop.f32.mrf.mxu0
  %1053 = vdwg.mxu0
  %v1054 = vmax.f32 %v913, 0.0
  %v1055 = vmax.f32 %v916, 0.0
  %v1056 = vmax.f32 %v921, 0.0
  %v1057 = vmax.f32 %v924, 0.0
  %v1058 = vmax.f32 %v929, 0.0
  %v1059 = vmax.f32 %v932, 0.0
  %v1060 = vmax.f32 %v937, 0.0
  %v1061 = vmax.f32 %v940, 0.0
  %v1062 = vmax.f32 %v945, 0.0
  %v1063 = vmax.f32 %v948, 0.0
  %v1064 = vmax.f32 %v953, 0.0
  %v1065 = vmax.f32 %v956, 0.0
  %v1066 = vmax.f32 %v961, 0.0
  %v1067 = vmax.f32 %v964, 0.0
  %v1068 = vmax.f32 %v969, 0.0
  %v1069 = vmax.f32 %v972, 0.0
  %v1070 = vmax.f32 %v977, 0.0
  %v1071 = vmax.f32 %v980, 0.0
  %v1072 = vmax.f32 %v985, 0.0
  %v1073 = vmax.f32 %v988, 0.0
  %v1074 = vmax.f32 %v993, 0.0
  %v1075 = vmax.f32 %v996, 0.0
  %v1076 = vmax.f32 %v1001, 0.0
  %v1077 = vmax.f32 %v1004, 0.0
  %v1078 = vmax.f32 %v1009, 0.0
  %v1079 = vmax.f32 %v1012, 0.0
  %v1080 = vmax.f32 %v1017, 0.0
  %v1081 = vmax.f32 %v1020, 0.0
  %v1082 = vmax.f32 %v1025, 0.0
  %v1083 = vmax.f32 %v1028, 0.0
  %v1084 = vmax.f32 %v1033, 0.0
  %v1085 = vmax.f32 %v1036, 0.0
  %v1086 = vmax.f32 %v1041, 0.0
  %v1087 = vmax.f32 %v1044, 0.0
  %v1088 = vmax.f32 %v1049, 0.0
  %v1089 = vpack.c.bf16 %v1055, %v1054
  %v1090 = vpack.c.bf16 %v1057, %v1056
  %v1091 = vpack.c.bf16 %v1059, %v1058
  %v1092 = vpack.c.bf16 %v1061, %v1060
  %v1093 = vpack.c.bf16 %v1063, %v1062
  %v1094 = vpack.c.bf16 %v1065, %v1064
  %v1095 = vpack.c.bf16 %v1067, %v1066
  %v1096 = vpack.c.bf16 %v1069, %v1068
  %v1097 = vpack.c.bf16 %v1071, %v1070
  %v1098 = vpack.c.bf16 %v1073, %v1072
  %v1099 = vpack.c.bf16 %v1075, %v1074
  %v1100 = vpack.c.bf16 %v1077, %v1076
  %v1101 = vpack.c.bf16 %v1079, %v1078
  %v1102 = vpack.c.bf16 %v1081, %v1080
  %v1103 = vpack.c.bf16 %v1083, %v1082
  %v1104 = vpack.c.bf16 %v1085, %v1084
  %v1105 = vpack.c.bf16 %v1087, %v1086
  %v1106 = vpack.c.bf16 %v1088, %v1088
  %v1125 = vunpack.c.l.b16 %v1089
  %v1126 = vunpack.c.h.b16 %v1089
  %v1127 = vunpack.c.l.b16 %v1090
  %v1128 = vunpack.c.h.b16 %v1090
  %v1129 = vunpack.c.l.b16 %v1091
  %v1130 = vunpack.c.h.b16 %v1091
  %v1131 = vunpack.c.l.b16 %v1092
  %v1132 = vunpack.c.h.b16 %v1092
  %v1133 = vunpack.c.l.b16 %v1093
  %v1134 = vunpack.c.h.b16 %v1093
  %v1135 = vunpack.c.l.b16 %v1094
  %v1136 = vunpack.c.h.b16 %v1094
  %v1137 = vunpack.c.l.b16 %v1095
  %v1138 = vunpack.c.h.b16 %v1095
  %v1139 = vunpack.c.l.b16 %v1096
  %v1140 = vunpack.c.h.b16 %v1096
  %v1141 = vunpack.c.l.b16 %v1097
  %v1142 = vunpack.c.h.b16 %v1097
  %v1143 = vunpack.c.l.b16 %v1098
  %v1144 = vunpack.c.h.b16 %v1098
  %v1145 = vunpack.c.l.b16 %v1099
  %v1146 = vunpack.c.h.b16 %v1099
  %v1147 = vunpack.c.l.b16 %v1100
  %v1148 = vunpack.c.h.b16 %v1100
  %v1149 = vunpack.c.l.b16 %v1101
  %v1150 = vunpack.c.h.b16 %v1101
  %v1151 = vunpack.c.l.b16 %v1102
  %v1152 = vunpack.c.h.b16 %v1102
  %v1153 = vunpack.c.l.b16 %v1103
  %v1154 = vunpack.c.h.b16 %v1103
  %v1155 = vunpack.c.l.b16 %v1104
  %v1156 = vunpack.c.h.b16 %v1104
  %v1157 = vunpack.c.l.b16 %v1105
  %v1158 = vunpack.c.h.b16 %v1105
  %v1159 = vunpack.c.l.b16 %v1106
  %v1160 = vpack.c.b16 %v1125, %v1125
  %v1161 = vpack.c.b16 %v1126, %v1126
  %v1162 = vpack.c.b16 %v1127, %v1127
  %v1163 = vpack.c.b16 %v1128, %v1128
  %v1164 = vpack.c.b16 %v1129, %v1129
  %v1165 = vpack.c.b16 %v1130, %v1130
  %v1166 = vpack.c.b16 %v1131, %v1131
  %v1167 = vpack.c.b16 %v1132, %v1132
  %v1168 = vpack.c.b16 %v1133, %v1133
  %v1169 = vpack.c.b16 %v1134, %v1134
  %v1170 = vpack.c.b16 %v1135, %v1135
  %v1171 = vpack.c.b16 %v1136, %v1136
  %v1172 = vpack.c.b16 %v1137, %v1137
  %v1173 = vpack.c.b16 %v1138, %v1138
  %v1174 = vpack.c.b16 %v1139, %v1139
  %v1175 = vpack.c.b16 %v1140, %v1140
  %v1176 = vpack.c.b16 %v1141, %v1141
  %v1177 = vpack.c.b16 %v1142, %v1142
  %v1178 = vpack.c.b16 %v1143, %v1143
  %v1179 = vpack.c.b16 %v1144, %v1144
  %v1180 = vpack.c.b16 %v1145, %v1145
  %v1181 = vpack.c.b16 %v1146, %v1146
  %v1182 = vpack.c.b16 %v1147, %v1147
  %v1183 = vpack.c.b16 %v1148, %v1148
  %v1184 = vpack.c.b16 %v1149, %v1149
  %v1185 = vpack.c.b16 %v1150, %v1150
  %v1186 = vpack.c.b16 %v1151, %v1151
  %v1187 = vpack.c.b16 %v1152, %v1152
  %v1188 = vpack.c.b16 %v1153, %v1153
  %v1189 = vpack.c.b16 %v1154, %v1154
  %v1190 = vpack.c.b16 %v1155, %v1155
  %v1191 = vpack.c.b16 %v1156, %v1156
  %v1192 = vpack.c.b16 %v1157, %v1157
  %v1193 = vpack.c.b16 %v1158, %v1158
  %v1194 = vpack.c.b16 %v1159, %v1159
  %vm1230 = vcmask 519168
  %1231 = vst.msk [vmem:[%s3] sm:$0xf] %vm1230, %v1160
  %1232 = vst.msk [vmem:[%s3 + $0x4] sm:$0xf] %vm1230, %v1161
  %1233 = vst.msk [vmem:[%s3 + $0x8] sm:$0xf] %vm1230, %v1162
  %1234 = vst.msk [vmem:[%s3 + $0xc] sm:$0xf] %vm1230, %v1163
  %1235 = vst.msk [vmem:[%s3 + $0x10] sm:$0xf] %vm1230, %v1164
  %1236 = vst.msk [vmem:[%s3 + $0x14] sm:$0xf] %vm1230, %v1165
  %1237 = vst.msk [vmem:[%s3 + $0x18] sm:$0xf] %vm1230, %v1166
  %1238 = vst.msk [vmem:[%s3 + $0x1c] sm:$0xf] %vm1230, %v1167
  %1239 = vst.msk [vmem:[%s3 + $0x20] sm:$0xf] %vm1230, %v1168
  %1240 = vst.msk [vmem:[%s3 + $0x24] sm:$0xf] %vm1230, %v1169
  %1241 = vst.msk [vmem:[%s3 + $0x28] sm:$0xf] %vm1230, %v1170
  %1242 = vst.msk [vmem:[%s3 + $0x2c] sm:$0xf] %vm1230, %v1171
  %1243 = vst.msk [vmem:[%s3 + $0x30] sm:$0xf] %vm1230, %v1172
  %1244 = vst.msk [vmem:[%s3 + $0x34] sm:$0xf] %vm1230, %v1173
  %1245 = vst.msk [vmem:[%s3 + $0x38] sm:$0xf] %vm1230, %v1174
  %1246 = vst.msk [vmem:[%s3 + $0x3c] sm:$0xf] %vm1230, %v1175
  %1247 = vst.msk [vmem:[%s3 + $0x40] sm:$0xf] %vm1230, %v1176
  %1248 = vst.msk [vmem:[%s3 + $0x44] sm:$0xf] %vm1230, %v1177
  %1249 = vst.msk [vmem:[%s3 + $0x48] sm:$0xf] %vm1230, %v1178
  %1250 = vst.msk [vmem:[%s3 + $0x4c] sm:$0xf] %vm1230, %v1179
  %1251 = vst.msk [vmem:[%s3 + $0x50] sm:$0xf] %vm1230, %v1180
  %1252 = vst.msk [vmem:[%s3 + $0x54] sm:$0xf] %vm1230, %v1181
  %1253 = vst.msk [vmem:[%s3 + $0x58] sm:$0xf] %vm1230, %v1182
  %1254 = vst.msk [vmem:[%s3 + $0x5c] sm:$0xf] %vm1230, %v1183
  %1255 = vst.msk [vmem:[%s3 + $0x60] sm:$0xf] %vm1230, %v1184
  %1256 = vst.msk [vmem:[%s3 + $0x64] sm:$0xf] %vm1230, %v1185
  %1257 = vst.msk [vmem:[%s3 + $0x68] sm:$0xf] %vm1230, %v1186
  %1258 = vst.msk [vmem:[%s3 + $0x6c] sm:$0xf] %vm1230, %v1187
  %1259 = vst.msk [vmem:[%s3 + $0x70] sm:$0xf] %vm1230, %v1188
  %1260 = vst.msk [vmem:[%s3 + $0x74] sm:$0xf] %vm1230, %v1189
  %1261 = vst.msk [vmem:[%s3 + $0x78] sm:$0xf] %vm1230, %v1190
  %1262 = vst.msk [vmem:[%s3 + $0x7c] sm:$0xf] %vm1230, %v1191
  %1263 = vst.msk [vmem:[%s3 + $0x80] sm:$0xf] %vm1230, %v1192
  %1264 = vst.msk [vmem:[%s3 + $0x84] sm:$0xf] %vm1230, %v1193
  %1265 = vst.msk [vmem:[%s3 + $0x88] sm:$0xf] %vm1230, %v1194
  // Predicated region
  $region14: #{actor_critic_forward.5} parent=0 // pred_check
    _
  $region15: #{actor_critic_forward.5} parent=0 // pred_check_branch
    %1267 = sbr.rel (0) target = $region17
  $region16: #{actor_critic_forward.5} parent=0 // pred_region
    _
  $region17: #{actor_critic_forward.5} parent=0 // pred_fallthru
    _
  // Predicated region
  $region18: #{actor_critic_forward.5} parent=0 // pred_check
    _
  $region19: #{actor_critic_forward.5} parent=0 // pred_check_branch
    %1269 = sbr.rel (0) target = $region21
  $region20: #{actor_critic_forward.5} parent=0 // pred_region
    _
  $region21: #{actor_critic_forward.5} parent=0 // pred_fallthru
    _

// kernel: actor_critic_forward.6
$region0: #{actor_critic_forward.6}
  #allocation0 [shape = 'u32[]', space=smem, size = 0x4, offset = 0x4, fixed_abs, tag = 'smem constant byte address 0x4 - core index']
  #allocation1 [shape = 'u32[144,128]{1,0:T(1,128)}', space=vmem, size = 0x12000, scoped, tag = 'internal scratch']
  %s0 = inlined_call_operand.vmem [shape: bf16[192,576], index: 0, kind: input, shape index: {}]
  %s1 = inlined_call_operand.vmem [shape: bf16[576,64], index: 1, kind: input, shape index: {}]
  %s2 = inlined_call_operand.vmem [shape: f32[1,64], index: 2, kind: input, shape index: {}]
  %s3 = inlined_call_operand.vmem [shape: bf16[192,64], index: 3, kind: output, shape index: {}]
  %s4 = sld [smem:[#allocation0]]
  $region22: #{actor_critic_forward.6} parent=0
    _
  %s6 = ssub.s32 1, %s4
  %s7 = scalar_select 0, %s6, %s4
  // Predicated region
  $region2: #{actor_critic_forward.6} parent=0 // pred_check
    _
  $region3: #{actor_critic_forward.6} parent=0 // pred_check_branch
    %9 = sbr.rel (0) target = $region5
  $region4: #{actor_critic_forward.6} parent=0 // pred_region
    _
  $region5: #{actor_critic_forward.6} parent=0 // pred_fallthru
    _
  // Predicated region
  $region6: #{actor_critic_forward.6} parent=0 // pred_check
    _
  $region7: #{actor_critic_forward.6} parent=0 // pred_check_branch
    %11 = sbr.rel (0) target = $region9
  $region8: #{actor_critic_forward.6} parent=0 // pred_region
    _
  $region9: #{actor_critic_forward.6} parent=0 // pred_fallthru
    _
  // Predicated region
  $region10: #{actor_critic_forward.6} parent=0 // pred_check
    _
  $region11: #{actor_critic_forward.6} parent=0 // pred_check_branch
    %13 = sbr.rel (0) target = $region13
  $region12: #{actor_critic_forward.6} parent=0 // pred_region
    _
  $region13: #{actor_critic_forward.6} parent=0 // pred_fallthru
    _
  %v15 = vld [vmem:[%s0] sm:$0xff]
  %v16 = vld [vmem:[%s0 + $0x8] sm:$0xff]
  %v17 = vld [vmem:[%s0 + $0x10] sm:$0xf]
  %v18 = vld [vmem:[%s0 + $0x14] sm:$0xff]
  %v19 = vld [vmem:[%s0 + $0x1c] sm:$0xff]
  %v20 = vld [vmem:[%s0 + $0x24] sm:$0xf]
  %v21 = vld [vmem:[%s0 + $0x28] sm:$0xff]
  %v22 = vld [vmem:[%s0 + $0x30] sm:$0xff]
  %v23 = vld [vmem:[%s0 + $0x38] sm:$0xf]
  %v24 = vld [vmem:[%s0 + $0x3c] sm:$0xff]
  %v25 = vld [vmem:[%s0 + $0x44] sm:$0xff]
  %v26 = vld [vmem:[%s0 + $0x4c] sm:$0xf]
  %v27 = vld [vmem:[%s0 + $0x50] sm:$0xff]
  %v28 = vld [vmem:[%s0 + $0x58] sm:$0xff]
  %v29 = vld [vmem:[%s0 + $0x60] sm:$0xf]
  %v30 = vld [vmem:[%s0 + $0x64] sm:$0xff]
  %v31 = vld [vmem:[%s0 + $0x6c] sm:$0xff]
  %v32 = vld [vmem:[%s0 + $0x74] sm:$0xf]
  %v33 = vld [vmem:[%s0 + $0x78] sm:$0xff]
  %v34 = vld [vmem:[%s0 + $0x80] sm:$0xff]
  %v35 = vld [vmem:[%s0 + $0x88] sm:$0xf]
  %v36 = vld [vmem:[%s0 + $0x8c] sm:$0xff]
  %v37 = vld [vmem:[%s0 + $0x94] sm:$0xff]
  %v38 = vld [vmem:[%s0 + $0x9c] sm:$0xf]
  %v39 = vld [vmem:[%s0 + $0xa0] sm:$0xff]
  %v40 = vld [vmem:[%s0 + $0xa8] sm:$0xff]
  %v41 = vld [vmem:[%s0 + $0xb0] sm:$0xf]
  %v42 = vld [vmem:[%s0 + $0xb4] sm:$0xff]
  %v43 = vld [vmem:[%s0 + $0xbc] sm:$0xff]
  %v44 = vld [vmem:[%s0 + $0xc4] sm:$0xf]
  %v45 = vld [vmem:[%s0 + $0xc8] sm:$0xff]
  %v46 = vld [vmem:[%s0 + $0xd0] sm:$0xff]
  %v47 = vld [vmem:[%s0 + $0xd8] sm:$0xf]
  %v48 = vld [vmem:[%s0 + $0xdc] sm:$0xff]
  %v49 = vld [vmem:[%s0 + $0xe4] sm:$0xff]
  %v50 = vld [vmem:[%s0 + $0xec] sm:$0xf]
  %v51 = vld [vmem:[%s0 + $0xf0] sm:$0xff]
  %v52 = vld [vmem:[%s0 + $0xf8] sm:$0xff]
  %v53 = vld [vmem:[%s0 + $0x100] sm:$0xf]
  %v54 = vld [vmem:[%s0 + $0x104] sm:$0xff]
  %v55 = vld [vmem:[%s0 + $0x10c] sm:$0xff]
  %v56 = vld [vmem:[%s0 + $0x114] sm:$0xf]
  %v57 = vld [vmem:[%s0 + $0x118] sm:$0xff]
  %v58 = vld [vmem:[%s0 + $0x120] sm:$0xff]
  %v59 = vld [vmem:[%s0 + $0x128] sm:$0xf]
  %v60 = vld [vmem:[%s0 + $0x12c] sm:$0xff]
  %v61 = vld [vmem:[%s0 + $0x134] sm:$0xff]
  %v62 = vld [vmem:[%s0 + $0x13c] sm:$0xf]
  %v63 = vld [vmem:[%s0 + $0x140] sm:$0xff]
  %v64 = vld [vmem:[%s0 + $0x148] sm:$0xff]
  %v65 = vld [vmem:[%s0 + $0x150] sm:$0xf]
  %v66 = vld [vmem:[%s0 + $0x154] sm:$0xff]
  %v67 = vld [vmem:[%s0 + $0x15c] sm:$0xff]
  %v68 = vld [vmem:[%s0 + $0x164] sm:$0xf]
  %v69 = vld [vmem:[%s0 + $0x168] sm:$0xff]
  %v70 = vld [vmem:[%s0 + $0x170] sm:$0xff]
  %v71 = vld [vmem:[%s0 + $0x178] sm:$0xf]
  %v72 = vld [vmem:[%s0 + $0x17c] sm:$0xff]
  %v73 = vld [vmem:[%s0 + $0x184] sm:$0xff]
  %v74 = vld [vmem:[%s0 + $0x18c] sm:$0xf]
  %v75 = vld [vmem:[%s0 + $0x190] sm:$0xff]
  %v76 = vld [vmem:[%s0 + $0x198] sm:$0xff]
  %v77 = vld [vmem:[%s0 + $0x1a0] sm:$0xf]
  %v78 = vld [vmem:[%s0 + $0x1a4] sm:$0xff]
  %v79 = vld [vmem:[%s0 + $0x1ac] sm:$0xff]
  %v80 = vld [vmem:[%s0 + $0x1b4] sm:$0xf]
  %v81 = vld [vmem:[%s0 + $0x1b8] sm:$0xff]
  %v82 = vld [vmem:[%s0 + $0x1c0] sm:$0xff]
  %v83 = vld [vmem:[%s0 + $0x1c8] sm:$0xf]
  %v84 = vld [vmem:[%s0 + $0x1cc] sm:$0xff]
  %v85 = vld [vmem:[%s0 + $0x1d4] sm:$0xff]
  %v86 = vld [vmem:[%s0 + $0x1dc] sm:$0xf]
  %v87 = vld [vmem:[%s1] sm:$0xf]
  %v88 = vld [vmem:[%s1 + $0x4] sm:$0xf]
  %v89 = vld [vmem:[%s1 + $0x8] sm:$0xf]
  %v90 = vld [vmem:[%s1 + $0xc] sm:$0xf]
  %v91 = vld [vmem:[%s1 + $0x10] sm:$0xf]
  %v92 = vld [vmem:[%s1 + $0x14] sm:$0xf]
  %v93 = vld [vmem:[%s1 + $0x18] sm:$0xf]
  %v94 = vld [vmem:[%s1 + $0x1c] sm:$0xf]
  %v95 = vld [vmem:[%s1 + $0x20] sm:$0xf]
  %v96 = vld [vmem:[%s1 + $0x24] sm:$0xf]
  %v97 = vld [vmem:[%s1 + $0x28] sm:$0xf]
  %v98 = vld [vmem:[%s1 + $0x2c] sm:$0xf]
  %v99 = vld [vmem:[%s1 + $0x30] sm:$0xf]
  %v100 = vld [vmem:[%s1 + $0x34] sm:$0xf]
  %v101 = vld [vmem:[%s1 + $0x38] sm:$0xf]
  %v102 = vld [vmem:[%s1 + $0x3c] sm:$0xf]
  %v103 = vld [vmem:[%s1 + $0x40] sm:$0xf]
  %v104 = vld [vmem:[%s1 + $0x44] sm:$0xf]
  %v105 = vld [vmem:[%s1 + $0x48] sm:$0xf]
  %v106 = vld [vmem:[%s1 + $0x4c] sm:$0xf]
  %v107 = vld [vmem:[%s1 + $0x50] sm:$0xf]
  %v108 = vld [vmem:[%s1 + $0x54] sm:$0xf]
  %v109 = vld [vmem:[%s1 + $0x58] sm:$0xf]
  %v110 = vld [vmem:[%s1 + $0x5c] sm:$0xf]
  %v111 = vld [vmem:[%s1 + $0x60] sm:$0xf]
  %v112 = vld [vmem:[%s1 + $0x64] sm:$0xf]
  %v113 = vld [vmem:[%s1 + $0x68] sm:$0xf]
  %v114 = vld [vmem:[%s1 + $0x6c] sm:$0xf]
  %v115 = vld [vmem:[%s1 + $0x70] sm:$0xf]
  %v116 = vld [vmem:[%s1 + $0x74] sm:$0xf]
  %v117 = vld [vmem:[%s1 + $0x78] sm:$0xf]
  %v118 = vld [vmem:[%s1 + $0x7c] sm:$0xf]
  %v119 = vld [vmem:[%s1 + $0x80] sm:$0xf]
  %v120 = vld [vmem:[%s1 + $0x84] sm:$0xf]
  %v121 = vld [vmem:[%s1 + $0x88] sm:$0xf]
  %v122 = vld [vmem:[%s1 + $0x8c] sm:$0xf]
  %v123 = vld [vmem:[%s1 + $0x90] sm:$0xf]
  %v124 = vld [vmem:[%s1 + $0x94] sm:$0xf]
  %v125 = vld [vmem:[%s1 + $0x98] sm:$0xf]
  %v126 = vld [vmem:[%s1 + $0x9c] sm:$0xf]
  %v127 = vld [vmem:[%s1 + $0xa0] sm:$0xf]
  %v128 = vld [vmem:[%s1 + $0xa4] sm:$0xf]
  %v129 = vld [vmem:[%s1 + $0xa8] sm:$0xf]
  %v130 = vld [vmem:[%s1 + $0xac] sm:$0xf]
  %v131 = vld [vmem:[%s1 + $0xb0] sm:$0xf]
  %v132 = vld [vmem:[%s1 + $0xb4] sm:$0xf]
  %v133 = vld [vmem:[%s1 + $0xb8] sm:$0xf]
  %v134 = vld [vmem:[%s1 + $0xbc] sm:$0xf]
  %v135 = vld [vmem:[%s1 + $0xc0] sm:$0xf]
  %v136 = vld [vmem:[%s1 + $0xc4] sm:$0xf]
  %v137 = vld [vmem:[%s1 + $0xc8] sm:$0xf]
  %v138 = vld [vmem:[%s1 + $0xcc] sm:$0xf]
  %v139 = vld [vmem:[%s1 + $0xd0] sm:$0xf]
  %v140 = vld [vmem:[%s1 + $0xd4] sm:$0xf]
  %v141 = vld [vmem:[%s1 + $0xd8] sm:$0xf]
  %v142 = vld [vmem:[%s1 + $0xdc] sm:$0xf]
  %v143 = vld [vmem:[%s1 + $0xe0] sm:$0xf]
  %v144 = vld [vmem:[%s1 + $0xe4] sm:$0xf]
  %v145 = vld [vmem:[%s1 + $0xe8] sm:$0xf]
  %v146 = vld [vmem:[%s1 + $0xec] sm:$0xf]
  %v147 = vld [vmem:[%s1 + $0xf0] sm:$0xf]
  %v148 = vld [vmem:[%s1 + $0xf4] sm:$0xf]
  %v149 = vld [vmem:[%s1 + $0xf8] sm:$0xf]
  %v150 = vld [vmem:[%s1 + $0xfc] sm:$0xf]
  %v151 = vld [vmem:[%s1 + $0x100] sm:$0xf]
  %v152 = vld [vmem:[%s1 + $0x104] sm:$0xf]
  %v153 = vld [vmem:[%s1 + $0x108] sm:$0xf]
  %v154 = vld [vmem:[%s1 + $0x10c] sm:$0xf]
  %v155 = vld [vmem:[%s1 + $0x110] sm:$0xf]
  %v156 = vld [vmem:[%s1 + $0x114] sm:$0xf]
  %v157 = vld [vmem:[%s1 + $0x118] sm:$0xf]
  %v158 = vld [vmem:[%s1 + $0x11c] sm:$0xf]
  %v159 = vld [vmem:[%s2] sm:$0x1]
  %v161 = vlaneseq
  %v162 = vshrl.u32 %v161, 7
  %v163 = vsub.s32 0, %v162
  %v164 = vrot.slane %v159, %v163
  %v238 = vunpack.c.l.b16 %v15
  %v239 = vunpack.c.h.b16 %v15
  %v240 = vunpack.c.l.b16 %v16
  %v241 = vunpack.c.h.b16 %v16
  %v242 = vunpack.c.l.b16 %v17
  %v243 = vunpack.c.l.b16 %v18
  %v244 = vunpack.c.h.b16 %v18
  %v245 = vunpack.c.l.b16 %v19
  %v246 = vunpack.c.h.b16 %v19
  %v247 = vunpack.c.l.b16 %v20
  %v248 = vunpack.c.l.b16 %v21
  %v249 = vunpack.c.h.b16 %v21
  %v250 = vunpack.c.l.b16 %v22
  %v251 = vunpack.c.h.b16 %v22
  %v252 = vunpack.c.l.b16 %v23
  %v253 = vunpack.c.l.b16 %v24
  %v254 = vunpack.c.h.b16 %v24
  %v255 = vunpack.c.l.b16 %v25
  %v256 = vunpack.c.h.b16 %v25
  %v257 = vunpack.c.l.b16 %v26
  %v258 = vunpack.c.l.b16 %v27
  %v259 = vunpack.c.h.b16 %v27
  %v260 = vunpack.c.l.b16 %v28
  %v261 = vunpack.c.h.b16 %v28
  %v262 = vunpack.c.l.b16 %v29
  %v263 = vunpack.c.l.b16 %v30
  %v264 = vunpack.c.h.b16 %v30
  %v265 = vunpack.c.l.b16 %v31
  %v266 = vunpack.c.h.b16 %v31
  %v267 = vunpack.c.l.b16 %v32
  %v268 = vunpack.c.l.b16 %v33
  %v269 = vunpack.c.h.b16 %v33
  %v270 = vunpack.c.l.b16 %v34
  %v271 = vunpack.c.h.b16 %v34
  %v272 = vunpack.c.l.b16 %v35
  %v273 = vunpack.c.l.b16 %v36
  %v274 = vunpack.c.h.b16 %v36
  %v275 = vunpack.c.l.b16 %v37
  %v276 = vunpack.c.h.b16 %v37
  %v277 = vunpack.c.l.b16 %v38
  %v278 = vunpack.c.l.b16 %v39
  %v279 = vunpack.c.h.b16 %v39
  %v280 = vunpack.c.l.b16 %v40
  %v281 = vunpack.c.h.b16 %v40
  %v282 = vunpack.c.l.b16 %v41
  %v283 = vunpack.c.l.b16 %v42
  %v284 = vunpack.c.h.b16 %v42
  %v285 = vunpack.c.l.b16 %v43
  %v286 = vunpack.c.h.b16 %v43
  %v287 = vunpack.c.l.b16 %v44
  %v288 = vunpack.c.l.b16 %v45
  %v289 = vunpack.c.h.b16 %v45
  %v290 = vunpack.c.l.b16 %v46
  %v291 = vunpack.c.h.b16 %v46
  %v292 = vunpack.c.l.b16 %v47
  %v293 = vunpack.c.l.b16 %v48
  %v294 = vunpack.c.h.b16 %v48
  %v295 = vunpack.c.l.b16 %v49
  %v296 = vunpack.c.h.b16 %v49
  %v297 = vunpack.c.l.b16 %v50
  %v298 = vunpack.c.l.b16 %v51
  %v299 = vunpack.c.h.b16 %v51
  %v300 = vunpack.c.l.b16 %v52
  %v301 = vunpack.c.h.b16 %v52
  %v302 = vunpack.c.l.b16 %v53
  %v303 = vunpack.c.l.b16 %v54
  %v304 = vunpack.c.h.b16 %v54
  %v305 = vunpack.c.l.b16 %v55
  %v306 = vunpack.c.h.b16 %v55
  %v307 = vunpack.c.l.b16 %v56
  %v308 = vunpack.c.l.b16 %v57
  %v309 = vunpack.c.h.b16 %v57
  %v310 = vunpack.c.l.b16 %v58
  %v311 = vunpack.c.h.b16 %v58
  %v312 = vunpack.c.l.b16 %v59
  %v313 = vunpack.c.l.b16 %v60
  %v314 = vunpack.c.h.b16 %v60
  %v315 = vunpack.c.l.b16 %v61
  %v316 = vunpack.c.h.b16 %v61
  %v317 = vunpack.c.l.b16 %v62
  %v318 = vunpack.c.l.b16 %v63
  %v319 = vunpack.c.h.b16 %v63
  %v320 = vunpack.c.l.b16 %v64
  %v321 = vunpack.c.h.b16 %v64
  %v322 = vunpack.c.l.b16 %v65
  %v323 = vunpack.c.l.b16 %v66
  %v324 = vunpack.c.h.b16 %v66
  %v325 = vunpack.c.l.b16 %v67
  %v326 = vunpack.c.h.b16 %v67
  %v327 = vunpack.c.l.b16 %v68
  %v328 = vunpack.c.l.b16 %v69
  %v329 = vunpack.c.h.b16 %v69
  %v330 = vunpack.c.l.b16 %v70
  %v331 = vunpack.c.h.b16 %v70
  %v332 = vunpack.c.l.b16 %v71
  %v333 = vunpack.c.l.b16 %v72
  %v334 = vunpack.c.h.b16 %v72
  %v335 = vunpack.c.l.b16 %v73
  %v336 = vunpack.c.h.b16 %v73
  %v337 = vunpack.c.l.b16 %v74
  %v338 = vunpack.c.l.b16 %v75
  %v339 = vunpack.c.h.b16 %v75
  %v340 = vunpack.c.l.b16 %v76
  %v341 = vunpack.c.h.b16 %v76
  %v342 = vunpack.c.l.b16 %v77
  %v343 = vunpack.c.l.b16 %v78
  %v344 = vunpack.c.h.b16 %v78
  %v345 = vunpack.c.l.b16 %v79
  %v346 = vunpack.c.h.b16 %v79
  %v347 = vunpack.c.l.b16 %v80
  %v348 = vunpack.c.l.b16 %v81
  %v349 = vunpack.c.h.b16 %v81
  %v350 = vunpack.c.l.b16 %v82
  %v351 = vunpack.c.h.b16 %v82
  %v352 = vunpack.c.l.b16 %v83
  %v353 = vunpack.c.l.b16 %v84
  %v354 = vunpack.c.h.b16 %v84
  %v355 = vunpack.c.l.b16 %v85
  %v356 = vunpack.c.h.b16 %v85
  %v357 = vunpack.c.l.b16 %v86
  %v358 = vpack.c.b16 %v243, %v238
  %v359 = vpack.c.b16 %v244, %v239
  %v360 = vpack.c.b16 %v245, %v240
  %v361 = vpack.c.b16 %v246, %v241
  %v362 = vpack.c.b16 %v247, %v242
  %v363 = vpack.c.b16 %v253, %v248
  %v364 = vpack.c.b16 %v254, %v249
  %v365 = vpack.c.b16 %v255, %v250
  %v366 = vpack.c.b16 %v256, %v251
  %v367 = vpack.c.b16 %v257, %v252
  %v368 = vpack.c.b16 %v263, %v258
  %v369 = vpack.c.b16 %v264, %v259
  %v370 = vpack.c.b16 %v265, %v260
  %v371 = vpack.c.b16 %v266, %v261
  %v372 = vpack.c.b16 %v267, %v262
  %v373 = vpack.c.b16 %v273, %v268
  %v374 = vpack.c.b16 %v274, %v269
  %v375 = vpack.c.b16 %v275, %v270
  %v376 = vpack.c.b16 %v276, %v271
  %v377 = vpack.c.b16 %v277, %v272
  %v378 = vpack.c.b16 %v283, %v278
  %v379 = vpack.c.b16 %v284, %v279
  %v380 = vpack.c.b16 %v285, %v280
  %v381 = vpack.c.b16 %v286, %v281
  %v382 = vpack.c.b16 %v287, %v282
  %v383 = vpack.c.b16 %v293, %v288
  %v384 = vpack.c.b16 %v294, %v289
  %v385 = vpack.c.b16 %v295, %v290
  %v386 = vpack.c.b16 %v296, %v291
  %v387 = vpack.c.b16 %v297, %v292
  %v388 = vpack.c.b16 %v303, %v298
  %v389 = vpack.c.b16 %v304, %v299
  %v390 = vpack.c.b16 %v305, %v300
  %v391 = vpack.c.b16 %v306, %v301
  %v392 = vpack.c.b16 %v307, %v302
  %v393 = vpack.c.b16 %v313, %v308
  %v394 = vpack.c.b16 %v314, %v309
  %v395 = vpack.c.b16 %v315, %v310
  %v396 = vpack.c.b16 %v316, %v311
  %v397 = vpack.c.b16 %v317, %v312
  %v398 = vpack.c.b16 %v323, %v318
  %v399 = vpack.c.b16 %v324, %v319
  %v400 = vpack.c.b16 %v325, %v320
  %v401 = vpack.c.b16 %v326, %v321
  %v402 = vpack.c.b16 %v327, %v322
  %v403 = vpack.c.b16 %v333, %v328
  %v404 = vpack.c.b16 %v334, %v329
  %v405 = vpack.c.b16 %v335, %v330
  %v406 = vpack.c.b16 %v336, %v331
  %v407 = vpack.c.b16 %v337, %v332
  %v408 = vpack.c.b16 %v343, %v338
  %v409 = vpack.c.b16 %v344, %v339
  %v410 = vpack.c.b16 %v345, %v340
  %v411 = vpack.c.b16 %v346, %v341
  %v412 = vpack.c.b16 %v347, %v342
  %v413 = vpack.c.b16 %v353, %v348
  %v414 = vpack.c.b16 %v354, %v349
  %v415 = vpack.c.b16 %v355, %v350
  %v416 = vpack.c.b16 %v356, %v351
  %v417 = vpack.c.b16 %v357, %v352
  %v538 = vunpack.c.l.b16 %v87
  %v539 = vunpack.c.l.b16 %v88
  %v540 = vunpack.c.l.b16 %v89
  %v541 = vunpack.c.l.b16 %v90
  %v542 = vunpack.c.l.b16 %v91
  %v543 = vunpack.c.l.b16 %v92
  %v544 = vunpack.c.l.b16 %v93
  %v545 = vunpack.c.l.b16 %v94
  %v546 = vunpack.c.l.b16 %v95
  %v547 = vunpack.c.l.b16 %v96
  %v548 = vunpack.c.l.b16 %v97
  %v549 = vunpack.c.l.b16 %v98
  %v550 = vunpack.c.l.b16 %v99
  %v551 = vunpack.c.l.b16 %v100
  %v552 = vunpack.c.l.b16 %v101
  %v553 = vunpack.c.l.b16 %v102
  %v554 = vunpack.c.l.b16 %v103
  %v555 = vunpack.c.l.b16 %v104
  %v556 = vunpack.c.l.b16 %v105
  %v557 = vunpack.c.l.b16 %v106
  %v558 = vunpack.c.l.b16 %v107
  %v559 = vunpack.c.l.b16 %v108
  %v560 = vunpack.c.l.b16 %v109
  %v561 = vunpack.c.l.b16 %v110
  %v562 = vunpack.c.l.b16 %v111
  %v563 = vunpack.c.l.b16 %v112
  %v564 = vunpack.c.l.b16 %v113
  %v565 = vunpack.c.l.b16 %v114
  %v566 = vunpack.c.l.b16 %v115
  %v567 = vunpack.c.l.b16 %v116
  %v568 = vunpack.c.l.b16 %v117
  %v569 = vunpack.c.l.b16 %v118
  %v570 = vunpack.c.l.b16 %v119
  %v571 = vunpack.c.l.b16 %v120
  %v572 = vunpack.c.l.b16 %v121
  %v573 = vunpack.c.l.b16 %v122
  %v574 = vunpack.c.l.b16 %v123
  %v575 = vunpack.c.l.b16 %v124
  %v576 = vunpack.c.l.b16 %v125
  %v577 = vunpack.c.l.b16 %v126
  %v578 = vunpack.c.l.b16 %v127
  %v579 = vunpack.c.l.b16 %v128
  %v580 = vunpack.c.l.b16 %v129
  %v581 = vunpack.c.l.b16 %v130
  %v582 = vunpack.c.l.b16 %v131
  %v583 = vunpack.c.l.b16 %v132
  %v584 = vunpack.c.l.b16 %v133
  %v585 = vunpack.c.l.b16 %v134
  %v586 = vunpack.c.l.b16 %v135
  %v587 = vunpack.c.l.b16 %v136
  %v588 = vunpack.c.l.b16 %v137
  %v589 = vunpack.c.l.b16 %v138
  %v590 = vunpack.c.l.b16 %v139
  %v591 = vunpack.c.l.b16 %v140
  %v592 = vunpack.c.l.b16 %v141
  %v593 = vunpack.c.l.b16 %v142
  %v594 = vunpack.c.l.b16 %v143
  %v595 = vunpack.c.l.b16 %v144
  %v596 = vunpack.c.l.b16 %v145
  %v597 = vunpack.c.l.b16 %v146
  %v598 = vunpack.c.l.b16 %v147
  %v599 = vunpack.c.l.b16 %v148
  %v600 = vunpack.c.l.b16 %v149
  %v601 = vunpack.c.l.b16 %v150
  %v602 = vunpack.c.l.b16 %v151
  %v603 = vunpack.c.l.b16 %v152
  %v604 = vunpack.c.l.b16 %v153
  %v605 = vunpack.c.l.b16 %v154
  %v606 = vunpack.c.l.b16 %v155
  %v607 = vunpack.c.l.b16 %v156
  %v608 = vunpack.c.l.b16 %v157
  %v609 = vunpack.c.l.b16 %v158
  %v610 = vpack.c.b16 %v539, %v538
  %v611 = vpack.c.b16 %v541, %v540
  %v612 = vpack.c.b16 %v543, %v542
  %v613 = vpack.c.b16 %v545, %v544
  %v614 = vpack.c.b16 %v547, %v546
  %v615 = vpack.c.b16 %v549, %v548
  %v616 = vpack.c.b16 %v551, %v550
  %v617 = vpack.c.b16 %v553, %v552
  %v618 = vpack.c.b16 %v555, %v554
  %v619 = vpack.c.b16 %v557, %v556
  %v620 = vpack.c.b16 %v559, %v558
  %v621 = vpack.c.b16 %v561, %v560
  %v622 = vpack.c.b16 %v563, %v562
  %v623 = vpack.c.b16 %v565, %v564
  %v624 = vpack.c.b16 %v567, %v566
  %v625 = vpack.c.b16 %v569, %v568
  %v626 = vpack.c.b16 %v571, %v570
  %v627 = vpack.c.b16 %v573, %v572
  %v628 = vpack.c.b16 %v575, %v574
  %v629 = vpack.c.b16 %v577, %v576
  %v630 = vpack.c.b16 %v579, %v578
  %v631 = vpack.c.b16 %v581, %v580
  %v632 = vpack.c.b16 %v583, %v582
  %v633 = vpack.c.b16 %v585, %v584
  %v634 = vpack.c.b16 %v587, %v586
  %v635 = vpack.c.b16 %v589, %v588
  %v636 = vpack.c.b16 %v591, %v590
  %v637 = vpack.c.b16 %v593, %v592
  %v638 = vpack.c.b16 %v595, %v594
  %v639 = vpack.c.b16 %v597, %v596
  %v640 = vpack.c.b16 %v599, %v598
  %v641 = vpack.c.b16 %v601, %v600
  %v642 = vpack.c.b16 %v603, %v602
  %v643 = vpack.c.b16 %v605, %v604
  %v644 = vpack.c.b16 %v607, %v606
  %v645 = vpack.c.b16 %v609, %v608
  %vm682 = vcmask 523264
  %v684 = vsel %vm682, %v362, 0
  %v687 = vsel %vm682, %v367, 0
  %v690 = vsel %vm682, %v372, 0
  %v693 = vsel %vm682, %v377, 0
  %v696 = vsel %vm682, %v382, 0
  %v699 = vsel %vm682, %v387, 0
  %v702 = vsel %vm682, %v392, 0
  %v705 = vsel %vm682, %v397, 0
  %v708 = vsel %vm682, %v402, 0
  %v711 = vsel %vm682, %v407, 0
  %v714 = vsel %vm682, %v412, 0
  %v717 = vsel %vm682, %v417, 0
  %719 = vmatprep.subr.bf16.mxu0 0
  %720 = vmatpush1.bf16.msra.mxu0 %v617
  %721 = vmatprep.subr.bf16.mxu0 0
  %722 = vmatpush1.bf16.msra.mxu0 %v616
  %723 = vmatprep.subr.bf16.mxu0 0
  %724 = vmatpush1.bf16.msra.mxu0 %v615
  %725 = vmatprep.subr.bf16.mxu0 0
  %726 = vmatpush1.bf16.msra.mxu0 %v614
  %727 = vmatprep.subr.bf16.mxu0 0
  %728 = vmatpush1.bf16.msra.mxu0 %v613
  %729 = vmatprep.subr.bf16.mxu0 0
  %730 = vmatpush1.bf16.msra.mxu0 %v612
  %731 = vmatprep.subr.bf16.mxu0 0
  %732 = vmatpush1.bf16.msra.mxu0 %v611
  %733 = vmatprep.subr.bf16.mxu0 0
  %734 = vmatpush1.bf16.msra.mxu0 %v610
  %735 = vmatprep.subr.bf16.mxu0 0
  %736 = vmatpush2.bf16.msra.mxu0 %v625
  %737 = vmatprep.subr.bf16.mxu0 0
  %738 = vmatpush2.bf16.msra.mxu0 %v624
  %739 = vmatprep.subr.bf16.mxu0 0
  %740 = vmatpush2.bf16.msra.mxu0 %v623
  %741 = vmatprep.subr.bf16.mxu0 0
  %742 = vmatpush2.bf16.msra.mxu0 %v622
  %743 = vmatprep.subr.bf16.mxu0 0
  %744 = vmatpush2.bf16.msra.mxu0 %v621
  %745 = vmatprep.subr.bf16.mxu0 0
  %746 = vmatpush2.bf16.msra.mxu0 %v620
  %747 = vmatprep.subr.bf16.mxu0 0
  %748 = vmatpush2.bf16.msra.mxu0 %v619
  %749 = vmatprep.subr.bf16.mxu0 0
  %750 = vmatpush2.bf16.msra.mxu0 %v618
  %751 = vmatprep.mubr.bf16.mxu0 %v359
  %752 = vmatmul.mubr.bf16.gmra.mxu0 %v358
  %v753 = vpop.f32.mrf.mxu0
  %v754 = vadd.f32 %v164, %v753
  %v755 = vpop.f32.mrf.mxu0
  %v756 = vpop.f32.mrf.mxu0
  %v757 = vadd.f32 %v164, %v756
  %v758 = vpop.f32.mrf.mxu0
  %759 = vmatprep.mubr.bf16.mxu0 %v364
  %760 = vmatmul.mubr.bf16.gmra.mxu0 %v363
  %v761 = vpop.f32.mrf.mxu0
  %v762 = vadd.f32 %v164, %v761
  %v763 = vpop.f32.mrf.mxu0
  %v764 = vpop.f32.mrf.mxu0
  %v765 = vadd.f32 %v164, %v764
  %v766 = vpop.f32.mrf.mxu0
  %767 = vmatprep.mubr.bf16.mxu0 %v369
  %768 = vmatmul.mubr.bf16.gmra.mxu0 %v368
  %v769 = vpop.f32.mrf.mxu0
  %v770 = vadd.f32 %v164, %v769
  %v771 = vpop.f32.mrf.mxu0
  %v772 = vpop.f32.mrf.mxu0
  %v773 = vadd.f32 %v164, %v772
  %v774 = vpop.f32.mrf.mxu0
  %775 = vmatprep.mubr.bf16.mxu0 %v374
  %776 = vmatmul.mubr.bf16.gmra.mxu0 %v373
  %v777 = vpop.f32.mrf.mxu0
  %v778 = vadd.f32 %v164, %v777
  %v779 = vpop.f32.mrf.mxu0
  %v780 = vpop.f32.mrf.mxu0
  %v781 = vadd.f32 %v164, %v780
  %v782 = vpop.f32.mrf.mxu0
  %783 = vmatprep.mubr.bf16.mxu0 %v379
  %784 = vmatmul.mubr.bf16.gmra.mxu0 %v378
  %v785 = vpop.f32.mrf.mxu0
  %v786 = vadd.f32 %v164, %v785
  %v787 = vpop.f32.mrf.mxu0
  %v788 = vpop.f32.mrf.mxu0
  %v789 = vadd.f32 %v164, %v788
  %v790 = vpop.f32.mrf.mxu0
  %791 = vmatprep.mubr.bf16.mxu0 %v384
  %792 = vmatmul.mubr.bf16.gmra.mxu0 %v383
  %v793 = vpop.f32.mrf.mxu0
  %v794 = vadd.f32 %v164, %v793
  %v795 = vpop.f32.mrf.mxu0
  %v796 = vpop.f32.mrf.mxu0
  %v797 = vadd.f32 %v164, %v796
  %v798 = vpop.f32.mrf.mxu0
  %799 = vmatprep.mubr.bf16.mxu0 %v389
  %800 = vmatmul.mubr.bf16.gmra.mxu0 %v388
  %v801 = vpop.f32.mrf.mxu0
  %v802 = vadd.f32 %v164, %v801
  %v803 = vpop.f32.mrf.mxu0
  %v804 = vpop.f32.mrf.mxu0
  %v805 = vadd.f32 %v164, %v804
  %v806 = vpop.f32.mrf.mxu0
  %807 = vmatprep.mubr.bf16.mxu0 %v394
  %808 = vmatmul.mubr.bf16.gmra.mxu0 %v393
  %v809 = vpop.f32.mrf.mxu0
  %v810 = vadd.f32 %v164, %v809
  %v811 = vpop.f32.mrf.mxu0
  %v812 = vpop.f32.mrf.mxu0
  %v813 = vadd.f32 %v164, %v812
  %v814 = vpop.f32.mrf.mxu0
  %815 = vmatprep.mubr.bf16.mxu0 %v399
  %816 = vmatmul.mubr.bf16.gmra.mxu0 %v398
  %v817 = vpop.f32.mrf.mxu0
  %v818 = vadd.f32 %v164, %v817
  %v819 = vpop.f32.mrf.mxu0
  %v820 = vpop.f32.mrf.mxu0
  %v821 = vadd.f32 %v164, %v820
  %v822 = vpop.f32.mrf.mxu0
  %823 = vmatprep.mubr.bf16.mxu0 %v404
  %824 = vmatmul.mubr.bf16.gmra.mxu0 %v403
  %v825 = vpop.f32.mrf.mxu0
  %v826 = vadd.f32 %v164, %v825
  %v827 = vpop.f32.mrf.mxu0
  %v828 = vpop.f32.mrf.mxu0
  %v829 = vadd.f32 %v164, %v828
  %v830 = vpop.f32.mrf.mxu0
  %831 = vmatprep.mubr.bf16.mxu0 %v409
  %832 = vmatmul.mubr.bf16.gmra.mxu0 %v408
  %v833 = vpop.f32.mrf.mxu0
  %v834 = vadd.f32 %v164, %v833
  %v835 = vpop.f32.mrf.mxu0
  %v836 = vpop.f32.mrf.mxu0
  %v837 = vadd.f32 %v164, %v836
  %v838 = vpop.f32.mrf.mxu0
  %839 = vmatprep.mubr.bf16.mxu0 %v414
  %840 = vmatmul.mubr.bf16.gmra.mxu0 %v413
  %v841 = vpop.f32.mrf.mxu0
  %v842 = vadd.f32 %v164, %v841
  %v843 = vpop.f32.mrf.mxu0
  %v844 = vpop.f32.mrf.mxu0
  %v845 = vadd.f32 %v164, %v844
  %v846 = vpop.f32.mrf.mxu0
  %847 = vdwg.mxu0
  %848 = vmatprep.subr.bf16.mxu0 0
  %849 = vmatpush1.bf16.msra.mxu0 %v633
  %850 = vmatprep.subr.bf16.mxu0 0
  %851 = vmatpush1.bf16.msra.mxu0 %v632
  %852 = vmatprep.subr.bf16.mxu0 0
  %853 = vmatpush1.bf16.msra.mxu0 %v631
  %854 = vmatprep.subr.bf16.mxu0 0
  %855 = vmatpush1.bf16.msra.mxu0 %v630
  %856 = vmatprep.subr.bf16.mxu0 0
  %857 = vmatpush1.bf16.msra.mxu0 %v629
  %858 = vmatprep.subr.bf16.mxu0 0
  %859 = vmatpush1.bf16.msra.mxu0 %v628
  %860 = vmatprep.subr.bf16.mxu0 0
  %861 = vmatpush1.bf16.msra.mxu0 %v627
  %862 = vmatprep.subr.bf16.mxu0 0
  %863 = vmatpush1.bf16.msra.mxu0 %v626
  %864 = vmatprep.subr.bf16.mxu0 0
  %865 = vmatpush2.bf16.msra.mxu0 %v641
  %866 = vmatprep.subr.bf16.mxu0 0
  %867 = vmatpush2.bf16.msra.mxu0 %v640
  %868 = vmatprep.subr.bf16.mxu0 0
  %869 = vmatpush2.bf16.msra.mxu0 %v639
  %870 = vmatprep.subr.bf16.mxu0 0
  %871 = vmatpush2.bf16.msra.mxu0 %v638
  %872 = vmatprep.subr.bf16.mxu0 0
  %873 = vmatpush2.bf16.msra.mxu0 %v637
  %874 = vmatprep.subr.bf16.mxu0 0
  %875 = vmatpush2.bf16.msra.mxu0 %v636
  %876 = vmatprep.subr.bf16.mxu0 0
  %877 = vmatpush2.bf16.msra.mxu0 %v635
  %878 = vmatprep.subr.bf16.mxu0 0
  %879 = vmatpush2.bf16.msra.mxu0 %v634
  %880 = vmatprep.mubr.bf16.mxu0 %v361
  %881 = vmatmul.mubr.bf16.gmra.mxu0 %v360
  %v882 = vpop.f32.mrf.mxu0
  %v883 = vadd.f32 %v754, %v882
  %v884 = vpop.f32.mrf.mxu0
  %v885 = vpop.f32.mrf.mxu0
  %v886 = vadd.f32 %v757, %v885
  %v887 = vpop.f32.mrf.mxu0
  %888 = vmatprep.mubr.bf16.mxu0 %v366
  %889 = vmatmul.mubr.bf16.gmra.mxu0 %v365
  %v890 = vpop.f32.mrf.mxu0
  %v891 = vadd.f32 %v762, %v890
  %v892 = vpop.f32.mrf.mxu0
  %v893 = vpop.f32.mrf.mxu0
  %v894 = vadd.f32 %v765, %v893
  %v895 = vpop.f32.mrf.mxu0
  %896 = vmatprep.mubr.bf16.mxu0 %v371
  %897 = vmatmul.mubr.bf16.gmra.mxu0 %v370
  %v898 = vpop.f32.mrf.mxu0
  %v899 = vadd.f32 %v770, %v898
  %v900 = vpop.f32.mrf.mxu0
  %v901 = vpop.f32.mrf.mxu0
  %v902 = vadd.f32 %v773, %v901
  %v903 = vpop.f32.mrf.mxu0
  %904 = vmatprep.mubr.bf16.mxu0 %v376
  %905 = vmatmul.mubr.bf16.gmra.mxu0 %v375
  %v906 = vpop.f32.mrf.mxu0
  %v907 = vadd.f32 %v778, %v906
  %v908 = vpop.f32.mrf.mxu0
  %v909 = vpop.f32.mrf.mxu0
  %v910 = vadd.f32 %v781, %v909
  %v911 = vpop.f32.mrf.mxu0
  %912 = vmatprep.mubr.bf16.mxu0 %v381
  %913 = vmatmul.mubr.bf16.gmra.mxu0 %v380
  %v914 = vpop.f32.mrf.mxu0
  %v915 = vadd.f32 %v786, %v914
  %v916 = vpop.f32.mrf.mxu0
  %v917 = vpop.f32.mrf.mxu0
  %v918 = vadd.f32 %v789, %v917
  %v919 = vpop.f32.mrf.mxu0
  %920 = vmatprep.mubr.bf16.mxu0 %v386
  %921 = vmatmul.mubr.bf16.gmra.mxu0 %v385
  %v922 = vpop.f32.mrf.mxu0
  %v923 = vadd.f32 %v794, %v922
  %v924 = vpop.f32.mrf.mxu0
  %v925 = vpop.f32.mrf.mxu0
  %v926 = vadd.f32 %v797, %v925
  %v927 = vpop.f32.mrf.mxu0
  %928 = vmatprep.mubr.bf16.mxu0 %v391
  %929 = vmatmul.mubr.bf16.gmra.mxu0 %v390
  %v930 = vpop.f32.mrf.mxu0
  %v931 = vadd.f32 %v802, %v930
  %v932 = vpop.f32.mrf.mxu0
  %v933 = vpop.f32.mrf.mxu0
  %v934 = vadd.f32 %v805, %v933
  %v935 = vpop.f32.mrf.mxu0
  %936 = vmatprep.mubr.bf16.mxu0 %v396
  %937 = vmatmul.mubr.bf16.gmra.mxu0 %v395
  %v938 = vpop.f32.mrf.mxu0
  %v939 = vadd.f32 %v810, %v938
  %v940 = vpop.f32.mrf.mxu0
  %v941 = vpop.f32.mrf.mxu0
  %v942 = vadd.f32 %v813, %v941
  %v943 = vpop.f32.mrf.mxu0
  %944 = vmatprep.mubr.bf16.mxu0 %v401
  %945 = vmatmul.mubr.bf16.gmra.mxu0 %v400
  %v946 = vpop.f32.mrf.mxu0
  %v947 = vadd.f32 %v818, %v946
  %v948 = vpop.f32.mrf.mxu0
  %v949 = vpop.f32.mrf.mxu0
  %v950 = vadd.f32 %v821, %v949
  %v951 = vpop.f32.mrf.mxu0
  %952 = vmatprep.mubr.bf16.mxu0 %v406
  %953 = vmatmul.mubr.bf16.gmra.mxu0 %v405
  %v954 = vpop.f32.mrf.mxu0
  %v955 = vadd.f32 %v826, %v954
  %v956 = vpop.f32.mrf.mxu0
  %v957 = vpop.f32.mrf.mxu0
  %v958 = vadd.f32 %v829, %v957
  %v959 = vpop.f32.mrf.mxu0
  %960 = vmatprep.mubr.bf16.mxu0 %v411
  %961 = vmatmul.mubr.bf16.gmra.mxu0 %v410
  %v962 = vpop.f32.mrf.mxu0
  %v963 = vadd.f32 %v834, %v962
  %v964 = vpop.f32.mrf.mxu0
  %v965 = vpop.f32.mrf.mxu0
  %v966 = vadd.f32 %v837, %v965
  %v967 = vpop.f32.mrf.mxu0
  %968 = vmatprep.mubr.bf16.mxu0 %v416
  %969 = vmatmul.mubr.bf16.gmra.mxu0 %v415
  %v970 = vpop.f32.mrf.mxu0
  %v971 = vadd.f32 %v842, %v970
  %v972 = vpop.f32.mrf.mxu0
  %v973 = vpop.f32.mrf.mxu0
  %v974 = vadd.f32 %v845, %v973
  %v975 = vpop.f32.mrf.mxu0
  %976 = vdwg.mxu0
  %977 = vmatprep.subr.bf16.mxu0 0
  %978 = vmatpush1.bf16.msra.mxu0 0
  %979 = vmatprep.subr.bf16.mxu0 0
  %980 = vmatpush1.bf16.msra.mxu0 0
  %981 = vmatprep.subr.bf16.mxu0 0
  %982 = vmatpush1.bf16.msra.mxu0 0
  %983 = vmatprep.subr.bf16.mxu0 0
  %984 = vmatpush1.bf16.msra.mxu0 0
  %985 = vmatprep.subr.bf16.mxu0 0
  %986 = vmatpush1.bf16.msra.mxu0 %v645
  %987 = vmatprep.subr.bf16.mxu0 0
  %988 = vmatpush1.bf16.msra.mxu0 %v644
  %989 = vmatprep.subr.bf16.mxu0 0
  %990 = vmatpush1.bf16.msra.mxu0 %v643
  %991 = vmatprep.subr.bf16.mxu0 0
  %992 = vmatpush1.bf16.msra.mxu0 %v642
  %993 = vmatprep.subr.bf16.mxu0 0
  %994 = vmatpush2.bf16.msra.mxu0 0
  %995 = vmatprep.subr.bf16.mxu0 0
  %996 = vmatpush2.bf16.msra.mxu0 0
  %997 = vmatprep.subr.bf16.mxu0 0
  %998 = vmatpush2.bf16.msra.mxu0 0
  %999 = vmatprep.subr.bf16.mxu0 0
  %1000 = vmatpush2.bf16.msra.mxu0 0
  %1001 = vmatprep.subr.bf16.mxu0 0
  %1002 = vmatpush2.bf16.msra.mxu0 0
  %1003 = vmatprep.subr.bf16.mxu0 0
  %1004 = vmatpush2.bf16.msra.mxu0 0
  %1005 = vmatprep.subr.bf16.mxu0 0
  %1006 = vmatpush2.bf16.msra.mxu0 0
  %1007 = vmatprep.subr.bf16.mxu0 0
  %1008 = vmatpush2.bf16.msra.mxu0 0
  %1009 = vmatprep.mubr.bf16.mxu0 0
  %1010 = vmatmul.mubr.bf16.gmra.mxu0 %v684
  %v1011 = vpop.f32.mrf.mxu0
  %v1012 = vadd.f32 %v883, %v1011
  %v1013 = vpop.f32.mrf.mxu0
  %v1014 = vpop.f32.mrf.mxu0
  %v1015 = vadd.f32 %v886, %v1014
  %v1016 = vpop.f32.mrf.mxu0
  %1017 = vmatprep.mubr.bf16.mxu0 0
  %1018 = vmatmul.mubr.bf16.gmra.mxu0 %v687
  %v1019 = vpop.f32.mrf.mxu0
  %v1020 = vadd.f32 %v891, %v1019
  %v1021 = vpop.f32.mrf.mxu0
  %v1022 = vpop.f32.mrf.mxu0
  %v1023 = vadd.f32 %v894, %v1022
  %v1024 = vpop.f32.mrf.mxu0
  %1025 = vmatprep.mubr.bf16.mxu0 0
  %1026 = vmatmul.mubr.bf16.gmra.mxu0 %v690
  %v1027 = vpop.f32.mrf.mxu0
  %v1028 = vadd.f32 %v899, %v1027
  %v1029 = vpop.f32.mrf.mxu0
  %v1030 = vpop.f32.mrf.mxu0
  %v1031 = vadd.f32 %v902, %v1030
  %v1032 = vpop.f32.mrf.mxu0
  %1033 = vmatprep.mubr.bf16.mxu0 0
  %1034 = vmatmul.mubr.bf16.gmra.mxu0 %v693
  %v1035 = vpop.f32.mrf.mxu0
  %v1036 = vadd.f32 %v907, %v1035
  %v1037 = vpop.f32.mrf.mxu0
  %v1038 = vpop.f32.mrf.mxu0
  %v1039 = vadd.f32 %v910, %v1038
  %v1040 = vpop.f32.mrf.mxu0
  %1041 = vmatprep.mubr.bf16.mxu0 0
  %1042 = vmatmul.mubr.bf16.gmra.mxu0 %v696
  %v1043 = vpop.f32.mrf.mxu0
  %v1044 = vadd.f32 %v915, %v1043
  %v1045 = vpop.f32.mrf.mxu0
  %v1046 = vpop.f32.mrf.mxu0
  %v1047 = vadd.f32 %v918, %v1046
  %v1048 = vpop.f32.mrf.mxu0
  %1049 = vmatprep.mubr.bf16.mxu0 0
  %1050 = vmatmul.mubr.bf16.gmra.mxu0 %v699
  %v1051 = vpop.f32.mrf.mxu0
  %v1052 = vadd.f32 %v923, %v1051
  %v1053 = vpop.f32.mrf.mxu0
  %v1054 = vpop.f32.mrf.mxu0
  %v1055 = vadd.f32 %v926, %v1054
  %v1056 = vpop.f32.mrf.mxu0
  %1057 = vmatprep.mubr.bf16.mxu0 0
  %1058 = vmatmul.mubr.bf16.gmra.mxu0 %v702
  %v1059 = vpop.f32.mrf.mxu0
  %v1060 = vadd.f32 %v931, %v1059
  %v1061 = vpop.f32.mrf.mxu0
  %v1062 = vpop.f32.mrf.mxu0
  %v1063 = vadd.f32 %v934, %v1062
  %v1064 = vpop.f32.mrf.mxu0
  %1065 = vmatprep.mubr.bf16.mxu0 0
  %1066 = vmatmul.mubr.bf16.gmra.mxu0 %v705
  %v1067 = vpop.f32.mrf.mxu0
  %v1068 = vadd.f32 %v939, %v1067
  %v1069 = vpop.f32.mrf.mxu0
  %v1070 = vpop.f32.mrf.mxu0
  %v1071 = vadd.f32 %v942, %v1070
  %v1072 = vpop.f32.mrf.mxu0
  %1073 = vmatprep.mubr.bf16.mxu0 0
  %1074 = vmatmul.mubr.bf16.gmra.mxu0 %v708
  %v1075 = vpop.f32.mrf.mxu0
  %v1076 = vadd.f32 %v947, %v1075
  %v1077 = vpop.f32.mrf.mxu0
  %v1078 = vpop.f32.mrf.mxu0
  %v1079 = vadd.f32 %v950, %v1078
  %v1080 = vpop.f32.mrf.mxu0
  %1081 = vmatprep.mubr.bf16.mxu0 0
  %1082 = vmatmul.mubr.bf16.gmra.mxu0 %v711
  %v1083 = vpop.f32.mrf.mxu0
  %v1084 = vadd.f32 %v955, %v1083
  %v1085 = vpop.f32.mrf.mxu0
  %v1086 = vpop.f32.mrf.mxu0
  %v1087 = vadd.f32 %v958, %v1086
  %v1088 = vpop.f32.mrf.mxu0
  %1089 = vmatprep.mubr.bf16.mxu0 0
  %1090 = vmatmul.mubr.bf16.gmra.mxu0 %v714
  %v1091 = vpop.f32.mrf.mxu0
  %v1092 = vadd.f32 %v963, %v1091
  %v1093 = vpop.f32.mrf.mxu0
  %v1094 = vpop.f32.mrf.mxu0
  %v1095 = vadd.f32 %v966, %v1094
  %v1096 = vpop.f32.mrf.mxu0
  %1097 = vmatprep.mubr.bf16.mxu0 0
  %1098 = vmatmul.mubr.bf16.gmra.mxu0 %v717
  %v1099 = vpop.f32.mrf.mxu0
  %v1100 = vadd.f32 %v971, %v1099
  %v1101 = vpop.f32.mrf.mxu0
  %v1102 = vpop.f32.mrf.mxu0
  %v1103 = vadd.f32 %v974, %v1102
  %v1104 = vpop.f32.mrf.mxu0
  %1105 = vdwg.mxu0
  %v1106 = vmax.f32 %v1012, 0.0
  %v1107 = vmax.f32 %v1015, 0.0
  %v1108 = vmax.f32 %v1020, 0.0
  %v1109 = vmax.f32 %v1023, 0.0
  %v1110 = vmax.f32 %v1028, 0.0
  %v1111 = vmax.f32 %v1031, 0.0
  %v1112 = vmax.f32 %v1036, 0.0
  %v1113 = vmax.f32 %v1039, 0.0
  %v1114 = vmax.f32 %v1044, 0.0
  %v1115 = vmax.f32 %v1047, 0.0
  %v1116 = vmax.f32 %v1052, 0.0
  %v1117 = vmax.f32 %v1055, 0.0
  %v1118 = vmax.f32 %v1060, 0.0
  %v1119 = vmax.f32 %v1063, 0.0
  %v1120 = vmax.f32 %v1068, 0.0
  %v1121 = vmax.f32 %v1071, 0.0
  %v1122 = vmax.f32 %v1076, 0.0
  %v1123 = vmax.f32 %v1079, 0.0
  %v1124 = vmax.f32 %v1084, 0.0
  %v1125 = vmax.f32 %v1087, 0.0
  %v1126 = vmax.f32 %v1092, 0.0
  %v1127 = vmax.f32 %v1095, 0.0
  %v1128 = vmax.f32 %v1100, 0.0
  %v1129 = vmax.f32 %v1103, 0.0
  %v1130 = vpack.c.bf16 %v1107, %v1106
  %v1131 = vpack.c.bf16 %v1109, %v1108
  %v1132 = vpack.c.bf16 %v1111, %v1110
  %v1133 = vpack.c.bf16 %v1113, %v1112
  %v1134 = vpack.c.bf16 %v1115, %v1114
  %v1135 = vpack.c.bf16 %v1117, %v1116
  %v1136 = vpack.c.bf16 %v1119, %v1118
  %v1137 = vpack.c.bf16 %v1121, %v1120
  %v1138 = vpack.c.bf16 %v1123, %v1122
  %v1139 = vpack.c.bf16 %v1125, %v1124
  %v1140 = vpack.c.bf16 %v1127, %v1126
  %v1141 = vpack.c.bf16 %v1129, %v1128
  %v1154 = vunpack.c.l.b16 %v1130
  %v1155 = vunpack.c.h.b16 %v1130
  %v1156 = vunpack.c.l.b16 %v1131
  %v1157 = vunpack.c.h.b16 %v1131
  %v1158 = vunpack.c.l.b16 %v1132
  %v1159 = vunpack.c.h.b16 %v1132
  %v1160 = vunpack.c.l.b16 %v1133
  %v1161 = vunpack.c.h.b16 %v1133
  %v1162 = vunpack.c.l.b16 %v1134
  %v1163 = vunpack.c.h.b16 %v1134
  %v1164 = vunpack.c.l.b16 %v1135
  %v1165 = vunpack.c.h.b16 %v1135
  %v1166 = vunpack.c.l.b16 %v1136
  %v1167 = vunpack.c.h.b16 %v1136
  %v1168 = vunpack.c.l.b16 %v1137
  %v1169 = vunpack.c.h.b16 %v1137
  %v1170 = vunpack.c.l.b16 %v1138
  %v1171 = vunpack.c.h.b16 %v1138
  %v1172 = vunpack.c.l.b16 %v1139
  %v1173 = vunpack.c.h.b16 %v1139
  %v1174 = vunpack.c.l.b16 %v1140
  %v1175 = vunpack.c.h.b16 %v1140
  %v1176 = vunpack.c.l.b16 %v1141
  %v1177 = vunpack.c.h.b16 %v1141
  %v1178 = vpack.c.b16 %v1154, %v1154
  %v1179 = vpack.c.b16 %v1155, %v1155
  %v1180 = vpack.c.b16 %v1156, %v1156
  %v1181 = vpack.c.b16 %v1157, %v1157
  %v1182 = vpack.c.b16 %v1158, %v1158
  %v1183 = vpack.c.b16 %v1159, %v1159
  %v1184 = vpack.c.b16 %v1160, %v1160
  %v1185 = vpack.c.b16 %v1161, %v1161
  %v1186 = vpack.c.b16 %v1162, %v1162
  %v1187 = vpack.c.b16 %v1163, %v1163
  %v1188 = vpack.c.b16 %v1164, %v1164
  %v1189 = vpack.c.b16 %v1165, %v1165
  %v1190 = vpack.c.b16 %v1166, %v1166
  %v1191 = vpack.c.b16 %v1167, %v1167
  %v1192 = vpack.c.b16 %v1168, %v1168
  %v1193 = vpack.c.b16 %v1169, %v1169
  %v1194 = vpack.c.b16 %v1170, %v1170
  %v1195 = vpack.c.b16 %v1171, %v1171
  %v1196 = vpack.c.b16 %v1172, %v1172
  %v1197 = vpack.c.b16 %v1173, %v1173
  %v1198 = vpack.c.b16 %v1174, %v1174
  %v1199 = vpack.c.b16 %v1175, %v1175
  %v1200 = vpack.c.b16 %v1176, %v1176
  %v1201 = vpack.c.b16 %v1177, %v1177
  %vm1226 = vcmask 519168
  %1227 = vst.msk [vmem:[%s3] sm:$0xf] %vm1226, %v1178
  %1228 = vst.msk [vmem:[%s3 + $0x4] sm:$0xf] %vm1226, %v1179
  %1229 = vst.msk [vmem:[%s3 + $0x8] sm:$0xf] %vm1226, %v1180
  %1230 = vst.msk [vmem:[%s3 + $0xc] sm:$0xf] %vm1226, %v1181
  %1231 = vst.msk [vmem:[%s3 + $0x10] sm:$0xf] %vm1226, %v1182
  %1232 = vst.msk [vmem:[%s3 + $0x14] sm:$0xf] %vm1226, %v1183
  %1233 = vst.msk [vmem:[%s3 + $0x18] sm:$0xf] %vm1226, %v1184
  %1234 = vst.msk [vmem:[%s3 + $0x1c] sm:$0xf] %vm1226, %v1185
  %1235 = vst.msk [vmem:[%s3 + $0x20] sm:$0xf] %vm1226, %v1186
  %1236 = vst.msk [vmem:[%s3 + $0x24] sm:$0xf] %vm1226, %v1187
  %1237 = vst.msk [vmem:[%s3 + $0x28] sm:$0xf] %vm1226, %v1188
  %1238 = vst.msk [vmem:[%s3 + $0x2c] sm:$0xf] %vm1226, %v1189
  %1239 = vst.msk [vmem:[%s3 + $0x30] sm:$0xf] %vm1226, %v1190
  %1240 = vst.msk [vmem:[%s3 + $0x34] sm:$0xf] %vm1226, %v1191
  %1241 = vst.msk [vmem:[%s3 + $0x38] sm:$0xf] %vm1226, %v1192
  %1242 = vst.msk [vmem:[%s3 + $0x3c] sm:$0xf] %vm1226, %v1193
  %1243 = vst.msk [vmem:[%s3 + $0x40] sm:$0xf] %vm1226, %v1194
  %1244 = vst.msk [vmem:[%s3 + $0x44] sm:$0xf] %vm1226, %v1195
  %1245 = vst.msk [vmem:[%s3 + $0x48] sm:$0xf] %vm1226, %v1196
  %1246 = vst.msk [vmem:[%s3 + $0x4c] sm:$0xf] %vm1226, %v1197
  %1247 = vst.msk [vmem:[%s3 + $0x50] sm:$0xf] %vm1226, %v1198
  %1248 = vst.msk [vmem:[%s3 + $0x54] sm:$0xf] %vm1226, %v1199
  %1249 = vst.msk [vmem:[%s3 + $0x58] sm:$0xf] %vm1226, %v1200
  %1250 = vst.msk [vmem:[%s3 + $0x5c] sm:$0xf] %vm1226, %v1201
  // Predicated region
  $region14: #{actor_critic_forward.6} parent=0 // pred_check
    _
  $region15: #{actor_critic_forward.6} parent=0 // pred_check_branch
    %1252 = sbr.rel (0) target = $region17
  $region16: #{actor_critic_forward.6} parent=0 // pred_region
    _
  $region17: #{actor_critic_forward.6} parent=0 // pred_fallthru
    _
  // Predicated region
  $region18: #{actor_critic_forward.6} parent=0 // pred_check
    _
  $region19: #{actor_critic_forward.6} parent=0 // pred_check_branch
    %1254 = sbr.rel (0) target = $region21
  $region20: #{actor_critic_forward.6} parent=0 // pred_region
    _
  $region21: #{actor_critic_forward.6} parent=0 // pred_fallthru
    _

// kernel: actor_critic_forward.7
$region0: #{actor_critic_forward.7}
  #allocation0 [shape = 'u32[]', space=smem, size = 0x4, offset = 0x4, fixed_abs, tag = 'smem constant byte address 0x4 - core index']
  #allocation1 [shape = 'u32[144,128]{1,0:T(1,128)}', space=vmem, size = 0x12000, scoped, tag = 'internal scratch']
  %s0 = inlined_call_operand.vmem [shape: bf16[2,6144], index: 0, kind: input, shape index: {}]
  %s1 = inlined_call_operand.vmem [shape: bf16[6144,256], index: 1, kind: input, shape index: {}]
  %s2 = inlined_call_operand.vmem [shape: f32[1,256], index: 2, kind: input, shape index: {}]
  %s3 = inlined_call_operand.vmem [shape: bf16[256,3], index: 3, kind: input, shape index: {}]
  %s4 = inlined_call_operand.vmem [shape: f32[1,3], index: 4, kind: input, shape index: {}]
  %s5 = inlined_call_operand.vmem [shape: f32[2,3], index: 5, kind: output, shape index: {}]
  %s6 = sld [smem:[#allocation0]]
  $region30: #{actor_critic_forward.7} parent=0
    _
  %s8 = ssub.s32 1, %s6
  %s9 = scalar_select 0, %s8, %s6
  // Predicated region
  $region2: #{actor_critic_forward.7} parent=0 // pred_check
    _
  $region3: #{actor_critic_forward.7} parent=0 // pred_check_branch
    %11 = sbr.rel (0) target = $region5
  $region4: #{actor_critic_forward.7} parent=0 // pred_region
    _
  $region5: #{actor_critic_forward.7} parent=0 // pred_fallthru
    _
  // Predicated region
  $region6: #{actor_critic_forward.7} parent=0 // pred_check
    _
  $region7: #{actor_critic_forward.7} parent=0 // pred_check_branch
    %13 = sbr.rel (0) target = $region9
  $region8: #{actor_critic_forward.7} parent=0 // pred_region
    _
  $region9: #{actor_critic_forward.7} parent=0 // pred_fallthru
    _
  // Predicated region
  $region10: #{actor_critic_forward.7} parent=0 // pred_check
    _
  $region11: #{actor_critic_forward.7} parent=0 // pred_check_branch
    %15 = sbr.rel (0) target = $region13
  $region12: #{actor_critic_forward.7} parent=0 // pred_region
    _
  $region13: #{actor_critic_forward.7} parent=0 // pred_fallthru
    _
  // Predicated region
  $region14: #{actor_critic_forward.7} parent=0 // pred_check
    _
  $region15: #{actor_critic_forward.7} parent=0 // pred_check_branch
    %17 = sbr.rel (0) target = $region17
  $region16: #{actor_critic_forward.7} parent=0 // pred_region
    _
  $region17: #{actor_critic_forward.7} parent=0 // pred_fallthru
    _
  // Predicated region
  $region18: #{actor_critic_forward.7} parent=0 // pred_check
    _
  $region19: #{actor_critic_forward.7} parent=0 // pred_check_branch
    %19 = sbr.rel (0) target = $region21
  $region20: #{actor_critic_forward.7} parent=0 // pred_region
    _
  $region21: #{actor_critic_forward.7} parent=0 // pred_fallthru
    _
  %v21 = vld [vmem:[%s0] sm:$0xff]
  %v22 = vld [vmem:[%s0 + $0x8] sm:$0xff]
  %v23 = vld [vmem:[%s0 + $0x10] sm:$0xff]
  %v24 = vld [vmem:[%s0 + $0x18] sm:$0xff]
  %v25 = vld [vmem:[%s0 + $0x20] sm:$0xff]
  %v26 = vld [vmem:[%s0 + $0x28] sm:$0xff]
  %v27 = vld [vmem:[%s1] sm:$0xff]
  %v28 = vld [vmem:[%s1 + $0x8] sm:$0xff]
  %v29 = vld [vmem:[%s1 + $0x10] sm:$0xff]
  %v30 = vld [vmem:[%s1 + $0x18] sm:$0xff]
  %v31 = vld [vmem:[%s1 + $0x20] sm:$0xff]
  %v32 = vld [vmem:[%s1 + $0x28] sm:$0xff]
  %v33 = vld [vmem:[%s1 + $0x30] sm:$0xff]
  %v34 = vld [vmem:[%s1 + $0x38] sm:$0xff]
  %v35 = vld [vmem:[%s1 + $0x40] sm:$0xff]
  %v36 = vld [vmem:[%s1 + $0x48] sm:$0xff]
  %v37 = vld [vmem:[%s1 + $0x50] sm:$0xff]
  %v38 = vld [vmem:[%s1 + $0x58] sm:$0xff]
  %v39 = vld [vmem:[%s1 + $0x60] sm:$0xff]
  %v40 = vld [vmem:[%s1 + $0x68] sm:$0xff]
  %v41 = vld [vmem:[%s1 + $0x70] sm:$0xff]
  %v42 = vld [vmem:[%s1 + $0x78] sm:$0xff]
  %v43 = vld [vmem:[%s1 + $0x80] sm:$0xff]
  %v44 = vld [vmem:[%s1 + $0x88] sm:$0xff]
  %v45 = vld [vmem:[%s1 + $0x90] sm:$0xff]
  %v46 = vld [vmem:[%s1 + $0x98] sm:$0xff]
  %v47 = vld [vmem:[%s1 + $0xa0] sm:$0xff]
  %v48 = vld [vmem:[%s1 + $0xa8] sm:$0xff]
  %v49 = vld [vmem:[%s1 + $0xb0] sm:$0xff]
  %v50 = vld [vmem:[%s1 + $0xb8] sm:$0xff]
  %v51 = vld [vmem:[%s1 + $0xc0] sm:$0xff]
  %v52 = vld [vmem:[%s1 + $0xc8] sm:$0xff]
  %v53 = vld [vmem:[%s1 + $0xd0] sm:$0xff]
  %v54 = vld [vmem:[%s1 + $0xd8] sm:$0xff]
  %v55 = vld [vmem:[%s1 + $0xe0] sm:$0xff]
  %v56 = vld [vmem:[%s1 + $0xe8] sm:$0xff]
  %v57 = vld [vmem:[%s1 + $0xf0] sm:$0xff]
  %v58 = vld [vmem:[%s1 + $0xf8] sm:$0xff]
  %v59 = vld [vmem:[%s1 + $0x100] sm:$0xff]
  %v60 = vld [vmem:[%s1 + $0x108] sm:$0xff]
  %v61 = vld [vmem:[%s1 + $0x110] sm:$0xff]
  %v62 = vld [vmem:[%s1 + $0x118] sm:$0xff]
  %v63 = vld [vmem:[%s1 + $0x120] sm:$0xff]
  %v64 = vld [vmem:[%s1 + $0x128] sm:$0xff]
  %v65 = vld [vmem:[%s1 + $0x130] sm:$0xff]
  %v66 = vld [vmem:[%s1 + $0x138] sm:$0xff]
  %v67 = vld [vmem:[%s1 + $0x140] sm:$0xff]
  %v68 = vld [vmem:[%s1 + $0x148] sm:$0xff]
  %v69 = vld [vmem:[%s1 + $0x150] sm:$0xff]
  %v70 = vld [vmem:[%s1 + $0x158] sm:$0xff]
  %v71 = vld [vmem:[%s1 + $0x160] sm:$0xff]
  %v72 = vld [vmem:[%s1 + $0x168] sm:$0xff]
  %v73 = vld [vmem:[%s1 + $0x170] sm:$0xff]
  %v74 = vld [vmem:[%s1 + $0x178] sm:$0xff]
  %v75 = vld [vmem:[%s1 + $0x180] sm:$0xff]
  %v76 = vld [vmem:[%s1 + $0x188] sm:$0xff]
  %v77 = vld [vmem:[%s1 + $0x190] sm:$0xff]
  %v78 = vld [vmem:[%s1 + $0x198] sm:$0xff]
  %v79 = vld [vmem:[%s1 + $0x1a0] sm:$0xff]
  %v80 = vld [vmem:[%s1 + $0x1a8] sm:$0xff]
  %v81 = vld [vmem:[%s1 + $0x1b0] sm:$0xff]
  %v82 = vld [vmem:[%s1 + $0x1b8] sm:$0xff]
  %v83 = vld [vmem:[%s1 + $0x1c0] sm:$0xff]
  %v84 = vld [vmem:[%s1 + $0x1c8] sm:$0xff]
  %v85 = vld [vmem:[%s1 + $0x1d0] sm:$0xff]
  %v86 = vld [vmem:[%s1 + $0x1d8] sm:$0xff]
  %v87 = vld [vmem:[%s1 + $0x1e0] sm:$0xff]
  %v88 = vld [vmem:[%s1 + $0x1e8] sm:$0xff]
  %v89 = vld [vmem:[%s1 + $0x1f0] sm:$0xff]
  %v90 = vld [vmem:[%s1 + $0x1f8] sm:$0xff]
  %v91 = vld [vmem:[%s1 + $0x200] sm:$0xff]
  %v92 = vld [vmem:[%s1 + $0x208] sm:$0xff]
  %v93 = vld [vmem:[%s1 + $0x210] sm:$0xff]
  %v94 = vld [vmem:[%s1 + $0x218] sm:$0xff]
  %v95 = vld [vmem:[%s1 + $0x220] sm:$0xff]
  %v96 = vld [vmem:[%s1 + $0x228] sm:$0xff]
  %v97 = vld [vmem:[%s1 + $0x230] sm:$0xff]
  %v98 = vld [vmem:[%s1 + $0x238] sm:$0xff]
  %v99 = vld [vmem:[%s1 + $0x240] sm:$0xff]
  %v100 = vld [vmem:[%s1 + $0x248] sm:$0xff]
  %v101 = vld [vmem:[%s1 + $0x250] sm:$0xff]
  %v102 = vld [vmem:[%s1 + $0x258] sm:$0xff]
  %v103 = vld [vmem:[%s1 + $0x260] sm:$0xff]
  %v104 = vld [vmem:[%s1 + $0x268] sm:$0xff]
  %v105 = vld [vmem:[%s1 + $0x270] sm:$0xff]
  %v106 = vld [vmem:[%s1 + $0x278] sm:$0xff]
  %v107 = vld [vmem:[%s1 + $0x280] sm:$0xff]
  %v108 = vld [vmem:[%s1 + $0x288] sm:$0xff]
  %v109 = vld [vmem:[%s1 + $0x290] sm:$0xff]
  %v110 = vld [vmem:[%s1 + $0x298] sm:$0xff]
  %v111 = vld [vmem:[%s1 + $0x2a0] sm:$0xff]
  %v112 = vld [vmem:[%s1 + $0x2a8] sm:$0xff]
  %v113 = vld [vmem:[%s1 + $0x2b0] sm:$0xff]
  %v114 = vld [vmem:[%s1 + $0x2b8] sm:$0xff]
  %v115 = vld [vmem:[%s1 + $0x2c0] sm:$0xff]
  %v116 = vld [vmem:[%s1 + $0x2c8] sm:$0xff]
  %v117 = vld [vmem:[%s1 + $0x2d0] sm:$0xff]
  %v118 = vld [vmem:[%s1 + $0x2d8] sm:$0xff]
  %v119 = vld [vmem:[%s1 + $0x2e0] sm:$0xff]
  %v120 = vld [vmem:[%s1 + $0x2e8] sm:$0xff]
  %v121 = vld [vmem:[%s1 + $0x2f0] sm:$0xff]
  %v122 = vld [vmem:[%s1 + $0x2f8] sm:$0xff]
  %v123 = vld [vmem:[%s1 + $0x300] sm:$0xff]
  %v124 = vld [vmem:[%s1 + $0x308] sm:$0xff]
  %v125 = vld [vmem:[%s1 + $0x310] sm:$0xff]
  %v126 = vld [vmem:[%s1 + $0x318] sm:$0xff]
  %v127 = vld [vmem:[%s1 + $0x320] sm:$0xff]
  %v128 = vld [vmem:[%s1 + $0x328] sm:$0xff]
  %v129 = vld [vmem:[%s1 + $0x330] sm:$0xff]
  %v130 = vld [vmem:[%s1 + $0x338] sm:$0xff]
  %v131 = vld [vmem:[%s1 + $0x340] sm:$0xff]
  %v132 = vld [vmem:[%s1 + $0x348] sm:$0xff]
  %v133 = vld [vmem:[%s1 + $0x350] sm:$0xff]
  %v134 = vld [vmem:[%s1 + $0x358] sm:$0xff]
  %v135 = vld [vmem:[%s1 + $0x360] sm:$0xff]
  %v136 = vld [vmem:[%s1 + $0x368] sm:$0xff]
  %v137 = vld [vmem:[%s1 + $0x370] sm:$0xff]
  %v138 = vld [vmem:[%s1 + $0x378] sm:$0xff]
  %v139 = vld [vmem:[%s1 + $0x380] sm:$0xff]
  %v140 = vld [vmem:[%s1 + $0x388] sm:$0xff]
  %v141 = vld [vmem:[%s1 + $0x390] sm:$0xff]
  %v142 = vld [vmem:[%s1 + $0x398] sm:$0xff]
  %v143 = vld [vmem:[%s1 + $0x3a0] sm:$0xff]
  %v144 = vld [vmem:[%s1 + $0x3a8] sm:$0xff]
  %v145 = vld [vmem:[%s1 + $0x3b0] sm:$0xff]
  %v146 = vld [vmem:[%s1 + $0x3b8] sm:$0xff]
  %v147 = vld [vmem:[%s1 + $0x3c0] sm:$0xff]
  %v148 = vld [vmem:[%s1 + $0x3c8] sm:$0xff]
  %v149 = vld [vmem:[%s1 + $0x3d0] sm:$0xff]
  %v150 = vld [vmem:[%s1 + $0x3d8] sm:$0xff]
  %v151 = vld [vmem:[%s1 + $0x3e0] sm:$0xff]
  %v152 = vld [vmem:[%s1 + $0x3e8] sm:$0xff]
  %v153 = vld [vmem:[%s1 + $0x3f0] sm:$0xff]
  %v154 = vld [vmem:[%s1 + $0x3f8] sm:$0xff]
  %v155 = vld [vmem:[%s1 + $0x400] sm:$0xff]
  %v156 = vld [vmem:[%s1 + $0x408] sm:$0xff]
  %v157 = vld [vmem:[%s1 + $0x410] sm:$0xff]
  %v158 = vld [vmem:[%s1 + $0x418] sm:$0xff]
  %v159 = vld [vmem:[%s1 + $0x420] sm:$0xff]
  %v160 = vld [vmem:[%s1 + $0x428] sm:$0xff]
  %v161 = vld [vmem:[%s1 + $0x430] sm:$0xff]
  %v162 = vld [vmem:[%s1 + $0x438] sm:$0xff]
  %v163 = vld [vmem:[%s1 + $0x440] sm:$0xff]
  %v164 = vld [vmem:[%s1 + $0x448] sm:$0xff]
  %v165 = vld [vmem:[%s1 + $0x450] sm:$0xff]
  %v166 = vld [vmem:[%s1 + $0x458] sm:$0xff]
  %v167 = vld [vmem:[%s1 + $0x460] sm:$0xff]
  %v168 = vld [vmem:[%s1 + $0x468] sm:$0xff]
  %v169 = vld [vmem:[%s1 + $0x470] sm:$0xff]
  %v170 = vld [vmem:[%s1 + $0x478] sm:$0xff]
  %v171 = vld [vmem:[%s1 + $0x480] sm:$0xff]
  %v172 = vld [vmem:[%s1 + $0x488] sm:$0xff]
  %v173 = vld [vmem:[%s1 + $0x490] sm:$0xff]
  %v174 = vld [vmem:[%s1 + $0x498] sm:$0xff]
  %v175 = vld [vmem:[%s1 + $0x4a0] sm:$0xff]
  %v176 = vld [vmem:[%s1 + $0x4a8] sm:$0xff]
  %v177 = vld [vmem:[%s1 + $0x4b0] sm:$0xff]
  %v178 = vld [vmem:[%s1 + $0x4b8] sm:$0xff]
  %v179 = vld [vmem:[%s1 + $0x4c0] sm:$0xff]
  %v180 = vld [vmem:[%s1 + $0x4c8] sm:$0xff]
  %v181 = vld [vmem:[%s1 + $0x4d0] sm:$0xff]
  %v182 = vld [vmem:[%s1 + $0x4d8] sm:$0xff]
  %v183 = vld [vmem:[%s1 + $0x4e0] sm:$0xff]
  %v184 = vld [vmem:[%s1 + $0x4e8] sm:$0xff]
  %v185 = vld [vmem:[%s1 + $0x4f0] sm:$0xff]
  %v186 = vld [vmem:[%s1 + $0x4f8] sm:$0xff]
  %v187 = vld [vmem:[%s1 + $0x500] sm:$0xff]
  %v188 = vld [vmem:[%s1 + $0x508] sm:$0xff]
  %v189 = vld [vmem:[%s1 + $0x510] sm:$0xff]
  %v190 = vld [vmem:[%s1 + $0x518] sm:$0xff]
  %v191 = vld [vmem:[%s1 + $0x520] sm:$0xff]
  %v192 = vld [vmem:[%s1 + $0x528] sm:$0xff]
  %v193 = vld [vmem:[%s1 + $0x530] sm:$0xff]
  %v194 = vld [vmem:[%s1 + $0x538] sm:$0xff]
  %v195 = vld [vmem:[%s1 + $0x540] sm:$0xff]
  %v196 = vld [vmem:[%s1 + $0x548] sm:$0xff]
  %v197 = vld [vmem:[%s1 + $0x550] sm:$0xff]
  %v198 = vld [vmem:[%s1 + $0x558] sm:$0xff]
  %v199 = vld [vmem:[%s1 + $0x560] sm:$0xff]
  %v200 = vld [vmem:[%s1 + $0x568] sm:$0xff]
  %v201 = vld [vmem:[%s1 + $0x570] sm:$0xff]
  %v202 = vld [vmem:[%s1 + $0x578] sm:$0xff]
  %v203 = vld [vmem:[%s1 + $0x580] sm:$0xff]
  %v204 = vld [vmem:[%s1 + $0x588] sm:$0xff]
  %v205 = vld [vmem:[%s1 + $0x590] sm:$0xff]
  %v206 = vld [vmem:[%s1 + $0x598] sm:$0xff]
  %v207 = vld [vmem:[%s1 + $0x5a0] sm:$0xff]
  %v208 = vld [vmem:[%s1 + $0x5a8] sm:$0xff]
  %v209 = vld [vmem:[%s1 + $0x5b0] sm:$0xff]
  %v210 = vld [vmem:[%s1 + $0x5b8] sm:$0xff]
  %v211 = vld [vmem:[%s1 + $0x5c0] sm:$0xff]
  %v212 = vld [vmem:[%s1 + $0x5c8] sm:$0xff]
  %v213 = vld [vmem:[%s1 + $0x5d0] sm:$0xff]
  %v214 = vld [vmem:[%s1 + $0x5d8] sm:$0xff]
  %v215 = vld [vmem:[%s1 + $0x5e0] sm:$0xff]
  %v216 = vld [vmem:[%s1 + $0x5e8] sm:$0xff]
  %v217 = vld [vmem:[%s1 + $0x5f0] sm:$0xff]
  %v218 = vld [vmem:[%s1 + $0x5f8] sm:$0xff]
  %v219 = vld [vmem:[%s1 + $0x600] sm:$0xff]
  %v220 = vld [vmem:[%s1 + $0x608] sm:$0xff]
  %v221 = vld [vmem:[%s1 + $0x610] sm:$0xff]
  %v222 = vld [vmem:[%s1 + $0x618] sm:$0xff]
  %v223 = vld [vmem:[%s1 + $0x620] sm:$0xff]
  %v224 = vld [vmem:[%s1 + $0x628] sm:$0xff]
  %v225 = vld [vmem:[%s1 + $0x630] sm:$0xff]
  %v226 = vld [vmem:[%s1 + $0x638] sm:$0xff]
  %v227 = vld [vmem:[%s1 + $0x640] sm:$0xff]
  %v228 = vld [vmem:[%s1 + $0x648] sm:$0xff]
  %v229 = vld [vmem:[%s1 + $0x650] sm:$0xff]
  %v230 = vld [vmem:[%s1 + $0x658] sm:$0xff]
  %v231 = vld [vmem:[%s1 + $0x660] sm:$0xff]
  %v232 = vld [vmem:[%s1 + $0x668] sm:$0xff]
  %v233 = vld [vmem:[%s1 + $0x670] sm:$0xff]
  %v234 = vld [vmem:[%s1 + $0x678] sm:$0xff]
  %v235 = vld [vmem:[%s1 + $0x680] sm:$0xff]
  %v236 = vld [vmem:[%s1 + $0x688] sm:$0xff]
  %v237 = vld [vmem:[%s1 + $0x690] sm:$0xff]
  %v238 = vld [vmem:[%s1 + $0x698] sm:$0xff]
  %v239 = vld [vmem:[%s1 + $0x6a0] sm:$0xff]
  %v240 = vld [vmem:[%s1 + $0x6a8] sm:$0xff]
  %v241 = vld [vmem:[%s1 + $0x6b0] sm:$0xff]
  %v242 = vld [vmem:[%s1 + $0x6b8] sm:$0xff]
  %v243 = vld [vmem:[%s1 + $0x6c0] sm:$0xff]
  %v244 = vld [vmem:[%s1 + $0x6c8] sm:$0xff]
  %v245 = vld [vmem:[%s1 + $0x6d0] sm:$0xff]
  %v246 = vld [vmem:[%s1 + $0x6d8] sm:$0xff]
  %v247 = vld [vmem:[%s1 + $0x6e0] sm:$0xff]
  %v248 = vld [vmem:[%s1 + $0x6e8] sm:$0xff]
  %v249 = vld [vmem:[%s1 + $0x6f0] sm:$0xff]
  %v250 = vld [vmem:[%s1 + $0x6f8] sm:$0xff]
  %v251 = vld [vmem:[%s1 + $0x700] sm:$0xff]
  %v252 = vld [vmem:[%s1 + $0x708] sm:$0xff]
  %v253 = vld [vmem:[%s1 + $0x710] sm:$0xff]
  %v254 = vld [vmem:[%s1 + $0x718] sm:$0xff]
  %v255 = vld [vmem:[%s1 + $0x720] sm:$0xff]
  %v256 = vld [vmem:[%s1 + $0x728] sm:$0xff]
  %v257 = vld [vmem:[%s1 + $0x730] sm:$0xff]
  %v258 = vld [vmem:[%s1 + $0x738] sm:$0xff]
  %v259 = vld [vmem:[%s1 + $0x740] sm:$0xff]
  %v260 = vld [vmem:[%s1 + $0x748] sm:$0xff]
  %v261 = vld [vmem:[%s1 + $0x750] sm:$0xff]
  %v262 = vld [vmem:[%s1 + $0x758] sm:$0xff]
  %v263 = vld [vmem:[%s1 + $0x760] sm:$0xff]
  %v264 = vld [vmem:[%s1 + $0x768] sm:$0xff]
  %v265 = vld [vmem:[%s1 + $0x770] sm:$0xff]
  %v266 = vld [vmem:[%s1 + $0x778] sm:$0xff]
  %v267 = vld [vmem:[%s1 + $0x780] sm:$0xff]
  %v268 = vld [vmem:[%s1 + $0x788] sm:$0xff]
  %v269 = vld [vmem:[%s1 + $0x790] sm:$0xff]
  %v270 = vld [vmem:[%s1 + $0x798] sm:$0xff]
  %v271 = vld [vmem:[%s1 + $0x7a0] sm:$0xff]
  %v272 = vld [vmem:[%s1 + $0x7a8] sm:$0xff]
  %v273 = vld [vmem:[%s1 + $0x7b0] sm:$0xff]
  %v274 = vld [vmem:[%s1 + $0x7b8] sm:$0xff]
  %v275 = vld [vmem:[%s1 + $0x7c0] sm:$0xff]
  %v276 = vld [vmem:[%s1 + $0x7c8] sm:$0xff]
  %v277 = vld [vmem:[%s1 + $0x7d0] sm:$0xff]
  %v278 = vld [vmem:[%s1 + $0x7d8] sm:$0xff]
  %v279 = vld [vmem:[%s1 + $0x7e0] sm:$0xff]
  %v280 = vld [vmem:[%s1 + $0x7e8] sm:$0xff]
  %v281 = vld [vmem:[%s1 + $0x7f0] sm:$0xff]
  %v282 = vld [vmem:[%s1 + $0x7f8] sm:$0xff]
  %v283 = vld [vmem:[%s1 + $0x800] sm:$0xff]
  %v284 = vld [vmem:[%s1 + $0x808] sm:$0xff]
  %v285 = vld [vmem:[%s1 + $0x810] sm:$0xff]
  %v286 = vld [vmem:[%s1 + $0x818] sm:$0xff]
  %v287 = vld [vmem:[%s1 + $0x820] sm:$0xff]
  %v288 = vld [vmem:[%s1 + $0x828] sm:$0xff]
  %v289 = vld [vmem:[%s1 + $0x830] sm:$0xff]
  %v290 = vld [vmem:[%s1 + $0x838] sm:$0xff]
  %v291 = vld [vmem:[%s1 + $0x840] sm:$0xff]
  %v292 = vld [vmem:[%s1 + $0x848] sm:$0xff]
  %v293 = vld [vmem:[%s1 + $0x850] sm:$0xff]
  %v294 = vld [vmem:[%s1 + $0x858] sm:$0xff]
  %v295 = vld [vmem:[%s1 + $0x860] sm:$0xff]
  %v296 = vld [vmem:[%s1 + $0x868] sm:$0xff]
  %v297 = vld [vmem:[%s1 + $0x870] sm:$0xff]
  %v298 = vld [vmem:[%s1 + $0x878] sm:$0xff]
  %v299 = vld [vmem:[%s1 + $0x880] sm:$0xff]
  %v300 = vld [vmem:[%s1 + $0x888] sm:$0xff]
  %v301 = vld [vmem:[%s1 + $0x890] sm:$0xff]
  %v302 = vld [vmem:[%s1 + $0x898] sm:$0xff]
  %v303 = vld [vmem:[%s1 + $0x8a0] sm:$0xff]
  %v304 = vld [vmem:[%s1 + $0x8a8] sm:$0xff]
  %v305 = vld [vmem:[%s1 + $0x8b0] sm:$0xff]
  %v306 = vld [vmem:[%s1 + $0x8b8] sm:$0xff]
  %v307 = vld [vmem:[%s1 + $0x8c0] sm:$0xff]
  %v308 = vld [vmem:[%s1 + $0x8c8] sm:$0xff]
  %v309 = vld [vmem:[%s1 + $0x8d0] sm:$0xff]
  %v310 = vld [vmem:[%s1 + $0x8d8] sm:$0xff]
  %v311 = vld [vmem:[%s1 + $0x8e0] sm:$0xff]
  %v312 = vld [vmem:[%s1 + $0x8e8] sm:$0xff]
  %v313 = vld [vmem:[%s1 + $0x8f0] sm:$0xff]
  %v314 = vld [vmem:[%s1 + $0x8f8] sm:$0xff]
  %v315 = vld [vmem:[%s1 + $0x900] sm:$0xff]
  %v316 = vld [vmem:[%s1 + $0x908] sm:$0xff]
  %v317 = vld [vmem:[%s1 + $0x910] sm:$0xff]
  %v318 = vld [vmem:[%s1 + $0x918] sm:$0xff]
  %v319 = vld [vmem:[%s1 + $0x920] sm:$0xff]
  %v320 = vld [vmem:[%s1 + $0x928] sm:$0xff]
  %v321 = vld [vmem:[%s1 + $0x930] sm:$0xff]
  %v322 = vld [vmem:[%s1 + $0x938] sm:$0xff]
  %v323 = vld [vmem:[%s1 + $0x940] sm:$0xff]
  %v324 = vld [vmem:[%s1 + $0x948] sm:$0xff]
  %v325 = vld [vmem:[%s1 + $0x950] sm:$0xff]
  %v326 = vld [vmem:[%s1 + $0x958] sm:$0xff]
  %v327 = vld [vmem:[%s1 + $0x960] sm:$0xff]
  %v328 = vld [vmem:[%s1 + $0x968] sm:$0xff]
  %v329 = vld [vmem:[%s1 + $0x970] sm:$0xff]
  %v330 = vld [vmem:[%s1 + $0x978] sm:$0xff]
  %v331 = vld [vmem:[%s1 + $0x980] sm:$0xff]
  %v332 = vld [vmem:[%s1 + $0x988] sm:$0xff]
  %v333 = vld [vmem:[%s1 + $0x990] sm:$0xff]
  %v334 = vld [vmem:[%s1 + $0x998] sm:$0xff]
  %v335 = vld [vmem:[%s1 + $0x9a0] sm:$0xff]
  %v336 = vld [vmem:[%s1 + $0x9a8] sm:$0xff]
  %v337 = vld [vmem:[%s1 + $0x9b0] sm:$0xff]
  %v338 = vld [vmem:[%s1 + $0x9b8] sm:$0xff]
  %v339 = vld [vmem:[%s1 + $0x9c0] sm:$0xff]
  %v340 = vld [vmem:[%s1 + $0x9c8] sm:$0xff]
  %v341 = vld [vmem:[%s1 + $0x9d0] sm:$0xff]
  %v342 = vld [vmem:[%s1 + $0x9d8] sm:$0xff]
  %v343 = vld [vmem:[%s1 + $0x9e0] sm:$0xff]
  %v344 = vld [vmem:[%s1 + $0x9e8] sm:$0xff]
  %v345 = vld [vmem:[%s1 + $0x9f0] sm:$0xff]
  %v346 = vld [vmem:[%s1 + $0x9f8] sm:$0xff]
  %v347 = vld [vmem:[%s1 + $0xa00] sm:$0xff]
  %v348 = vld [vmem:[%s1 + $0xa08] sm:$0xff]
  %v349 = vld [vmem:[%s1 + $0xa10] sm:$0xff]
  %v350 = vld [vmem:[%s1 + $0xa18] sm:$0xff]
  %v351 = vld [vmem:[%s1 + $0xa20] sm:$0xff]
  %v352 = vld [vmem:[%s1 + $0xa28] sm:$0xff]
  %v353 = vld [vmem:[%s1 + $0xa30] sm:$0xff]
  %v354 = vld [vmem:[%s1 + $0xa38] sm:$0xff]
  %v355 = vld [vmem:[%s1 + $0xa40] sm:$0xff]
  %v356 = vld [vmem:[%s1 + $0xa48] sm:$0xff]
  %v357 = vld [vmem:[%s1 + $0xa50] sm:$0xff]
  %v358 = vld [vmem:[%s1 + $0xa58] sm:$0xff]
  %v359 = vld [vmem:[%s1 + $0xa60] sm:$0xff]
  %v360 = vld [vmem:[%s1 + $0xa68] sm:$0xff]
  %v361 = vld [vmem:[%s1 + $0xa70] sm:$0xff]
  %v362 = vld [vmem:[%s1 + $0xa78] sm:$0xff]
  %v363 = vld [vmem:[%s1 + $0xa80] sm:$0xff]
  %v364 = vld [vmem:[%s1 + $0xa88] sm:$0xff]
  %v365 = vld [vmem:[%s1 + $0xa90] sm:$0xff]
  %v366 = vld [vmem:[%s1 + $0xa98] sm:$0xff]
  %v367 = vld [vmem:[%s1 + $0xaa0] sm:$0xff]
  %v368 = vld [vmem:[%s1 + $0xaa8] sm:$0xff]
  %v369 = vld [vmem:[%s1 + $0xab0] sm:$0xff]
  %v370 = vld [vmem:[%s1 + $0xab8] sm:$0xff]
  %v371 = vld [vmem:[%s1 + $0xac0] sm:$0xff]
  %v372 = vld [vmem:[%s1 + $0xac8] sm:$0xff]
  %v373 = vld [vmem:[%s1 + $0xad0] sm:$0xff]
  %v374 = vld [vmem:[%s1 + $0xad8] sm:$0xff]
  %v375 = vld [vmem:[%s1 + $0xae0] sm:$0xff]
  %v376 = vld [vmem:[%s1 + $0xae8] sm:$0xff]
  %v377 = vld [vmem:[%s1 + $0xaf0] sm:$0xff]
  %v378 = vld [vmem:[%s1 + $0xaf8] sm:$0xff]
  %v379 = vld [vmem:[%s1 + $0xb00] sm:$0xff]
  %v380 = vld [vmem:[%s1 + $0xb08] sm:$0xff]
  %v381 = vld [vmem:[%s1 + $0xb10] sm:$0xff]
  %v382 = vld [vmem:[%s1 + $0xb18] sm:$0xff]
  %v383 = vld [vmem:[%s1 + $0xb20] sm:$0xff]
  %v384 = vld [vmem:[%s1 + $0xb28] sm:$0xff]
  %v385 = vld [vmem:[%s1 + $0xb30] sm:$0xff]
  %v386 = vld [vmem:[%s1 + $0xb38] sm:$0xff]
  %v387 = vld [vmem:[%s1 + $0xb40] sm:$0xff]
  %v388 = vld [vmem:[%s1 + $0xb48] sm:$0xff]
  %v389 = vld [vmem:[%s1 + $0xb50] sm:$0xff]
  %v390 = vld [vmem:[%s1 + $0xb58] sm:$0xff]
  %v391 = vld [vmem:[%s1 + $0xb60] sm:$0xff]
  %v392 = vld [vmem:[%s1 + $0xb68] sm:$0xff]
  %v393 = vld [vmem:[%s1 + $0xb70] sm:$0xff]
  %v394 = vld [vmem:[%s1 + $0xb78] sm:$0xff]
  %v395 = vld [vmem:[%s1 + $0xb80] sm:$0xff]
  %v396 = vld [vmem:[%s1 + $0xb88] sm:$0xff]
  %v397 = vld [vmem:[%s1 + $0xb90] sm:$0xff]
  %v398 = vld [vmem:[%s1 + $0xb98] sm:$0xff]
  %v399 = vld [vmem:[%s1 + $0xba0] sm:$0xff]
  %v400 = vld [vmem:[%s1 + $0xba8] sm:$0xff]
  %v401 = vld [vmem:[%s1 + $0xbb0] sm:$0xff]
  %v402 = vld [vmem:[%s1 + $0xbb8] sm:$0xff]
  %v403 = vld [vmem:[%s1 + $0xbc0] sm:$0xff]
  %v404 = vld [vmem:[%s1 + $0xbc8] sm:$0xff]
  %v405 = vld [vmem:[%s1 + $0xbd0] sm:$0xff]
  %v406 = vld [vmem:[%s1 + $0xbd8] sm:$0xff]
  %v407 = vld [vmem:[%s1 + $0xbe0] sm:$0xff]
  %v408 = vld [vmem:[%s1 + $0xbe8] sm:$0xff]
  %v409 = vld [vmem:[%s1 + $0xbf0] sm:$0xff]
  %v410 = vld [vmem:[%s1 + $0xbf8] sm:$0xff]
  %v411 = vld [vmem:[%s1 + $0xc00] sm:$0xff]
  %v412 = vld [vmem:[%s1 + $0xc08] sm:$0xff]
  %v413 = vld [vmem:[%s1 + $0xc10] sm:$0xff]
  %v414 = vld [vmem:[%s1 + $0xc18] sm:$0xff]
  %v415 = vld [vmem:[%s1 + $0xc20] sm:$0xff]
  %v416 = vld [vmem:[%s1 + $0xc28] sm:$0xff]
  %v417 = vld [vmem:[%s1 + $0xc30] sm:$0xff]
  %v418 = vld [vmem:[%s1 + $0xc38] sm:$0xff]
  %v419 = vld [vmem:[%s1 + $0xc40] sm:$0xff]
  %v420 = vld [vmem:[%s1 + $0xc48] sm:$0xff]
  %v421 = vld [vmem:[%s1 + $0xc50] sm:$0xff]
  %v422 = vld [vmem:[%s1 + $0xc58] sm:$0xff]
  %v423 = vld [vmem:[%s1 + $0xc60] sm:$0xff]
  %v424 = vld [vmem:[%s1 + $0xc68] sm:$0xff]
  %v425 = vld [vmem:[%s1 + $0xc70] sm:$0xff]
  %v426 = vld [vmem:[%s1 + $0xc78] sm:$0xff]
  %v427 = vld [vmem:[%s1 + $0xc80] sm:$0xff]
  %v428 = vld [vmem:[%s1 + $0xc88] sm:$0xff]
  %v429 = vld [vmem:[%s1 + $0xc90] sm:$0xff]
  %v430 = vld [vmem:[%s1 + $0xc98] sm:$0xff]
  %v431 = vld [vmem:[%s1 + $0xca0] sm:$0xff]
  %v432 = vld [vmem:[%s1 + $0xca8] sm:$0xff]
  %v433 = vld [vmem:[%s1 + $0xcb0] sm:$0xff]
  %v434 = vld [vmem:[%s1 + $0xcb8] sm:$0xff]
  %v435 = vld [vmem:[%s1 + $0xcc0] sm:$0xff]
  %v436 = vld [vmem:[%s1 + $0xcc8] sm:$0xff]
  %v437 = vld [vmem:[%s1 + $0xcd0] sm:$0xff]
  %v438 = vld [vmem:[%s1 + $0xcd8] sm:$0xff]
  %v439 = vld [vmem:[%s1 + $0xce0] sm:$0xff]
  %v440 = vld [vmem:[%s1 + $0xce8] sm:$0xff]
  %v441 = vld [vmem:[%s1 + $0xcf0] sm:$0xff]
  %v442 = vld [vmem:[%s1 + $0xcf8] sm:$0xff]
  %v443 = vld [vmem:[%s1 + $0xd00] sm:$0xff]
  %v444 = vld [vmem:[%s1 + $0xd08] sm:$0xff]
  %v445 = vld [vmem:[%s1 + $0xd10] sm:$0xff]
  %v446 = vld [vmem:[%s1 + $0xd18] sm:$0xff]
  %v447 = vld [vmem:[%s1 + $0xd20] sm:$0xff]
  %v448 = vld [vmem:[%s1 + $0xd28] sm:$0xff]
  %v449 = vld [vmem:[%s1 + $0xd30] sm:$0xff]
  %v450 = vld [vmem:[%s1 + $0xd38] sm:$0xff]
  %v451 = vld [vmem:[%s1 + $0xd40] sm:$0xff]
  %v452 = vld [vmem:[%s1 + $0xd48] sm:$0xff]
  %v453 = vld [vmem:[%s1 + $0xd50] sm:$0xff]
  %v454 = vld [vmem:[%s1 + $0xd58] sm:$0xff]
  %v455 = vld [vmem:[%s1 + $0xd60] sm:$0xff]
  %v456 = vld [vmem:[%s1 + $0xd68] sm:$0xff]
  %v457 = vld [vmem:[%s1 + $0xd70] sm:$0xff]
  %v458 = vld [vmem:[%s1 + $0xd78] sm:$0xff]
  %v459 = vld [vmem:[%s1 + $0xd80] sm:$0xff]
  %v460 = vld [vmem:[%s1 + $0xd88] sm:$0xff]
  %v461 = vld [vmem:[%s1 + $0xd90] sm:$0xff]
  %v462 = vld [vmem:[%s1 + $0xd98] sm:$0xff]
  %v463 = vld [vmem:[%s1 + $0xda0] sm:$0xff]
  %v464 = vld [vmem:[%s1 + $0xda8] sm:$0xff]
  %v465 = vld [vmem:[%s1 + $0xdb0] sm:$0xff]
  %v466 = vld [vmem:[%s1 + $0xdb8] sm:$0xff]
  %v467 = vld [vmem:[%s1 + $0xdc0] sm:$0xff]
  %v468 = vld [vmem:[%s1 + $0xdc8] sm:$0xff]
  %v469 = vld [vmem:[%s1 + $0xdd0] sm:$0xff]
  %v470 = vld [vmem:[%s1 + $0xdd8] sm:$0xff]
  %v471 = vld [vmem:[%s1 + $0xde0] sm:$0xff]
  %v472 = vld [vmem:[%s1 + $0xde8] sm:$0xff]
  %v473 = vld [vmem:[%s1 + $0xdf0] sm:$0xff]
  %v474 = vld [vmem:[%s1 + $0xdf8] sm:$0xff]
  %v475 = vld [vmem:[%s1 + $0xe00] sm:$0xff]
  %v476 = vld [vmem:[%s1 + $0xe08] sm:$0xff]
  %v477 = vld [vmem:[%s1 + $0xe10] sm:$0xff]
  %v478 = vld [vmem:[%s1 + $0xe18] sm:$0xff]
  %v479 = vld [vmem:[%s1 + $0xe20] sm:$0xff]
  %v480 = vld [vmem:[%s1 + $0xe28] sm:$0xff]
  %v481 = vld [vmem:[%s1 + $0xe30] sm:$0xff]
  %v482 = vld [vmem:[%s1 + $0xe38] sm:$0xff]
  %v483 = vld [vmem:[%s1 + $0xe40] sm:$0xff]
  %v484 = vld [vmem:[%s1 + $0xe48] sm:$0xff]
  %v485 = vld [vmem:[%s1 + $0xe50] sm:$0xff]
  %v486 = vld [vmem:[%s1 + $0xe58] sm:$0xff]
  %v487 = vld [vmem:[%s1 + $0xe60] sm:$0xff]
  %v488 = vld [vmem:[%s1 + $0xe68] sm:$0xff]
  %v489 = vld [vmem:[%s1 + $0xe70] sm:$0xff]
  %v490 = vld [vmem:[%s1 + $0xe78] sm:$0xff]
  %v491 = vld [vmem:[%s1 + $0xe80] sm:$0xff]
  %v492 = vld [vmem:[%s1 + $0xe88] sm:$0xff]
  %v493 = vld [vmem:[%s1 + $0xe90] sm:$0xff]
  %v494 = vld [vmem:[%s1 + $0xe98] sm:$0xff]
  %v495 = vld [vmem:[%s1 + $0xea0] sm:$0xff]
  %v496 = vld [vmem:[%s1 + $0xea8] sm:$0xff]
  %v497 = vld [vmem:[%s1 + $0xeb0] sm:$0xff]
  %v498 = vld [vmem:[%s1 + $0xeb8] sm:$0xff]
  %v499 = vld [vmem:[%s1 + $0xec0] sm:$0xff]
  %v500 = vld [vmem:[%s1 + $0xec8] sm:$0xff]
  %v501 = vld [vmem:[%s1 + $0xed0] sm:$0xff]
  %v502 = vld [vmem:[%s1 + $0xed8] sm:$0xff]
  %v503 = vld [vmem:[%s1 + $0xee0] sm:$0xff]
  %v504 = vld [vmem:[%s1 + $0xee8] sm:$0xff]
  %v505 = vld [vmem:[%s1 + $0xef0] sm:$0xff]
  %v506 = vld [vmem:[%s1 + $0xef8] sm:$0xff]
  %v507 = vld [vmem:[%s1 + $0xf00] sm:$0xff]
  %v508 = vld [vmem:[%s1 + $0xf08] sm:$0xff]
  %v509 = vld [vmem:[%s1 + $0xf10] sm:$0xff]
  %v510 = vld [vmem:[%s1 + $0xf18] sm:$0xff]
  %v511 = vld [vmem:[%s1 + $0xf20] sm:$0xff]
  %v512 = vld [vmem:[%s1 + $0xf28] sm:$0xff]
  %v513 = vld [vmem:[%s1 + $0xf30] sm:$0xff]
  %v514 = vld [vmem:[%s1 + $0xf38] sm:$0xff]
  %v515 = vld [vmem:[%s1 + $0xf40] sm:$0xff]
  %v516 = vld [vmem:[%s1 + $0xf48] sm:$0xff]
  %v517 = vld [vmem:[%s1 + $0xf50] sm:$0xff]
  %v518 = vld [vmem:[%s1 + $0xf58] sm:$0xff]
  %v519 = vld [vmem:[%s1 + $0xf60] sm:$0xff]
  %v520 = vld [vmem:[%s1 + $0xf68] sm:$0xff]
  %v521 = vld [vmem:[%s1 + $0xf70] sm:$0xff]
  %v522 = vld [vmem:[%s1 + $0xf78] sm:$0xff]
  %v523 = vld [vmem:[%s1 + $0xf80] sm:$0xff]
  %v524 = vld [vmem:[%s1 + $0xf88] sm:$0xff]
  %v525 = vld [vmem:[%s1 + $0xf90] sm:$0xff]
  %v526 = vld [vmem:[%s1 + $0xf98] sm:$0xff]
  %v527 = vld [vmem:[%s1 + $0xfa0] sm:$0xff]
  %v528 = vld [vmem:[%s1 + $0xfa8] sm:$0xff]
  %v529 = vld [vmem:[%s1 + $0xfb0] sm:$0xff]
  %v530 = vld [vmem:[%s1 + $0xfb8] sm:$0xff]
  %v531 = vld [vmem:[%s1 + $0xfc0] sm:$0xff]
  %v532 = vld [vmem:[%s1 + $0xfc8] sm:$0xff]
  %v533 = vld [vmem:[%s1 + $0xfd0] sm:$0xff]
  %v534 = vld [vmem:[%s1 + $0xfd8] sm:$0xff]
  %v535 = vld [vmem:[%s1 + $0xfe0] sm:$0xff]
  %v536 = vld [vmem:[%s1 + $0xfe8] sm:$0xff]
  %v537 = vld [vmem:[%s1 + $0xff0] sm:$0xff]
  %v538 = vld [vmem:[%s1 + $0xff8] sm:$0xff]
  %v539 = vld [vmem:[%s1 + $0x1000] sm:$0xff]
  %v540 = vld [vmem:[%s1 + $0x1008] sm:$0xff]
  %v541 = vld [vmem:[%s1 + $0x1010] sm:$0xff]
  %v542 = vld [vmem:[%s1 + $0x1018] sm:$0xff]
  %v543 = vld [vmem:[%s1 + $0x1020] sm:$0xff]
  %v544 = vld [vmem:[%s1 + $0x1028] sm:$0xff]
  %v545 = vld [vmem:[%s1 + $0x1030] sm:$0xff]
  %v546 = vld [vmem:[%s1 + $0x1038] sm:$0xff]
  %v547 = vld [vmem:[%s1 + $0x1040] sm:$0xff]
  %v548 = vld [vmem:[%s1 + $0x1048] sm:$0xff]
  %v549 = vld [vmem:[%s1 + $0x1050] sm:$0xff]
  %v550 = vld [vmem:[%s1 + $0x1058] sm:$0xff]
  %v551 = vld [vmem:[%s1 + $0x1060] sm:$0xff]
  %v552 = vld [vmem:[%s1 + $0x1068] sm:$0xff]
  %v553 = vld [vmem:[%s1 + $0x1070] sm:$0xff]
  %v554 = vld [vmem:[%s1 + $0x1078] sm:$0xff]
  %v555 = vld [vmem:[%s1 + $0x1080] sm:$0xff]
  %v556 = vld [vmem:[%s1 + $0x1088] sm:$0xff]
  %v557 = vld [vmem:[%s1 + $0x1090] sm:$0xff]
  %v558 = vld [vmem:[%s1 + $0x1098] sm:$0xff]
  %v559 = vld [vmem:[%s1 + $0x10a0] sm:$0xff]
  %v560 = vld [vmem:[%s1 + $0x10a8] sm:$0xff]
  %v561 = vld [vmem:[%s1 + $0x10b0] sm:$0xff]
  %v562 = vld [vmem:[%s1 + $0x10b8] sm:$0xff]
  %v563 = vld [vmem:[%s1 + $0x10c0] sm:$0xff]
  %v564 = vld [vmem:[%s1 + $0x10c8] sm:$0xff]
  %v565 = vld [vmem:[%s1 + $0x10d0] sm:$0xff]
  %v566 = vld [vmem:[%s1 + $0x10d8] sm:$0xff]
  %v567 = vld [vmem:[%s1 + $0x10e0] sm:$0xff]
  %v568 = vld [vmem:[%s1 + $0x10e8] sm:$0xff]
  %v569 = vld [vmem:[%s1 + $0x10f0] sm:$0xff]
  %v570 = vld [vmem:[%s1 + $0x10f8] sm:$0xff]
  %v571 = vld [vmem:[%s1 + $0x1100] sm:$0xff]
  %v572 = vld [vmem:[%s1 + $0x1108] sm:$0xff]
  %v573 = vld [vmem:[%s1 + $0x1110] sm:$0xff]
  %v574 = vld [vmem:[%s1 + $0x1118] sm:$0xff]
  %v575 = vld [vmem:[%s1 + $0x1120] sm:$0xff]
  %v576 = vld [vmem:[%s1 + $0x1128] sm:$0xff]
  %v577 = vld [vmem:[%s1 + $0x1130] sm:$0xff]
  %v578 = vld [vmem:[%s1 + $0x1138] sm:$0xff]
  %v579 = vld [vmem:[%s1 + $0x1140] sm:$0xff]
  %v580 = vld [vmem:[%s1 + $0x1148] sm:$0xff]
  %v581 = vld [vmem:[%s1 + $0x1150] sm:$0xff]
  %v582 = vld [vmem:[%s1 + $0x1158] sm:$0xff]
  %v583 = vld [vmem:[%s1 + $0x1160] sm:$0xff]
  %v584 = vld [vmem:[%s1 + $0x1168] sm:$0xff]
  %v585 = vld [vmem:[%s1 + $0x1170] sm:$0xff]
  %v586 = vld [vmem:[%s1 + $0x1178] sm:$0xff]
  %v587 = vld [vmem:[%s1 + $0x1180] sm:$0xff]
  %v588 = vld [vmem:[%s1 + $0x1188] sm:$0xff]
  %v589 = vld [vmem:[%s1 + $0x1190] sm:$0xff]
  %v590 = vld [vmem:[%s1 + $0x1198] sm:$0xff]
  %v591 = vld [vmem:[%s1 + $0x11a0] sm:$0xff]
  %v592 = vld [vmem:[%s1 + $0x11a8] sm:$0xff]
  %v593 = vld [vmem:[%s1 + $0x11b0] sm:$0xff]
  %v594 = vld [vmem:[%s1 + $0x11b8] sm:$0xff]
  %v595 = vld [vmem:[%s1 + $0x11c0] sm:$0xff]
  %v596 = vld [vmem:[%s1 + $0x11c8] sm:$0xff]
  %v597 = vld [vmem:[%s1 + $0x11d0] sm:$0xff]
  %v598 = vld [vmem:[%s1 + $0x11d8] sm:$0xff]
  %v599 = vld [vmem:[%s1 + $0x11e0] sm:$0xff]
  %v600 = vld [vmem:[%s1 + $0x11e8] sm:$0xff]
  %v601 = vld [vmem:[%s1 + $0x11f0] sm:$0xff]
  %v602 = vld [vmem:[%s1 + $0x11f8] sm:$0xff]
  %v603 = vld [vmem:[%s1 + $0x1200] sm:$0xff]
  %v604 = vld [vmem:[%s1 + $0x1208] sm:$0xff]
  %v605 = vld [vmem:[%s1 + $0x1210] sm:$0xff]
  %v606 = vld [vmem:[%s1 + $0x1218] sm:$0xff]
  %v607 = vld [vmem:[%s1 + $0x1220] sm:$0xff]
  %v608 = vld [vmem:[%s1 + $0x1228] sm:$0xff]
  %v609 = vld [vmem:[%s1 + $0x1230] sm:$0xff]
  %v610 = vld [vmem:[%s1 + $0x1238] sm:$0xff]
  %v611 = vld [vmem:[%s1 + $0x1240] sm:$0xff]
  %v612 = vld [vmem:[%s1 + $0x1248] sm:$0xff]
  %v613 = vld [vmem:[%s1 + $0x1250] sm:$0xff]
  %v614 = vld [vmem:[%s1 + $0x1258] sm:$0xff]
  %v615 = vld [vmem:[%s1 + $0x1260] sm:$0xff]
  %v616 = vld [vmem:[%s1 + $0x1268] sm:$0xff]
  %v617 = vld [vmem:[%s1 + $0x1270] sm:$0xff]
  %v618 = vld [vmem:[%s1 + $0x1278] sm:$0xff]
  %v619 = vld [vmem:[%s1 + $0x1280] sm:$0xff]
  %v620 = vld [vmem:[%s1 + $0x1288] sm:$0xff]
  %v621 = vld [vmem:[%s1 + $0x1290] sm:$0xff]
  %v622 = vld [vmem:[%s1 + $0x1298] sm:$0xff]
  %v623 = vld [vmem:[%s1 + $0x12a0] sm:$0xff]
  %v624 = vld [vmem:[%s1 + $0x12a8] sm:$0xff]
  %v625 = vld [vmem:[%s1 + $0x12b0] sm:$0xff]
  %v626 = vld [vmem:[%s1 + $0x12b8] sm:$0xff]
  %v627 = vld [vmem:[%s1 + $0x12c0] sm:$0xff]
  %v628 = vld [vmem:[%s1 + $0x12c8] sm:$0xff]
  %v629 = vld [vmem:[%s1 + $0x12d0] sm:$0xff]
  %v630 = vld [vmem:[%s1 + $0x12d8] sm:$0xff]
  %v631 = vld [vmem:[%s1 + $0x12e0] sm:$0xff]
  %v632 = vld [vmem:[%s1 + $0x12e8] sm:$0xff]
  %v633 = vld [vmem:[%s1 + $0x12f0] sm:$0xff]
  %v634 = vld [vmem:[%s1 + $0x12f8] sm:$0xff]
  %v635 = vld [vmem:[%s1 + $0x1300] sm:$0xff]
  %v636 = vld [vmem:[%s1 + $0x1308] sm:$0xff]
  %v637 = vld [vmem:[%s1 + $0x1310] sm:$0xff]
  %v638 = vld [vmem:[%s1 + $0x1318] sm:$0xff]
  %v639 = vld [vmem:[%s1 + $0x1320] sm:$0xff]
  %v640 = vld [vmem:[%s1 + $0x1328] sm:$0xff]
  %v641 = vld [vmem:[%s1 + $0x1330] sm:$0xff]
  %v642 = vld [vmem:[%s1 + $0x1338] sm:$0xff]
  %v643 = vld [vmem:[%s1 + $0x1340] sm:$0xff]
  %v644 = vld [vmem:[%s1 + $0x1348] sm:$0xff]
  %v645 = vld [vmem:[%s1 + $0x1350] sm:$0xff]
  %v646 = vld [vmem:[%s1 + $0x1358] sm:$0xff]
  %v647 = vld [vmem:[%s1 + $0x1360] sm:$0xff]
  %v648 = vld [vmem:[%s1 + $0x1368] sm:$0xff]
  %v649 = vld [vmem:[%s1 + $0x1370] sm:$0xff]
  %v650 = vld [vmem:[%s1 + $0x1378] sm:$0xff]
  %v651 = vld [vmem:[%s1 + $0x1380] sm:$0xff]
  %v652 = vld [vmem:[%s1 + $0x1388] sm:$0xff]
  %v653 = vld [vmem:[%s1 + $0x1390] sm:$0xff]
  %v654 = vld [vmem:[%s1 + $0x1398] sm:$0xff]
  %v655 = vld [vmem:[%s1 + $0x13a0] sm:$0xff]
  %v656 = vld [vmem:[%s1 + $0x13a8] sm:$0xff]
  %v657 = vld [vmem:[%s1 + $0x13b0] sm:$0xff]
  %v658 = vld [vmem:[%s1 + $0x13b8] sm:$0xff]
  %v659 = vld [vmem:[%s1 + $0x13c0] sm:$0xff]
  %v660 = vld [vmem:[%s1 + $0x13c8] sm:$0xff]
  %v661 = vld [vmem:[%s1 + $0x13d0] sm:$0xff]
  %v662 = vld [vmem:[%s1 + $0x13d8] sm:$0xff]
  %v663 = vld [vmem:[%s1 + $0x13e0] sm:$0xff]
  %v664 = vld [vmem:[%s1 + $0x13e8] sm:$0xff]
  %v665 = vld [vmem:[%s1 + $0x13f0] sm:$0xff]
  %v666 = vld [vmem:[%s1 + $0x13f8] sm:$0xff]
  %v667 = vld [vmem:[%s1 + $0x1400] sm:$0xff]
  %v668 = vld [vmem:[%s1 + $0x1408] sm:$0xff]
  %v669 = vld [vmem:[%s1 + $0x1410] sm:$0xff]
  %v670 = vld [vmem:[%s1 + $0x1418] sm:$0xff]
  %v671 = vld [vmem:[%s1 + $0x1420] sm:$0xff]
  %v672 = vld [vmem:[%s1 + $0x1428] sm:$0xff]
  %v673 = vld [vmem:[%s1 + $0x1430] sm:$0xff]
  %v674 = vld [vmem:[%s1 + $0x1438] sm:$0xff]
  %v675 = vld [vmem:[%s1 + $0x1440] sm:$0xff]
  %v676 = vld [vmem:[%s1 + $0x1448] sm:$0xff]
  %v677 = vld [vmem:[%s1 + $0x1450] sm:$0xff]
  %v678 = vld [vmem:[%s1 + $0x1458] sm:$0xff]
  %v679 = vld [vmem:[%s1 + $0x1460] sm:$0xff]
  %v680 = vld [vmem:[%s1 + $0x1468] sm:$0xff]
  %v681 = vld [vmem:[%s1 + $0x1470] sm:$0xff]
  %v682 = vld [vmem:[%s1 + $0x1478] sm:$0xff]
  %v683 = vld [vmem:[%s1 + $0x1480] sm:$0xff]
  %v684 = vld [vmem:[%s1 + $0x1488] sm:$0xff]
  %v685 = vld [vmem:[%s1 + $0x1490] sm:$0xff]
  %v686 = vld [vmem:[%s1 + $0x1498] sm:$0xff]
  %v687 = vld [vmem:[%s1 + $0x14a0] sm:$0xff]
  %v688 = vld [vmem:[%s1 + $0x14a8] sm:$0xff]
  %v689 = vld [vmem:[%s1 + $0x14b0] sm:$0xff]
  %v690 = vld [vmem:[%s1 + $0x14b8] sm:$0xff]
  %v691 = vld [vmem:[%s1 + $0x14c0] sm:$0xff]
  %v692 = vld [vmem:[%s1 + $0x14c8] sm:$0xff]
  %v693 = vld [vmem:[%s1 + $0x14d0] sm:$0xff]
  %v694 = vld [vmem:[%s1 + $0x14d8] sm:$0xff]
  %v695 = vld [vmem:[%s1 + $0x14e0] sm:$0xff]
  %v696 = vld [vmem:[%s1 + $0x14e8] sm:$0xff]
  %v697 = vld [vmem:[%s1 + $0x14f0] sm:$0xff]
  %v698 = vld [vmem:[%s1 + $0x14f8] sm:$0xff]
  %v699 = vld [vmem:[%s1 + $0x1500] sm:$0xff]
  %v700 = vld [vmem:[%s1 + $0x1508] sm:$0xff]
  %v701 = vld [vmem:[%s1 + $0x1510] sm:$0xff]
  %v702 = vld [vmem:[%s1 + $0x1518] sm:$0xff]
  %v703 = vld [vmem:[%s1 + $0x1520] sm:$0xff]
  %v704 = vld [vmem:[%s1 + $0x1528] sm:$0xff]
  %v705 = vld [vmem:[%s1 + $0x1530] sm:$0xff]
  %v706 = vld [vmem:[%s1 + $0x1538] sm:$0xff]
  %v707 = vld [vmem:[%s1 + $0x1540] sm:$0xff]
  %v708 = vld [vmem:[%s1 + $0x1548] sm:$0xff]
  %v709 = vld [vmem:[%s1 + $0x1550] sm:$0xff]
  %v710 = vld [vmem:[%s1 + $0x1558] sm:$0xff]
  %v711 = vld [vmem:[%s1 + $0x1560] sm:$0xff]
  %v712 = vld [vmem:[%s1 + $0x1568] sm:$0xff]
  %v713 = vld [vmem:[%s1 + $0x1570] sm:$0xff]
  %v714 = vld [vmem:[%s1 + $0x1578] sm:$0xff]
  %v715 = vld [vmem:[%s1 + $0x1580] sm:$0xff]
  %v716 = vld [vmem:[%s1 + $0x1588] sm:$0xff]
  %v717 = vld [vmem:[%s1 + $0x1590] sm:$0xff]
  %v718 = vld [vmem:[%s1 + $0x1598] sm:$0xff]
  %v719 = vld [vmem:[%s1 + $0x15a0] sm:$0xff]
  %v720 = vld [vmem:[%s1 + $0x15a8] sm:$0xff]
  %v721 = vld [vmem:[%s1 + $0x15b0] sm:$0xff]
  %v722 = vld [vmem:[%s1 + $0x15b8] sm:$0xff]
  %v723 = vld [vmem:[%s1 + $0x15c0] sm:$0xff]
  %v724 = vld [vmem:[%s1 + $0x15c8] sm:$0xff]
  %v725 = vld [vmem:[%s1 + $0x15d0] sm:$0xff]
  %v726 = vld [vmem:[%s1 + $0x15d8] sm:$0xff]
  %v727 = vld [vmem:[%s1 + $0x15e0] sm:$0xff]
  %v728 = vld [vmem:[%s1 + $0x15e8] sm:$0xff]
  %v729 = vld [vmem:[%s1 + $0x15f0] sm:$0xff]
  %v730 = vld [vmem:[%s1 + $0x15f8] sm:$0xff]
  %v731 = vld [vmem:[%s1 + $0x1600] sm:$0xff]
  %v732 = vld [vmem:[%s1 + $0x1608] sm:$0xff]
  %v733 = vld [vmem:[%s1 + $0x1610] sm:$0xff]
  %v734 = vld [vmem:[%s1 + $0x1618] sm:$0xff]
  %v735 = vld [vmem:[%s1 + $0x1620] sm:$0xff]
  %v736 = vld [vmem:[%s1 + $0x1628] sm:$0xff]
  %v737 = vld [vmem:[%s1 + $0x1630] sm:$0xff]
  %v738 = vld [vmem:[%s1 + $0x1638] sm:$0xff]
  %v739 = vld [vmem:[%s1 + $0x1640] sm:$0xff]
  %v740 = vld [vmem:[%s1 + $0x1648] sm:$0xff]
  %v741 = vld [vmem:[%s1 + $0x1650] sm:$0xff]
  %v742 = vld [vmem:[%s1 + $0x1658] sm:$0xff]
  %v743 = vld [vmem:[%s1 + $0x1660] sm:$0xff]
  %v744 = vld [vmem:[%s1 + $0x1668] sm:$0xff]
  %v745 = vld [vmem:[%s1 + $0x1670] sm:$0xff]
  %v746 = vld [vmem:[%s1 + $0x1678] sm:$0xff]
  %v747 = vld [vmem:[%s1 + $0x1680] sm:$0xff]
  %v748 = vld [vmem:[%s1 + $0x1688] sm:$0xff]
  %v749 = vld [vmem:[%s1 + $0x1690] sm:$0xff]
  %v750 = vld [vmem:[%s1 + $0x1698] sm:$0xff]
  %v751 = vld [vmem:[%s1 + $0x16a0] sm:$0xff]
  %v752 = vld [vmem:[%s1 + $0x16a8] sm:$0xff]
  %v753 = vld [vmem:[%s1 + $0x16b0] sm:$0xff]
  %v754 = vld [vmem:[%s1 + $0x16b8] sm:$0xff]
  %v755 = vld [vmem:[%s1 + $0x16c0] sm:$0xff]
  %v756 = vld [vmem:[%s1 + $0x16c8] sm:$0xff]
  %v757 = vld [vmem:[%s1 + $0x16d0] sm:$0xff]
  %v758 = vld [vmem:[%s1 + $0x16d8] sm:$0xff]
  %v759 = vld [vmem:[%s1 + $0x16e0] sm:$0xff]
  %v760 = vld [vmem:[%s1 + $0x16e8] sm:$0xff]
  %v761 = vld [vmem:[%s1 + $0x16f0] sm:$0xff]
  %v762 = vld [vmem:[%s1 + $0x16f8] sm:$0xff]
  %v763 = vld [vmem:[%s1 + $0x1700] sm:$0xff]
  %v764 = vld [vmem:[%s1 + $0x1708] sm:$0xff]
  %v765 = vld [vmem:[%s1 + $0x1710] sm:$0xff]
  %v766 = vld [vmem:[%s1 + $0x1718] sm:$0xff]
  %v767 = vld [vmem:[%s1 + $0x1720] sm:$0xff]
  %v768 = vld [vmem:[%s1 + $0x1728] sm:$0xff]
  %v769 = vld [vmem:[%s1 + $0x1730] sm:$0xff]
  %v770 = vld [vmem:[%s1 + $0x1738] sm:$0xff]
  %v771 = vld [vmem:[%s1 + $0x1740] sm:$0xff]
  %v772 = vld [vmem:[%s1 + $0x1748] sm:$0xff]
  %v773 = vld [vmem:[%s1 + $0x1750] sm:$0xff]
  %v774 = vld [vmem:[%s1 + $0x1758] sm:$0xff]
  %v775 = vld [vmem:[%s1 + $0x1760] sm:$0xff]
  %v776 = vld [vmem:[%s1 + $0x1768] sm:$0xff]
  %v777 = vld [vmem:[%s1 + $0x1770] sm:$0xff]
  %v778 = vld [vmem:[%s1 + $0x1778] sm:$0xff]
  %v779 = vld [vmem:[%s1 + $0x1780] sm:$0xff]
  %v780 = vld [vmem:[%s1 + $0x1788] sm:$0xff]
  %v781 = vld [vmem:[%s1 + $0x1790] sm:$0xff]
  %v782 = vld [vmem:[%s1 + $0x1798] sm:$0xff]
  %v783 = vld [vmem:[%s1 + $0x17a0] sm:$0xff]
  %v784 = vld [vmem:[%s1 + $0x17a8] sm:$0xff]
  %v785 = vld [vmem:[%s1 + $0x17b0] sm:$0xff]
  %v786 = vld [vmem:[%s1 + $0x17b8] sm:$0xff]
  %v787 = vld [vmem:[%s1 + $0x17c0] sm:$0xff]
  %v788 = vld [vmem:[%s1 + $0x17c8] sm:$0xff]
  %v789 = vld [vmem:[%s1 + $0x17d0] sm:$0xff]
  %v790 = vld [vmem:[%s1 + $0x17d8] sm:$0xff]
  %v791 = vld [vmem:[%s1 + $0x17e0] sm:$0xff]
  %v792 = vld [vmem:[%s1 + $0x17e8] sm:$0xff]
  %v793 = vld [vmem:[%s1 + $0x17f0] sm:$0xff]
  %v794 = vld [vmem:[%s1 + $0x17f8] sm:$0xff]
  %v795 = vld [vmem:[%s2] sm:$0x3]
  %v797 = vlaneseq
  %v798 = vshrl.u32 %v797, 7
  %v799 = vsub.s32 0, %v798
  %v800 = vrot.slane %v795, %v799
  %v801 = vlaneseq
  %v802 = vshrl.u32 %v801, 7
  %v803 = vsub.s32 1, %v802
  %v804 = vrot.slane %v795, %v803
  %v813 = vcombine.high %v21, %v21
  %v815 = vunpack.c.l.s4 1966171168
  %v816 = vunpack.c.0.s8 %v815
  %v817 = vlaneseq
  %v818 = vshrl.u32 %v817, 7
  %v819 = vsub.s32 %v816, %v818
  %v820 = vrot.slane %v21, %v819
  %v822 = vunpack.c.l.s4 1966171168
  %v823 = vunpack.c.0.s8 %v822
  %v824 = vlaneseq
  %v825 = vshrl.u32 %v824, 7
  %v826 = vsub.s32 %v823, %v825
  %v827 = vrot.slane %v813, %v826
  %v828 = vcombine.high %v820, %v820
  %v829 = vcombine.high %v827, %v827
  %v831 = vunpack.c.l.s4 1966171168
  %v832 = vunpack.c.0.s8 %v831
  %v833 = vlaneseq
  %v834 = vshrl.u32 %v833, 7
  %v835 = vsub.s32 %v832, %v834
  %v836 = vrot.slane %v820, %v835
  %v838 = vunpack.c.l.s4 1966171168
  %v839 = vunpack.c.0.s8 %v838
  %v840 = vlaneseq
  %v841 = vshrl.u32 %v840, 7
  %v842 = vsub.s32 %v839, %v841
  %v843 = vrot.slane %v827, %v842
  %v845 = vunpack.c.l.s4 1966171168
  %v846 = vunpack.c.0.s8 %v845
  %v847 = vlaneseq
  %v848 = vshrl.u32 %v847, 7
  %v849 = vsub.s32 %v846, %v848
  %v850 = vrot.slane %v828, %v849
  %v852 = vunpack.c.l.s4 1966171168
  %v853 = vunpack.c.0.s8 %v852
  %v854 = vlaneseq
  %v855 = vshrl.u32 %v854, 7
  %v856 = vsub.s32 %v853, %v855
  %v857 = vrot.slane %v829, %v856
  %v858 = vcombine.high %v836, %v836
  %v859 = vcombine.high %v843, %v843
  %v860 = vcombine.high %v850, %v850
  %v861 = vcombine.high %v857, %v857
  %v862 = vcombine.high %v22, %v22
  %v864 = vunpack.c.l.s4 1966171168
  %v865 = vunpack.c.0.s8 %v864
  %v866 = vlaneseq
  %v867 = vshrl.u32 %v866, 7
  %v868 = vsub.s32 %v865, %v867
  %v869 = vrot.slane %v22, %v868
  %v871 = vunpack.c.l.s4 1966171168
  %v872 = vunpack.c.0.s8 %v871
  %v873 = vlaneseq
  %v874 = vshrl.u32 %v873, 7
  %v875 = vsub.s32 %v872, %v874
  %v876 = vrot.slane %v862, %v875
  %v877 = vcombine.high %v869, %v869
  %v878 = vcombine.high %v876, %v876
  %v880 = vunpack.c.l.s4 1966171168
  %v881 = vunpack.c.0.s8 %v880
  %v882 = vlaneseq
  %v883 = vshrl.u32 %v882, 7
  %v884 = vsub.s32 %v881, %v883
  %v885 = vrot.slane %v869, %v884
  %v887 = vunpack.c.l.s4 1966171168
  %v888 = vunpack.c.0.s8 %v887
  %v889 = vlaneseq
  %v890 = vshrl.u32 %v889, 7
  %v891 = vsub.s32 %v888, %v890
  %v892 = vrot.slane %v876, %v891
  %v894 = vunpack.c.l.s4 1966171168
  %v895 = vunpack.c.0.s8 %v894
  %v896 = vlaneseq
  %v897 = vshrl.u32 %v896, 7
  %v898 = vsub.s32 %v895, %v897
  %v899 = vrot.slane %v877, %v898
  %v901 = vunpack.c.l.s4 1966171168
  %v902 = vunpack.c.0.s8 %v901
  %v903 = vlaneseq
  %v904 = vshrl.u32 %v903, 7
  %v905 = vsub.s32 %v902, %v904
  %v906 = vrot.slane %v878, %v905
  %v907 = vcombine.high %v885, %v885
  %v908 = vcombine.high %v892, %v892
  %v909 = vcombine.high %v899, %v899
  %v910 = vcombine.high %v906, %v906
  %v911 = vcombine.high %v23, %v23
  %v913 = vunpack.c.l.s4 1966171168
  %v914 = vunpack.c.0.s8 %v913
  %v915 = vlaneseq
  %v916 = vshrl.u32 %v915, 7
  %v917 = vsub.s32 %v914, %v916
  %v918 = vrot.slane %v23, %v917
  %v920 = vunpack.c.l.s4 1966171168
  %v921 = vunpack.c.0.s8 %v920
  %v922 = vlaneseq
  %v923 = vshrl.u32 %v922, 7
  %v924 = vsub.s32 %v921, %v923
  %v925 = vrot.slane %v911, %v924
  %v926 = vcombine.high %v918, %v918
  %v927 = vcombine.high %v925, %v925
  %v929 = vunpack.c.l.s4 1966171168
  %v930 = vunpack.c.0.s8 %v929
  %v931 = vlaneseq
  %v932 = vshrl.u32 %v931, 7
  %v933 = vsub.s32 %v930, %v932
  %v934 = vrot.slane %v918, %v933
  %v936 = vunpack.c.l.s4 1966171168
  %v937 = vunpack.c.0.s8 %v936
  %v938 = vlaneseq
  %v939 = vshrl.u32 %v938, 7
  %v940 = vsub.s32 %v937, %v939
  %v941 = vrot.slane %v925, %v940
  %v943 = vunpack.c.l.s4 1966171168
  %v944 = vunpack.c.0.s8 %v943
  %v945 = vlaneseq
  %v946 = vshrl.u32 %v945, 7
  %v947 = vsub.s32 %v944, %v946
  %v948 = vrot.slane %v926, %v947
  %v950 = vunpack.c.l.s4 1966171168
  %v951 = vunpack.c.0.s8 %v950
  %v952 = vlaneseq
  %v953 = vshrl.u32 %v952, 7
  %v954 = vsub.s32 %v951, %v953
  %v955 = vrot.slane %v927, %v954
  %v956 = vcombine.high %v934, %v934
  %v957 = vcombine.high %v941, %v941
  %v958 = vcombine.high %v948, %v948
  %v959 = vcombine.high %v955, %v955
  %v960 = vcombine.high %v24, %v24
  %v962 = vunpack.c.l.s4 1966171168
  %v963 = vunpack.c.0.s8 %v962
  %v964 = vlaneseq
  %v965 = vshrl.u32 %v964, 7
  %v966 = vsub.s32 %v963, %v965
  %v967 = vrot.slane %v24, %v966
  %v969 = vunpack.c.l.s4 1966171168
  %v970 = vunpack.c.0.s8 %v969
  %v971 = vlaneseq
  %v972 = vshrl.u32 %v971, 7
  %v973 = vsub.s32 %v970, %v972
  %v974 = vrot.slane %v960, %v973
  %v975 = vcombine.high %v967, %v967
  %v976 = vcombine.high %v974, %v974
  %v978 = vunpack.c.l.s4 1966171168
  %v979 = vunpack.c.0.s8 %v978
  %v980 = vlaneseq
  %v981 = vshrl.u32 %v980, 7
  %v982 = vsub.s32 %v979, %v981
  %v983 = vrot.slane %v967, %v982
  %v985 = vunpack.c.l.s4 1966171168
  %v986 = vunpack.c.0.s8 %v985
  %v987 = vlaneseq
  %v988 = vshrl.u32 %v987, 7
  %v989 = vsub.s32 %v986, %v988
  %v990 = vrot.slane %v974, %v989
  %v992 = vunpack.c.l.s4 1966171168
  %v993 = vunpack.c.0.s8 %v992
  %v994 = vlaneseq
  %v995 = vshrl.u32 %v994, 7
  %v996 = vsub.s32 %v993, %v995
  %v997 = vrot.slane %v975, %v996
  %v999 = vunpack.c.l.s4 1966171168
  %v1000 = vunpack.c.0.s8 %v999
  %v1001 = vlaneseq
  %v1002 = vshrl.u32 %v1001, 7
  %v1003 = vsub.s32 %v1000, %v1002
  %v1004 = vrot.slane %v976, %v1003
  %v1005 = vcombine.high %v983, %v983
  %v1006 = vcombine.high %v990, %v990
  %v1007 = vcombine.high %v997, %v997
  %v1008 = vcombine.high %v1004, %v1004
  %v1009 = vcombine.high %v25, %v25
  %v1011 = vunpack.c.l.s4 1966171168
  %v1012 = vunpack.c.0.s8 %v1011
  %v1013 = vlaneseq
  %v1014 = vshrl.u32 %v1013, 7
  %v1015 = vsub.s32 %v1012, %v1014
  %v1016 = vrot.slane %v25, %v1015
  %v1018 = vunpack.c.l.s4 1966171168
  %v1019 = vunpack.c.0.s8 %v1018
  %v1020 = vlaneseq
  %v1021 = vshrl.u32 %v1020, 7
  %v1022 = vsub.s32 %v1019, %v1021
  %v1023 = vrot.slane %v1009, %v1022
  %v1024 = vcombine.high %v1016, %v1016
  %v1025 = vcombine.high %v1023, %v1023
  %v1027 = vunpack.c.l.s4 1966171168
  %v1028 = vunpack.c.0.s8 %v1027
  %v1029 = vlaneseq
  %v1030 = vshrl.u32 %v1029, 7
  %v1031 = vsub.s32 %v1028, %v1030
  %v1032 = vrot.slane %v1016, %v1031
  %v1034 = vunpack.c.l.s4 1966171168
  %v1035 = vunpack.c.0.s8 %v1034
  %v1036 = vlaneseq
  %v1037 = vshrl.u32 %v1036, 7
  %v1038 = vsub.s32 %v1035, %v1037
  %v1039 = vrot.slane %v1023, %v1038
  %v1041 = vunpack.c.l.s4 1966171168
  %v1042 = vunpack.c.0.s8 %v1041
  %v1043 = vlaneseq
  %v1044 = vshrl.u32 %v1043, 7
  %v1045 = vsub.s32 %v1042, %v1044
  %v1046 = vrot.slane %v1024, %v1045
  %v1048 = vunpack.c.l.s4 1966171168
  %v1049 = vunpack.c.0.s8 %v1048
  %v1050 = vlaneseq
  %v1051 = vshrl.u32 %v1050, 7
  %v1052 = vsub.s32 %v1049, %v1051
  %v1053 = vrot.slane %v1025, %v1052
  %v1054 = vcombine.high %v1032, %v1032
  %v1055 = vcombine.high %v1039, %v1039
  %v1056 = vcombine.high %v1046, %v1046
  %v1057 = vcombine.high %v1053, %v1053
  %v1058 = vcombine.high %v26, %v26
  %v1060 = vunpack.c.l.s4 1966171168
  %v1061 = vunpack.c.0.s8 %v1060
  %v1062 = vlaneseq
  %v1063 = vshrl.u32 %v1062, 7
  %v1064 = vsub.s32 %v1061, %v1063
  %v1065 = vrot.slane %v26, %v1064
  %v1067 = vunpack.c.l.s4 1966171168
  %v1068 = vunpack.c.0.s8 %v1067
  %v1069 = vlaneseq
  %v1070 = vshrl.u32 %v1069, 7
  %v1071 = vsub.s32 %v1068, %v1070
  %v1072 = vrot.slane %v1058, %v1071
  %v1073 = vcombine.high %v1065, %v1065
  %v1074 = vcombine.high %v1072, %v1072
  %v1076 = vunpack.c.l.s4 1966171168
  %v1077 = vunpack.c.0.s8 %v1076
  %v1078 = vlaneseq
  %v1079 = vshrl.u32 %v1078, 7
  %v1080 = vsub.s32 %v1077, %v1079
  %v1081 = vrot.slane %v1065, %v1080
  %v1083 = vunpack.c.l.s4 1966171168
  %v1084 = vunpack.c.0.s8 %v1083
  %v1085 = vlaneseq
  %v1086 = vshrl.u32 %v1085, 7
  %v1087 = vsub.s32 %v1084, %v1086
  %v1088 = vrot.slane %v1072, %v1087
  %v1090 = vunpack.c.l.s4 1966171168
  %v1091 = vunpack.c.0.s8 %v1090
  %v1092 = vlaneseq
  %v1093 = vshrl.u32 %v1092, 7
  %v1094 = vsub.s32 %v1091, %v1093
  %v1095 = vrot.slane %v1073, %v1094
  %v1097 = vunpack.c.l.s4 1966171168
  %v1098 = vunpack.c.0.s8 %v1097
  %v1099 = vlaneseq
  %v1100 = vshrl.u32 %v1099, 7
  %v1101 = vsub.s32 %v1098, %v1100
  %v1102 = vrot.slane %v1074, %v1101
  %v1103 = vcombine.high %v1081, %v1081
  %v1104 = vcombine.high %v1088, %v1088
  %v1105 = vcombine.high %v1095, %v1095
  %v1106 = vcombine.high %v1102, %v1102
  %v1923 = vunpack.c.l.b16 %v27
  %v1924 = vunpack.c.h.b16 %v27
  %v1925 = vunpack.c.l.b16 %v28
  %v1926 = vunpack.c.h.b16 %v28
  %v1927 = vunpack.c.l.b16 %v29
  %v1928 = vunpack.c.h.b16 %v29
  %v1929 = vunpack.c.l.b16 %v30
  %v1930 = vunpack.c.h.b16 %v30
  %v1931 = vunpack.c.l.b16 %v31
  %v1932 = vunpack.c.h.b16 %v31
  %v1933 = vunpack.c.l.b16 %v32
  %v1934 = vunpack.c.h.b16 %v32
  %v1935 = vunpack.c.l.b16 %v33
  %v1936 = vunpack.c.h.b16 %v33
  %v1937 = vunpack.c.l.b16 %v34
  %v1938 = vunpack.c.h.b16 %v34
  %v1939 = vunpack.c.l.b16 %v35
  %v1940 = vunpack.c.h.b16 %v35
  %v1941 = vunpack.c.l.b16 %v36
  %v1942 = vunpack.c.h.b16 %v36
  %v1943 = vunpack.c.l.b16 %v37
  %v1944 = vunpack.c.h.b16 %v37
  %v1945 = vunpack.c.l.b16 %v38
  %v1946 = vunpack.c.h.b16 %v38
  %v1947 = vunpack.c.l.b16 %v39
  %v1948 = vunpack.c.h.b16 %v39
  %v1949 = vunpack.c.l.b16 %v40
  %v1950 = vunpack.c.h.b16 %v40
  %v1951 = vunpack.c.l.b16 %v41
  %v1952 = vunpack.c.h.b16 %v41
  %v1953 = vunpack.c.l.b16 %v42
  %v1954 = vunpack.c.h.b16 %v42
  %v1955 = vunpack.c.l.b16 %v43
  %v1956 = vunpack.c.h.b16 %v43
  %v1957 = vunpack.c.l.b16 %v44
  %v1958 = vunpack.c.h.b16 %v44
  %v1959 = vunpack.c.l.b16 %v45
  %v1960 = vunpack.c.h.b16 %v45
  %v1961 = vunpack.c.l.b16 %v46
  %v1962 = vunpack.c.h.b16 %v46
  %v1963 = vunpack.c.l.b16 %v47
  %v1964 = vunpack.c.h.b16 %v47
  %v1965 = vunpack.c.l.b16 %v48
  %v1966 = vunpack.c.h.b16 %v48
  %v1967 = vunpack.c.l.b16 %v49
  %v1968 = vunpack.c.h.b16 %v49
  %v1969 = vunpack.c.l.b16 %v50
  %v1970 = vunpack.c.h.b16 %v50
  %v1971 = vunpack.c.l.b16 %v51
  %v1972 = vunpack.c.h.b16 %v51
  %v1973 = vunpack.c.l.b16 %v52
  %v1974 = vunpack.c.h.b16 %v52
  %v1975 = vunpack.c.l.b16 %v53
  %v1976 = vunpack.c.h.b16 %v53
  %v1977 = vunpack.c.l.b16 %v54
  %v1978 = vunpack.c.h.b16 %v54
  %v1979 = vunpack.c.l.b16 %v55
  %v1980 = vunpack.c.h.b16 %v55
  %v1981 = vunpack.c.l.b16 %v56
  %v1982 = vunpack.c.h.b16 %v56
  %v1983 = vunpack.c.l.b16 %v57
  %v1984 = vunpack.c.h.b16 %v57
  %v1985 = vunpack.c.l.b16 %v58
  %v1986 = vunpack.c.h.b16 %v58
  %v1987 = vunpack.c.l.b16 %v59
  %v1988 = vunpack.c.h.b16 %v59
  %v1989 = vunpack.c.l.b16 %v60
  %v1990 = vunpack.c.h.b16 %v60
  %v1991 = vunpack.c.l.b16 %v61
  %v1992 = vunpack.c.h.b16 %v61
  %v1993 = vunpack.c.l.b16 %v62
  %v1994 = vunpack.c.h.b16 %v62
  %v1995 = vunpack.c.l.b16 %v63
  %v1996 = vunpack.c.h.b16 %v63
  %v1997 = vunpack.c.l.b16 %v64
  %v1998 = vunpack.c.h.b16 %v64
  %v1999 = vunpack.c.l.b16 %v65
  %v2000 = vunpack.c.h.b16 %v65
  %v2001 = vunpack.c.l.b16 %v66
  %v2002 = vunpack.c.h.b16 %v66
  %v2003 = vunpack.c.l.b16 %v67
  %v2004 = vunpack.c.h.b16 %v67
  %v2005 = vunpack.c.l.b16 %v68
  %v2006 = vunpack.c.h.b16 %v68
  %v2007 = vunpack.c.l.b16 %v69
  %v2008 = vunpack.c.h.b16 %v69
  %v2009 = vunpack.c.l.b16 %v70
  %v2010 = vunpack.c.h.b16 %v70
  %v2011 = vunpack.c.l.b16 %v71
  %v2012 = vunpack.c.h.b16 %v71
  %v2013 = vunpack.c.l.b16 %v72
  %v2014 = vunpack.c.h.b16 %v72
  %v2015 = vunpack.c.l.b16 %v73
  %v2016 = vunpack.c.h.b16 %v73
  %v2017 = vunpack.c.l.b16 %v74
  %v2018 = vunpack.c.h.b16 %v74
  %v2019 = vunpack.c.l.b16 %v75
  %v2020 = vunpack.c.h.b16 %v75
  %v2021 = vunpack.c.l.b16 %v76
  %v2022 = vunpack.c.h.b16 %v76
  %v2023 = vunpack.c.l.b16 %v77
  %v2024 = vunpack.c.h.b16 %v77
  %v2025 = vunpack.c.l.b16 %v78
  %v2026 = vunpack.c.h.b16 %v78
  %v2027 = vunpack.c.l.b16 %v79
  %v2028 = vunpack.c.h.b16 %v79
  %v2029 = vunpack.c.l.b16 %v80
  %v2030 = vunpack.c.h.b16 %v80
  %v2031 = vunpack.c.l.b16 %v81
  %v2032 = vunpack.c.h.b16 %v81
  %v2033 = vunpack.c.l.b16 %v82
  %v2034 = vunpack.c.h.b16 %v82
  %v2035 = vunpack.c.l.b16 %v83
  %v2036 = vunpack.c.h.b16 %v83
  %v2037 = vunpack.c.l.b16 %v84
  %v2038 = vunpack.c.h.b16 %v84
  %v2039 = vunpack.c.l.b16 %v85
  %v2040 = vunpack.c.h.b16 %v85
  %v2041 = vunpack.c.l.b16 %v86
  %v2042 = vunpack.c.h.b16 %v86
  %v2043 = vunpack.c.l.b16 %v87
  %v2044 = vunpack.c.h.b16 %v87
  %v2045 = vunpack.c.l.b16 %v88
  %v2046 = vunpack.c.h.b16 %v88
  %v2047 = vunpack.c.l.b16 %v89
  %v2048 = vunpack.c.h.b16 %v89
  %v2049 = vunpack.c.l.b16 %v90
  %v2050 = vunpack.c.h.b16 %v90
  %v2051 = vunpack.c.l.b16 %v91
  %v2052 = vunpack.c.h.b16 %v91
  %v2053 = vunpack.c.l.b16 %v92
  %v2054 = vunpack.c.h.b16 %v92
  %v2055 = vunpack.c.l.b16 %v93
  %v2056 = vunpack.c.h.b16 %v93
  %v2057 = vunpack.c.l.b16 %v94
  %v2058 = vunpack.c.h.b16 %v94
  %v2059 = vunpack.c.l.b16 %v95
  %v2060 = vunpack.c.h.b16 %v95
  %v2061 = vunpack.c.l.b16 %v96
  %v2062 = vunpack.c.h.b16 %v96
  %v2063 = vunpack.c.l.b16 %v97
  %v2064 = vunpack.c.h.b16 %v97
  %v2065 = vunpack.c.l.b16 %v98
  %v2066 = vunpack.c.h.b16 %v98
  %v2067 = vunpack.c.l.b16 %v99
  %v2068 = vunpack.c.h.b16 %v99
  %v2069 = vunpack.c.l.b16 %v100
  %v2070 = vunpack.c.h.b16 %v100
  %v2071 = vunpack.c.l.b16 %v101
  %v2072 = vunpack.c.h.b16 %v101
  %v2073 = vunpack.c.l.b16 %v102
  %v2074 = vunpack.c.h.b16 %v102
  %v2075 = vunpack.c.l.b16 %v103
  %v2076 = vunpack.c.h.b16 %v103
  %v2077 = vunpack.c.l.b16 %v104
  %v2078 = vunpack.c.h.b16 %v104
  %v2079 = vunpack.c.l.b16 %v105
  %v2080 = vunpack.c.h.b16 %v105
  %v2081 = vunpack.c.l.b16 %v106
  %v2082 = vunpack.c.h.b16 %v106
  %v2083 = vunpack.c.l.b16 %v107
  %v2084 = vunpack.c.h.b16 %v107
  %v2085 = vunpack.c.l.b16 %v108
  %v2086 = vunpack.c.h.b16 %v108
  %v2087 = vunpack.c.l.b16 %v109
  %v2088 = vunpack.c.h.b16 %v109
  %v2089 = vunpack.c.l.b16 %v110
  %v2090 = vunpack.c.h.b16 %v110
  %v2091 = vunpack.c.l.b16 %v111
  %v2092 = vunpack.c.h.b16 %v111
  %v2093 = vunpack.c.l.b16 %v112
  %v2094 = vunpack.c.h.b16 %v112
  %v2095 = vunpack.c.l.b16 %v113
  %v2096 = vunpack.c.h.b16 %v113
  %v2097 = vunpack.c.l.b16 %v114
  %v2098 = vunpack.c.h.b16 %v114
  %v2099 = vunpack.c.l.b16 %v115
  %v2100 = vunpack.c.h.b16 %v115
  %v2101 = vunpack.c.l.b16 %v116
  %v2102 = vunpack.c.h.b16 %v116
  %v2103 = vunpack.c.l.b16 %v117
  %v2104 = vunpack.c.h.b16 %v117
  %v2105 = vunpack.c.l.b16 %v118
  %v2106 = vunpack.c.h.b16 %v118
  %v2107 = vunpack.c.l.b16 %v119
  %v2108 = vunpack.c.h.b16 %v119
  %v2109 = vunpack.c.l.b16 %v120
  %v2110 = vunpack.c.h.b16 %v120
  %v2111 = vunpack.c.l.b16 %v121
  %v2112 = vunpack.c.h.b16 %v121
  %v2113 = vunpack.c.l.b16 %v122
  %v2114 = vunpack.c.h.b16 %v122
  %v2115 = vunpack.c.l.b16 %v123
  %v2116 = vunpack.c.h.b16 %v123
  %v2117 = vunpack.c.l.b16 %v124
  %v2118 = vunpack.c.h.b16 %v124
  %v2119 = vunpack.c.l.b16 %v125
  %v2120 = vunpack.c.h.b16 %v125
  %v2121 = vunpack.c.l.b16 %v126
  %v2122 = vunpack.c.h.b16 %v126
  %v2123 = vunpack.c.l.b16 %v127
  %v2124 = vunpack.c.h.b16 %v127
  %v2125 = vunpack.c.l.b16 %v128
  %v2126 = vunpack.c.h.b16 %v128
  %v2127 = vunpack.c.l.b16 %v129
  %v2128 = vunpack.c.h.b16 %v129
  %v2129 = vunpack.c.l.b16 %v130
  %v2130 = vunpack.c.h.b16 %v130
  %v2131 = vunpack.c.l.b16 %v131
  %v2132 = vunpack.c.h.b16 %v131
  %v2133 = vunpack.c.l.b16 %v132
  %v2134 = vunpack.c.h.b16 %v132
  %v2135 = vunpack.c.l.b16 %v133
  %v2136 = vunpack.c.h.b16 %v133
  %v2137 = vunpack.c.l.b16 %v134
  %v2138 = vunpack.c.h.b16 %v134
  %v2139 = vunpack.c.l.b16 %v135
  %v2140 = vunpack.c.h.b16 %v135
  %v2141 = vunpack.c.l.b16 %v136
  %v2142 = vunpack.c.h.b16 %v136
  %v2143 = vunpack.c.l.b16 %v137
  %v2144 = vunpack.c.h.b16 %v137
  %v2145 = vunpack.c.l.b16 %v138
  %v2146 = vunpack.c.h.b16 %v138
  %v2147 = vunpack.c.l.b16 %v139
  %v2148 = vunpack.c.h.b16 %v139
  %v2149 = vunpack.c.l.b16 %v140
  %v2150 = vunpack.c.h.b16 %v140
  %v2151 = vunpack.c.l.b16 %v141
  %v2152 = vunpack.c.h.b16 %v141
  %v2153 = vunpack.c.l.b16 %v142
  %v2154 = vunpack.c.h.b16 %v142
  %v2155 = vunpack.c.l.b16 %v143
  %v2156 = vunpack.c.h.b16 %v143
  %v2157 = vunpack.c.l.b16 %v144
  %v2158 = vunpack.c.h.b16 %v144
  %v2159 = vunpack.c.l.b16 %v145
  %v2160 = vunpack.c.h.b16 %v145
  %v2161 = vunpack.c.l.b16 %v146
  %v2162 = vunpack.c.h.b16 %v146
  %v2163 = vunpack.c.l.b16 %v147
  %v2164 = vunpack.c.h.b16 %v147
  %v2165 = vunpack.c.l.b16 %v148
  %v2166 = vunpack.c.h.b16 %v148
  %v2167 = vunpack.c.l.b16 %v149
  %v2168 = vunpack.c.h.b16 %v149
  %v2169 = vunpack.c.l.b16 %v150
  %v2170 = vunpack.c.h.b16 %v150
  %v2171 = vunpack.c.l.b16 %v151
  %v2172 = vunpack.c.h.b16 %v151
  %v2173 = vunpack.c.l.b16 %v152
  %v2174 = vunpack.c.h.b16 %v152
  %v2175 = vunpack.c.l.b16 %v153
  %v2176 = vunpack.c.h.b16 %v153
  %v2177 = vunpack.c.l.b16 %v154
  %v2178 = vunpack.c.h.b16 %v154
  %v2179 = vunpack.c.l.b16 %v155
  %v2180 = vunpack.c.h.b16 %v155
  %v2181 = vunpack.c.l.b16 %v156
  %v2182 = vunpack.c.h.b16 %v156
  %v2183 = vunpack.c.l.b16 %v157
  %v2184 = vunpack.c.h.b16 %v157
  %v2185 = vunpack.c.l.b16 %v158
  %v2186 = vunpack.c.h.b16 %v158
  %v2187 = vunpack.c.l.b16 %v159
  %v2188 = vunpack.c.h.b16 %v159
  %v2189 = vunpack.c.l.b16 %v160
  %v2190 = vunpack.c.h.b16 %v160
  %v2191 = vunpack.c.l.b16 %v161
  %v2192 = vunpack.c.h.b16 %v161
  %v2193 = vunpack.c.l.b16 %v162
  %v2194 = vunpack.c.h.b16 %v162
  %v2195 = vunpack.c.l.b16 %v163
  %v2196 = vunpack.c.h.b16 %v163
  %v2197 = vunpack.c.l.b16 %v164
  %v2198 = vunpack.c.h.b16 %v164
  %v2199 = vunpack.c.l.b16 %v165
  %v2200 = vunpack.c.h.b16 %v165
  %v2201 = vunpack.c.l.b16 %v166
  %v2202 = vunpack.c.h.b16 %v166
  %v2203 = vunpack.c.l.b16 %v167
  %v2204 = vunpack.c.h.b16 %v167
  %v2205 = vunpack.c.l.b16 %v168
  %v2206 = vunpack.c.h.b16 %v168
  %v2207 = vunpack.c.l.b16 %v169
  %v2208 = vunpack.c.h.b16 %v169
  %v2209 = vunpack.c.l.b16 %v170
  %v2210 = vunpack.c.h.b16 %v170
  %v2211 = vunpack.c.l.b16 %v171
  %v2212 = vunpack.c.h.b16 %v171
  %v2213 = vunpack.c.l.b16 %v172
  %v2214 = vunpack.c.h.b16 %v172
  %v2215 = vunpack.c.l.b16 %v173
  %v2216 = vunpack.c.h.b16 %v173
  %v2217 = vunpack.c.l.b16 %v174
  %v2218 = vunpack.c.h.b16 %v174
  %v2219 = vunpack.c.l.b16 %v175
  %v2220 = vunpack.c.h.b16 %v175
  %v2221 = vunpack.c.l.b16 %v176
  %v2222 = vunpack.c.h.b16 %v176
  %v2223 = vunpack.c.l.b16 %v177
  %v2224 = vunpack.c.h.b16 %v177
  %v2225 = vunpack.c.l.b16 %v178
  %v2226 = vunpack.c.h.b16 %v178
  %v2227 = vunpack.c.l.b16 %v179
  %v2228 = vunpack.c.h.b16 %v179
  %v2229 = vunpack.c.l.b16 %v180
  %v2230 = vunpack.c.h.b16 %v180
  %v2231 = vunpack.c.l.b16 %v181
  %v2232 = vunpack.c.h.b16 %v181
  %v2233 = vunpack.c.l.b16 %v182
  %v2234 = vunpack.c.h.b16 %v182
  %v2235 = vunpack.c.l.b16 %v183
  %v2236 = vunpack.c.h.b16 %v183
  %v2237 = vunpack.c.l.b16 %v184
  %v2238 = vunpack.c.h.b16 %v184
  %v2239 = vunpack.c.l.b16 %v185
  %v2240 = vunpack.c.h.b16 %v185
  %v2241 = vunpack.c.l.b16 %v186
  %v2242 = vunpack.c.h.b16 %v186
  %v2243 = vunpack.c.l.b16 %v187
  %v2244 = vunpack.c.h.b16 %v187
  %v2245 = vunpack.c.l.b16 %v188
  %v2246 = vunpack.c.h.b16 %v188
  %v2247 = vunpack.c.l.b16 %v189
  %v2248 = vunpack.c.h.b16 %v189
  %v2249 = vunpack.c.l.b16 %v190
  %v2250 = vunpack.c.h.b16 %v190
  %v2251 = vunpack.c.l.b16 %v191
  %v2252 = vunpack.c.h.b16 %v191
  %v2253 = vunpack.c.l.b16 %v192
  %v2254 = vunpack.c.h.b16 %v192
  %v2255 = vunpack.c.l.b16 %v193
  %v2256 = vunpack.c.h.b16 %v193
  %v2257 = vunpack.c.l.b16 %v194
  %v2258 = vunpack.c.h.b16 %v194
  %v2259 = vunpack.c.l.b16 %v195
  %v2260 = vunpack.c.h.b16 %v195
  %v2261 = vunpack.c.l.b16 %v196
  %v2262 = vunpack.c.h.b16 %v196
  %v2263 = vunpack.c.l.b16 %v197
  %v2264 = vunpack.c.h.b16 %v197
  %v2265 = vunpack.c.l.b16 %v198
  %v2266 = vunpack.c.h.b16 %v198
  %v2267 = vunpack.c.l.b16 %v199
  %v2268 = vunpack.c.h.b16 %v199
  %v2269 = vunpack.c.l.b16 %v200
  %v2270 = vunpack.c.h.b16 %v200
  %v2271 = vunpack.c.l.b16 %v201
  %v2272 = vunpack.c.h.b16 %v201
  %v2273 = vunpack.c.l.b16 %v202
  %v2274 = vunpack.c.h.b16 %v202
  %v2275 = vunpack.c.l.b16 %v203
  %v2276 = vunpack.c.h.b16 %v203
  %v2277 = vunpack.c.l.b16 %v204
  %v2278 = vunpack.c.h.b16 %v204
  %v2279 = vunpack.c.l.b16 %v205
  %v2280 = vunpack.c.h.b16 %v205
  %v2281 = vunpack.c.l.b16 %v206
  %v2282 = vunpack.c.h.b16 %v206
  %v2283 = vunpack.c.l.b16 %v207
  %v2284 = vunpack.c.h.b16 %v207
  %v2285 = vunpack.c.l.b16 %v208
  %v2286 = vunpack.c.h.b16 %v208
  %v2287 = vunpack.c.l.b16 %v209
  %v2288 = vunpack.c.h.b16 %v209
  %v2289 = vunpack.c.l.b16 %v210
  %v2290 = vunpack.c.h.b16 %v210
  %v2291 = vunpack.c.l.b16 %v211
  %v2292 = vunpack.c.h.b16 %v211
  %v2293 = vunpack.c.l.b16 %v212
  %v2294 = vunpack.c.h.b16 %v212
  %v2295 = vunpack.c.l.b16 %v213
  %v2296 = vunpack.c.h.b16 %v213
  %v2297 = vunpack.c.l.b16 %v214
  %v2298 = vunpack.c.h.b16 %v214
  %v2299 = vunpack.c.l.b16 %v215
  %v2300 = vunpack.c.h.b16 %v215
  %v2301 = vunpack.c.l.b16 %v216
  %v2302 = vunpack.c.h.b16 %v216
  %v2303 = vunpack.c.l.b16 %v217
  %v2304 = vunpack.c.h.b16 %v217
  %v2305 = vunpack.c.l.b16 %v218
  %v2306 = vunpack.c.h.b16 %v218
  %v2307 = vunpack.c.l.b16 %v219
  %v2308 = vunpack.c.h.b16 %v219
  %v2309 = vunpack.c.l.b16 %v220
  %v2310 = vunpack.c.h.b16 %v220
  %v2311 = vunpack.c.l.b16 %v221
  %v2312 = vunpack.c.h.b16 %v221
  %v2313 = vunpack.c.l.b16 %v222
  %v2314 = vunpack.c.h.b16 %v222
  %v2315 = vunpack.c.l.b16 %v223
  %v2316 = vunpack.c.h.b16 %v223
  %v2317 = vunpack.c.l.b16 %v224
  %v2318 = vunpack.c.h.b16 %v224
  %v2319 = vunpack.c.l.b16 %v225
  %v2320 = vunpack.c.h.b16 %v225
  %v2321 = vunpack.c.l.b16 %v226
  %v2322 = vunpack.c.h.b16 %v226
  %v2323 = vunpack.c.l.b16 %v227
  %v2324 = vunpack.c.h.b16 %v227
  %v2325 = vunpack.c.l.b16 %v228
  %v2326 = vunpack.c.h.b16 %v228
  %v2327 = vunpack.c.l.b16 %v229
  %v2328 = vunpack.c.h.b16 %v229
  %v2329 = vunpack.c.l.b16 %v230
  %v2330 = vunpack.c.h.b16 %v230
  %v2331 = vunpack.c.l.b16 %v231
  %v2332 = vunpack.c.h.b16 %v231
  %v2333 = vunpack.c.l.b16 %v232
  %v2334 = vunpack.c.h.b16 %v232
  %v2335 = vunpack.c.l.b16 %v233
  %v2336 = vunpack.c.h.b16 %v233
  %v2337 = vunpack.c.l.b16 %v234
  %v2338 = vunpack.c.h.b16 %v234
  %v2339 = vunpack.c.l.b16 %v235
  %v2340 = vunpack.c.h.b16 %v235
  %v2341 = vunpack.c.l.b16 %v236
  %v2342 = vunpack.c.h.b16 %v236
  %v2343 = vunpack.c.l.b16 %v237
  %v2344 = vunpack.c.h.b16 %v237
  %v2345 = vunpack.c.l.b16 %v238
  %v2346 = vunpack.c.h.b16 %v238
  %v2347 = vunpack.c.l.b16 %v239
  %v2348 = vunpack.c.h.b16 %v239
  %v2349 = vunpack.c.l.b16 %v240
  %v2350 = vunpack.c.h.b16 %v240
  %v2351 = vunpack.c.l.b16 %v241
  %v2352 = vunpack.c.h.b16 %v241
  %v2353 = vunpack.c.l.b16 %v242
  %v2354 = vunpack.c.h.b16 %v242
  %v2355 = vunpack.c.l.b16 %v243
  %v2356 = vunpack.c.h.b16 %v243
  %v2357 = vunpack.c.l.b16 %v244
  %v2358 = vunpack.c.h.b16 %v244
  %v2359 = vunpack.c.l.b16 %v245
  %v2360 = vunpack.c.h.b16 %v245
  %v2361 = vunpack.c.l.b16 %v246
  %v2362 = vunpack.c.h.b16 %v246
  %v2363 = vunpack.c.l.b16 %v247
  %v2364 = vunpack.c.h.b16 %v247
  %v2365 = vunpack.c.l.b16 %v248
  %v2366 = vunpack.c.h.b16 %v248
  %v2367 = vunpack.c.l.b16 %v249
  %v2368 = vunpack.c.h.b16 %v249
  %v2369 = vunpack.c.l.b16 %v250
  %v2370 = vunpack.c.h.b16 %v250
  %v2371 = vunpack.c.l.b16 %v251
  %v2372 = vunpack.c.h.b16 %v251
  %v2373 = vunpack.c.l.b16 %v252
  %v2374 = vunpack.c.h.b16 %v252
  %v2375 = vunpack.c.l.b16 %v253
  %v2376 = vunpack.c.h.b16 %v253
  %v2377 = vunpack.c.l.b16 %v254
  %v2378 = vunpack.c.h.b16 %v254
  %v2379 = vunpack.c.l.b16 %v255
  %v2380 = vunpack.c.h.b16 %v255
  %v2381 = vunpack.c.l.b16 %v256
  %v2382 = vunpack.c.h.b16 %v256
  %v2383 = vunpack.c.l.b16 %v257
  %v2384 = vunpack.c.h.b16 %v257
  %v2385 = vunpack.c.l.b16 %v258
  %v2386 = vunpack.c.h.b16 %v258
  %v2387 = vunpack.c.l.b16 %v259
  %v2388 = vunpack.c.h.b16 %v259
  %v2389 = vunpack.c.l.b16 %v260
  %v2390 = vunpack.c.h.b16 %v260
  %v2391 = vunpack.c.l.b16 %v261
  %v2392 = vunpack.c.h.b16 %v261
  %v2393 = vunpack.c.l.b16 %v262
  %v2394 = vunpack.c.h.b16 %v262
  %v2395 = vunpack.c.l.b16 %v263
  %v2396 = vunpack.c.h.b16 %v263
  %v2397 = vunpack.c.l.b16 %v264
  %v2398 = vunpack.c.h.b16 %v264
  %v2399 = vunpack.c.l.b16 %v265
  %v2400 = vunpack.c.h.b16 %v265
  %v2401 = vunpack.c.l.b16 %v266
  %v2402 = vunpack.c.h.b16 %v266
  %v2403 = vunpack.c.l.b16 %v267
  %v2404 = vunpack.c.h.b16 %v267
  %v2405 = vunpack.c.l.b16 %v268
  %v2406 = vunpack.c.h.b16 %v268
  %v2407 = vunpack.c.l.b16 %v269
  %v2408 = vunpack.c.h.b16 %v269
  %v2409 = vunpack.c.l.b16 %v270
  %v2410 = vunpack.c.h.b16 %v270
  %v2411 = vunpack.c.l.b16 %v271
  %v2412 = vunpack.c.h.b16 %v271
  %v2413 = vunpack.c.l.b16 %v272
  %v2414 = vunpack.c.h.b16 %v272
  %v2415 = vunpack.c.l.b16 %v273
  %v2416 = vunpack.c.h.b16 %v273
  %v2417 = vunpack.c.l.b16 %v274
  %v2418 = vunpack.c.h.b16 %v274
  %v2419 = vunpack.c.l.b16 %v275
  %v2420 = vunpack.c.h.b16 %v275
  %v2421 = vunpack.c.l.b16 %v276
  %v2422 = vunpack.c.h.b16 %v276
  %v2423 = vunpack.c.l.b16 %v277
  %v2424 = vunpack.c.h.b16 %v277
  %v2425 = vunpack.c.l.b16 %v278
  %v2426 = vunpack.c.h.b16 %v278
  %v2427 = vunpack.c.l.b16 %v279
  %v2428 = vunpack.c.h.b16 %v279
  %v2429 = vunpack.c.l.b16 %v280
  %v2430 = vunpack.c.h.b16 %v280
  %v2431 = vunpack.c.l.b16 %v281
  %v2432 = vunpack.c.h.b16 %v281
  %v2433 = vunpack.c.l.b16 %v282
  %v2434 = vunpack.c.h.b16 %v282
  %v2435 = vunpack.c.l.b16 %v283
  %v2436 = vunpack.c.h.b16 %v283
  %v2437 = vunpack.c.l.b16 %v284
  %v2438 = vunpack.c.h.b16 %v284
  %v2439 = vunpack.c.l.b16 %v285
  %v2440 = vunpack.c.h.b16 %v285
  %v2441 = vunpack.c.l.b16 %v286
  %v2442 = vunpack.c.h.b16 %v286
  %v2443 = vunpack.c.l.b16 %v287
  %v2444 = vunpack.c.h.b16 %v287
  %v2445 = vunpack.c.l.b16 %v288
  %v2446 = vunpack.c.h.b16 %v288
  %v2447 = vunpack.c.l.b16 %v289
  %v2448 = vunpack.c.h.b16 %v289
  %v2449 = vunpack.c.l.b16 %v290
  %v2450 = vunpack.c.h.b16 %v290
  %v2451 = vunpack.c.l.b16 %v291
  %v2452 = vunpack.c.h.b16 %v291
  %v2453 = vunpack.c.l.b16 %v292
  %v2454 = vunpack.c.h.b16 %v292
  %v2455 = vunpack.c.l.b16 %v293
  %v2456 = vunpack.c.h.b16 %v293
  %v2457 = vunpack.c.l.b16 %v294
  %v2458 = vunpack.c.h.b16 %v294
  %v2459 = vunpack.c.l.b16 %v295
  %v2460 = vunpack.c.h.b16 %v295
  %v2461 = vunpack.c.l.b16 %v296
  %v2462 = vunpack.c.h.b16 %v296
  %v2463 = vunpack.c.l.b16 %v297
  %v2464 = vunpack.c.h.b16 %v297
  %v2465 = vunpack.c.l.b16 %v298
  %v2466 = vunpack.c.h.b16 %v298
  %v2467 = vunpack.c.l.b16 %v299
  %v2468 = vunpack.c.h.b16 %v299
  %v2469 = vunpack.c.l.b16 %v300
  %v2470 = vunpack.c.h.b16 %v300
  %v2471 = vunpack.c.l.b16 %v301
  %v2472 = vunpack.c.h.b16 %v301
  %v2473 = vunpack.c.l.b16 %v302
  %v2474 = vunpack.c.h.b16 %v302
  %v2475 = vunpack.c.l.b16 %v303
  %v2476 = vunpack.c.h.b16 %v303
  %v2477 = vunpack.c.l.b16 %v304
  %v2478 = vunpack.c.h.b16 %v304
  %v2479 = vunpack.c.l.b16 %v305
  %v2480 = vunpack.c.h.b16 %v305
  %v2481 = vunpack.c.l.b16 %v306
  %v2482 = vunpack.c.h.b16 %v306
  %v2483 = vunpack.c.l.b16 %v307
  %v2484 = vunpack.c.h.b16 %v307
  %v2485 = vunpack.c.l.b16 %v308
  %v2486 = vunpack.c.h.b16 %v308
  %v2487 = vunpack.c.l.b16 %v309
  %v2488 = vunpack.c.h.b16 %v309
  %v2489 = vunpack.c.l.b16 %v310
  %v2490 = vunpack.c.h.b16 %v310
  %v2491 = vunpack.c.l.b16 %v311
  %v2492 = vunpack.c.h.b16 %v311
  %v2493 = vunpack.c.l.b16 %v312
  %v2494 = vunpack.c.h.b16 %v312
  %v2495 = vunpack.c.l.b16 %v313
  %v2496 = vunpack.c.h.b16 %v313
  %v2497 = vunpack.c.l.b16 %v314
  %v2498 = vunpack.c.h.b16 %v314
  %v2499 = vunpack.c.l.b16 %v315
  %v2500 = vunpack.c.h.b16 %v315
  %v2501 = vunpack.c.l.b16 %v316
  %v2502 = vunpack.c.h.b16 %v316
  %v2503 = vunpack.c.l.b16 %v317
  %v2504 = vunpack.c.h.b16 %v317
  %v2505 = vunpack.c.l.b16 %v318
  %v2506 = vunpack.c.h.b16 %v318
  %v2507 = vunpack.c.l.b16 %v319
  %v2508 = vunpack.c.h.b16 %v319
  %v2509 = vunpack.c.l.b16 %v320
  %v2510 = vunpack.c.h.b16 %v320
  %v2511 = vunpack.c.l.b16 %v321
  %v2512 = vunpack.c.h.b16 %v321
  %v2513 = vunpack.c.l.b16 %v322
  %v2514 = vunpack.c.h.b16 %v322
  %v2515 = vunpack.c.l.b16 %v323
  %v2516 = vunpack.c.h.b16 %v323
  %v2517 = vunpack.c.l.b16 %v324
  %v2518 = vunpack.c.h.b16 %v324
  %v2519 = vunpack.c.l.b16 %v325
  %v2520 = vunpack.c.h.b16 %v325
  %v2521 = vunpack.c.l.b16 %v326
  %v2522 = vunpack.c.h.b16 %v326
  %v2523 = vunpack.c.l.b16 %v327
  %v2524 = vunpack.c.h.b16 %v327
  %v2525 = vunpack.c.l.b16 %v328
  %v2526 = vunpack.c.h.b16 %v328
  %v2527 = vunpack.c.l.b16 %v329
  %v2528 = vunpack.c.h.b16 %v329
  %v2529 = vunpack.c.l.b16 %v330
  %v2530 = vunpack.c.h.b16 %v330
  %v2531 = vunpack.c.l.b16 %v331
  %v2532 = vunpack.c.h.b16 %v331
  %v2533 = vunpack.c.l.b16 %v332
  %v2534 = vunpack.c.h.b16 %v332
  %v2535 = vunpack.c.l.b16 %v333
  %v2536 = vunpack.c.h.b16 %v333
  %v2537 = vunpack.c.l.b16 %v334
  %v2538 = vunpack.c.h.b16 %v334
  %v2539 = vunpack.c.l.b16 %v335
  %v2540 = vunpack.c.h.b16 %v335
  %v2541 = vunpack.c.l.b16 %v336
  %v2542 = vunpack.c.h.b16 %v336
  %v2543 = vunpack.c.l.b16 %v337
  %v2544 = vunpack.c.h.b16 %v337
  %v2545 = vunpack.c.l.b16 %v338
  %v2546 = vunpack.c.h.b16 %v338
  %v2547 = vunpack.c.l.b16 %v339
  %v2548 = vunpack.c.h.b16 %v339
  %v2549 = vunpack.c.l.b16 %v340
  %v2550 = vunpack.c.h.b16 %v340
  %v2551 = vunpack.c.l.b16 %v341
  %v2552 = vunpack.c.h.b16 %v341
  %v2553 = vunpack.c.l.b16 %v342
  %v2554 = vunpack.c.h.b16 %v342
  %v2555 = vunpack.c.l.b16 %v343
  %v2556 = vunpack.c.h.b16 %v343
  %v2557 = vunpack.c.l.b16 %v344
  %v2558 = vunpack.c.h.b16 %v344
  %v2559 = vunpack.c.l.b16 %v345
  %v2560 = vunpack.c.h.b16 %v345
  %v2561 = vunpack.c.l.b16 %v346
  %v2562 = vunpack.c.h.b16 %v346
  %v2563 = vunpack.c.l.b16 %v347
  %v2564 = vunpack.c.h.b16 %v347
  %v2565 = vunpack.c.l.b16 %v348
  %v2566 = vunpack.c.h.b16 %v348
  %v2567 = vunpack.c.l.b16 %v349
  %v2568 = vunpack.c.h.b16 %v349
  %v2569 = vunpack.c.l.b16 %v350
  %v2570 = vunpack.c.h.b16 %v350
  %v2571 = vunpack.c.l.b16 %v351
  %v2572 = vunpack.c.h.b16 %v351
  %v2573 = vunpack.c.l.b16 %v352
  %v2574 = vunpack.c.h.b16 %v352
  %v2575 = vunpack.c.l.b16 %v353
  %v2576 = vunpack.c.h.b16 %v353
  %v2577 = vunpack.c.l.b16 %v354
  %v2578 = vunpack.c.h.b16 %v354
  %v2579 = vunpack.c.l.b16 %v355
  %v2580 = vunpack.c.h.b16 %v355
  %v2581 = vunpack.c.l.b16 %v356
  %v2582 = vunpack.c.h.b16 %v356
  %v2583 = vunpack.c.l.b16 %v357
  %v2584 = vunpack.c.h.b16 %v357
  %v2585 = vunpack.c.l.b16 %v358
  %v2586 = vunpack.c.h.b16 %v358
  %v2587 = vunpack.c.l.b16 %v359
  %v2588 = vunpack.c.h.b16 %v359
  %v2589 = vunpack.c.l.b16 %v360
  %v2590 = vunpack.c.h.b16 %v360
  %v2591 = vunpack.c.l.b16 %v361
  %v2592 = vunpack.c.h.b16 %v361
  %v2593 = vunpack.c.l.b16 %v362
  %v2594 = vunpack.c.h.b16 %v362
  %v2595 = vunpack.c.l.b16 %v363
  %v2596 = vunpack.c.h.b16 %v363
  %v2597 = vunpack.c.l.b16 %v364
  %v2598 = vunpack.c.h.b16 %v364
  %v2599 = vunpack.c.l.b16 %v365
  %v2600 = vunpack.c.h.b16 %v365
  %v2601 = vunpack.c.l.b16 %v366
  %v2602 = vunpack.c.h.b16 %v366
  %v2603 = vunpack.c.l.b16 %v367
  %v2604 = vunpack.c.h.b16 %v367
  %v2605 = vunpack.c.l.b16 %v368
  %v2606 = vunpack.c.h.b16 %v368
  %v2607 = vunpack.c.l.b16 %v369
  %v2608 = vunpack.c.h.b16 %v369
  %v2609 = vunpack.c.l.b16 %v370
  %v2610 = vunpack.c.h.b16 %v370
  %v2611 = vunpack.c.l.b16 %v371
  %v2612 = vunpack.c.h.b16 %v371
  %v2613 = vunpack.c.l.b16 %v372
  %v2614 = vunpack.c.h.b16 %v372
  %v2615 = vunpack.c.l.b16 %v373
  %v2616 = vunpack.c.h.b16 %v373
  %v2617 = vunpack.c.l.b16 %v374
  %v2618 = vunpack.c.h.b16 %v374
  %v2619 = vunpack.c.l.b16 %v375
  %v2620 = vunpack.c.h.b16 %v375
  %v2621 = vunpack.c.l.b16 %v376
  %v2622 = vunpack.c.h.b16 %v376
  %v2623 = vunpack.c.l.b16 %v377
  %v2624 = vunpack.c.h.b16 %v377
  %v2625 = vunpack.c.l.b16 %v378
  %v2626 = vunpack.c.h.b16 %v378
  %v2627 = vunpack.c.l.b16 %v379
  %v2628 = vunpack.c.h.b16 %v379
  %v2629 = vunpack.c.l.b16 %v380
  %v2630 = vunpack.c.h.b16 %v380
  %v2631 = vunpack.c.l.b16 %v381
  %v2632 = vunpack.c.h.b16 %v381
  %v2633 = vunpack.c.l.b16 %v382
  %v2634 = vunpack.c.h.b16 %v382
  %v2635 = vunpack.c.l.b16 %v383
  %v2636 = vunpack.c.h.b16 %v383
  %v2637 = vunpack.c.l.b16 %v384
  %v2638 = vunpack.c.h.b16 %v384
  %v2639 = vunpack.c.l.b16 %v385
  %v2640 = vunpack.c.h.b16 %v385
  %v2641 = vunpack.c.l.b16 %v386
  %v2642 = vunpack.c.h.b16 %v386
  %v2643 = vunpack.c.l.b16 %v387
  %v2644 = vunpack.c.h.b16 %v387
  %v2645 = vunpack.c.l.b16 %v388
  %v2646 = vunpack.c.h.b16 %v388
  %v2647 = vunpack.c.l.b16 %v389
  %v2648 = vunpack.c.h.b16 %v389
  %v2649 = vunpack.c.l.b16 %v390
  %v2650 = vunpack.c.h.b16 %v390
  %v2651 = vunpack.c.l.b16 %v391
  %v2652 = vunpack.c.h.b16 %v391
  %v2653 = vunpack.c.l.b16 %v392
  %v2654 = vunpack.c.h.b16 %v392
  %v2655 = vunpack.c.l.b16 %v393
  %v2656 = vunpack.c.h.b16 %v393
  %v2657 = vunpack.c.l.b16 %v394
  %v2658 = vunpack.c.h.b16 %v394
  %v2659 = vunpack.c.l.b16 %v395
  %v2660 = vunpack.c.h.b16 %v395
  %v2661 = vunpack.c.l.b16 %v396
  %v2662 = vunpack.c.h.b16 %v396
  %v2663 = vunpack.c.l.b16 %v397
  %v2664 = vunpack.c.h.b16 %v397
  %v2665 = vunpack.c.l.b16 %v398
  %v2666 = vunpack.c.h.b16 %v398
  %v2667 = vunpack.c.l.b16 %v399
  %v2668 = vunpack.c.h.b16 %v399
  %v2669 = vunpack.c.l.b16 %v400
  %v2670 = vunpack.c.h.b16 %v400
  %v2671 = vunpack.c.l.b16 %v401
  %v2672 = vunpack.c.h.b16 %v401
  %v2673 = vunpack.c.l.b16 %v402
  %v2674 = vunpack.c.h.b16 %v402
  %v2675 = vunpack.c.l.b16 %v403
  %v2676 = vunpack.c.h.b16 %v403
  %v2677 = vunpack.c.l.b16 %v404
  %v2678 = vunpack.c.h.b16 %v404
  %v2679 = vunpack.c.l.b16 %v405
  %v2680 = vunpack.c.h.b16 %v405
  %v2681 = vunpack.c.l.b16 %v406
  %v2682 = vunpack.c.h.b16 %v406
  %v2683 = vunpack.c.l.b16 %v407
  %v2684 = vunpack.c.h.b16 %v407
  %v2685 = vunpack.c.l.b16 %v408
  %v2686 = vunpack.c.h.b16 %v408
  %v2687 = vunpack.c.l.b16 %v409
  %v2688 = vunpack.c.h.b16 %v409
  %v2689 = vunpack.c.l.b16 %v410
  %v2690 = vunpack.c.h.b16 %v410
  %v2691 = vunpack.c.l.b16 %v411
  %v2692 = vunpack.c.h.b16 %v411
  %v2693 = vunpack.c.l.b16 %v412
  %v2694 = vunpack.c.h.b16 %v412
  %v2695 = vunpack.c.l.b16 %v413
  %v2696 = vunpack.c.h.b16 %v413
  %v2697 = vunpack.c.l.b16 %v414
  %v2698 = vunpack.c.h.b16 %v414
  %v2699 = vunpack.c.l.b16 %v415
  %v2700 = vunpack.c.h.b16 %v415
  %v2701 = vunpack.c.l.b16 %v416
  %v2702 = vunpack.c.h.b16 %v416
  %v2703 = vunpack.c.l.b16 %v417
  %v2704 = vunpack.c.h.b16 %v417
  %v2705 = vunpack.c.l.b16 %v418
  %v2706 = vunpack.c.h.b16 %v418
  %v2707 = vunpack.c.l.b16 %v419
  %v2708 = vunpack.c.h.b16 %v419
  %v2709 = vunpack.c.l.b16 %v420
  %v2710 = vunpack.c.h.b16 %v420
  %v2711 = vunpack.c.l.b16 %v421
  %v2712 = vunpack.c.h.b16 %v421
  %v2713 = vunpack.c.l.b16 %v422
  %v2714 = vunpack.c.h.b16 %v422
  %v2715 = vunpack.c.l.b16 %v423
  %v2716 = vunpack.c.h.b16 %v423
  %v2717 = vunpack.c.l.b16 %v424
  %v2718 = vunpack.c.h.b16 %v424
  %v2719 = vunpack.c.l.b16 %v425
  %v2720 = vunpack.c.h.b16 %v425
  %v2721 = vunpack.c.l.b16 %v426
  %v2722 = vunpack.c.h.b16 %v426
  %v2723 = vunpack.c.l.b16 %v427
  %v2724 = vunpack.c.h.b16 %v427
  %v2725 = vunpack.c.l.b16 %v428
  %v2726 = vunpack.c.h.b16 %v428
  %v2727 = vunpack.c.l.b16 %v429
  %v2728 = vunpack.c.h.b16 %v429
  %v2729 = vunpack.c.l.b16 %v430
  %v2730 = vunpack.c.h.b16 %v430
  %v2731 = vunpack.c.l.b16 %v431
  %v2732 = vunpack.c.h.b16 %v431
  %v2733 = vunpack.c.l.b16 %v432
  %v2734 = vunpack.c.h.b16 %v432
  %v2735 = vunpack.c.l.b16 %v433
  %v2736 = vunpack.c.h.b16 %v433
  %v2737 = vunpack.c.l.b16 %v434
  %v2738 = vunpack.c.h.b16 %v434
  %v2739 = vunpack.c.l.b16 %v435
  %v2740 = vunpack.c.h.b16 %v435
  %v2741 = vunpack.c.l.b16 %v436
  %v2742 = vunpack.c.h.b16 %v436
  %v2743 = vunpack.c.l.b16 %v437
  %v2744 = vunpack.c.h.b16 %v437
  %v2745 = vunpack.c.l.b16 %v438
  %v2746 = vunpack.c.h.b16 %v438
  %v2747 = vunpack.c.l.b16 %v439
  %v2748 = vunpack.c.h.b16 %v439
  %v2749 = vunpack.c.l.b16 %v440
  %v2750 = vunpack.c.h.b16 %v440
  %v2751 = vunpack.c.l.b16 %v441
  %v2752 = vunpack.c.h.b16 %v441
  %v2753 = vunpack.c.l.b16 %v442
  %v2754 = vunpack.c.h.b16 %v442
  %v2755 = vunpack.c.l.b16 %v443
  %v2756 = vunpack.c.h.b16 %v443
  %v2757 = vunpack.c.l.b16 %v444
  %v2758 = vunpack.c.h.b16 %v444
  %v2759 = vunpack.c.l.b16 %v445
  %v2760 = vunpack.c.h.b16 %v445
  %v2761 = vunpack.c.l.b16 %v446
  %v2762 = vunpack.c.h.b16 %v446
  %v2763 = vunpack.c.l.b16 %v447
  %v2764 = vunpack.c.h.b16 %v447
  %v2765 = vunpack.c.l.b16 %v448
  %v2766 = vunpack.c.h.b16 %v448
  %v2767 = vunpack.c.l.b16 %v449
  %v2768 = vunpack.c.h.b16 %v449
  %v2769 = vunpack.c.l.b16 %v450
  %v2770 = vunpack.c.h.b16 %v450
  %v2771 = vunpack.c.l.b16 %v451
  %v2772 = vunpack.c.h.b16 %v451
  %v2773 = vunpack.c.l.b16 %v452
  %v2774 = vunpack.c.h.b16 %v452
  %v2775 = vunpack.c.l.b16 %v453
  %v2776 = vunpack.c.h.b16 %v453
  %v2777 = vunpack.c.l.b16 %v454
  %v2778 = vunpack.c.h.b16 %v454
  %v2779 = vunpack.c.l.b16 %v455
  %v2780 = vunpack.c.h.b16 %v455
  %v2781 = vunpack.c.l.b16 %v456
  %v2782 = vunpack.c.h.b16 %v456
  %v2783 = vunpack.c.l.b16 %v457
  %v2784 = vunpack.c.h.b16 %v457
  %v2785 = vunpack.c.l.b16 %v458
  %v2786 = vunpack.c.h.b16 %v458
  %v2787 = vunpack.c.l.b16 %v459
  %v2788 = vunpack.c.h.b16 %v459
  %v2789 = vunpack.c.l.b16 %v460
  %v2790 = vunpack.c.h.b16 %v460
  %v2791 = vunpack.c.l.b16 %v461
  %v2792 = vunpack.c.h.b16 %v461
  %v2793 = vunpack.c.l.b16 %v462
  %v2794 = vunpack.c.h.b16 %v462
  %v2795 = vunpack.c.l.b16 %v463
  %v2796 = vunpack.c.h.b16 %v463
  %v2797 = vunpack.c.l.b16 %v464
  %v2798 = vunpack.c.h.b16 %v464
  %v2799 = vunpack.c.l.b16 %v465
  %v2800 = vunpack.c.h.b16 %v465
  %v2801 = vunpack.c.l.b16 %v466
  %v2802 = vunpack.c.h.b16 %v466
  %v2803 = vunpack.c.l.b16 %v467
  %v2804 = vunpack.c.h.b16 %v467
  %v2805 = vunpack.c.l.b16 %v468
  %v2806 = vunpack.c.h.b16 %v468
  %v2807 = vunpack.c.l.b16 %v469
  %v2808 = vunpack.c.h.b16 %v469
  %v2809 = vunpack.c.l.b16 %v470
  %v2810 = vunpack.c.h.b16 %v470
  %v2811 = vunpack.c.l.b16 %v471
  %v2812 = vunpack.c.h.b16 %v471
  %v2813 = vunpack.c.l.b16 %v472
  %v2814 = vunpack.c.h.b16 %v472
  %v2815 = vunpack.c.l.b16 %v473
  %v2816 = vunpack.c.h.b16 %v473
  %v2817 = vunpack.c.l.b16 %v474
  %v2818 = vunpack.c.h.b16 %v474
  %v2819 = vunpack.c.l.b16 %v475
  %v2820 = vunpack.c.h.b16 %v475
  %v2821 = vunpack.c.l.b16 %v476
  %v2822 = vunpack.c.h.b16 %v476
  %v2823 = vunpack.c.l.b16 %v477
  %v2824 = vunpack.c.h.b16 %v477
  %v2825 = vunpack.c.l.b16 %v478
  %v2826 = vunpack.c.h.b16 %v478
  %v2827 = vunpack.c.l.b16 %v479
  %v2828 = vunpack.c.h.b16 %v479
  %v2829 = vunpack.c.l.b16 %v480
  %v2830 = vunpack.c.h.b16 %v480
  %v2831 = vunpack.c.l.b16 %v481
  %v2832 = vunpack.c.h.b16 %v481
  %v2833 = vunpack.c.l.b16 %v482
  %v2834 = vunpack.c.h.b16 %v482
  %v2835 = vunpack.c.l.b16 %v483
  %v2836 = vunpack.c.h.b16 %v483
  %v2837 = vunpack.c.l.b16 %v484
  %v2838 = vunpack.c.h.b16 %v484
  %v2839 = vunpack.c.l.b16 %v485
  %v2840 = vunpack.c.h.b16 %v485
  %v2841 = vunpack.c.l.b16 %v486
  %v2842 = vunpack.c.h.b16 %v486
  %v2843 = vunpack.c.l.b16 %v487
  %v2844 = vunpack.c.h.b16 %v487
  %v2845 = vunpack.c.l.b16 %v488
  %v2846 = vunpack.c.h.b16 %v488
  %v2847 = vunpack.c.l.b16 %v489
  %v2848 = vunpack.c.h.b16 %v489
  %v2849 = vunpack.c.l.b16 %v490
  %v2850 = vunpack.c.h.b16 %v490
  %v2851 = vunpack.c.l.b16 %v491
  %v2852 = vunpack.c.h.b16 %v491
  %v2853 = vunpack.c.l.b16 %v492
  %v2854 = vunpack.c.h.b16 %v492
  %v2855 = vunpack.c.l.b16 %v493
  %v2856 = vunpack.c.h.b16 %v493
  %v2857 = vunpack.c.l.b16 %v494
  %v2858 = vunpack.c.h.b16 %v494
  %v2859 = vunpack.c.l.b16 %v495
  %v2860 = vunpack.c.h.b16 %v495
  %v2861 = vunpack.c.l.b16 %v496
  %v2862 = vunpack.c.h.b16 %v496
  %v2863 = vunpack.c.l.b16 %v497
  %v2864 = vunpack.c.h.b16 %v497
  %v2865 = vunpack.c.l.b16 %v498
  %v2866 = vunpack.c.h.b16 %v498
  %v2867 = vunpack.c.l.b16 %v499
  %v2868 = vunpack.c.h.b16 %v499
  %v2869 = vunpack.c.l.b16 %v500
  %v2870 = vunpack.c.h.b16 %v500
  %v2871 = vunpack.c.l.b16 %v501
  %v2872 = vunpack.c.h.b16 %v501
  %v2873 = vunpack.c.l.b16 %v502
  %v2874 = vunpack.c.h.b16 %v502
  %v2875 = vunpack.c.l.b16 %v503
  %v2876 = vunpack.c.h.b16 %v503
  %v2877 = vunpack.c.l.b16 %v504
  %v2878 = vunpack.c.h.b16 %v504
  %v2879 = vunpack.c.l.b16 %v505
  %v2880 = vunpack.c.h.b16 %v505
  %v2881 = vunpack.c.l.b16 %v506
  %v2882 = vunpack.c.h.b16 %v506
  %v2883 = vunpack.c.l.b16 %v507
  %v2884 = vunpack.c.h.b16 %v507
  %v2885 = vunpack.c.l.b16 %v508
  %v2886 = vunpack.c.h.b16 %v508
  %v2887 = vunpack.c.l.b16 %v509
  %v2888 = vunpack.c.h.b16 %v509
  %v2889 = vunpack.c.l.b16 %v510
  %v2890 = vunpack.c.h.b16 %v510
  %v2891 = vunpack.c.l.b16 %v511
  %v2892 = vunpack.c.h.b16 %v511
  %v2893 = vunpack.c.l.b16 %v512
  %v2894 = vunpack.c.h.b16 %v512
  %v2895 = vunpack.c.l.b16 %v513
  %v2896 = vunpack.c.h.b16 %v513
  %v2897 = vunpack.c.l.b16 %v514
  %v2898 = vunpack.c.h.b16 %v514
  %v2899 = vunpack.c.l.b16 %v515
  %v2900 = vunpack.c.h.b16 %v515
  %v2901 = vunpack.c.l.b16 %v516
  %v2902 = vunpack.c.h.b16 %v516
  %v2903 = vunpack.c.l.b16 %v517
  %v2904 = vunpack.c.h.b16 %v517
  %v2905 = vunpack.c.l.b16 %v518
  %v2906 = vunpack.c.h.b16 %v518
  %v2907 = vunpack.c.l.b16 %v519
  %v2908 = vunpack.c.h.b16 %v519
  %v2909 = vunpack.c.l.b16 %v520
  %v2910 = vunpack.c.h.b16 %v520
  %v2911 = vunpack.c.l.b16 %v521
  %v2912 = vunpack.c.h.b16 %v521
  %v2913 = vunpack.c.l.b16 %v522
  %v2914 = vunpack.c.h.b16 %v522
  %v2915 = vunpack.c.l.b16 %v523
  %v2916 = vunpack.c.h.b16 %v523
  %v2917 = vunpack.c.l.b16 %v524
  %v2918 = vunpack.c.h.b16 %v524
  %v2919 = vunpack.c.l.b16 %v525
  %v2920 = vunpack.c.h.b16 %v525
  %v2921 = vunpack.c.l.b16 %v526
  %v2922 = vunpack.c.h.b16 %v526
  %v2923 = vunpack.c.l.b16 %v527
  %v2924 = vunpack.c.h.b16 %v527
  %v2925 = vunpack.c.l.b16 %v528
  %v2926 = vunpack.c.h.b16 %v528
  %v2927 = vunpack.c.l.b16 %v529
  %v2928 = vunpack.c.h.b16 %v529
  %v2929 = vunpack.c.l.b16 %v530
  %v2930 = vunpack.c.h.b16 %v530
  %v2931 = vunpack.c.l.b16 %v531
  %v2932 = vunpack.c.h.b16 %v531
  %v2933 = vunpack.c.l.b16 %v532
  %v2934 = vunpack.c.h.b16 %v532
  %v2935 = vunpack.c.l.b16 %v533
  %v2936 = vunpack.c.h.b16 %v533
  %v2937 = vunpack.c.l.b16 %v534
  %v2938 = vunpack.c.h.b16 %v534
  %v2939 = vunpack.c.l.b16 %v535
  %v2940 = vunpack.c.h.b16 %v535
  %v2941 = vunpack.c.l.b16 %v536
  %v2942 = vunpack.c.h.b16 %v536
  %v2943 = vunpack.c.l.b16 %v537
  %v2944 = vunpack.c.h.b16 %v537
  %v2945 = vunpack.c.l.b16 %v538
  %v2946 = vunpack.c.h.b16 %v538
  %v2947 = vunpack.c.l.b16 %v539
  %v2948 = vunpack.c.h.b16 %v539
  %v2949 = vunpack.c.l.b16 %v540
  %v2950 = vunpack.c.h.b16 %v540
  %v2951 = vunpack.c.l.b16 %v541
  %v2952 = vunpack.c.h.b16 %v541
  %v2953 = vunpack.c.l.b16 %v542
  %v2954 = vunpack.c.h.b16 %v542
  %v2955 = vunpack.c.l.b16 %v543
  %v2956 = vunpack.c.h.b16 %v543
  %v2957 = vunpack.c.l.b16 %v544
  %v2958 = vunpack.c.h.b16 %v544
  %v2959 = vunpack.c.l.b16 %v545
  %v2960 = vunpack.c.h.b16 %v545
  %v2961 = vunpack.c.l.b16 %v546
  %v2962 = vunpack.c.h.b16 %v546
  %v2963 = vunpack.c.l.b16 %v547
  %v2964 = vunpack.c.h.b16 %v547
  %v2965 = vunpack.c.l.b16 %v548
  %v2966 = vunpack.c.h.b16 %v548
  %v2967 = vunpack.c.l.b16 %v549
  %v2968 = vunpack.c.h.b16 %v549
  %v2969 = vunpack.c.l.b16 %v550
  %v2970 = vunpack.c.h.b16 %v550
  %v2971 = vunpack.c.l.b16 %v551
  %v2972 = vunpack.c.h.b16 %v551
  %v2973 = vunpack.c.l.b16 %v552
  %v2974 = vunpack.c.h.b16 %v552
  %v2975 = vunpack.c.l.b16 %v553
  %v2976 = vunpack.c.h.b16 %v553
  %v2977 = vunpack.c.l.b16 %v554
  %v2978 = vunpack.c.h.b16 %v554
  %v2979 = vunpack.c.l.b16 %v555
  %v2980 = vunpack.c.h.b16 %v555
  %v2981 = vunpack.c.l.b16 %v556
  %v2982 = vunpack.c.h.b16 %v556
  %v2983 = vunpack.c.l.b16 %v557
  %v2984 = vunpack.c.h.b16 %v557
  %v2985 = vunpack.c.l.b16 %v558
  %v2986 = vunpack.c.h.b16 %v558
  %v2987 = vunpack.c.l.b16 %v559
  %v2988 = vunpack.c.h.b16 %v559
  %v2989 = vunpack.c.l.b16 %v560
  %v2990 = vunpack.c.h.b16 %v560
  %v2991 = vunpack.c.l.b16 %v561
  %v2992 = vunpack.c.h.b16 %v561
  %v2993 = vunpack.c.l.b16 %v562
  %v2994 = vunpack.c.h.b16 %v562
  %v2995 = vunpack.c.l.b16 %v563
  %v2996 = vunpack.c.h.b16 %v563
  %v2997 = vunpack.c.l.b16 %v564
  %v2998 = vunpack.c.h.b16 %v564
  %v2999 = vunpack.c.l.b16 %v565
  %v3000 = vunpack.c.h.b16 %v565
  %v3001 = vunpack.c.l.b16 %v566
  %v3002 = vunpack.c.h.b16 %v566
  %v3003 = vunpack.c.l.b16 %v567
  %v3004 = vunpack.c.h.b16 %v567
  %v3005 = vunpack.c.l.b16 %v568
  %v3006 = vunpack.c.h.b16 %v568
  %v3007 = vunpack.c.l.b16 %v569
  %v3008 = vunpack.c.h.b16 %v569
  %v3009 = vunpack.c.l.b16 %v570
  %v3010 = vunpack.c.h.b16 %v570
  %v3011 = vunpack.c.l.b16 %v571
  %v3012 = vunpack.c.h.b16 %v571
  %v3013 = vunpack.c.l.b16 %v572
  %v3014 = vunpack.c.h.b16 %v572
  %v3015 = vunpack.c.l.b16 %v573
  %v3016 = vunpack.c.h.b16 %v573
  %v3017 = vunpack.c.l.b16 %v574
  %v3018 = vunpack.c.h.b16 %v574
  %v3019 = vunpack.c.l.b16 %v575
  %v3020 = vunpack.c.h.b16 %v575
  %v3021 = vunpack.c.l.b16 %v576
  %v3022 = vunpack.c.h.b16 %v576
  %v3023 = vunpack.c.l.b16 %v577
  %v3024 = vunpack.c.h.b16 %v577
  %v3025 = vunpack.c.l.b16 %v578
  %v3026 = vunpack.c.h.b16 %v578
  %v3027 = vunpack.c.l.b16 %v579
  %v3028 = vunpack.c.h.b16 %v579
  %v3029 = vunpack.c.l.b16 %v580
  %v3030 = vunpack.c.h.b16 %v580
  %v3031 = vunpack.c.l.b16 %v581
  %v3032 = vunpack.c.h.b16 %v581
  %v3033 = vunpack.c.l.b16 %v582
  %v3034 = vunpack.c.h.b16 %v582
  %v3035 = vunpack.c.l.b16 %v583
  %v3036 = vunpack.c.h.b16 %v583
  %v3037 = vunpack.c.l.b16 %v584
  %v3038 = vunpack.c.h.b16 %v584
  %v3039 = vunpack.c.l.b16 %v585
  %v3040 = vunpack.c.h.b16 %v585
  %v3041 = vunpack.c.l.b16 %v586
  %v3042 = vunpack.c.h.b16 %v586
  %v3043 = vunpack.c.l.b16 %v587
  %v3044 = vunpack.c.h.b16 %v587
  %v3045 = vunpack.c.l.b16 %v588
  %v3046 = vunpack.c.h.b16 %v588
  %v3047 = vunpack.c.l.b16 %v589
  %v3048 = vunpack.c.h.b16 %v589
  %v3049 = vunpack.c.l.b16 %v590
  %v3050 = vunpack.c.h.b16 %v590
  %v3051 = vunpack.c.l.b16 %v591
  %v3052 = vunpack.c.h.b16 %v591
  %v3053 = vunpack.c.l.b16 %v592
  %v3054 = vunpack.c.h.b16 %v592
  %v3055 = vunpack.c.l.b16 %v593
  %v3056 = vunpack.c.h.b16 %v593
  %v3057 = vunpack.c.l.b16 %v594
  %v3058 = vunpack.c.h.b16 %v594
  %v3059 = vunpack.c.l.b16 %v595
  %v3060 = vunpack.c.h.b16 %v595
  %v3061 = vunpack.c.l.b16 %v596
  %v3062 = vunpack.c.h.b16 %v596
  %v3063 = vunpack.c.l.b16 %v597
  %v3064 = vunpack.c.h.b16 %v597
  %v3065 = vunpack.c.l.b16 %v598
  %v3066 = vunpack.c.h.b16 %v598
  %v3067 = vunpack.c.l.b16 %v599
  %v3068 = vunpack.c.h.b16 %v599
  %v3069 = vunpack.c.l.b16 %v600
  %v3070 = vunpack.c.h.b16 %v600
  %v3071 = vunpack.c.l.b16 %v601
  %v3072 = vunpack.c.h.b16 %v601
  %v3073 = vunpack.c.l.b16 %v602
  %v3074 = vunpack.c.h.b16 %v602
  %v3075 = vunpack.c.l.b16 %v603
  %v3076 = vunpack.c.h.b16 %v603
  %v3077 = vunpack.c.l.b16 %v604
  %v3078 = vunpack.c.h.b16 %v604
  %v3079 = vunpack.c.l.b16 %v605
  %v3080 = vunpack.c.h.b16 %v605
  %v3081 = vunpack.c.l.b16 %v606
  %v3082 = vunpack.c.h.b16 %v606
  %v3083 = vunpack.c.l.b16 %v607
  %v3084 = vunpack.c.h.b16 %v607
  %v3085 = vunpack.c.l.b16 %v608
  %v3086 = vunpack.c.h.b16 %v608
  %v3087 = vunpack.c.l.b16 %v609
  %v3088 = vunpack.c.h.b16 %v609
  %v3089 = vunpack.c.l.b16 %v610
  %v3090 = vunpack.c.h.b16 %v610
  %v3091 = vunpack.c.l.b16 %v611
  %v3092 = vunpack.c.h.b16 %v611
  %v3093 = vunpack.c.l.b16 %v612
  %v3094 = vunpack.c.h.b16 %v612
  %v3095 = vunpack.c.l.b16 %v613
  %v3096 = vunpack.c.h.b16 %v613
  %v3097 = vunpack.c.l.b16 %v614
  %v3098 = vunpack.c.h.b16 %v614
  %v3099 = vunpack.c.l.b16 %v615
  %v3100 = vunpack.c.h.b16 %v615
  %v3101 = vunpack.c.l.b16 %v616
  %v3102 = vunpack.c.h.b16 %v616
  %v3103 = vunpack.c.l.b16 %v617
  %v3104 = vunpack.c.h.b16 %v617
  %v3105 = vunpack.c.l.b16 %v618
  %v3106 = vunpack.c.h.b16 %v618
  %v3107 = vunpack.c.l.b16 %v619
  %v3108 = vunpack.c.h.b16 %v619
  %v3109 = vunpack.c.l.b16 %v620
  %v3110 = vunpack.c.h.b16 %v620
  %v3111 = vunpack.c.l.b16 %v621
  %v3112 = vunpack.c.h.b16 %v621
  %v3113 = vunpack.c.l.b16 %v622
  %v3114 = vunpack.c.h.b16 %v622
  %v3115 = vunpack.c.l.b16 %v623
  %v3116 = vunpack.c.h.b16 %v623
  %v3117 = vunpack.c.l.b16 %v624
  %v3118 = vunpack.c.h.b16 %v624
  %v3119 = vunpack.c.l.b16 %v625
  %v3120 = vunpack.c.h.b16 %v625
  %v3121 = vunpack.c.l.b16 %v626
  %v3122 = vunpack.c.h.b16 %v626
  %v3123 = vunpack.c.l.b16 %v627
  %v3124 = vunpack.c.h.b16 %v627
  %v3125 = vunpack.c.l.b16 %v628
  %v3126 = vunpack.c.h.b16 %v628
  %v3127 = vunpack.c.l.b16 %v629
  %v3128 = vunpack.c.h.b16 %v629
  %v3129 = vunpack.c.l.b16 %v630
  %v3130 = vunpack.c.h.b16 %v630
  %v3131 = vunpack.c.l.b16 %v631
  %v3132 = vunpack.c.h.b16 %v631
  %v3133 = vunpack.c.l.b16 %v632
  %v3134 = vunpack.c.h.b16 %v632
  %v3135 = vunpack.c.l.b16 %v633
  %v3136 = vunpack.c.h.b16 %v633
  %v3137 = vunpack.c.l.b16 %v634
  %v3138 = vunpack.c.h.b16 %v634
  %v3139 = vunpack.c.l.b16 %v635
  %v3140 = vunpack.c.h.b16 %v635
  %v3141 = vunpack.c.l.b16 %v636
  %v3142 = vunpack.c.h.b16 %v636
  %v3143 = vunpack.c.l.b16 %v637
  %v3144 = vunpack.c.h.b16 %v637
  %v3145 = vunpack.c.l.b16 %v638
  %v3146 = vunpack.c.h.b16 %v638
  %v3147 = vunpack.c.l.b16 %v639
  %v3148 = vunpack.c.h.b16 %v639
  %v3149 = vunpack.c.l.b16 %v640
  %v3150 = vunpack.c.h.b16 %v640
  %v3151 = vunpack.c.l.b16 %v641
  %v3152 = vunpack.c.h.b16 %v641
  %v3153 = vunpack.c.l.b16 %v642
  %v3154 = vunpack.c.h.b16 %v642
  %v3155 = vunpack.c.l.b16 %v643
  %v3156 = vunpack.c.h.b16 %v643
  %v3157 = vunpack.c.l.b16 %v644
  %v3158 = vunpack.c.h.b16 %v644
  %v3159 = vunpack.c.l.b16 %v645
  %v3160 = vunpack.c.h.b16 %v645
  %v3161 = vunpack.c.l.b16 %v646
  %v3162 = vunpack.c.h.b16 %v646
  %v3163 = vunpack.c.l.b16 %v647
  %v3164 = vunpack.c.h.b16 %v647
  %v3165 = vunpack.c.l.b16 %v648
  %v3166 = vunpack.c.h.b16 %v648
  %v3167 = vunpack.c.l.b16 %v649
  %v3168 = vunpack.c.h.b16 %v649
  %v3169 = vunpack.c.l.b16 %v650
  %v3170 = vunpack.c.h.b16 %v650
  %v3171 = vunpack.c.l.b16 %v651
  %v3172 = vunpack.c.h.b16 %v651
  %v3173 = vunpack.c.l.b16 %v652
  %v3174 = vunpack.c.h.b16 %v652
  %v3175 = vunpack.c.l.b16 %v653
  %v3176 = vunpack.c.h.b16 %v653
  %v3177 = vunpack.c.l.b16 %v654
  %v3178 = vunpack.c.h.b16 %v654
  %v3179 = vunpack.c.l.b16 %v655
  %v3180 = vunpack.c.h.b16 %v655
  %v3181 = vunpack.c.l.b16 %v656
  %v3182 = vunpack.c.h.b16 %v656
  %v3183 = vunpack.c.l.b16 %v657
  %v3184 = vunpack.c.h.b16 %v657
  %v3185 = vunpack.c.l.b16 %v658
  %v3186 = vunpack.c.h.b16 %v658
  %v3187 = vunpack.c.l.b16 %v659
  %v3188 = vunpack.c.h.b16 %v659
  %v3189 = vunpack.c.l.b16 %v660
  %v3190 = vunpack.c.h.b16 %v660
  %v3191 = vunpack.c.l.b16 %v661
  %v3192 = vunpack.c.h.b16 %v661
  %v3193 = vunpack.c.l.b16 %v662
  %v3194 = vunpack.c.h.b16 %v662
  %v3195 = vunpack.c.l.b16 %v663
  %v3196 = vunpack.c.h.b16 %v663
  %v3197 = vunpack.c.l.b16 %v664
  %v3198 = vunpack.c.h.b16 %v664
  %v3199 = vunpack.c.l.b16 %v665
  %v3200 = vunpack.c.h.b16 %v665
  %v3201 = vunpack.c.l.b16 %v666
  %v3202 = vunpack.c.h.b16 %v666
  %v3203 = vunpack.c.l.b16 %v667
  %v3204 = vunpack.c.h.b16 %v667
  %v3205 = vunpack.c.l.b16 %v668
  %v3206 = vunpack.c.h.b16 %v668
  %v3207 = vunpack.c.l.b16 %v669
  %v3208 = vunpack.c.h.b16 %v669
  %v3209 = vunpack.c.l.b16 %v670
  %v3210 = vunpack.c.h.b16 %v670
  %v3211 = vunpack.c.l.b16 %v671
  %v3212 = vunpack.c.h.b16 %v671
  %v3213 = vunpack.c.l.b16 %v672
  %v3214 = vunpack.c.h.b16 %v672
  %v3215 = vunpack.c.l.b16 %v673
  %v3216 = vunpack.c.h.b16 %v673
  %v3217 = vunpack.c.l.b16 %v674
  %v3218 = vunpack.c.h.b16 %v674
  %v3219 = vunpack.c.l.b16 %v675
  %v3220 = vunpack.c.h.b16 %v675
  %v3221 = vunpack.c.l.b16 %v676
  %v3222 = vunpack.c.h.b16 %v676
  %v3223 = vunpack.c.l.b16 %v677
  %v3224 = vunpack.c.h.b16 %v677
  %v3225 = vunpack.c.l.b16 %v678
  %v3226 = vunpack.c.h.b16 %v678
  %v3227 = vunpack.c.l.b16 %v679
  %v3228 = vunpack.c.h.b16 %v679
  %v3229 = vunpack.c.l.b16 %v680
  %v3230 = vunpack.c.h.b16 %v680
  %v3231 = vunpack.c.l.b16 %v681
  %v3232 = vunpack.c.h.b16 %v681
  %v3233 = vunpack.c.l.b16 %v682
  %v3234 = vunpack.c.h.b16 %v682
  %v3235 = vunpack.c.l.b16 %v683
  %v3236 = vunpack.c.h.b16 %v683
  %v3237 = vunpack.c.l.b16 %v684
  %v3238 = vunpack.c.h.b16 %v684
  %v3239 = vunpack.c.l.b16 %v685
  %v3240 = vunpack.c.h.b16 %v685
  %v3241 = vunpack.c.l.b16 %v686
  %v3242 = vunpack.c.h.b16 %v686
  %v3243 = vunpack.c.l.b16 %v687
  %v3244 = vunpack.c.h.b16 %v687
  %v3245 = vunpack.c.l.b16 %v688
  %v3246 = vunpack.c.h.b16 %v688
  %v3247 = vunpack.c.l.b16 %v689
  %v3248 = vunpack.c.h.b16 %v689
  %v3249 = vunpack.c.l.b16 %v690
  %v3250 = vunpack.c.h.b16 %v690
  %v3251 = vunpack.c.l.b16 %v691
  %v3252 = vunpack.c.h.b16 %v691
  %v3253 = vunpack.c.l.b16 %v692
  %v3254 = vunpack.c.h.b16 %v692
  %v3255 = vunpack.c.l.b16 %v693
  %v3256 = vunpack.c.h.b16 %v693
  %v3257 = vunpack.c.l.b16 %v694
  %v3258 = vunpack.c.h.b16 %v694
  %v3259 = vunpack.c.l.b16 %v695
  %v3260 = vunpack.c.h.b16 %v695
  %v3261 = vunpack.c.l.b16 %v696
  %v3262 = vunpack.c.h.b16 %v696
  %v3263 = vunpack.c.l.b16 %v697
  %v3264 = vunpack.c.h.b16 %v697
  %v3265 = vunpack.c.l.b16 %v698
  %v3266 = vunpack.c.h.b16 %v698
  %v3267 = vunpack.c.l.b16 %v699
  %v3268 = vunpack.c.h.b16 %v699
  %v3269 = vunpack.c.l.b16 %v700
  %v3270 = vunpack.c.h.b16 %v700
  %v3271 = vunpack.c.l.b16 %v701
  %v3272 = vunpack.c.h.b16 %v701
  %v3273 = vunpack.c.l.b16 %v702
  %v3274 = vunpack.c.h.b16 %v702
  %v3275 = vunpack.c.l.b16 %v703
  %v3276 = vunpack.c.h.b16 %v703
  %v3277 = vunpack.c.l.b16 %v704
  %v3278 = vunpack.c.h.b16 %v704
  %v3279 = vunpack.c.l.b16 %v705
  %v3280 = vunpack.c.h.b16 %v705
  %v3281 = vunpack.c.l.b16 %v706
  %v3282 = vunpack.c.h.b16 %v706
  %v3283 = vunpack.c.l.b16 %v707
  %v3284 = vunpack.c.h.b16 %v707
  %v3285 = vunpack.c.l.b16 %v708
  %v3286 = vunpack.c.h.b16 %v708
  %v3287 = vunpack.c.l.b16 %v709
  %v3288 = vunpack.c.h.b16 %v709
  %v3289 = vunpack.c.l.b16 %v710
  %v3290 = vunpack.c.h.b16 %v710
  %v3291 = vunpack.c.l.b16 %v711
  %v3292 = vunpack.c.h.b16 %v711
  %v3293 = vunpack.c.l.b16 %v712
  %v3294 = vunpack.c.h.b16 %v712
  %v3295 = vunpack.c.l.b16 %v713
  %v3296 = vunpack.c.h.b16 %v713
  %v3297 = vunpack.c.l.b16 %v714
  %v3298 = vunpack.c.h.b16 %v714
  %v3299 = vunpack.c.l.b16 %v715
  %v3300 = vunpack.c.h.b16 %v715
  %v3301 = vunpack.c.l.b16 %v716
  %v3302 = vunpack.c.h.b16 %v716
  %v3303 = vunpack.c.l.b16 %v717
  %v3304 = vunpack.c.h.b16 %v717
  %v3305 = vunpack.c.l.b16 %v718
  %v3306 = vunpack.c.h.b16 %v718
  %v3307 = vunpack.c.l.b16 %v719
  %v3308 = vunpack.c.h.b16 %v719
  %v3309 = vunpack.c.l.b16 %v720
  %v3310 = vunpack.c.h.b16 %v720
  %v3311 = vunpack.c.l.b16 %v721
  %v3312 = vunpack.c.h.b16 %v721
  %v3313 = vunpack.c.l.b16 %v722
  %v3314 = vunpack.c.h.b16 %v722
  %v3315 = vunpack.c.l.b16 %v723
  %v3316 = vunpack.c.h.b16 %v723
  %v3317 = vunpack.c.l.b16 %v724
  %v3318 = vunpack.c.h.b16 %v724
  %v3319 = vunpack.c.l.b16 %v725
  %v3320 = vunpack.c.h.b16 %v725
  %v3321 = vunpack.c.l.b16 %v726
  %v3322 = vunpack.c.h.b16 %v726
  %v3323 = vunpack.c.l.b16 %v727
  %v3324 = vunpack.c.h.b16 %v727
  %v3325 = vunpack.c.l.b16 %v728
  %v3326 = vunpack.c.h.b16 %v728
  %v3327 = vunpack.c.l.b16 %v729
  %v3328 = vunpack.c.h.b16 %v729
  %v3329 = vunpack.c.l.b16 %v730
  %v3330 = vunpack.c.h.b16 %v730
  %v3331 = vunpack.c.l.b16 %v731
  %v3332 = vunpack.c.h.b16 %v731
  %v3333 = vunpack.c.l.b16 %v732
  %v3334 = vunpack.c.h.b16 %v732
  %v3335 = vunpack.c.l.b16 %v733
  %v3336 = vunpack.c.h.b16 %v733
  %v3337 = vunpack.c.l.b16 %v734
  %v3338 = vunpack.c.h.b16 %v734
  %v3339 = vunpack.c.l.b16 %v735
  %v3340 = vunpack.c.h.b16 %v735
  %v3341 = vunpack.c.l.b16 %v736
  %v3342 = vunpack.c.h.b16 %v736
  %v3343 = vunpack.c.l.b16 %v737
  %v3344 = vunpack.c.h.b16 %v737
  %v3345 = vunpack.c.l.b16 %v738
  %v3346 = vunpack.c.h.b16 %v738
  %v3347 = vunpack.c.l.b16 %v739
  %v3348 = vunpack.c.h.b16 %v739
  %v3349 = vunpack.c.l.b16 %v740
  %v3350 = vunpack.c.h.b16 %v740
  %v3351 = vunpack.c.l.b16 %v741
  %v3352 = vunpack.c.h.b16 %v741
  %v3353 = vunpack.c.l.b16 %v742
  %v3354 = vunpack.c.h.b16 %v742
  %v3355 = vunpack.c.l.b16 %v743
  %v3356 = vunpack.c.h.b16 %v743
  %v3357 = vunpack.c.l.b16 %v744
  %v3358 = vunpack.c.h.b16 %v744
  %v3359 = vunpack.c.l.b16 %v745
  %v3360 = vunpack.c.h.b16 %v745
  %v3361 = vunpack.c.l.b16 %v746
  %v3362 = vunpack.c.h.b16 %v746
  %v3363 = vunpack.c.l.b16 %v747
  %v3364 = vunpack.c.h.b16 %v747
  %v3365 = vunpack.c.l.b16 %v748
  %v3366 = vunpack.c.h.b16 %v748
  %v3367 = vunpack.c.l.b16 %v749
  %v3368 = vunpack.c.h.b16 %v749
  %v3369 = vunpack.c.l.b16 %v750
  %v3370 = vunpack.c.h.b16 %v750
  %v3371 = vunpack.c.l.b16 %v751
  %v3372 = vunpack.c.h.b16 %v751
  %v3373 = vunpack.c.l.b16 %v752
  %v3374 = vunpack.c.h.b16 %v752
  %v3375 = vunpack.c.l.b16 %v753
  %v3376 = vunpack.c.h.b16 %v753
  %v3377 = vunpack.c.l.b16 %v754
  %v3378 = vunpack.c.h.b16 %v754
  %v3379 = vunpack.c.l.b16 %v755
  %v3380 = vunpack.c.h.b16 %v755
  %v3381 = vunpack.c.l.b16 %v756
  %v3382 = vunpack.c.h.b16 %v756
  %v3383 = vunpack.c.l.b16 %v757
  %v3384 = vunpack.c.h.b16 %v757
  %v3385 = vunpack.c.l.b16 %v758
  %v3386 = vunpack.c.h.b16 %v758
  %v3387 = vunpack.c.l.b16 %v759
  %v3388 = vunpack.c.h.b16 %v759
  %v3389 = vunpack.c.l.b16 %v760
  %v3390 = vunpack.c.h.b16 %v760
  %v3391 = vunpack.c.l.b16 %v761
  %v3392 = vunpack.c.h.b16 %v761
  %v3393 = vunpack.c.l.b16 %v762
  %v3394 = vunpack.c.h.b16 %v762
  %v3395 = vunpack.c.l.b16 %v763
  %v3396 = vunpack.c.h.b16 %v763
  %v3397 = vunpack.c.l.b16 %v764
  %v3398 = vunpack.c.h.b16 %v764
  %v3399 = vunpack.c.l.b16 %v765
  %v3400 = vunpack.c.h.b16 %v765
  %v3401 = vunpack.c.l.b16 %v766
  %v3402 = vunpack.c.h.b16 %v766
  %v3403 = vunpack.c.l.b16 %v767
  %v3404 = vunpack.c.h.b16 %v767
  %v3405 = vunpack.c.l.b16 %v768
  %v3406 = vunpack.c.h.b16 %v768
  %v3407 = vunpack.c.l.b16 %v769
  %v3408 = vunpack.c.h.b16 %v769
  %v3409 = vunpack.c.l.b16 %v770
  %v3410 = vunpack.c.h.b16 %v770
  %v3411 = vunpack.c.l.b16 %v771
  %v3412 = vunpack.c.h.b16 %v771
  %v3413 = vunpack.c.l.b16 %v772
  %v3414 = vunpack.c.h.b16 %v772
  %v3415 = vunpack.c.l.b16 %v773
  %v3416 = vunpack.c.h.b16 %v773
  %v3417 = vunpack.c.l.b16 %v774
  %v3418 = vunpack.c.h.b16 %v774
  %v3419 = vunpack.c.l.b16 %v775
  %v3420 = vunpack.c.h.b16 %v775
  %v3421 = vunpack.c.l.b16 %v776
  %v3422 = vunpack.c.h.b16 %v776
  %v3423 = vunpack.c.l.b16 %v777
  %v3424 = vunpack.c.h.b16 %v777
  %v3425 = vunpack.c.l.b16 %v778
  %v3426 = vunpack.c.h.b16 %v778
  %v3427 = vunpack.c.l.b16 %v779
  %v3428 = vunpack.c.h.b16 %v779
  %v3429 = vunpack.c.l.b16 %v780
  %v3430 = vunpack.c.h.b16 %v780
  %v3431 = vunpack.c.l.b16 %v781
  %v3432 = vunpack.c.h.b16 %v781
  %v3433 = vunpack.c.l.b16 %v782
  %v3434 = vunpack.c.h.b16 %v782
  %v3435 = vunpack.c.l.b16 %v783
  %v3436 = vunpack.c.h.b16 %v783
  %v3437 = vunpack.c.l.b16 %v784
  %v3438 = vunpack.c.h.b16 %v784
  %v3439 = vunpack.c.l.b16 %v785
  %v3440 = vunpack.c.h.b16 %v785
  %v3441 = vunpack.c.l.b16 %v786
  %v3442 = vunpack.c.h.b16 %v786
  %v3443 = vunpack.c.l.b16 %v787
  %v3444 = vunpack.c.h.b16 %v787
  %v3445 = vunpack.c.l.b16 %v788
  %v3446 = vunpack.c.h.b16 %v788
  %v3447 = vunpack.c.l.b16 %v789
  %v3448 = vunpack.c.h.b16 %v789
  %v3449 = vunpack.c.l.b16 %v790
  %v3450 = vunpack.c.h.b16 %v790
  %v3451 = vunpack.c.l.b16 %v791
  %v3452 = vunpack.c.h.b16 %v791
  %v3453 = vunpack.c.l.b16 %v792
  %v3454 = vunpack.c.h.b16 %v792
  %v3455 = vunpack.c.l.b16 %v793
  %v3456 = vunpack.c.h.b16 %v793
  %v3457 = vunpack.c.l.b16 %v794
  %v3458 = vunpack.c.h.b16 %v794
  %v3459 = vpack.c.b16 %v1925, %v1923
  %v3460 = vpack.c.b16 %v1926, %v1924
  %v3461 = vpack.c.b16 %v1929, %v1927
  %v3462 = vpack.c.b16 %v1930, %v1928
  %v3463 = vpack.c.b16 %v1933, %v1931
  %v3464 = vpack.c.b16 %v1934, %v1932
  %v3465 = vpack.c.b16 %v1937, %v1935
  %v3466 = vpack.c.b16 %v1938, %v1936
  %v3467 = vpack.c.b16 %v1941, %v1939
  %v3468 = vpack.c.b16 %v1942, %v1940
  %v3469 = vpack.c.b16 %v1945, %v1943
  %v3470 = vpack.c.b16 %v1946, %v1944
  %v3471 = vpack.c.b16 %v1949, %v1947
  %v3472 = vpack.c.b16 %v1950, %v1948
  %v3473 = vpack.c.b16 %v1953, %v1951
  %v3474 = vpack.c.b16 %v1954, %v1952
  %v3475 = vpack.c.b16 %v1957, %v1955
  %v3476 = vpack.c.b16 %v1958, %v1956
  %v3477 = vpack.c.b16 %v1961, %v1959
  %v3478 = vpack.c.b16 %v1962, %v1960
  %v3479 = vpack.c.b16 %v1965, %v1963
  %v3480 = vpack.c.b16 %v1966, %v1964
  %v3481 = vpack.c.b16 %v1969, %v1967
  %v3482 = vpack.c.b16 %v1970, %v1968
  %v3483 = vpack.c.b16 %v1973, %v1971
  %v3484 = vpack.c.b16 %v1974, %v1972
  %v3485 = vpack.c.b16 %v1977, %v1975
  %v3486 = vpack.c.b16 %v1978, %v1976
  %v3487 = vpack.c.b16 %v1981, %v1979
  %v3488 = vpack.c.b16 %v1982, %v1980
  %v3489 = vpack.c.b16 %v1985, %v1983
  %v3490 = vpack.c.b16 %v1986, %v1984
  %v3491 = vpack.c.b16 %v1989, %v1987
  %v3492 = vpack.c.b16 %v1990, %v1988
  %v3493 = vpack.c.b16 %v1993, %v1991
  %v3494 = vpack.c.b16 %v1994, %v1992
  %v3495 = vpack.c.b16 %v1997, %v1995
  %v3496 = vpack.c.b16 %v1998, %v1996
  %v3497 = vpack.c.b16 %v2001, %v1999
  %v3498 = vpack.c.b16 %v2002, %v2000
  %v3499 = vpack.c.b16 %v2005, %v2003
  %v3500 = vpack.c.b16 %v2006, %v2004
  %v3501 = vpack.c.b16 %v2009, %v2007
  %v3502 = vpack.c.b16 %v2010, %v2008
  %v3503 = vpack.c.b16 %v2013, %v2011
  %v3504 = vpack.c.b16 %v2014, %v2012
  %v3505 = vpack.c.b16 %v2017, %v2015
  %v3506 = vpack.c.b16 %v2018, %v2016
  %v3507 = vpack.c.b16 %v2021, %v2019
  %v3508 = vpack.c.b16 %v2022, %v2020
  %v3509 = vpack.c.b16 %v2025, %v2023
  %v3510 = vpack.c.b16 %v2026, %v2024
  %v3511 = vpack.c.b16 %v2029, %v2027
  %v3512 = vpack.c.b16 %v2030, %v2028
  %v3513 = vpack.c.b16 %v2033, %v2031
  %v3514 = vpack.c.b16 %v2034, %v2032
  %v3515 = vpack.c.b16 %v2037, %v2035
  %v3516 = vpack.c.b16 %v2038, %v2036
  %v3517 = vpack.c.b16 %v2041, %v2039
  %v3518 = vpack.c.b16 %v2042, %v2040
  %v3519 = vpack.c.b16 %v2045, %v2043
  %v3520 = vpack.c.b16 %v2046, %v2044
  %v3521 = vpack.c.b16 %v2049, %v2047
  %v3522 = vpack.c.b16 %v2050, %v2048
  %v3523 = vpack.c.b16 %v2053, %v2051
  %v3524 = vpack.c.b16 %v2054, %v2052
  %v3525 = vpack.c.b16 %v2057, %v2055
  %v3526 = vpack.c.b16 %v2058, %v2056
  %v3527 = vpack.c.b16 %v2061, %v2059
  %v3528 = vpack.c.b16 %v2062, %v2060
  %v3529 = vpack.c.b16 %v2065, %v2063
  %v3530 = vpack.c.b16 %v2066, %v2064
  %v3531 = vpack.c.b16 %v2069, %v2067
  %v3532 = vpack.c.b16 %v2070, %v2068
  %v3533 = vpack.c.b16 %v2073, %v2071
  %v3534 = vpack.c.b16 %v2074, %v2072
  %v3535 = vpack.c.b16 %v2077, %v2075
  %v3536 = vpack.c.b16 %v2078, %v2076
  %v3537 = vpack.c.b16 %v2081, %v2079
  %v3538 = vpack.c.b16 %v2082, %v2080
  %v3539 = vpack.c.b16 %v2085, %v2083
  %v3540 = vpack.c.b16 %v2086, %v2084
  %v3541 = vpack.c.b16 %v2089, %v2087
  %v3542 = vpack.c.b16 %v2090, %v2088
  %v3543 = vpack.c.b16 %v2093, %v2091
  %v3544 = vpack.c.b16 %v2094, %v2092
  %v3545 = vpack.c.b16 %v2097, %v2095
  %v3546 = vpack.c.b16 %v2098, %v2096
  %v3547 = vpack.c.b16 %v2101, %v2099
  %v3548 = vpack.c.b16 %v2102, %v2100
  %v3549 = vpack.c.b16 %v2105, %v2103
  %v3550 = vpack.c.b16 %v2106, %v2104
  %v3551 = vpack.c.b16 %v2109, %v2107
  %v3552 = vpack.c.b16 %v2110, %v2108
  %v3553 = vpack.c.b16 %v2113, %v2111
  %v3554 = vpack.c.b16 %v2114, %v2112
  %v3555 = vpack.c.b16 %v2117, %v2115
  %v3556 = vpack.c.b16 %v2118, %v2116
  %v3557 = vpack.c.b16 %v2121, %v2119
  %v3558 = vpack.c.b16 %v2122, %v2120
  %v3559 = vpack.c.b16 %v2125, %v2123
  %v3560 = vpack.c.b16 %v2126, %v2124
  %v3561 = vpack.c.b16 %v2129, %v2127
  %v3562 = vpack.c.b16 %v2130, %v2128
  %v3563 = vpack.c.b16 %v2133, %v2131
  %v3564 = vpack.c.b16 %v2134, %v2132
  %v3565 = vpack.c.b16 %v2137, %v2135
  %v3566 = vpack.c.b16 %v2138, %v2136
  %v3567 = vpack.c.b16 %v2141, %v2139
  %v3568 = vpack.c.b16 %v2142, %v2140
  %v3569 = vpack.c.b16 %v2145, %v2143
  %v3570 = vpack.c.b16 %v2146, %v2144
  %v3571 = vpack.c.b16 %v2149, %v2147
  %v3572 = vpack.c.b16 %v2150, %v2148
  %v3573 = vpack.c.b16 %v2153, %v2151
  %v3574 = vpack.c.b16 %v2154, %v2152
  %v3575 = vpack.c.b16 %v2157, %v2155
  %v3576 = vpack.c.b16 %v2158, %v2156
  %v3577 = vpack.c.b16 %v2161, %v2159
  %v3578 = vpack.c.b16 %v2162, %v2160
  %v3579 = vpack.c.b16 %v2165, %v2163
  %v3580 = vpack.c.b16 %v2166, %v2164
  %v3581 = vpack.c.b16 %v2169, %v2167
  %v3582 = vpack.c.b16 %v2170, %v2168
  %v3583 = vpack.c.b16 %v2173, %v2171
  %v3584 = vpack.c.b16 %v2174, %v2172
  %v3585 = vpack.c.b16 %v2177, %v2175
  %v3586 = vpack.c.b16 %v2178, %v2176
  %v3587 = vpack.c.b16 %v2181, %v2179
  %v3588 = vpack.c.b16 %v2182, %v2180
  %v3589 = vpack.c.b16 %v2185, %v2183
  %v3590 = vpack.c.b16 %v2186, %v2184
  %v3591 = vpack.c.b16 %v2189, %v2187
  %v3592 = vpack.c.b16 %v2190, %v2188
  %v3593 = vpack.c.b16 %v2193, %v2191
  %v3594 = vpack.c.b16 %v2194, %v2192
  %v3595 = vpack.c.b16 %v2197, %v2195
  %v3596 = vpack.c.b16 %v2198, %v2196
  %v3597 = vpack.c.b16 %v2201, %v2199
  %v3598 = vpack.c.b16 %v2202, %v2200
  %v3599 = vpack.c.b16 %v2205, %v2203
  %v3600 = vpack.c.b16 %v2206, %v2204
  %v3601 = vpack.c.b16 %v2209, %v2207
  %v3602 = vpack.c.b16 %v2210, %v2208
  %v3603 = vpack.c.b16 %v2213, %v2211
  %v3604 = vpack.c.b16 %v2214, %v2212
  %v3605 = vpack.c.b16 %v2217, %v2215
  %v3606 = vpack.c.b16 %v2218, %v2216
  %v3607 = vpack.c.b16 %v2221, %v2219
  %v3608 = vpack.c.b16 %v2222, %v2220
  %v3609 = vpack.c.b16 %v2225, %v2223
  %v3610 = vpack.c.b16 %v2226, %v2224
  %v3611 = vpack.c.b16 %v2229, %v2227
  %v3612 = vpack.c.b16 %v2230, %v2228
  %v3613 = vpack.c.b16 %v2233, %v2231
  %v3614 = vpack.c.b16 %v2234, %v2232
  %v3615 = vpack.c.b16 %v2237, %v2235
  %v3616 = vpack.c.b16 %v2238, %v2236
  %v3617 = vpack.c.b16 %v2241, %v2239
  %v3618 = vpack.c.b16 %v2242, %v2240
  %v3619 = vpack.c.b16 %v2245, %v2243
  %v3620 = vpack.c.b16 %v2246, %v2244
  %v3621 = vpack.c.b16 %v2249, %v2247
  %v3622 = vpack.c.b16 %v2250, %v2248
  %v3623 = vpack.c.b16 %v2253, %v2251
  %v3624 = vpack.c.b16 %v2254, %v2252
  %v3625 = vpack.c.b16 %v2257, %v2255
  %v3626 = vpack.c.b16 %v2258, %v2256
  %v3627 = vpack.c.b16 %v2261, %v2259
  %v3628 = vpack.c.b16 %v2262, %v2260
  %v3629 = vpack.c.b16 %v2265, %v2263
  %v3630 = vpack.c.b16 %v2266, %v2264
  %v3631 = vpack.c.b16 %v2269, %v2267
  %v3632 = vpack.c.b16 %v2270, %v2268
  %v3633 = vpack.c.b16 %v2273, %v2271
  %v3634 = vpack.c.b16 %v2274, %v2272
  %v3635 = vpack.c.b16 %v2277, %v2275
  %v3636 = vpack.c.b16 %v2278, %v2276
  %v3637 = vpack.c.b16 %v2281, %v2279
  %v3638 = vpack.c.b16 %v2282, %v2280
  %v3639 = vpack.c.b16 %v2285, %v2283
  %v3640 = vpack.c.b16 %v2286, %v2284
  %v3641 = vpack.c.b16 %v2289, %v2287
  %v3642 = vpack.c.b16 %v2290, %v2288
  %v3643 = vpack.c.b16 %v2293, %v2291
  %v3644 = vpack.c.b16 %v2294, %v2292
  %v3645 = vpack.c.b16 %v2297, %v2295
  %v3646 = vpack.c.b16 %v2298, %v2296
  %v3647 = vpack.c.b16 %v2301, %v2299
  %v3648 = vpack.c.b16 %v2302, %v2300
  %v3649 = vpack.c.b16 %v2305, %v2303
  %v3650 = vpack.c.b16 %v2306, %v2304
  %v3651 = vpack.c.b16 %v2309, %v2307
  %v3652 = vpack.c.b16 %v2310, %v2308
  %v3653 = vpack.c.b16 %v2313, %v2311
  %v3654 = vpack.c.b16 %v2314, %v2312
  %v3655 = vpack.c.b16 %v2317, %v2315
  %v3656 = vpack.c.b16 %v2318, %v2316
  %v3657 = vpack.c.b16 %v2321, %v2319
  %v3658 = vpack.c.b16 %v2322, %v2320
  %v3659 = vpack.c.b16 %v2325, %v2323
  %v3660 = vpack.c.b16 %v2326, %v2324
  %v3661 = vpack.c.b16 %v2329, %v2327
  %v3662 = vpack.c.b16 %v2330, %v2328
  %v3663 = vpack.c.b16 %v2333, %v2331
  %v3664 = vpack.c.b16 %v2334, %v2332
  %v3665 = vpack.c.b16 %v2337, %v2335
  %v3666 = vpack.c.b16 %v2338, %v2336
  %v3667 = vpack.c.b16 %v2341, %v2339
  %v3668 = vpack.c.b16 %v2342, %v2340
  %v3669 = vpack.c.b16 %v2345, %v2343
  %v3670 = vpack.c.b16 %v2346, %v2344
  %v3671 = vpack.c.b16 %v2349, %v2347
  %v3672 = vpack.c.b16 %v2350, %v2348
  %v3673 = vpack.c.b16 %v2353, %v2351
  %v3674 = vpack.c.b16 %v2354, %v2352
  %v3675 = vpack.c.b16 %v2357, %v2355
  %v3676 = vpack.c.b16 %v2358, %v2356
  %v3677 = vpack.c.b16 %v2361, %v2359
  %v3678 = vpack.c.b16 %v2362, %v2360
  %v3679 = vpack.c.b16 %v2365, %v2363
  %v3680 = vpack.c.b16 %v2366, %v2364
  %v3681 = vpack.c.b16 %v2369, %v2367
  %v3682 = vpack.c.b16 %v2370, %v2368
  %v3683 = vpack.c.b16 %v2373, %v2371
  %v3684 = vpack.c.b16 %v2374, %v2372
  %v3685 = vpack.c.b16 %v2377, %v2375
  %v3686 = vpack.c.b16 %v2378, %v2376
  %v3687 = vpack.c.b16 %v2381, %v2379
  %v3688 = vpack.c.b16 %v2382, %v2380
  %v3689 = vpack.c.b16 %v2385, %v2383
  %v3690 = vpack.c.b16 %v2386, %v2384
  %v3691 = vpack.c.b16 %v2389, %v2387
  %v3692 = vpack.c.b16 %v2390, %v2388
  %v3693 = vpack.c.b16 %v2393, %v2391
  %v3694 = vpack.c.b16 %v2394, %v2392
  %v3695 = vpack.c.b16 %v2397, %v2395
  %v3696 = vpack.c.b16 %v2398, %v2396
  %v3697 = vpack.c.b16 %v2401, %v2399
  %v3698 = vpack.c.b16 %v2402, %v2400
  %v3699 = vpack.c.b16 %v2405, %v2403
  %v3700 = vpack.c.b16 %v2406, %v2404
  %v3701 = vpack.c.b16 %v2409, %v2407
  %v3702 = vpack.c.b16 %v2410, %v2408
  %v3703 = vpack.c.b16 %v2413, %v2411
  %v3704 = vpack.c.b16 %v2414, %v2412
  %v3705 = vpack.c.b16 %v2417, %v2415
  %v3706 = vpack.c.b16 %v2418, %v2416
  %v3707 = vpack.c.b16 %v2421, %v2419
  %v3708 = vpack.c.b16 %v2422, %v2420
  %v3709 = vpack.c.b16 %v2425, %v2423
  %v3710 = vpack.c.b16 %v2426, %v2424
  %v3711 = vpack.c.b16 %v2429, %v2427
  %v3712 = vpack.c.b16 %v2430, %v2428
  %v3713 = vpack.c.b16 %v2433, %v2431
  %v3714 = vpack.c.b16 %v2434, %v2432
  %v3715 = vpack.c.b16 %v2437, %v2435
  %v3716 = vpack.c.b16 %v2438, %v2436
  %v3717 = vpack.c.b16 %v2441, %v2439
  %v3718 = vpack.c.b16 %v2442, %v2440
  %v3719 = vpack.c.b16 %v2445, %v2443
  %v3720 = vpack.c.b16 %v2446, %v2444
  %v3721 = vpack.c.b16 %v2449, %v2447
  %v3722 = vpack.c.b16 %v2450, %v2448
  %v3723 = vpack.c.b16 %v2453, %v2451
  %v3724 = vpack.c.b16 %v2454, %v2452
  %v3725 = vpack.c.b16 %v2457, %v2455
  %v3726 = vpack.c.b16 %v2458, %v2456
  %v3727 = vpack.c.b16 %v2461, %v2459
  %v3728 = vpack.c.b16 %v2462, %v2460
  %v3729 = vpack.c.b16 %v2465, %v2463
  %v3730 = vpack.c.b16 %v2466, %v2464
  %v3731 = vpack.c.b16 %v2469, %v2467
  %v3732 = vpack.c.b16 %v2470, %v2468
  %v3733 = vpack.c.b16 %v2473, %v2471
  %v3734 = vpack.c.b16 %v2474, %v2472
  %v3735 = vpack.c.b16 %v2477, %v2475
  %v3736 = vpack.c.b16 %v2478, %v2476
  %v3737 = vpack.c.b16 %v2481, %v2479
  %v3738 = vpack.c.b16 %v2482, %v2480
  %v3739 = vpack.c.b16 %v2485, %v2483
  %v3740 = vpack.c.b16 %v2486, %v2484
  %v3741 = vpack.c.b16 %v2489, %v2487
  %v3742 = vpack.c.b16 %v2490, %v2488
  %v3743 = vpack.c.b16 %v2493, %v2491
  %v3744 = vpack.c.b16 %v2494, %v2492
  %v3745 = vpack.c.b16 %v2497, %v2495
  %v3746 = vpack.c.b16 %v2498, %v2496
  %v3747 = vpack.c.b16 %v2501, %v2499
  %v3748 = vpack.c.b16 %v2502, %v2500
  %v3749 = vpack.c.b16 %v2505, %v2503
  %v3750 = vpack.c.b16 %v2506, %v2504
  %v3751 = vpack.c.b16 %v2509, %v2507
  %v3752 = vpack.c.b16 %v2510, %v2508
  %v3753 = vpack.c.b16 %v2513, %v2511
  %v3754 = vpack.c.b16 %v2514, %v2512
  %v3755 = vpack.c.b16 %v2517, %v2515
  %v3756 = vpack.c.b16 %v2518, %v2516
  %v3757 = vpack.c.b16 %v2521, %v2519
  %v3758 = vpack.c.b16 %v2522, %v2520
  %v3759 = vpack.c.b16 %v2525, %v2523
  %v3760 = vpack.c.b16 %v2526, %v2524
  %v3761 = vpack.c.b16 %v2529, %v2527
  %v3762 = vpack.c.b16 %v2530, %v2528
  %v3763 = vpack.c.b16 %v2533, %v2531
  %v3764 = vpack.c.b16 %v2534, %v2532
  %v3765 = vpack.c.b16 %v2537, %v2535
  %v3766 = vpack.c.b16 %v2538, %v2536
  %v3767 = vpack.c.b16 %v2541, %v2539
  %v3768 = vpack.c.b16 %v2542, %v2540
  %v3769 = vpack.c.b16 %v2545, %v2543
  %v3770 = vpack.c.b16 %v2546, %v2544
  %v3771 = vpack.c.b16 %v2549, %v2547
  %v3772 = vpack.c.b16 %v2550, %v2548
  %v3773 = vpack.c.b16 %v2553, %v2551
  %v3774 = vpack.c.b16 %v2554, %v2552
  %v3775 = vpack.c.b16 %v2557, %v2555
  %v3776 = vpack.c.b16 %v2558, %v2556
  %v3777 = vpack.c.b16 %v2561, %v2559
  %v3778 = vpack.c.b16 %v2562, %v2560
  %v3779 = vpack.c.b16 %v2565, %v2563
  %v3780 = vpack.c.b16 %v2566, %v2564
  %v3781 = vpack.c.b16 %v2569, %v2567
  %v3782 = vpack.c.b16 %v2570, %v2568
  %v3783 = vpack.c.b16 %v2573, %v2571
  %v3784 = vpack.c.b16 %v2574, %v2572
  %v3785 = vpack.c.b16 %v2577, %v2575
  %v3786 = vpack.c.b16 %v2578, %v2576
  %v3787 = vpack.c.b16 %v2581, %v2579
  %v3788 = vpack.c.b16 %v2582, %v2580
  %v3789 = vpack.c.b16 %v2585, %v2583
  %v3790 = vpack.c.b16 %v2586, %v2584
  %v3791 = vpack.c.b16 %v2589, %v2587
  %v3792 = vpack.c.b16 %v2590, %v2588
  %v3793 = vpack.c.b16 %v2593, %v2591
  %v3794 = vpack.c.b16 %v2594, %v2592
  %v3795 = vpack.c.b16 %v2597, %v2595
  %v3796 = vpack.c.b16 %v2598, %v2596
  %v3797 = vpack.c.b16 %v2601, %v2599
  %v3798 = vpack.c.b16 %v2602, %v2600
  %v3799 = vpack.c.b16 %v2605, %v2603
  %v3800 = vpack.c.b16 %v2606, %v2604
  %v3801 = vpack.c.b16 %v2609, %v2607
  %v3802 = vpack.c.b16 %v2610, %v2608
  %v3803 = vpack.c.b16 %v2613, %v2611
  %v3804 = vpack.c.b16 %v2614, %v2612
  %v3805 = vpack.c.b16 %v2617, %v2615
  %v3806 = vpack.c.b16 %v2618, %v2616
  %v3807 = vpack.c.b16 %v2621, %v2619
  %v3808 = vpack.c.b16 %v2622, %v2620
  %v3809 = vpack.c.b16 %v2625, %v2623
  %v3810 = vpack.c.b16 %v2626, %v2624
  %v3811 = vpack.c.b16 %v2629, %v2627
  %v3812 = vpack.c.b16 %v2630, %v2628
  %v3813 = vpack.c.b16 %v2633, %v2631
  %v3814 = vpack.c.b16 %v2634, %v2632
  %v3815 = vpack.c.b16 %v2637, %v2635
  %v3816 = vpack.c.b16 %v2638, %v2636
  %v3817 = vpack.c.b16 %v2641, %v2639
  %v3818 = vpack.c.b16 %v2642, %v2640
  %v3819 = vpack.c.b16 %v2645, %v2643
  %v3820 = vpack.c.b16 %v2646, %v2644
  %v3821 = vpack.c.b16 %v2649, %v2647
  %v3822 = vpack.c.b16 %v2650, %v2648
  %v3823 = vpack.c.b16 %v2653, %v2651
  %v3824 = vpack.c.b16 %v2654, %v2652
  %v3825 = vpack.c.b16 %v2657, %v2655
  %v3826 = vpack.c.b16 %v2658, %v2656
  %v3827 = vpack.c.b16 %v2661, %v2659
  %v3828 = vpack.c.b16 %v2662, %v2660
  %v3829 = vpack.c.b16 %v2665, %v2663
  %v3830 = vpack.c.b16 %v2666, %v2664
  %v3831 = vpack.c.b16 %v2669, %v2667
  %v3832 = vpack.c.b16 %v2670, %v2668
  %v3833 = vpack.c.b16 %v2673, %v2671
  %v3834 = vpack.c.b16 %v2674, %v2672
  %v3835 = vpack.c.b16 %v2677, %v2675
  %v3836 = vpack.c.b16 %v2678, %v2676
  %v3837 = vpack.c.b16 %v2681, %v2679
  %v3838 = vpack.c.b16 %v2682, %v2680
  %v3839 = vpack.c.b16 %v2685, %v2683
  %v3840 = vpack.c.b16 %v2686, %v2684
  %v3841 = vpack.c.b16 %v2689, %v2687
  %v3842 = vpack.c.b16 %v2690, %v2688
  %v3843 = vpack.c.b16 %v2693, %v2691
  %v3844 = vpack.c.b16 %v2694, %v2692
  %v3845 = vpack.c.b16 %v2697, %v2695
  %v3846 = vpack.c.b16 %v2698, %v2696
  %v3847 = vpack.c.b16 %v2701, %v2699
  %v3848 = vpack.c.b16 %v2702, %v2700
  %v3849 = vpack.c.b16 %v2705, %v2703
  %v3850 = vpack.c.b16 %v2706, %v2704
  %v3851 = vpack.c.b16 %v2709, %v2707
  %v3852 = vpack.c.b16 %v2710, %v2708
  %v3853 = vpack.c.b16 %v2713, %v2711
  %v3854 = vpack.c.b16 %v2714, %v2712
  %v3855 = vpack.c.b16 %v2717, %v2715
  %v3856 = vpack.c.b16 %v2718, %v2716
  %v3857 = vpack.c.b16 %v2721, %v2719
  %v3858 = vpack.c.b16 %v2722, %v2720
  %v3859 = vpack.c.b16 %v2725, %v2723
  %v3860 = vpack.c.b16 %v2726, %v2724
  %v3861 = vpack.c.b16 %v2729, %v2727
  %v3862 = vpack.c.b16 %v2730, %v2728
  %v3863 = vpack.c.b16 %v2733, %v2731
  %v3864 = vpack.c.b16 %v2734, %v2732
  %v3865 = vpack.c.b16 %v2737, %v2735
  %v3866 = vpack.c.b16 %v2738, %v2736
  %v3867 = vpack.c.b16 %v2741, %v2739
  %v3868 = vpack.c.b16 %v2742, %v2740
  %v3869 = vpack.c.b16 %v2745, %v2743
  %v3870 = vpack.c.b16 %v2746, %v2744
  %v3871 = vpack.c.b16 %v2749, %v2747
  %v3872 = vpack.c.b16 %v2750, %v2748
  %v3873 = vpack.c.b16 %v2753, %v2751
  %v3874 = vpack.c.b16 %v2754, %v2752
  %v3875 = vpack.c.b16 %v2757, %v2755
  %v3876 = vpack.c.b16 %v2758, %v2756
  %v3877 = vpack.c.b16 %v2761, %v2759
  %v3878 = vpack.c.b16 %v2762, %v2760
  %v3879 = vpack.c.b16 %v2765, %v2763
  %v3880 = vpack.c.b16 %v2766, %v2764
  %v3881 = vpack.c.b16 %v2769, %v2767
  %v3882 = vpack.c.b16 %v2770, %v2768
  %v3883 = vpack.c.b16 %v2773, %v2771
  %v3884 = vpack.c.b16 %v2774, %v2772
  %v3885 = vpack.c.b16 %v2777, %v2775
  %v3886 = vpack.c.b16 %v2778, %v2776
  %v3887 = vpack.c.b16 %v2781, %v2779
  %v3888 = vpack.c.b16 %v2782, %v2780
  %v3889 = vpack.c.b16 %v2785, %v2783
  %v3890 = vpack.c.b16 %v2786, %v2784
  %v3891 = vpack.c.b16 %v2789, %v2787
  %v3892 = vpack.c.b16 %v2790, %v2788
  %v3893 = vpack.c.b16 %v2793, %v2791
  %v3894 = vpack.c.b16 %v2794, %v2792
  %v3895 = vpack.c.b16 %v2797, %v2795
  %v3896 = vpack.c.b16 %v2798, %v2796
  %v3897 = vpack.c.b16 %v2801, %v2799
  %v3898 = vpack.c.b16 %v2802, %v2800
  %v3899 = vpack.c.b16 %v2805, %v2803
  %v3900 = vpack.c.b16 %v2806, %v2804
  %v3901 = vpack.c.b16 %v2809, %v2807
  %v3902 = vpack.c.b16 %v2810, %v2808
  %v3903 = vpack.c.b16 %v2813, %v2811
  %v3904 = vpack.c.b16 %v2814, %v2812
  %v3905 = vpack.c.b16 %v2817, %v2815
  %v3906 = vpack.c.b16 %v2818, %v2816
  %v3907 = vpack.c.b16 %v2821, %v2819
  %v3908 = vpack.c.b16 %v2822, %v2820
  %v3909 = vpack.c.b16 %v2825, %v2823
  %v3910 = vpack.c.b16 %v2826, %v2824
  %v3911 = vpack.c.b16 %v2829, %v2827
  %v3912 = vpack.c.b16 %v2830, %v2828
  %v3913 = vpack.c.b16 %v2833, %v2831
  %v3914 = vpack.c.b16 %v2834, %v2832
  %v3915 = vpack.c.b16 %v2837, %v2835
  %v3916 = vpack.c.b16 %v2838, %v2836
  %v3917 = vpack.c.b16 %v2841, %v2839
  %v3918 = vpack.c.b16 %v2842, %v2840
  %v3919 = vpack.c.b16 %v2845, %v2843
  %v3920 = vpack.c.b16 %v2846, %v2844
  %v3921 = vpack.c.b16 %v2849, %v2847
  %v3922 = vpack.c.b16 %v2850, %v2848
  %v3923 = vpack.c.b16 %v2853, %v2851
  %v3924 = vpack.c.b16 %v2854, %v2852
  %v3925 = vpack.c.b16 %v2857, %v2855
  %v3926 = vpack.c.b16 %v2858, %v2856
  %v3927 = vpack.c.b16 %v2861, %v2859
  %v3928 = vpack.c.b16 %v2862, %v2860
  %v3929 = vpack.c.b16 %v2865, %v2863
  %v3930 = vpack.c.b16 %v2866, %v2864
  %v3931 = vpack.c.b16 %v2869, %v2867
  %v3932 = vpack.c.b16 %v2870, %v2868
  %v3933 = vpack.c.b16 %v2873, %v2871
  %v3934 = vpack.c.b16 %v2874, %v2872
  %v3935 = vpack.c.b16 %v2877, %v2875
  %v3936 = vpack.c.b16 %v2878, %v2876
  %v3937 = vpack.c.b16 %v2881, %v2879
  %v3938 = vpack.c.b16 %v2882, %v2880
  %v3939 = vpack.c.b16 %v2885, %v2883
  %v3940 = vpack.c.b16 %v2886, %v2884
  %v3941 = vpack.c.b16 %v2889, %v2887
  %v3942 = vpack.c.b16 %v2890, %v2888
  %v3943 = vpack.c.b16 %v2893, %v2891
  %v3944 = vpack.c.b16 %v2894, %v2892
  %v3945 = vpack.c.b16 %v2897, %v2895
  %v3946 = vpack.c.b16 %v2898, %v2896
  %v3947 = vpack.c.b16 %v2901, %v2899
  %v3948 = vpack.c.b16 %v2902, %v2900
  %v3949 = vpack.c.b16 %v2905, %v2903
  %v3950 = vpack.c.b16 %v2906, %v2904
  %v3951 = vpack.c.b16 %v2909, %v2907
  %v3952 = vpack.c.b16 %v2910, %v2908
  %v3953 = vpack.c.b16 %v2913, %v2911
  %v3954 = vpack.c.b16 %v2914, %v2912
  %v3955 = vpack.c.b16 %v2917, %v2915
  %v3956 = vpack.c.b16 %v2918, %v2916
  %v3957 = vpack.c.b16 %v2921, %v2919
  %v3958 = vpack.c.b16 %v2922, %v2920
  %v3959 = vpack.c.b16 %v2925, %v2923
  %v3960 = vpack.c.b16 %v2926, %v2924
  %v3961 = vpack.c.b16 %v2929, %v2927
  %v3962 = vpack.c.b16 %v2930, %v2928
  %v3963 = vpack.c.b16 %v2933, %v2931
  %v3964 = vpack.c.b16 %v2934, %v2932
  %v3965 = vpack.c.b16 %v2937, %v2935
  %v3966 = vpack.c.b16 %v2938, %v2936
  %v3967 = vpack.c.b16 %v2941, %v2939
  %v3968 = vpack.c.b16 %v2942, %v2940
  %v3969 = vpack.c.b16 %v2945, %v2943
  %v3970 = vpack.c.b16 %v2946, %v2944
  %v3971 = vpack.c.b16 %v2949, %v2947
  %v3972 = vpack.c.b16 %v2950, %v2948
  %v3973 = vpack.c.b16 %v2953, %v2951
  %v3974 = vpack.c.b16 %v2954, %v2952
  %v3975 = vpack.c.b16 %v2957, %v2955
  %v3976 = vpack.c.b16 %v2958, %v2956
  %v3977 = vpack.c.b16 %v2961, %v2959
  %v3978 = vpack.c.b16 %v2962, %v2960
  %v3979 = vpack.c.b16 %v2965, %v2963
  %v3980 = vpack.c.b16 %v2966, %v2964
  %v3981 = vpack.c.b16 %v2969, %v2967
  %v3982 = vpack.c.b16 %v2970, %v2968
  %v3983 = vpack.c.b16 %v2973, %v2971
  %v3984 = vpack.c.b16 %v2974, %v2972
  %v3985 = vpack.c.b16 %v2977, %v2975
  %v3986 = vpack.c.b16 %v2978, %v2976
  %v3987 = vpack.c.b16 %v2981, %v2979
  %v3988 = vpack.c.b16 %v2982, %v2980
  %v3989 = vpack.c.b16 %v2985, %v2983
  %v3990 = vpack.c.b16 %v2986, %v2984
  %v3991 = vpack.c.b16 %v2989, %v2987
  %v3992 = vpack.c.b16 %v2990, %v2988
  %v3993 = vpack.c.b16 %v2993, %v2991
  %v3994 = vpack.c.b16 %v2994, %v2992
  %v3995 = vpack.c.b16 %v2997, %v2995
  %v3996 = vpack.c.b16 %v2998, %v2996
  %v3997 = vpack.c.b16 %v3001, %v2999
  %v3998 = vpack.c.b16 %v3002, %v3000
  %v3999 = vpack.c.b16 %v3005, %v3003
  %v4000 = vpack.c.b16 %v3006, %v3004
  %v4001 = vpack.c.b16 %v3009, %v3007
  %v4002 = vpack.c.b16 %v3010, %v3008
  %v4003 = vpack.c.b16 %v3013, %v3011
  %v4004 = vpack.c.b16 %v3014, %v3012
  %v4005 = vpack.c.b16 %v3017, %v3015
  %v4006 = vpack.c.b16 %v3018, %v3016
  %v4007 = vpack.c.b16 %v3021, %v3019
  %v4008 = vpack.c.b16 %v3022, %v3020
  %v4009 = vpack.c.b16 %v3025, %v3023
  %v4010 = vpack.c.b16 %v3026, %v3024
  %v4011 = vpack.c.b16 %v3029, %v3027
  %v4012 = vpack.c.b16 %v3030, %v3028
  %v4013 = vpack.c.b16 %v3033, %v3031
  %v4014 = vpack.c.b16 %v3034, %v3032
  %v4015 = vpack.c.b16 %v3037, %v3035
  %v4016 = vpack.c.b16 %v3038, %v3036
  %v4017 = vpack.c.b16 %v3041, %v3039
  %v4018 = vpack.c.b16 %v3042, %v3040
  %v4019 = vpack.c.b16 %v3045, %v3043
  %v4020 = vpack.c.b16 %v3046, %v3044
  %v4021 = vpack.c.b16 %v3049, %v3047
  %v4022 = vpack.c.b16 %v3050, %v3048
  %v4023 = vpack.c.b16 %v3053, %v3051
  %v4024 = vpack.c.b16 %v3054, %v3052
  %v4025 = vpack.c.b16 %v3057, %v3055
  %v4026 = vpack.c.b16 %v3058, %v3056
  %v4027 = vpack.c.b16 %v3061, %v3059
  %v4028 = vpack.c.b16 %v3062, %v3060
  %v4029 = vpack.c.b16 %v3065, %v3063
  %v4030 = vpack.c.b16 %v3066, %v3064
  %v4031 = vpack.c.b16 %v3069, %v3067
  %v4032 = vpack.c.b16 %v3070, %v3068
  %v4033 = vpack.c.b16 %v3073, %v3071
  %v4034 = vpack.c.b16 %v3074, %v3072
  %v4035 = vpack.c.b16 %v3077, %v3075
  %v4036 = vpack.c.b16 %v3078, %v3076
  %v4037 = vpack.c.b16 %v3081, %v3079
  %v4038 = vpack.c.b16 %v3082, %v3080
  %v4039 = vpack.c.b16 %v3085, %v3083
  %v4040 = vpack.c.b16 %v3086, %v3084
  %v4041 = vpack.c.b16 %v3089, %v3087
  %v4042 = vpack.c.b16 %v3090, %v3088
  %v4043 = vpack.c.b16 %v3093, %v3091
  %v4044 = vpack.c.b16 %v3094, %v3092
  %v4045 = vpack.c.b16 %v3097, %v3095
  %v4046 = vpack.c.b16 %v3098, %v3096
  %v4047 = vpack.c.b16 %v3101, %v3099
  %v4048 = vpack.c.b16 %v3102, %v3100
  %v4049 = vpack.c.b16 %v3105, %v3103
  %v4050 = vpack.c.b16 %v3106, %v3104
  %v4051 = vpack.c.b16 %v3109, %v3107
  %v4052 = vpack.c.b16 %v3110, %v3108
  %v4053 = vpack.c.b16 %v3113, %v3111
  %v4054 = vpack.c.b16 %v3114, %v3112
  %v4055 = vpack.c.b16 %v3117, %v3115
  %v4056 = vpack.c.b16 %v3118, %v3116
  %v4057 = vpack.c.b16 %v3121, %v3119
  %v4058 = vpack.c.b16 %v3122, %v3120
  %v4059 = vpack.c.b16 %v3125, %v3123
  %v4060 = vpack.c.b16 %v3126, %v3124
  %v4061 = vpack.c.b16 %v3129, %v3127
  %v4062 = vpack.c.b16 %v3130, %v3128
  %v4063 = vpack.c.b16 %v3133, %v3131
  %v4064 = vpack.c.b16 %v3134, %v3132
  %v4065 = vpack.c.b16 %v3137, %v3135
  %v4066 = vpack.c.b16 %v3138, %v3136
  %v4067 = vpack.c.b16 %v3141, %v3139
  %v4068 = vpack.c.b16 %v3142, %v3140
  %v4069 = vpack.c.b16 %v3145, %v3143
  %v4070 = vpack.c.b16 %v3146, %v3144
  %v4071 = vpack.c.b16 %v3149, %v3147
  %v4072 = vpack.c.b16 %v3150, %v3148
  %v4073 = vpack.c.b16 %v3153, %v3151
  %v4074 = vpack.c.b16 %v3154, %v3152
  %v4075 = vpack.c.b16 %v3157, %v3155
  %v4076 = vpack.c.b16 %v3158, %v3156
  %v4077 = vpack.c.b16 %v3161, %v3159
  %v4078 = vpack.c.b16 %v3162, %v3160
  %v4079 = vpack.c.b16 %v3165, %v3163
  %v4080 = vpack.c.b16 %v3166, %v3164
  %v4081 = vpack.c.b16 %v3169, %v3167
  %v4082 = vpack.c.b16 %v3170, %v3168
  %v4083 = vpack.c.b16 %v3173, %v3171
  %v4084 = vpack.c.b16 %v3174, %v3172
  %v4085 = vpack.c.b16 %v3177, %v3175
  %v4086 = vpack.c.b16 %v3178, %v3176
  %v4087 = vpack.c.b16 %v3181, %v3179
  %v4088 = vpack.c.b16 %v3182, %v3180
  %v4089 = vpack.c.b16 %v3185, %v3183
  %v4090 = vpack.c.b16 %v3186, %v3184
  %v4091 = vpack.c.b16 %v3189, %v3187
  %v4092 = vpack.c.b16 %v3190, %v3188
  %v4093 = vpack.c.b16 %v3193, %v3191
  %v4094 = vpack.c.b16 %v3194, %v3192
  %v4095 = vpack.c.b16 %v3197, %v3195
  %v4096 = vpack.c.b16 %v3198, %v3196
  %v4097 = vpack.c.b16 %v3201, %v3199
  %v4098 = vpack.c.b16 %v3202, %v3200
  %v4099 = vpack.c.b16 %v3205, %v3203
  %v4100 = vpack.c.b16 %v3206, %v3204
  %v4101 = vpack.c.b16 %v3209, %v3207
  %v4102 = vpack.c.b16 %v3210, %v3208
  %v4103 = vpack.c.b16 %v3213, %v3211
  %v4104 = vpack.c.b16 %v3214, %v3212
  %v4105 = vpack.c.b16 %v3217, %v3215
  %v4106 = vpack.c.b16 %v3218, %v3216
  %v4107 = vpack.c.b16 %v3221, %v3219
  %v4108 = vpack.c.b16 %v3222, %v3220
  %v4109 = vpack.c.b16 %v3225, %v3223
  %v4110 = vpack.c.b16 %v3226, %v3224
  %v4111 = vpack.c.b16 %v3229, %v3227
  %v4112 = vpack.c.b16 %v3230, %v3228
  %v4113 = vpack.c.b16 %v3233, %v3231
  %v4114 = vpack.c.b16 %v3234, %v3232
  %v4115 = vpack.c.b16 %v3237, %v3235
  %v4116 = vpack.c.b16 %v3238, %v3236
  %v4117 = vpack.c.b16 %v3241, %v3239
  %v4118 = vpack.c.b16 %v3242, %v3240
  %v4119 = vpack.c.b16 %v3245, %v3243
  %v4120 = vpack.c.b16 %v3246, %v3244
  %v4121 = vpack.c.b16 %v3249, %v3247
  %v4122 = vpack.c.b16 %v3250, %v3248
  %v4123 = vpack.c.b16 %v3253, %v3251
  %v4124 = vpack.c.b16 %v3254, %v3252
  %v4125 = vpack.c.b16 %v3257, %v3255
  %v4126 = vpack.c.b16 %v3258, %v3256
  %v4127 = vpack.c.b16 %v3261, %v3259
  %v4128 = vpack.c.b16 %v3262, %v3260
  %v4129 = vpack.c.b16 %v3265, %v3263
  %v4130 = vpack.c.b16 %v3266, %v3264
  %v4131 = vpack.c.b16 %v3269, %v3267
  %v4132 = vpack.c.b16 %v3270, %v3268
  %v4133 = vpack.c.b16 %v3273, %v3271
  %v4134 = vpack.c.b16 %v3274, %v3272
  %v4135 = vpack.c.b16 %v3277, %v3275
  %v4136 = vpack.c.b16 %v3278, %v3276
  %v4137 = vpack.c.b16 %v3281, %v3279
  %v4138 = vpack.c.b16 %v3282, %v3280
  %v4139 = vpack.c.b16 %v3285, %v3283
  %v4140 = vpack.c.b16 %v3286, %v3284
  %v4141 = vpack.c.b16 %v3289, %v3287
  %v4142 = vpack.c.b16 %v3290, %v3288
  %v4143 = vpack.c.b16 %v3293, %v3291
  %v4144 = vpack.c.b16 %v3294, %v3292
  %v4145 = vpack.c.b16 %v3297, %v3295
  %v4146 = vpack.c.b16 %v3298, %v3296
  %v4147 = vpack.c.b16 %v3301, %v3299
  %v4148 = vpack.c.b16 %v3302, %v3300
  %v4149 = vpack.c.b16 %v3305, %v3303
  %v4150 = vpack.c.b16 %v3306, %v3304
  %v4151 = vpack.c.b16 %v3309, %v3307
  %v4152 = vpack.c.b16 %v3310, %v3308
  %v4153 = vpack.c.b16 %v3313, %v3311
  %v4154 = vpack.c.b16 %v3314, %v3312
  %v4155 = vpack.c.b16 %v3317, %v3315
  %v4156 = vpack.c.b16 %v3318, %v3316
  %v4157 = vpack.c.b16 %v3321, %v3319
  %v4158 = vpack.c.b16 %v3322, %v3320
  %v4159 = vpack.c.b16 %v3325, %v3323
  %v4160 = vpack.c.b16 %v3326, %v3324
  %v4161 = vpack.c.b16 %v3329, %v3327
  %v4162 = vpack.c.b16 %v3330, %v3328
  %v4163 = vpack.c.b16 %v3333, %v3331
  %v4164 = vpack.c.b16 %v3334, %v3332
  %v4165 = vpack.c.b16 %v3337, %v3335
  %v4166 = vpack.c.b16 %v3338, %v3336
  %v4167 = vpack.c.b16 %v3341, %v3339
  %v4168 = vpack.c.b16 %v3342, %v3340
  %v4169 = vpack.c.b16 %v3345, %v3343
  %v4170 = vpack.c.b16 %v3346, %v3344
  %v4171 = vpack.c.b16 %v3349, %v3347
  %v4172 = vpack.c.b16 %v3350, %v3348
  %v4173 = vpack.c.b16 %v3353, %v3351
  %v4174 = vpack.c.b16 %v3354, %v3352
  %v4175 = vpack.c.b16 %v3357, %v3355
  %v4176 = vpack.c.b16 %v3358, %v3356
  %v4177 = vpack.c.b16 %v3361, %v3359
  %v4178 = vpack.c.b16 %v3362, %v3360
  %v4179 = vpack.c.b16 %v3365, %v3363
  %v4180 = vpack.c.b16 %v3366, %v3364
  %v4181 = vpack.c.b16 %v3369, %v3367
  %v4182 = vpack.c.b16 %v3370, %v3368
  %v4183 = vpack.c.b16 %v3373, %v3371
  %v4184 = vpack.c.b16 %v3374, %v3372
  %v4185 = vpack.c.b16 %v3377, %v3375
  %v4186 = vpack.c.b16 %v3378, %v3376
  %v4187 = vpack.c.b16 %v3381, %v3379
  %v4188 = vpack.c.b16 %v3382, %v3380
  %v4189 = vpack.c.b16 %v3385, %v3383
  %v4190 = vpack.c.b16 %v3386, %v3384
  %v4191 = vpack.c.b16 %v3389, %v3387
  %v4192 = vpack.c.b16 %v3390, %v3388
  %v4193 = vpack.c.b16 %v3393, %v3391
  %v4194 = vpack.c.b16 %v3394, %v3392
  %v4195 = vpack.c.b16 %v3397, %v3395
  %v4196 = vpack.c.b16 %v3398, %v3396
  %v4197 = vpack.c.b16 %v3401, %v3399
  %v4198 = vpack.c.b16 %v3402, %v3400
  %v4199 = vpack.c.b16 %v3405, %v3403
  %v4200 = vpack.c.b16 %v3406, %v3404
  %v4201 = vpack.c.b16 %v3409, %v3407
  %v4202 = vpack.c.b16 %v3410, %v3408
  %v4203 = vpack.c.b16 %v3413, %v3411
  %v4204 = vpack.c.b16 %v3414, %v3412
  %v4205 = vpack.c.b16 %v3417, %v3415
  %v4206 = vpack.c.b16 %v3418, %v3416
  %v4207 = vpack.c.b16 %v3421, %v3419
  %v4208 = vpack.c.b16 %v3422, %v3420
  %v4209 = vpack.c.b16 %v3425, %v3423
  %v4210 = vpack.c.b16 %v3426, %v3424
  %v4211 = vpack.c.b16 %v3429, %v3427
  %v4212 = vpack.c.b16 %v3430, %v3428
  %v4213 = vpack.c.b16 %v3433, %v3431
  %v4214 = vpack.c.b16 %v3434, %v3432
  %v4215 = vpack.c.b16 %v3437, %v3435
  %v4216 = vpack.c.b16 %v3438, %v3436
  %v4217 = vpack.c.b16 %v3441, %v3439
  %v4218 = vpack.c.b16 %v3442, %v3440
  %v4219 = vpack.c.b16 %v3445, %v3443
  %v4220 = vpack.c.b16 %v3446, %v3444
  %v4221 = vpack.c.b16 %v3449, %v3447
  %v4222 = vpack.c.b16 %v3450, %v3448
  %v4223 = vpack.c.b16 %v3453, %v3451
  %v4224 = vpack.c.b16 %v3454, %v3452
  %v4225 = vpack.c.b16 %v3457, %v3455
  %v4226 = vpack.c.b16 %v3458, %v3456
  %4995 = vmatprep.subr.bf16.mxu0 %v3474
  %4996 = vmatpush1.bf16.msra.mxu0 %v3473
  %4997 = vmatprep.subr.bf16.mxu0 %v3472
  %4998 = vmatpush1.bf16.msra.mxu0 %v3471
  %4999 = vmatprep.subr.bf16.mxu0 %v3470
  %5000 = vmatpush1.bf16.msra.mxu0 %v3469
  %5001 = vmatprep.subr.bf16.mxu0 %v3468
  %5002 = vmatpush1.bf16.msra.mxu0 %v3467
  %5003 = vmatprep.subr.bf16.mxu0 %v3466
  %5004 = vmatpush1.bf16.msra.mxu0 %v3465
  %5005 = vmatprep.subr.bf16.mxu0 %v3464
  %5006 = vmatpush1.bf16.msra.mxu0 %v3463
  %5007 = vmatprep.subr.bf16.mxu0 %v3462
  %5008 = vmatpush1.bf16.msra.mxu0 %v3461
  %5009 = vmatprep.subr.bf16.mxu0 %v3460
  %5010 = vmatpush1.bf16.msra.mxu0 %v3459
  %5011 = vmatprep.subr.bf16.mxu0 %v3490
  %5012 = vmatpush2.bf16.msra.mxu0 %v3489
  %5013 = vmatprep.subr.bf16.mxu0 %v3488
  %5014 = vmatpush2.bf16.msra.mxu0 %v3487
  %5015 = vmatprep.subr.bf16.mxu0 %v3486
  %5016 = vmatpush2.bf16.msra.mxu0 %v3485
  %5017 = vmatprep.subr.bf16.mxu0 %v3484
  %5018 = vmatpush2.bf16.msra.mxu0 %v3483
  %5019 = vmatprep.subr.bf16.mxu0 %v3482
  %5020 = vmatpush2.bf16.msra.mxu0 %v3481
  %5021 = vmatprep.subr.bf16.mxu0 %v3480
  %5022 = vmatpush2.bf16.msra.mxu0 %v3479
  %5023 = vmatprep.subr.bf16.mxu0 %v3478
  %5024 = vmatpush2.bf16.msra.mxu0 %v3477
  %5025 = vmatprep.subr.bf16.mxu0 %v3476
  %5026 = vmatpush2.bf16.msra.mxu0 %v3475
  %5027 = vmatprep.mubr.bf16.mxu0 %v850
  %5028 = vmatmul.mubr.bf16.gmra.mxu0 %v836
  %v5029 = vpop.f32.mrf.mxu0
  %v5030 = vadd.f32 %v800, %v5029
  %v5031 = vpop.f32.mrf.mxu0
  %v5032 = vadd.f32 %v804, %v5031
  %v5033 = vpop.f32.mrf.mxu0
  %v5034 = vpop.f32.mrf.mxu0
  %5035 = vdwg.mxu0
  %5036 = vmatprep.subr.bf16.mxu0 %v3506
  %5037 = vmatpush1.bf16.msra.mxu0 %v3505
  %5038 = vmatprep.subr.bf16.mxu0 %v3504
  %5039 = vmatpush1.bf16.msra.mxu0 %v3503
  %5040 = vmatprep.subr.bf16.mxu0 %v3502
  %5041 = vmatpush1.bf16.msra.mxu0 %v3501
  %5042 = vmatprep.subr.bf16.mxu0 %v3500
  %5043 = vmatpush1.bf16.msra.mxu0 %v3499
  %5044 = vmatprep.subr.bf16.mxu0 %v3498
  %5045 = vmatpush1.bf16.msra.mxu0 %v3497
  %5046 = vmatprep.subr.bf16.mxu0 %v3496
  %5047 = vmatpush1.bf16.msra.mxu0 %v3495
  %5048 = vmatprep.subr.bf16.mxu0 %v3494
  %5049 = vmatpush1.bf16.msra.mxu0 %v3493
  %5050 = vmatprep.subr.bf16.mxu0 %v3492
  %5051 = vmatpush1.bf16.msra.mxu0 %v3491
  %5052 = vmatprep.subr.bf16.mxu0 %v3522
  %5053 = vmatpush2.bf16.msra.mxu0 %v3521
  %5054 = vmatprep.subr.bf16.mxu0 %v3520
  %5055 = vmatpush2.bf16.msra.mxu0 %v3519
  %5056 = vmatprep.subr.bf16.mxu0 %v3518
  %5057 = vmatpush2.bf16.msra.mxu0 %v3517
  %5058 = vmatprep.subr.bf16.mxu0 %v3516
  %5059 = vmatpush2.bf16.msra.mxu0 %v3515
  %5060 = vmatprep.subr.bf16.mxu0 %v3514
  %5061 = vmatpush2.bf16.msra.mxu0 %v3513
  %5062 = vmatprep.subr.bf16.mxu0 %v3512
  %5063 = vmatpush2.bf16.msra.mxu0 %v3511
  %5064 = vmatprep.subr.bf16.mxu0 %v3510
  %5065 = vmatpush2.bf16.msra.mxu0 %v3509
  %5066 = vmatprep.subr.bf16.mxu0 %v3508
  %5067 = vmatpush2.bf16.msra.mxu0 %v3507
  %5068 = vmatprep.mubr.bf16.mxu0 %v860
  %5069 = vmatmul.mubr.bf16.gmra.mxu0 %v858
  %v5070 = vpop.f32.mrf.mxu0
  %v5071 = vadd.f32 %v5030, %v5070
  %v5072 = vpop.f32.mrf.mxu0
  %v5073 = vadd.f32 %v5032, %v5072
  %v5074 = vpop.f32.mrf.mxu0
  %v5075 = vpop.f32.mrf.mxu0
  %5076 = vdwg.mxu0
  %5077 = vmatprep.subr.bf16.mxu0 %v3538
  %5078 = vmatpush1.bf16.msra.mxu0 %v3537
  %5079 = vmatprep.subr.bf16.mxu0 %v3536
  %5080 = vmatpush1.bf16.msra.mxu0 %v3535
  %5081 = vmatprep.subr.bf16.mxu0 %v3534
  %5082 = vmatpush1.bf16.msra.mxu0 %v3533
  %5083 = vmatprep.subr.bf16.mxu0 %v3532
  %5084 = vmatpush1.bf16.msra.mxu0 %v3531
  %5085 = vmatprep.subr.bf16.mxu0 %v3530
  %5086 = vmatpush1.bf16.msra.mxu0 %v3529
  %5087 = vmatprep.subr.bf16.mxu0 %v3528
  %5088 = vmatpush1.bf16.msra.mxu0 %v3527
  %5089 = vmatprep.subr.bf16.mxu0 %v3526
  %5090 = vmatpush1.bf16.msra.mxu0 %v3525
  %5091 = vmatprep.subr.bf16.mxu0 %v3524
  %5092 = vmatpush1.bf16.msra.mxu0 %v3523
  %5093 = vmatprep.subr.bf16.mxu0 %v3554
  %5094 = vmatpush2.bf16.msra.mxu0 %v3553
  %5095 = vmatprep.subr.bf16.mxu0 %v3552
  %5096 = vmatpush2.bf16.msra.mxu0 %v3551
  %5097 = vmatprep.subr.bf16.mxu0 %v3550
  %5098 = vmatpush2.bf16.msra.mxu0 %v3549
  %5099 = vmatprep.subr.bf16.mxu0 %v3548
  %5100 = vmatpush2.bf16.msra.mxu0 %v3547
  %5101 = vmatprep.subr.bf16.mxu0 %v3546
  %5102 = vmatpush2.bf16.msra.mxu0 %v3545
  %5103 = vmatprep.subr.bf16.mxu0 %v3544
  %5104 = vmatpush2.bf16.msra.mxu0 %v3543
  %5105 = vmatprep.subr.bf16.mxu0 %v3542
  %5106 = vmatpush2.bf16.msra.mxu0 %v3541
  %5107 = vmatprep.subr.bf16.mxu0 %v3540
  %5108 = vmatpush2.bf16.msra.mxu0 %v3539
  %5109 = vmatprep.mubr.bf16.mxu0 %v857
  %5110 = vmatmul.mubr.bf16.gmra.mxu0 %v843
  %v5111 = vpop.f32.mrf.mxu0
  %v5112 = vadd.f32 %v5071, %v5111
  %v5113 = vpop.f32.mrf.mxu0
  %v5114 = vadd.f32 %v5073, %v5113
  %v5115 = vpop.f32.mrf.mxu0
  %v5116 = vpop.f32.mrf.mxu0
  %5117 = vdwg.mxu0
  %5118 = vmatprep.subr.bf16.mxu0 %v3570
  %5119 = vmatpush1.bf16.msra.mxu0 %v3569
  %5120 = vmatprep.subr.bf16.mxu0 %v3568
  %5121 = vmatpush1.bf16.msra.mxu0 %v3567
  %5122 = vmatprep.subr.bf16.mxu0 %v3566
  %5123 = vmatpush1.bf16.msra.mxu0 %v3565
  %5124 = vmatprep.subr.bf16.mxu0 %v3564
  %5125 = vmatpush1.bf16.msra.mxu0 %v3563
  %5126 = vmatprep.subr.bf16.mxu0 %v3562
  %5127 = vmatpush1.bf16.msra.mxu0 %v3561
  %5128 = vmatprep.subr.bf16.mxu0 %v3560
  %5129 = vmatpush1.bf16.msra.mxu0 %v3559
  %5130 = vmatprep.subr.bf16.mxu0 %v3558
  %5131 = vmatpush1.bf16.msra.mxu0 %v3557
  %5132 = vmatprep.subr.bf16.mxu0 %v3556
  %5133 = vmatpush1.bf16.msra.mxu0 %v3555
  %5134 = vmatprep.subr.bf16.mxu0 %v3586
  %5135 = vmatpush2.bf16.msra.mxu0 %v3585
  %5136 = vmatprep.subr.bf16.mxu0 %v3584
  %5137 = vmatpush2.bf16.msra.mxu0 %v3583
  %5138 = vmatprep.subr.bf16.mxu0 %v3582
  %5139 = vmatpush2.bf16.msra.mxu0 %v3581
  %5140 = vmatprep.subr.bf16.mxu0 %v3580
  %5141 = vmatpush2.bf16.msra.mxu0 %v3579
  %5142 = vmatprep.subr.bf16.mxu0 %v3578
  %5143 = vmatpush2.bf16.msra.mxu0 %v3577
  %5144 = vmatprep.subr.bf16.mxu0 %v3576
  %5145 = vmatpush2.bf16.msra.mxu0 %v3575
  %5146 = vmatprep.subr.bf16.mxu0 %v3574
  %5147 = vmatpush2.bf16.msra.mxu0 %v3573
  %5148 = vmatprep.subr.bf16.mxu0 %v3572
  %5149 = vmatpush2.bf16.msra.mxu0 %v3571
  %5150 = vmatprep.mubr.bf16.mxu0 %v861
  %5151 = vmatmul.mubr.bf16.gmra.mxu0 %v859
  %v5152 = vpop.f32.mrf.mxu0
  %v5153 = vadd.f32 %v5112, %v5152
  %v5154 = vpop.f32.mrf.mxu0
  %v5155 = vadd.f32 %v5114, %v5154
  %v5156 = vpop.f32.mrf.mxu0
  %v5157 = vpop.f32.mrf.mxu0
  %5158 = vdwg.mxu0
  %5159 = vmatprep.subr.bf16.mxu0 %v3602
  %5160 = vmatpush1.bf16.msra.mxu0 %v3601
  %5161 = vmatprep.subr.bf16.mxu0 %v3600
  %5162 = vmatpush1.bf16.msra.mxu0 %v3599
  %5163 = vmatprep.subr.bf16.mxu0 %v3598
  %5164 = vmatpush1.bf16.msra.mxu0 %v3597
  %5165 = vmatprep.subr.bf16.mxu0 %v3596
  %5166 = vmatpush1.bf16.msra.mxu0 %v3595
  %5167 = vmatprep.subr.bf16.mxu0 %v3594
  %5168 = vmatpush1.bf16.msra.mxu0 %v3593
  %5169 = vmatprep.subr.bf16.mxu0 %v3592
  %5170 = vmatpush1.bf16.msra.mxu0 %v3591
  %5171 = vmatprep.subr.bf16.mxu0 %v3590
  %5172 = vmatpush1.bf16.msra.mxu0 %v3589
  %5173 = vmatprep.subr.bf16.mxu0 %v3588
  %5174 = vmatpush1.bf16.msra.mxu0 %v3587
  %5175 = vmatprep.subr.bf16.mxu0 %v3618
  %5176 = vmatpush2.bf16.msra.mxu0 %v3617
  %5177 = vmatprep.subr.bf16.mxu0 %v3616
  %5178 = vmatpush2.bf16.msra.mxu0 %v3615
  %5179 = vmatprep.subr.bf16.mxu0 %v3614
  %5180 = vmatpush2.bf16.msra.mxu0 %v3613
  %5181 = vmatprep.subr.bf16.mxu0 %v3612
  %5182 = vmatpush2.bf16.msra.mxu0 %v3611
  %5183 = vmatprep.subr.bf16.mxu0 %v3610
  %5184 = vmatpush2.bf16.msra.mxu0 %v3609
  %5185 = vmatprep.subr.bf16.mxu0 %v3608
  %5186 = vmatpush2.bf16.msra.mxu0 %v3607
  %5187 = vmatprep.subr.bf16.mxu0 %v3606
  %5188 = vmatpush2.bf16.msra.mxu0 %v3605
  %5189 = vmatprep.subr.bf16.mxu0 %v3604
  %5190 = vmatpush2.bf16.msra.mxu0 %v3603
  %5191 = vmatprep.mubr.bf16.mxu0 %v899
  %5192 = vmatmul.mubr.bf16.gmra.mxu0 %v885
  %v5193 = vpop.f32.mrf.mxu0
  %v5194 = vadd.f32 %v5153, %v5193
  %v5195 = vpop.f32.mrf.mxu0
  %v5196 = vadd.f32 %v5155, %v5195
  %v5197 = vpop.f32.mrf.mxu0
  %v5198 = vpop.f32.mrf.mxu0
  %5199 = vdwg.mxu0
  %5200 = vmatprep.subr.bf16.mxu0 %v3634
  %5201 = vmatpush1.bf16.msra.mxu0 %v3633
  %5202 = vmatprep.subr.bf16.mxu0 %v3632
  %5203 = vmatpush1.bf16.msra.mxu0 %v3631
  %5204 = vmatprep.subr.bf16.mxu0 %v3630
  %5205 = vmatpush1.bf16.msra.mxu0 %v3629
  %5206 = vmatprep.subr.bf16.mxu0 %v3628
  %5207 = vmatpush1.bf16.msra.mxu0 %v3627
  %5208 = vmatprep.subr.bf16.mxu0 %v3626
  %5209 = vmatpush1.bf16.msra.mxu0 %v3625
  %5210 = vmatprep.subr.bf16.mxu0 %v3624
  %5211 = vmatpush1.bf16.msra.mxu0 %v3623
  %5212 = vmatprep.subr.bf16.mxu0 %v3622
  %5213 = vmatpush1.bf16.msra.mxu0 %v3621
  %5214 = vmatprep.subr.bf16.mxu0 %v3620
  %5215 = vmatpush1.bf16.msra.mxu0 %v3619
  %5216 = vmatprep.subr.bf16.mxu0 %v3650
  %5217 = vmatpush2.bf16.msra.mxu0 %v3649
  %5218 = vmatprep.subr.bf16.mxu0 %v3648
  %5219 = vmatpush2.bf16.msra.mxu0 %v3647
  %5220 = vmatprep.subr.bf16.mxu0 %v3646
  %5221 = vmatpush2.bf16.msra.mxu0 %v3645
  %5222 = vmatprep.subr.bf16.mxu0 %v3644
  %5223 = vmatpush2.bf16.msra.mxu0 %v3643
  %5224 = vmatprep.subr.bf16.mxu0 %v3642
  %5225 = vmatpush2.bf16.msra.mxu0 %v3641
  %5226 = vmatprep.subr.bf16.mxu0 %v3640
  %5227 = vmatpush2.bf16.msra.mxu0 %v3639
  %5228 = vmatprep.subr.bf16.mxu0 %v3638
  %5229 = vmatpush2.bf16.msra.mxu0 %v3637
  %5230 = vmatprep.subr.bf16.mxu0 %v3636
  %5231 = vmatpush2.bf16.msra.mxu0 %v3635
  %5232 = vmatprep.mubr.bf16.mxu0 %v909
  %5233 = vmatmul.mubr.bf16.gmra.mxu0 %v907
  %v5234 = vpop.f32.mrf.mxu0
  %v5235 = vadd.f32 %v5194, %v5234
  %v5236 = vpop.f32.mrf.mxu0
  %v5237 = vadd.f32 %v5196, %v5236
  %v5238 = vpop.f32.mrf.mxu0
  %v5239 = vpop.f32.mrf.mxu0
  %5240 = vdwg.mxu0
  %5241 = vmatprep.subr.bf16.mxu0 %v3666
  %5242 = vmatpush1.bf16.msra.mxu0 %v3665
  %5243 = vmatprep.subr.bf16.mxu0 %v3664
  %5244 = vmatpush1.bf16.msra.mxu0 %v3663
  %5245 = vmatprep.subr.bf16.mxu0 %v3662
  %5246 = vmatpush1.bf16.msra.mxu0 %v3661
  %5247 = vmatprep.subr.bf16.mxu0 %v3660
  %5248 = vmatpush1.bf16.msra.mxu0 %v3659
  %5249 = vmatprep.subr.bf16.mxu0 %v3658
  %5250 = vmatpush1.bf16.msra.mxu0 %v3657
  %5251 = vmatprep.subr.bf16.mxu0 %v3656
  %5252 = vmatpush1.bf16.msra.mxu0 %v3655
  %5253 = vmatprep.subr.bf16.mxu0 %v3654
  %5254 = vmatpush1.bf16.msra.mxu0 %v3653
  %5255 = vmatprep.subr.bf16.mxu0 %v3652
  %5256 = vmatpush1.bf16.msra.mxu0 %v3651
  %5257 = vmatprep.subr.bf16.mxu0 %v3682
  %5258 = vmatpush2.bf16.msra.mxu0 %v3681
  %5259 = vmatprep.subr.bf16.mxu0 %v3680
  %5260 = vmatpush2.bf16.msra.mxu0 %v3679
  %5261 = vmatprep.subr.bf16.mxu0 %v3678
  %5262 = vmatpush2.bf16.msra.mxu0 %v3677
  %5263 = vmatprep.subr.bf16.mxu0 %v3676
  %5264 = vmatpush2.bf16.msra.mxu0 %v3675
  %5265 = vmatprep.subr.bf16.mxu0 %v3674
  %5266 = vmatpush2.bf16.msra.mxu0 %v3673
  %5267 = vmatprep.subr.bf16.mxu0 %v3672
  %5268 = vmatpush2.bf16.msra.mxu0 %v3671
  %5269 = vmatprep.subr.bf16.mxu0 %v3670
  %5270 = vmatpush2.bf16.msra.mxu0 %v3669
  %5271 = vmatprep.subr.bf16.mxu0 %v3668
  %5272 = vmatpush2.bf16.msra.mxu0 %v3667
  %5273 = vmatprep.mubr.bf16.mxu0 %v906
  %5274 = vmatmul.mubr.bf16.gmra.mxu0 %v892
  %v5275 = vpop.f32.mrf.mxu0
  %v5276 = vadd.f32 %v5235, %v5275
  %v5277 = vpop.f32.mrf.mxu0
  %v5278 = vadd.f32 %v5237, %v5277
  %v5279 = vpop.f32.mrf.mxu0
  %v5280 = vpop.f32.mrf.mxu0
  %5281 = vdwg.mxu0
  %5282 = vmatprep.subr.bf16.mxu0 %v3698
  %5283 = vmatpush1.bf16.msra.mxu0 %v3697
  %5284 = vmatprep.subr.bf16.mxu0 %v3696
  %5285 = vmatpush1.bf16.msra.mxu0 %v3695
  %5286 = vmatprep.subr.bf16.mxu0 %v3694
  %5287 = vmatpush1.bf16.msra.mxu0 %v3693
  %5288 = vmatprep.subr.bf16.mxu0 %v3692
  %5289 = vmatpush1.bf16.msra.mxu0 %v3691
  %5290 = vmatprep.subr.bf16.mxu0 %v3690
  %5291 = vmatpush1.bf16.msra.mxu0 %v3689
  %5292 = vmatprep.subr.bf16.mxu0 %v3688
  %5293 = vmatpush1.bf16.msra.mxu0 %v3687
  %5294 = vmatprep.subr.bf16.mxu0 %v3686
  %5295 = vmatpush1.bf16.msra.mxu0 %v3685
  %5296 = vmatprep.subr.bf16.mxu0 %v3684
  %5297 = vmatpush1.bf16.msra.mxu0 %v3683
  %5298 = vmatprep.subr.bf16.mxu0 %v3714
  %5299 = vmatpush2.bf16.msra.mxu0 %v3713
  %5300 = vmatprep.subr.bf16.mxu0 %v3712
  %5301 = vmatpush2.bf16.msra.mxu0 %v3711
  %5302 = vmatprep.subr.bf16.mxu0 %v3710
  %5303 = vmatpush2.bf16.msra.mxu0 %v3709
  %5304 = vmatprep.subr.bf16.mxu0 %v3708
  %5305 = vmatpush2.bf16.msra.mxu0 %v3707
  %5306 = vmatprep.subr.bf16.mxu0 %v3706
  %5307 = vmatpush2.bf16.msra.mxu0 %v3705
  %5308 = vmatprep.subr.bf16.mxu0 %v3704
  %5309 = vmatpush2.bf16.msra.mxu0 %v3703
  %5310 = vmatprep.subr.bf16.mxu0 %v3702
  %5311 = vmatpush2.bf16.msra.mxu0 %v3701
  %5312 = vmatprep.subr.bf16.mxu0 %v3700
  %5313 = vmatpush2.bf16.msra.mxu0 %v3699
  %5314 = vmatprep.mubr.bf16.mxu0 %v910
  %5315 = vmatmul.mubr.bf16.gmra.mxu0 %v908
  %v5316 = vpop.f32.mrf.mxu0
  %v5317 = vadd.f32 %v5276, %v5316
  %v5318 = vpop.f32.mrf.mxu0
  %v5319 = vadd.f32 %v5278, %v5318
  %v5320 = vpop.f32.mrf.mxu0
  %v5321 = vpop.f32.mrf.mxu0
  %5322 = vdwg.mxu0
  %5323 = vmatprep.subr.bf16.mxu0 %v3730
  %5324 = vmatpush1.bf16.msra.mxu0 %v3729
  %5325 = vmatprep.subr.bf16.mxu0 %v3728
  %5326 = vmatpush1.bf16.msra.mxu0 %v3727
  %5327 = vmatprep.subr.bf16.mxu0 %v3726
  %5328 = vmatpush1.bf16.msra.mxu0 %v3725
  %5329 = vmatprep.subr.bf16.mxu0 %v3724
  %5330 = vmatpush1.bf16.msra.mxu0 %v3723
  %5331 = vmatprep.subr.bf16.mxu0 %v3722
  %5332 = vmatpush1.bf16.msra.mxu0 %v3721
  %5333 = vmatprep.subr.bf16.mxu0 %v3720
  %5334 = vmatpush1.bf16.msra.mxu0 %v3719
  %5335 = vmatprep.subr.bf16.mxu0 %v3718
  %5336 = vmatpush1.bf16.msra.mxu0 %v3717
  %5337 = vmatprep.subr.bf16.mxu0 %v3716
  %5338 = vmatpush1.bf16.msra.mxu0 %v3715
  %5339 = vmatprep.subr.bf16.mxu0 %v3746
  %5340 = vmatpush2.bf16.msra.mxu0 %v3745
  %5341 = vmatprep.subr.bf16.mxu0 %v3744
  %5342 = vmatpush2.bf16.msra.mxu0 %v3743
  %5343 = vmatprep.subr.bf16.mxu0 %v3742
  %5344 = vmatpush2.bf16.msra.mxu0 %v3741
  %5345 = vmatprep.subr.bf16.mxu0 %v3740
  %5346 = vmatpush2.bf16.msra.mxu0 %v3739
  %5347 = vmatprep.subr.bf16.mxu0 %v3738
  %5348 = vmatpush2.bf16.msra.mxu0 %v3737
  %5349 = vmatprep.subr.bf16.mxu0 %v3736
  %5350 = vmatpush2.bf16.msra.mxu0 %v3735
  %5351 = vmatprep.subr.bf16.mxu0 %v3734
  %5352 = vmatpush2.bf16.msra.mxu0 %v3733
  %5353 = vmatprep.subr.bf16.mxu0 %v3732
  %5354 = vmatpush2.bf16.msra.mxu0 %v3731
  %5355 = vmatprep.mubr.bf16.mxu0 %v948
  %5356 = vmatmul.mubr.bf16.gmra.mxu0 %v934
  %v5357 = vpop.f32.mrf.mxu0
  %v5358 = vadd.f32 %v5317, %v5357
  %v5359 = vpop.f32.mrf.mxu0
  %v5360 = vadd.f32 %v5319, %v5359
  %v5361 = vpop.f32.mrf.mxu0
  %v5362 = vpop.f32.mrf.mxu0
  %5363 = vdwg.mxu0
  %5364 = vmatprep.subr.bf16.mxu0 %v3762
  %5365 = vmatpush1.bf16.msra.mxu0 %v3761
  %5366 = vmatprep.subr.bf16.mxu0 %v3760
  %5367 = vmatpush1.bf16.msra.mxu0 %v3759
  %5368 = vmatprep.subr.bf16.mxu0 %v3758
  %5369 = vmatpush1.bf16.msra.mxu0 %v3757
  %5370 = vmatprep.subr.bf16.mxu0 %v3756
  %5371 = vmatpush1.bf16.msra.mxu0 %v3755
  %5372 = vmatprep.subr.bf16.mxu0 %v3754
  %5373 = vmatpush1.bf16.msra.mxu0 %v3753
  %5374 = vmatprep.subr.bf16.mxu0 %v3752
  %5375 = vmatpush1.bf16.msra.mxu0 %v3751
  %5376 = vmatprep.subr.bf16.mxu0 %v3750
  %5377 = vmatpush1.bf16.msra.mxu0 %v3749
  %5378 = vmatprep.subr.bf16.mxu0 %v3748
  %5379 = vmatpush1.bf16.msra.mxu0 %v3747
  %5380 = vmatprep.subr.bf16.mxu0 %v3778
  %5381 = vmatpush2.bf16.msra.mxu0 %v3777
  %5382 = vmatprep.subr.bf16.mxu0 %v3776
  %5383 = vmatpush2.bf16.msra.mxu0 %v3775
  %5384 = vmatprep.subr.bf16.mxu0 %v3774
  %5385 = vmatpush2.bf16.msra.mxu0 %v3773
  %5386 = vmatprep.subr.bf16.mxu0 %v3772
  %5387 = vmatpush2.bf16.msra.mxu0 %v3771
  %5388 = vmatprep.subr.bf16.mxu0 %v3770
  %5389 = vmatpush2.bf16.msra.mxu0 %v3769
  %5390 = vmatprep.subr.bf16.mxu0 %v3768
  %5391 = vmatpush2.bf16.msra.mxu0 %v3767
  %5392 = vmatprep.subr.bf16.mxu0 %v3766
  %5393 = vmatpush2.bf16.msra.mxu0 %v3765
  %5394 = vmatprep.subr.bf16.mxu0 %v3764
  %5395 = vmatpush2.bf16.msra.mxu0 %v3763
  %5396 = vmatprep.mubr.bf16.mxu0 %v958
  %5397 = vmatmul.mubr.bf16.gmra.mxu0 %v956
  %v5398 = vpop.f32.mrf.mxu0
  %v5399 = vadd.f32 %v5358, %v5398
  %v5400 = vpop.f32.mrf.mxu0
  %v5401 = vadd.f32 %v5360, %v5400
  %v5402 = vpop.f32.mrf.mxu0
  %v5403 = vpop.f32.mrf.mxu0
  %5404 = vdwg.mxu0
  %5405 = vmatprep.subr.bf16.mxu0 %v3794
  %5406 = vmatpush1.bf16.msra.mxu0 %v3793
  %5407 = vmatprep.subr.bf16.mxu0 %v3792
  %5408 = vmatpush1.bf16.msra.mxu0 %v3791
  %5409 = vmatprep.subr.bf16.mxu0 %v3790
  %5410 = vmatpush1.bf16.msra.mxu0 %v3789
  %5411 = vmatprep.subr.bf16.mxu0 %v3788
  %5412 = vmatpush1.bf16.msra.mxu0 %v3787
  %5413 = vmatprep.subr.bf16.mxu0 %v3786
  %5414 = vmatpush1.bf16.msra.mxu0 %v3785
  %5415 = vmatprep.subr.bf16.mxu0 %v3784
  %5416 = vmatpush1.bf16.msra.mxu0 %v3783
  %5417 = vmatprep.subr.bf16.mxu0 %v3782
  %5418 = vmatpush1.bf16.msra.mxu0 %v3781
  %5419 = vmatprep.subr.bf16.mxu0 %v3780
  %5420 = vmatpush1.bf16.msra.mxu0 %v3779
  %5421 = vmatprep.subr.bf16.mxu0 %v3810
  %5422 = vmatpush2.bf16.msra.mxu0 %v3809
  %5423 = vmatprep.subr.bf16.mxu0 %v3808
  %5424 = vmatpush2.bf16.msra.mxu0 %v3807
  %5425 = vmatprep.subr.bf16.mxu0 %v3806
  %5426 = vmatpush2.bf16.msra.mxu0 %v3805
  %5427 = vmatprep.subr.bf16.mxu0 %v3804
  %5428 = vmatpush2.bf16.msra.mxu0 %v3803
  %5429 = vmatprep.subr.bf16.mxu0 %v3802
  %5430 = vmatpush2.bf16.msra.mxu0 %v3801
  %5431 = vmatprep.subr.bf16.mxu0 %v3800
  %5432 = vmatpush2.bf16.msra.mxu0 %v3799
  %5433 = vmatprep.subr.bf16.mxu0 %v3798
  %5434 = vmatpush2.bf16.msra.mxu0 %v3797
  %5435 = vmatprep.subr.bf16.mxu0 %v3796
  %5436 = vmatpush2.bf16.msra.mxu0 %v3795
  %5437 = vmatprep.mubr.bf16.mxu0 %v955
  %5438 = vmatmul.mubr.bf16.gmra.mxu0 %v941
  %v5439 = vpop.f32.mrf.mxu0
  %v5440 = vadd.f32 %v5399, %v5439
  %v5441 = vpop.f32.mrf.mxu0
  %v5442 = vadd.f32 %v5401, %v5441
  %v5443 = vpop.f32.mrf.mxu0
  %v5444 = vpop.f32.mrf.mxu0
  %5445 = vdwg.mxu0
  %5446 = vmatprep.subr.bf16.mxu0 %v3826
  %5447 = vmatpush1.bf16.msra.mxu0 %v3825
  %5448 = vmatprep.subr.bf16.mxu0 %v3824
  %5449 = vmatpush1.bf16.msra.mxu0 %v3823
  %5450 = vmatprep.subr.bf16.mxu0 %v3822
  %5451 = vmatpush1.bf16.msra.mxu0 %v3821
  %5452 = vmatprep.subr.bf16.mxu0 %v3820
  %5453 = vmatpush1.bf16.msra.mxu0 %v3819
  %5454 = vmatprep.subr.bf16.mxu0 %v3818
  %5455 = vmatpush1.bf16.msra.mxu0 %v3817
  %5456 = vmatprep.subr.bf16.mxu0 %v3816
  %5457 = vmatpush1.bf16.msra.mxu0 %v3815
  %5458 = vmatprep.subr.bf16.mxu0 %v3814
  %5459 = vmatpush1.bf16.msra.mxu0 %v3813
  %5460 = vmatprep.subr.bf16.mxu0 %v3812
  %5461 = vmatpush1.bf16.msra.mxu0 %v3811
  %5462 = vmatprep.subr.bf16.mxu0 %v3842
  %5463 = vmatpush2.bf16.msra.mxu0 %v3841
  %5464 = vmatprep.subr.bf16.mxu0 %v3840
  %5465 = vmatpush2.bf16.msra.mxu0 %v3839
  %5466 = vmatprep.subr.bf16.mxu0 %v3838
  %5467 = vmatpush2.bf16.msra.mxu0 %v3837
  %5468 = vmatprep.subr.bf16.mxu0 %v3836
  %5469 = vmatpush2.bf16.msra.mxu0 %v3835
  %5470 = vmatprep.subr.bf16.mxu0 %v3834
  %5471 = vmatpush2.bf16.msra.mxu0 %v3833
  %5472 = vmatprep.subr.bf16.mxu0 %v3832
  %5473 = vmatpush2.bf16.msra.mxu0 %v3831
  %5474 = vmatprep.subr.bf16.mxu0 %v3830
  %5475 = vmatpush2.bf16.msra.mxu0 %v3829
  %5476 = vmatprep.subr.bf16.mxu0 %v3828
  %5477 = vmatpush2.bf16.msra.mxu0 %v3827
  %5478 = vmatprep.mubr.bf16.mxu0 %v959
  %5479 = vmatmul.mubr.bf16.gmra.mxu0 %v957
  %v5480 = vpop.f32.mrf.mxu0
  %v5481 = vadd.f32 %v5440, %v5480
  %v5482 = vpop.f32.mrf.mxu0
  %v5483 = vadd.f32 %v5442, %v5482
  %v5484 = vpop.f32.mrf.mxu0
  %v5485 = vpop.f32.mrf.mxu0
  %5486 = vdwg.mxu0
  %5487 = vmatprep.subr.bf16.mxu0 %v3858
  %5488 = vmatpush1.bf16.msra.mxu0 %v3857
  %5489 = vmatprep.subr.bf16.mxu0 %v3856
  %5490 = vmatpush1.bf16.msra.mxu0 %v3855
  %5491 = vmatprep.subr.bf16.mxu0 %v3854
  %5492 = vmatpush1.bf16.msra.mxu0 %v3853
  %5493 = vmatprep.subr.bf16.mxu0 %v3852
  %5494 = vmatpush1.bf16.msra.mxu0 %v3851
  %5495 = vmatprep.subr.bf16.mxu0 %v3850
  %5496 = vmatpush1.bf16.msra.mxu0 %v3849
  %5497 = vmatprep.subr.bf16.mxu0 %v3848
  %5498 = vmatpush1.bf16.msra.mxu0 %v3847
  %5499 = vmatprep.subr.bf16.mxu0 %v3846
  %5500 = vmatpush1.bf16.msra.mxu0 %v3845
  %5501 = vmatprep.subr.bf16.mxu0 %v3844
  %5502 = vmatpush1.bf16.msra.mxu0 %v3843
  %5503 = vmatprep.subr.bf16.mxu0 %v3874
  %5504 = vmatpush2.bf16.msra.mxu0 %v3873
  %5505 = vmatprep.subr.bf16.mxu0 %v3872
  %5506 = vmatpush2.bf16.msra.mxu0 %v3871
  %5507 = vmatprep.subr.bf16.mxu0 %v3870
  %5508 = vmatpush2.bf16.msra.mxu0 %v3869
  %5509 = vmatprep.subr.bf16.mxu0 %v3868
  %5510 = vmatpush2.bf16.msra.mxu0 %v3867
  %5511 = vmatprep.subr.bf16.mxu0 %v3866
  %5512 = vmatpush2.bf16.msra.mxu0 %v3865
  %5513 = vmatprep.subr.bf16.mxu0 %v3864
  %5514 = vmatpush2.bf16.msra.mxu0 %v3863
  %5515 = vmatprep.subr.bf16.mxu0 %v3862
  %5516 = vmatpush2.bf16.msra.mxu0 %v3861
  %5517 = vmatprep.subr.bf16.mxu0 %v3860
  %5518 = vmatpush2.bf16.msra.mxu0 %v3859
  %5519 = vmatprep.mubr.bf16.mxu0 %v997
  %5520 = vmatmul.mubr.bf16.gmra.mxu0 %v983
  %v5521 = vpop.f32.mrf.mxu0
  %v5522 = vadd.f32 %v5481, %v5521
  %v5523 = vpop.f32.mrf.mxu0
  %v5524 = vadd.f32 %v5483, %v5523
  %v5525 = vpop.f32.mrf.mxu0
  %v5526 = vpop.f32.mrf.mxu0
  %5527 = vdwg.mxu0
  %5528 = vmatprep.subr.bf16.mxu0 %v3890
  %5529 = vmatpush1.bf16.msra.mxu0 %v3889
  %5530 = vmatprep.subr.bf16.mxu0 %v3888
  %5531 = vmatpush1.bf16.msra.mxu0 %v3887
  %5532 = vmatprep.subr.bf16.mxu0 %v3886
  %5533 = vmatpush1.bf16.msra.mxu0 %v3885
  %5534 = vmatprep.subr.bf16.mxu0 %v3884
  %5535 = vmatpush1.bf16.msra.mxu0 %v3883
  %5536 = vmatprep.subr.bf16.mxu0 %v3882
  %5537 = vmatpush1.bf16.msra.mxu0 %v3881
  %5538 = vmatprep.subr.bf16.mxu0 %v3880
  %5539 = vmatpush1.bf16.msra.mxu0 %v3879
  %5540 = vmatprep.subr.bf16.mxu0 %v3878
  %5541 = vmatpush1.bf16.msra.mxu0 %v3877
  %5542 = vmatprep.subr.bf16.mxu0 %v3876
  %5543 = vmatpush1.bf16.msra.mxu0 %v3875
  %5544 = vmatprep.subr.bf16.mxu0 %v3906
  %5545 = vmatpush2.bf16.msra.mxu0 %v3905
  %5546 = vmatprep.subr.bf16.mxu0 %v3904
  %5547 = vmatpush2.bf16.msra.mxu0 %v3903
  %5548 = vmatprep.subr.bf16.mxu0 %v3902
  %5549 = vmatpush2.bf16.msra.mxu0 %v3901
  %5550 = vmatprep.subr.bf16.mxu0 %v3900
  %5551 = vmatpush2.bf16.msra.mxu0 %v3899
  %5552 = vmatprep.subr.bf16.mxu0 %v3898
  %5553 = vmatpush2.bf16.msra.mxu0 %v3897
  %5554 = vmatprep.subr.bf16.mxu0 %v3896
  %5555 = vmatpush2.bf16.msra.mxu0 %v3895
  %5556 = vmatprep.subr.bf16.mxu0 %v3894
  %5557 = vmatpush2.bf16.msra.mxu0 %v3893
  %5558 = vmatprep.subr.bf16.mxu0 %v3892
  %5559 = vmatpush2.bf16.msra.mxu0 %v3891
  %5560 = vmatprep.mubr.bf16.mxu0 %v1007
  %5561 = vmatmul.mubr.bf16.gmra.mxu0 %v1005
  %v5562 = vpop.f32.mrf.mxu0
  %v5563 = vadd.f32 %v5522, %v5562
  %v5564 = vpop.f32.mrf.mxu0
  %v5565 = vadd.f32 %v5524, %v5564
  %v5566 = vpop.f32.mrf.mxu0
  %v5567 = vpop.f32.mrf.mxu0
  %5568 = vdwg.mxu0
  %5569 = vmatprep.subr.bf16.mxu0 %v3922
  %5570 = vmatpush1.bf16.msra.mxu0 %v3921
  %5571 = vmatprep.subr.bf16.mxu0 %v3920
  %5572 = vmatpush1.bf16.msra.mxu0 %v3919
  %5573 = vmatprep.subr.bf16.mxu0 %v3918
  %5574 = vmatpush1.bf16.msra.mxu0 %v3917
  %5575 = vmatprep.subr.bf16.mxu0 %v3916
  %5576 = vmatpush1.bf16.msra.mxu0 %v3915
  %5577 = vmatprep.subr.bf16.mxu0 %v3914
  %5578 = vmatpush1.bf16.msra.mxu0 %v3913
  %5579 = vmatprep.subr.bf16.mxu0 %v3912
  %5580 = vmatpush1.bf16.msra.mxu0 %v3911
  %5581 = vmatprep.subr.bf16.mxu0 %v3910
  %5582 = vmatpush1.bf16.msra.mxu0 %v3909
  %5583 = vmatprep.subr.bf16.mxu0 %v3908
  %5584 = vmatpush1.bf16.msra.mxu0 %v3907
  %5585 = vmatprep.subr.bf16.mxu0 %v3938
  %5586 = vmatpush2.bf16.msra.mxu0 %v3937
  %5587 = vmatprep.subr.bf16.mxu0 %v3936
  %5588 = vmatpush2.bf16.msra.mxu0 %v3935
  %5589 = vmatprep.subr.bf16.mxu0 %v3934
  %5590 = vmatpush2.bf16.msra.mxu0 %v3933
  %5591 = vmatprep.subr.bf16.mxu0 %v3932
  %5592 = vmatpush2.bf16.msra.mxu0 %v3931
  %5593 = vmatprep.subr.bf16.mxu0 %v3930
  %5594 = vmatpush2.bf16.msra.mxu0 %v3929
  %5595 = vmatprep.subr.bf16.mxu0 %v3928
  %5596 = vmatpush2.bf16.msra.mxu0 %v3927
  %5597 = vmatprep.subr.bf16.mxu0 %v3926
  %5598 = vmatpush2.bf16.msra.mxu0 %v3925
  %5599 = vmatprep.subr.bf16.mxu0 %v3924
  %5600 = vmatpush2.bf16.msra.mxu0 %v3923
  %5601 = vmatprep.mubr.bf16.mxu0 %v1004
  %5602 = vmatmul.mubr.bf16.gmra.mxu0 %v990
  %v5603 = vpop.f32.mrf.mxu0
  %v5604 = vadd.f32 %v5563, %v5603
  %v5605 = vpop.f32.mrf.mxu0
  %v5606 = vadd.f32 %v5565, %v5605
  %v5607 = vpop.f32.mrf.mxu0
  %v5608 = vpop.f32.mrf.mxu0
  %5609 = vdwg.mxu0
  %5610 = vmatprep.subr.bf16.mxu0 %v3954
  %5611 = vmatpush1.bf16.msra.mxu0 %v3953
  %5612 = vmatprep.subr.bf16.mxu0 %v3952
  %5613 = vmatpush1.bf16.msra.mxu0 %v3951
  %5614 = vmatprep.subr.bf16.mxu0 %v3950
  %5615 = vmatpush1.bf16.msra.mxu0 %v3949
  %5616 = vmatprep.subr.bf16.mxu0 %v3948
  %5617 = vmatpush1.bf16.msra.mxu0 %v3947
  %5618 = vmatprep.subr.bf16.mxu0 %v3946
  %5619 = vmatpush1.bf16.msra.mxu0 %v3945
  %5620 = vmatprep.subr.bf16.mxu0 %v3944
  %5621 = vmatpush1.bf16.msra.mxu0 %v3943
  %5622 = vmatprep.subr.bf16.mxu0 %v3942
  %5623 = vmatpush1.bf16.msra.mxu0 %v3941
  %5624 = vmatprep.subr.bf16.mxu0 %v3940
  %5625 = vmatpush1.bf16.msra.mxu0 %v3939
  %5626 = vmatprep.subr.bf16.mxu0 %v3970
  %5627 = vmatpush2.bf16.msra.mxu0 %v3969
  %5628 = vmatprep.subr.bf16.mxu0 %v3968
  %5629 = vmatpush2.bf16.msra.mxu0 %v3967
  %5630 = vmatprep.subr.bf16.mxu0 %v3966
  %5631 = vmatpush2.bf16.msra.mxu0 %v3965
  %5632 = vmatprep.subr.bf16.mxu0 %v3964
  %5633 = vmatpush2.bf16.msra.mxu0 %v3963
  %5634 = vmatprep.subr.bf16.mxu0 %v3962
  %5635 = vmatpush2.bf16.msra.mxu0 %v3961
  %5636 = vmatprep.subr.bf16.mxu0 %v3960
  %5637 = vmatpush2.bf16.msra.mxu0 %v3959
  %5638 = vmatprep.subr.bf16.mxu0 %v3958
  %5639 = vmatpush2.bf16.msra.mxu0 %v3957
  %5640 = vmatprep.subr.bf16.mxu0 %v3956
  %5641 = vmatpush2.bf16.msra.mxu0 %v3955
  %5642 = vmatprep.mubr.bf16.mxu0 %v1008
  %5643 = vmatmul.mubr.bf16.gmra.mxu0 %v1006
  %v5644 = vpop.f32.mrf.mxu0
  %v5645 = vadd.f32 %v5604, %v5644
  %v5646 = vpop.f32.mrf.mxu0
  %v5647 = vadd.f32 %v5606, %v5646
  %v5648 = vpop.f32.mrf.mxu0
  %v5649 = vpop.f32.mrf.mxu0
  %5650 = vdwg.mxu0
  %5651 = vmatprep.subr.bf16.mxu0 %v3986
  %5652 = vmatpush1.bf16.msra.mxu0 %v3985
  %5653 = vmatprep.subr.bf16.mxu0 %v3984
  %5654 = vmatpush1.bf16.msra.mxu0 %v3983
  %5655 = vmatprep.subr.bf16.mxu0 %v3982
  %5656 = vmatpush1.bf16.msra.mxu0 %v3981
  %5657 = vmatprep.subr.bf16.mxu0 %v3980
  %5658 = vmatpush1.bf16.msra.mxu0 %v3979
  %5659 = vmatprep.subr.bf16.mxu0 %v3978
  %5660 = vmatpush1.bf16.msra.mxu0 %v3977
  %5661 = vmatprep.subr.bf16.mxu0 %v3976
  %5662 = vmatpush1.bf16.msra.mxu0 %v3975
  %5663 = vmatprep.subr.bf16.mxu0 %v3974
  %5664 = vmatpush1.bf16.msra.mxu0 %v3973
  %5665 = vmatprep.subr.bf16.mxu0 %v3972
  %5666 = vmatpush1.bf16.msra.mxu0 %v3971
  %5667 = vmatprep.subr.bf16.mxu0 %v4002
  %5668 = vmatpush2.bf16.msra.mxu0 %v4001
  %5669 = vmatprep.subr.bf16.mxu0 %v4000
  %5670 = vmatpush2.bf16.msra.mxu0 %v3999
  %5671 = vmatprep.subr.bf16.mxu0 %v3998
  %5672 = vmatpush2.bf16.msra.mxu0 %v3997
  %5673 = vmatprep.subr.bf16.mxu0 %v3996
  %5674 = vmatpush2.bf16.msra.mxu0 %v3995
  %5675 = vmatprep.subr.bf16.mxu0 %v3994
  %5676 = vmatpush2.bf16.msra.mxu0 %v3993
  %5677 = vmatprep.subr.bf16.mxu0 %v3992
  %5678 = vmatpush2.bf16.msra.mxu0 %v3991
  %5679 = vmatprep.subr.bf16.mxu0 %v3990
  %5680 = vmatpush2.bf16.msra.mxu0 %v3989
  %5681 = vmatprep.subr.bf16.mxu0 %v3988
  %5682 = vmatpush2.bf16.msra.mxu0 %v3987
  %5683 = vmatprep.mubr.bf16.mxu0 %v1046
  %5684 = vmatmul.mubr.bf16.gmra.mxu0 %v1032
  %v5685 = vpop.f32.mrf.mxu0
  %v5686 = vadd.f32 %v5645, %v5685
  %v5687 = vpop.f32.mrf.mxu0
  %v5688 = vadd.f32 %v5647, %v5687
  %v5689 = vpop.f32.mrf.mxu0
  %v5690 = vpop.f32.mrf.mxu0
  %5691 = vdwg.mxu0
  %5692 = vmatprep.subr.bf16.mxu0 %v4018
  %5693 = vmatpush1.bf16.msra.mxu0 %v4017
  %5694 = vmatprep.subr.bf16.mxu0 %v4016
  %5695 = vmatpush1.bf16.msra.mxu0 %v4015
  %5696 = vmatprep.subr.bf16.mxu0 %v4014
  %5697 = vmatpush1.bf16.msra.mxu0 %v4013
  %5698 = vmatprep.subr.bf16.mxu0 %v4012
  %5699 = vmatpush1.bf16.msra.mxu0 %v4011
  %5700 = vmatprep.subr.bf16.mxu0 %v4010
  %5701 = vmatpush1.bf16.msra.mxu0 %v4009
  %5702 = vmatprep.subr.bf16.mxu0 %v4008
  %5703 = vmatpush1.bf16.msra.mxu0 %v4007
  %5704 = vmatprep.subr.bf16.mxu0 %v4006
  %5705 = vmatpush1.bf16.msra.mxu0 %v4005
  %5706 = vmatprep.subr.bf16.mxu0 %v4004
  %5707 = vmatpush1.bf16.msra.mxu0 %v4003
  %5708 = vmatprep.subr.bf16.mxu0 %v4034
  %5709 = vmatpush2.bf16.msra.mxu0 %v4033
  %5710 = vmatprep.subr.bf16.mxu0 %v4032
  %5711 = vmatpush2.bf16.msra.mxu0 %v4031
  %5712 = vmatprep.subr.bf16.mxu0 %v4030
  %5713 = vmatpush2.bf16.msra.mxu0 %v4029
  %5714 = vmatprep.subr.bf16.mxu0 %v4028
  %5715 = vmatpush2.bf16.msra.mxu0 %v4027
  %5716 = vmatprep.subr.bf16.mxu0 %v4026
  %5717 = vmatpush2.bf16.msra.mxu0 %v4025
  %5718 = vmatprep.subr.bf16.mxu0 %v4024
  %5719 = vmatpush2.bf16.msra.mxu0 %v4023
  %5720 = vmatprep.subr.bf16.mxu0 %v4022
  %5721 = vmatpush2.bf16.msra.mxu0 %v4021
  %5722 = vmatprep.subr.bf16.mxu0 %v4020
  %5723 = vmatpush2.bf16.msra.mxu0 %v4019
  %5724 = vmatprep.mubr.bf16.mxu0 %v1056
  %5725 = vmatmul.mubr.bf16.gmra.mxu0 %v1054
  %v5726 = vpop.f32.mrf.mxu0
  %v5727 = vadd.f32 %v5686, %v5726
  %v5728 = vpop.f32.mrf.mxu0
  %v5729 = vadd.f32 %v5688, %v5728
  %v5730 = vpop.f32.mrf.mxu0
  %v5731 = vpop.f32.mrf.mxu0
  %5732 = vdwg.mxu0
  %5733 = vmatprep.subr.bf16.mxu0 %v4050
  %5734 = vmatpush1.bf16.msra.mxu0 %v4049
  %5735 = vmatprep.subr.bf16.mxu0 %v4048
  %5736 = vmatpush1.bf16.msra.mxu0 %v4047
  %5737 = vmatprep.subr.bf16.mxu0 %v4046
  %5738 = vmatpush1.bf16.msra.mxu0 %v4045
  %5739 = vmatprep.subr.bf16.mxu0 %v4044
  %5740 = vmatpush1.bf16.msra.mxu0 %v4043
  %5741 = vmatprep.subr.bf16.mxu0 %v4042
  %5742 = vmatpush1.bf16.msra.mxu0 %v4041
  %5743 = vmatprep.subr.bf16.mxu0 %v4040
  %5744 = vmatpush1.bf16.msra.mxu0 %v4039
  %5745 = vmatprep.subr.bf16.mxu0 %v4038
  %5746 = vmatpush1.bf16.msra.mxu0 %v4037
  %5747 = vmatprep.subr.bf16.mxu0 %v4036
  %5748 = vmatpush1.bf16.msra.mxu0 %v4035
  %5749 = vmatprep.subr.bf16.mxu0 %v4066
  %5750 = vmatpush2.bf16.msra.mxu0 %v4065
  %5751 = vmatprep.subr.bf16.mxu0 %v4064
  %5752 = vmatpush2.bf16.msra.mxu0 %v4063
  %5753 = vmatprep.subr.bf16.mxu0 %v4062
  %5754 = vmatpush2.bf16.msra.mxu0 %v4061
  %5755 = vmatprep.subr.bf16.mxu0 %v4060
  %5756 = vmatpush2.bf16.msra.mxu0 %v4059
  %5757 = vmatprep.subr.bf16.mxu0 %v4058
  %5758 = vmatpush2.bf16.msra.mxu0 %v4057
  %5759 = vmatprep.subr.bf16.mxu0 %v4056
  %5760 = vmatpush2.bf16.msra.mxu0 %v4055
  %5761 = vmatprep.subr.bf16.mxu0 %v4054
  %5762 = vmatpush2.bf16.msra.mxu0 %v4053
  %5763 = vmatprep.subr.bf16.mxu0 %v4052
  %5764 = vmatpush2.bf16.msra.mxu0 %v4051
  %5765 = vmatprep.mubr.bf16.mxu0 %v1053
  %5766 = vmatmul.mubr.bf16.gmra.mxu0 %v1039
  %v5767 = vpop.f32.mrf.mxu0
  %v5768 = vadd.f32 %v5727, %v5767
  %v5769 = vpop.f32.mrf.mxu0
  %v5770 = vadd.f32 %v5729, %v5769
  %v5771 = vpop.f32.mrf.mxu0
  %v5772 = vpop.f32.mrf.mxu0
  %5773 = vdwg.mxu0
  %5774 = vmatprep.subr.bf16.mxu0 %v4082
  %5775 = vmatpush1.bf16.msra.mxu0 %v4081
  %5776 = vmatprep.subr.bf16.mxu0 %v4080
  %5777 = vmatpush1.bf16.msra.mxu0 %v4079
  %5778 = vmatprep.subr.bf16.mxu0 %v4078
  %5779 = vmatpush1.bf16.msra.mxu0 %v4077
  %5780 = vmatprep.subr.bf16.mxu0 %v4076
  %5781 = vmatpush1.bf16.msra.mxu0 %v4075
  %5782 = vmatprep.subr.bf16.mxu0 %v4074
  %5783 = vmatpush1.bf16.msra.mxu0 %v4073
  %5784 = vmatprep.subr.bf16.mxu0 %v4072
  %5785 = vmatpush1.bf16.msra.mxu0 %v4071
  %5786 = vmatprep.subr.bf16.mxu0 %v4070
  %5787 = vmatpush1.bf16.msra.mxu0 %v4069
  %5788 = vmatprep.subr.bf16.mxu0 %v4068
  %5789 = vmatpush1.bf16.msra.mxu0 %v4067
  %5790 = vmatprep.subr.bf16.mxu0 %v4098
  %5791 = vmatpush2.bf16.msra.mxu0 %v4097
  %5792 = vmatprep.subr.bf16.mxu0 %v4096
  %5793 = vmatpush2.bf16.msra.mxu0 %v4095
  %5794 = vmatprep.subr.bf16.mxu0 %v4094
  %5795 = vmatpush2.bf16.msra.mxu0 %v4093
  %5796 = vmatprep.subr.bf16.mxu0 %v4092
  %5797 = vmatpush2.bf16.msra.mxu0 %v4091
  %5798 = vmatprep.subr.bf16.mxu0 %v4090
  %5799 = vmatpush2.bf16.msra.mxu0 %v4089
  %5800 = vmatprep.subr.bf16.mxu0 %v4088
  %5801 = vmatpush2.bf16.msra.mxu0 %v4087
  %5802 = vmatprep.subr.bf16.mxu0 %v4086
  %5803 = vmatpush2.bf16.msra.mxu0 %v4085
  %5804 = vmatprep.subr.bf16.mxu0 %v4084
  %5805 = vmatpush2.bf16.msra.mxu0 %v4083
  %5806 = vmatprep.mubr.bf16.mxu0 %v1057
  %5807 = vmatmul.mubr.bf16.gmra.mxu0 %v1055
  %v5808 = vpop.f32.mrf.mxu0
  %v5809 = vadd.f32 %v5768, %v5808
  %v5810 = vpop.f32.mrf.mxu0
  %v5811 = vadd.f32 %v5770, %v5810
  %v5812 = vpop.f32.mrf.mxu0
  %v5813 = vpop.f32.mrf.mxu0
  %5814 = vdwg.mxu0
  %5815 = vmatprep.subr.bf16.mxu0 %v4114
  %5816 = vmatpush1.bf16.msra.mxu0 %v4113
  %5817 = vmatprep.subr.bf16.mxu0 %v4112
  %5818 = vmatpush1.bf16.msra.mxu0 %v4111
  %5819 = vmatprep.subr.bf16.mxu0 %v4110
  %5820 = vmatpush1.bf16.msra.mxu0 %v4109
  %5821 = vmatprep.subr.bf16.mxu0 %v4108
  %5822 = vmatpush1.bf16.msra.mxu0 %v4107
  %5823 = vmatprep.subr.bf16.mxu0 %v4106
  %5824 = vmatpush1.bf16.msra.mxu0 %v4105
  %5825 = vmatprep.subr.bf16.mxu0 %v4104
  %5826 = vmatpush1.bf16.msra.mxu0 %v4103
  %5827 = vmatprep.subr.bf16.mxu0 %v4102
  %5828 = vmatpush1.bf16.msra.mxu0 %v4101
  %5829 = vmatprep.subr.bf16.mxu0 %v4100
  %5830 = vmatpush1.bf16.msra.mxu0 %v4099
  %5831 = vmatprep.subr.bf16.mxu0 %v4130
  %5832 = vmatpush2.bf16.msra.mxu0 %v4129
  %5833 = vmatprep.subr.bf16.mxu0 %v4128
  %5834 = vmatpush2.bf16.msra.mxu0 %v4127
  %5835 = vmatprep.subr.bf16.mxu0 %v4126
  %5836 = vmatpush2.bf16.msra.mxu0 %v4125
  %5837 = vmatprep.subr.bf16.mxu0 %v4124
  %5838 = vmatpush2.bf16.msra.mxu0 %v4123
  %5839 = vmatprep.subr.bf16.mxu0 %v4122
  %5840 = vmatpush2.bf16.msra.mxu0 %v4121
  %5841 = vmatprep.subr.bf16.mxu0 %v4120
  %5842 = vmatpush2.bf16.msra.mxu0 %v4119
  %5843 = vmatprep.subr.bf16.mxu0 %v4118
  %5844 = vmatpush2.bf16.msra.mxu0 %v4117
  %5845 = vmatprep.subr.bf16.mxu0 %v4116
  %5846 = vmatpush2.bf16.msra.mxu0 %v4115
  %5847 = vmatprep.mubr.bf16.mxu0 %v1095
  %5848 = vmatmul.mubr.bf16.gmra.mxu0 %v1081
  %v5849 = vpop.f32.mrf.mxu0
  %v5850 = vadd.f32 %v5809, %v5849
  %v5851 = vpop.f32.mrf.mxu0
  %v5852 = vadd.f32 %v5811, %v5851
  %v5853 = vpop.f32.mrf.mxu0
  %v5854 = vpop.f32.mrf.mxu0
  %5855 = vdwg.mxu0
  %5856 = vmatprep.subr.bf16.mxu0 %v4146
  %5857 = vmatpush1.bf16.msra.mxu0 %v4145
  %5858 = vmatprep.subr.bf16.mxu0 %v4144
  %5859 = vmatpush1.bf16.msra.mxu0 %v4143
  %5860 = vmatprep.subr.bf16.mxu0 %v4142
  %5861 = vmatpush1.bf16.msra.mxu0 %v4141
  %5862 = vmatprep.subr.bf16.mxu0 %v4140
  %5863 = vmatpush1.bf16.msra.mxu0 %v4139
  %5864 = vmatprep.subr.bf16.mxu0 %v4138
  %5865 = vmatpush1.bf16.msra.mxu0 %v4137
  %5866 = vmatprep.subr.bf16.mxu0 %v4136
  %5867 = vmatpush1.bf16.msra.mxu0 %v4135
  %5868 = vmatprep.subr.bf16.mxu0 %v4134
  %5869 = vmatpush1.bf16.msra.mxu0 %v4133
  %5870 = vmatprep.subr.bf16.mxu0 %v4132
  %5871 = vmatpush1.bf16.msra.mxu0 %v4131
  %5872 = vmatprep.subr.bf16.mxu0 %v4162
  %5873 = vmatpush2.bf16.msra.mxu0 %v4161
  %5874 = vmatprep.subr.bf16.mxu0 %v4160
  %5875 = vmatpush2.bf16.msra.mxu0 %v4159
  %5876 = vmatprep.subr.bf16.mxu0 %v4158
  %5877 = vmatpush2.bf16.msra.mxu0 %v4157
  %5878 = vmatprep.subr.bf16.mxu0 %v4156
  %5879 = vmatpush2.bf16.msra.mxu0 %v4155
  %5880 = vmatprep.subr.bf16.mxu0 %v4154
  %5881 = vmatpush2.bf16.msra.mxu0 %v4153
  %5882 = vmatprep.subr.bf16.mxu0 %v4152
  %5883 = vmatpush2.bf16.msra.mxu0 %v4151
  %5884 = vmatprep.subr.bf16.mxu0 %v4150
  %5885 = vmatpush2.bf16.msra.mxu0 %v4149
  %5886 = vmatprep.subr.bf16.mxu0 %v4148
  %5887 = vmatpush2.bf16.msra.mxu0 %v4147
  %5888 = vmatprep.mubr.bf16.mxu0 %v1105
  %5889 = vmatmul.mubr.bf16.gmra.mxu0 %v1103
  %v5890 = vpop.f32.mrf.mxu0
  %v5891 = vadd.f32 %v5850, %v5890
  %v5892 = vpop.f32.mrf.mxu0
  %v5893 = vadd.f32 %v5852, %v5892
  %v5894 = vpop.f32.mrf.mxu0
  %v5895 = vpop.f32.mrf.mxu0
  %5896 = vdwg.mxu0
  %5897 = vmatprep.subr.bf16.mxu0 %v4178
  %5898 = vmatpush1.bf16.msra.mxu0 %v4177
  %5899 = vmatprep.subr.bf16.mxu0 %v4176
  %5900 = vmatpush1.bf16.msra.mxu0 %v4175
  %5901 = vmatprep.subr.bf16.mxu0 %v4174
  %5902 = vmatpush1.bf16.msra.mxu0 %v4173
  %5903 = vmatprep.subr.bf16.mxu0 %v4172
  %5904 = vmatpush1.bf16.msra.mxu0 %v4171
  %5905 = vmatprep.subr.bf16.mxu0 %v4170
  %5906 = vmatpush1.bf16.msra.mxu0 %v4169
  %5907 = vmatprep.subr.bf16.mxu0 %v4168
  %5908 = vmatpush1.bf16.msra.mxu0 %v4167
  %5909 = vmatprep.subr.bf16.mxu0 %v4166
  %5910 = vmatpush1.bf16.msra.mxu0 %v4165
  %5911 = vmatprep.subr.bf16.mxu0 %v4164
  %5912 = vmatpush1.bf16.msra.mxu0 %v4163
  %5913 = vmatprep.subr.bf16.mxu0 %v4194
  %5914 = vmatpush2.bf16.msra.mxu0 %v4193
  %5915 = vmatprep.subr.bf16.mxu0 %v4192
  %5916 = vmatpush2.bf16.msra.mxu0 %v4191
  %5917 = vmatprep.subr.bf16.mxu0 %v4190
  %5918 = vmatpush2.bf16.msra.mxu0 %v4189
  %5919 = vmatprep.subr.bf16.mxu0 %v4188
  %5920 = vmatpush2.bf16.msra.mxu0 %v4187
  %5921 = vmatprep.subr.bf16.mxu0 %v4186
  %5922 = vmatpush2.bf16.msra.mxu0 %v4185
  %5923 = vmatprep.subr.bf16.mxu0 %v4184
  %5924 = vmatpush2.bf16.msra.mxu0 %v4183
  %5925 = vmatprep.subr.bf16.mxu0 %v4182
  %5926 = vmatpush2.bf16.msra.mxu0 %v4181
  %5927 = vmatprep.subr.bf16.mxu0 %v4180
  %5928 = vmatpush2.bf16.msra.mxu0 %v4179
  %5929 = vmatprep.mubr.bf16.mxu0 %v1102
  %5930 = vmatmul.mubr.bf16.gmra.mxu0 %v1088
  %v5931 = vpop.f32.mrf.mxu0
  %v5932 = vadd.f32 %v5891, %v5931
  %v5933 = vpop.f32.mrf.mxu0
  %v5934 = vadd.f32 %v5893, %v5933
  %v5935 = vpop.f32.mrf.mxu0
  %v5936 = vpop.f32.mrf.mxu0
  %5937 = vdwg.mxu0
  %5938 = vmatprep.subr.bf16.mxu0 %v4210
  %5939 = vmatpush1.bf16.msra.mxu0 %v4209
  %5940 = vmatprep.subr.bf16.mxu0 %v4208
  %5941 = vmatpush1.bf16.msra.mxu0 %v4207
  %5942 = vmatprep.subr.bf16.mxu0 %v4206
  %5943 = vmatpush1.bf16.msra.mxu0 %v4205
  %5944 = vmatprep.subr.bf16.mxu0 %v4204
  %5945 = vmatpush1.bf16.msra.mxu0 %v4203
  %5946 = vmatprep.subr.bf16.mxu0 %v4202
  %5947 = vmatpush1.bf16.msra.mxu0 %v4201
  %5948 = vmatprep.subr.bf16.mxu0 %v4200
  %5949 = vmatpush1.bf16.msra.mxu0 %v4199
  %5950 = vmatprep.subr.bf16.mxu0 %v4198
  %5951 = vmatpush1.bf16.msra.mxu0 %v4197
  %5952 = vmatprep.subr.bf16.mxu0 %v4196
  %5953 = vmatpush1.bf16.msra.mxu0 %v4195
  %5954 = vmatprep.subr.bf16.mxu0 %v4226
  %5955 = vmatpush2.bf16.msra.mxu0 %v4225
  %5956 = vmatprep.subr.bf16.mxu0 %v4224
  %5957 = vmatpush2.bf16.msra.mxu0 %v4223
  %5958 = vmatprep.subr.bf16.mxu0 %v4222
  %5959 = vmatpush2.bf16.msra.mxu0 %v4221
  %5960 = vmatprep.subr.bf16.mxu0 %v4220
  %5961 = vmatpush2.bf16.msra.mxu0 %v4219
  %5962 = vmatprep.subr.bf16.mxu0 %v4218
  %5963 = vmatpush2.bf16.msra.mxu0 %v4217
  %5964 = vmatprep.subr.bf16.mxu0 %v4216
  %5965 = vmatpush2.bf16.msra.mxu0 %v4215
  %5966 = vmatprep.subr.bf16.mxu0 %v4214
  %5967 = vmatpush2.bf16.msra.mxu0 %v4213
  %5968 = vmatprep.subr.bf16.mxu0 %v4212
  %5969 = vmatpush2.bf16.msra.mxu0 %v4211
  %5970 = vmatprep.mubr.bf16.mxu0 %v1106
  %5971 = vmatmul.mubr.bf16.gmra.mxu0 %v1104
  %v5972 = vpop.f32.mrf.mxu0
  %v5973 = vadd.f32 %v5932, %v5972
  %v5974 = vpop.f32.mrf.mxu0
  %v5975 = vadd.f32 %v5934, %v5974
  %v5976 = vpop.f32.mrf.mxu0
  %v5977 = vpop.f32.mrf.mxu0
  %5978 = vdwg.mxu0
  %v5979 = vmax.f32 %v5973, 0.0
  %v5980 = vmax.f32 %v5975, 0.0
  %v5981 = vpack.c.bf16 %v5979, %v5979
  %v5982 = vpack.c.bf16 %v5980, %v5980
  %v5983 = vld [vmem:[%s3] sm:$0xf]
  %v5984 = vld [vmem:[%s3 + $0x4] sm:$0xf]
  %v5985 = vld [vmem:[%s3 + $0x8] sm:$0xf]
  %v5986 = vld [vmem:[%s3 + $0xc] sm:$0xf]
  %v5987 = vld [vmem:[%s3 + $0x10] sm:$0xf]
  %v5988 = vld [vmem:[%s3 + $0x14] sm:$0xf]
  %v5989 = vld [vmem:[%s3 + $0x18] sm:$0xf]
  %v5990 = vld [vmem:[%s3 + $0x1c] sm:$0xf]
  %v5991 = vld [vmem:[%s3 + $0x20] sm:$0xf]
  %v5992 = vld [vmem:[%s3 + $0x24] sm:$0xf]
  %v5993 = vld [vmem:[%s3 + $0x28] sm:$0xf]
  %v5994 = vld [vmem:[%s3 + $0x2c] sm:$0xf]
  %v5995 = vld [vmem:[%s3 + $0x30] sm:$0xf]
  %v5996 = vld [vmem:[%s3 + $0x34] sm:$0xf]
  %v5997 = vld [vmem:[%s3 + $0x38] sm:$0xf]
  %v5998 = vld [vmem:[%s3 + $0x3c] sm:$0xf]
  %v5999 = vld [vmem:[%s3 + $0x40] sm:$0xf]
  %v6000 = vld [vmem:[%s3 + $0x44] sm:$0xf]
  %v6001 = vld [vmem:[%s3 + $0x48] sm:$0xf]
  %v6002 = vld [vmem:[%s3 + $0x4c] sm:$0xf]
  %v6003 = vld [vmem:[%s3 + $0x50] sm:$0xf]
  %v6004 = vld [vmem:[%s3 + $0x54] sm:$0xf]
  %v6005 = vld [vmem:[%s3 + $0x58] sm:$0xf]
  %v6006 = vld [vmem:[%s3 + $0x5c] sm:$0xf]
  %v6007 = vld [vmem:[%s3 + $0x60] sm:$0xf]
  %v6008 = vld [vmem:[%s3 + $0x64] sm:$0xf]
  %v6009 = vld [vmem:[%s3 + $0x68] sm:$0xf]
  %v6010 = vld [vmem:[%s3 + $0x6c] sm:$0xf]
  %v6011 = vld [vmem:[%s3 + $0x70] sm:$0xf]
  %v6012 = vld [vmem:[%s3 + $0x74] sm:$0xf]
  %v6013 = vld [vmem:[%s3 + $0x78] sm:$0xf]
  %v6014 = vld [vmem:[%s3 + $0x7c] sm:$0xf]
  %v6015 = vld [vmem:[%s4] sm:$0x1]
  %v6017 = vlaneseq
  %v6018 = vshrl.u32 %v6017, 7
  %v6019 = vsub.s32 0, %v6018
  %v6020 = vrot.slane %v6015, %v6019
  %v6054 = vunpack.c.l.b16 %v5983
  %v6055 = vunpack.c.l.b16 %v5984
  %v6056 = vunpack.c.l.b16 %v5985
  %v6057 = vunpack.c.l.b16 %v5986
  %v6058 = vunpack.c.l.b16 %v5987
  %v6059 = vunpack.c.l.b16 %v5988
  %v6060 = vunpack.c.l.b16 %v5989
  %v6061 = vunpack.c.l.b16 %v5990
  %v6062 = vunpack.c.l.b16 %v5991
  %v6063 = vunpack.c.l.b16 %v5992
  %v6064 = vunpack.c.l.b16 %v5993
  %v6065 = vunpack.c.l.b16 %v5994
  %v6066 = vunpack.c.l.b16 %v5995
  %v6067 = vunpack.c.l.b16 %v5996
  %v6068 = vunpack.c.l.b16 %v5997
  %v6069 = vunpack.c.l.b16 %v5998
  %v6070 = vunpack.c.l.b16 %v5999
  %v6071 = vunpack.c.l.b16 %v6000
  %v6072 = vunpack.c.l.b16 %v6001
  %v6073 = vunpack.c.l.b16 %v6002
  %v6074 = vunpack.c.l.b16 %v6003
  %v6075 = vunpack.c.l.b16 %v6004
  %v6076 = vunpack.c.l.b16 %v6005
  %v6077 = vunpack.c.l.b16 %v6006
  %v6078 = vunpack.c.l.b16 %v6007
  %v6079 = vunpack.c.l.b16 %v6008
  %v6080 = vunpack.c.l.b16 %v6009
  %v6081 = vunpack.c.l.b16 %v6010
  %v6082 = vunpack.c.l.b16 %v6011
  %v6083 = vunpack.c.l.b16 %v6012
  %v6084 = vunpack.c.l.b16 %v6013
  %v6085 = vunpack.c.l.b16 %v6014
  %v6086 = vpack.c.b16 %v6055, %v6054
  %v6087 = vpack.c.b16 %v6057, %v6056
  %v6088 = vpack.c.b16 %v6059, %v6058
  %v6089 = vpack.c.b16 %v6061, %v6060
  %v6090 = vpack.c.b16 %v6063, %v6062
  %v6091 = vpack.c.b16 %v6065, %v6064
  %v6092 = vpack.c.b16 %v6067, %v6066
  %v6093 = vpack.c.b16 %v6069, %v6068
  %v6094 = vpack.c.b16 %v6071, %v6070
  %v6095 = vpack.c.b16 %v6073, %v6072
  %v6096 = vpack.c.b16 %v6075, %v6074
  %v6097 = vpack.c.b16 %v6077, %v6076
  %v6098 = vpack.c.b16 %v6079, %v6078
  %v6099 = vpack.c.b16 %v6081, %v6080
  %v6100 = vpack.c.b16 %v6083, %v6082
  %v6101 = vpack.c.b16 %v6085, %v6084
  %6118 = vmatprep.subr.bf16.mxu0 0
  %6119 = vmatpush1.bf16.msra.mxu0 %v6093
  %6120 = vmatprep.subr.bf16.mxu0 0
  %6121 = vmatpush1.bf16.msra.mxu0 %v6092
  %6122 = vmatprep.subr.bf16.mxu0 0
  %6123 = vmatpush1.bf16.msra.mxu0 %v6091
  %6124 = vmatprep.subr.bf16.mxu0 0
  %6125 = vmatpush1.bf16.msra.mxu0 %v6090
  %6126 = vmatprep.subr.bf16.mxu0 0
  %6127 = vmatpush1.bf16.msra.mxu0 %v6089
  %6128 = vmatprep.subr.bf16.mxu0 0
  %6129 = vmatpush1.bf16.msra.mxu0 %v6088
  %6130 = vmatprep.subr.bf16.mxu0 0
  %6131 = vmatpush1.bf16.msra.mxu0 %v6087
  %6132 = vmatprep.subr.bf16.mxu0 0
  %6133 = vmatpush1.bf16.msra.mxu0 %v6086
  %6134 = vmatprep.subr.bf16.mxu0 0
  %6135 = vmatpush2.bf16.msra.mxu0 %v6101
  %6136 = vmatprep.subr.bf16.mxu0 0
  %6137 = vmatpush2.bf16.msra.mxu0 %v6100
  %6138 = vmatprep.subr.bf16.mxu0 0
  %6139 = vmatpush2.bf16.msra.mxu0 %v6099
  %6140 = vmatprep.subr.bf16.mxu0 0
  %6141 = vmatpush2.bf16.msra.mxu0 %v6098
  %6142 = vmatprep.subr.bf16.mxu0 0
  %6143 = vmatpush2.bf16.msra.mxu0 %v6097
  %6144 = vmatprep.subr.bf16.mxu0 0
  %6145 = vmatpush2.bf16.msra.mxu0 %v6096
  %6146 = vmatprep.subr.bf16.mxu0 0
  %6147 = vmatpush2.bf16.msra.mxu0 %v6095
  %6148 = vmatprep.subr.bf16.mxu0 0
  %6149 = vmatpush2.bf16.msra.mxu0 %v6094
  %6150 = vmatprep.mubr.bf16.mxu0 %v5982
  %6151 = vmatmul.mubr.bf16.gmra.mxu0 %v5981
  %v6152 = vpop.f32.mrf.mxu0
  %v6153 = vadd.f32 %v6020, %v6152
  %v6154 = vpop.f32.mrf.mxu0
  %v6155 = vpop.f32.mrf.mxu0
  %v6156 = vpop.f32.mrf.mxu0
  %6157 = vdwg.mxu0
  %vm6158 = vcmask 17408
  %6159 = vst.msk [vmem:[%s5] sm:$0x3] %vm6158, %v6153
  // Predicated region
  $region22: #{actor_critic_forward.7} parent=0 // pred_check
    _
  $region23: #{actor_critic_forward.7} parent=0 // pred_check_branch
    %6161 = sbr.rel (0) target = $region25
  $region24: #{actor_critic_forward.7} parent=0 // pred_region
    _
  $region25: #{actor_critic_forward.7} parent=0 // pred_fallthru
    _
  // Predicated region
  $region26: #{actor_critic_forward.7} parent=0 // pred_check
    _
  $region27: #{actor_critic_forward.7} parent=0 // pred_check_branch
    %6163 = sbr.rel (0) target = $region29
  $region28: #{actor_critic_forward.7} parent=0 // pred_region
    _
  $region29: #{actor_critic_forward.7} parent=0 // pred_fallthru
    _

</llo_original>
